<compile_context>
chip_gen: v7x
topology: tpu7x:2x2x1
jax: 0.10.0
libtpu: 0.0.40
codegen_flags: <defaults>
</compile_context>

<pallas_src>
import jax
import jax.numpy as jnp
from jax.experimental import pallas as pl
from jax.experimental.pallas import tpu as pltpu

# ---- small demo config (module defaults: rnn_hidden_dim=256, num_layers=3) ----
B = 2          # user-facing batch
C_IN = 8       # in_channels
T = 16         # seq_len
H = 32         # rnn_hidden_dim (small demo; 4H = 128 = one lane tile)
L = 3          # num_layers
NC = 4         # num_classes
BP = 8         # batch padded to a sublane multiple inside the kernel
G = 4 * H      # stacked gate width (i, f, g, o)
NCP = 128      # head output padded to one lane tile (unmasked stores)


def _mm(a, b):
    return jnp.dot(a, b, preferred_element_type=jnp.float32)


# --------------------------------------------------------------------- kernel
def _lstm_kernel(x_ref, wih0_ref, wihr_ref, whh_ref, b_ref, hw_ref, hb_ref,
                 out_ref, gates_ref, seq_ref):
    # x_ref     : (T*BP, C_IN)   time-major flattened input, row = t*BP + b
    # wih0_ref  : (C_IN, 4H)     layer-0 input weights (pre-transposed)
    # wihr_ref  : (L-1, H, 4H)   input weights of layers 1..L-1 (pre-transposed)
    # whh_ref   : (L, H, 4H)     hidden weights (pre-transposed)
    # b_ref     : (L, 1, 4H)     b_ih + b_hh per layer
    # hw_ref    : (H, NCP), hb_ref : (1, NCP)   classifier head (lane-padded)
    # gates_ref : (T*BP, 4H) VMEM scratch ; seq_ref : (T*BP, H) VMEM scratch

    def gate_update(g, c):
        i = jax.nn.sigmoid(g[:, 0 * H:1 * H])
        f = jax.nn.sigmoid(g[:, 1 * H:2 * H])
        gg = jnp.tanh(g[:, 2 * H:3 * H])
        o = jax.nn.sigmoid(g[:, 3 * H:4 * H])
        c = f * c + i * gg
        h = o * jnp.tanh(c)
        return h, c

    h_last = jnp.zeros((BP, H), jnp.float32)

    for layer in range(L):
        # Non-recurrent input projection for the WHOLE sequence: one MXU matmul
        # (lane-dense (T*BP, 4H) result), bias folded in once per layer.
        if layer == 0:
            gates_ref[...] = _mm(x_ref[...], wih0_ref[...]) + b_ref[layer]
        else:
            gates_ref[...] = _mm(seq_ref[...], wihr_ref[layer - 1]) + b_ref[layer]

        whh = whh_ref[layer]                                  # (H, 4H), loaded once

        # t = 0 : h_{-1} = c_{-1} = 0  ->  skip the dead h @ W_hh matmul.
        h, c = gate_update(gates_ref[0:BP, :], jnp.zeros((BP, H), jnp.float32))
        seq_ref[0:BP, :] = h

        # Remaining timesteps: fully unrolled (T static & small) so the
        # scheduler sees the whole chain; all slice offsets are static and
        # sublane-aligned (multiples of BP = 8).
        for t in range(1, T):
            r0 = t * BP
            g = gates_ref[r0:r0 + BP, :] + _mm(h, whh)        # (BP, 4H)
            h, c = gate_update(g, c)
            seq_ref[r0:r0 + BP, :] = h                        # feeds the next layer

        h_last = h
        # TODO(synk): nn.LSTM applies dropout(p=0.7) between layers in training
        # mode only; this eval-mode forward treats it as the identity.

    # Classifier head on the last timestep of the last layer (lane-padded).
    out_ref[...] = _mm(h_last, hw_ref[...]) + hb_ref[...]


# --------------------------------------------------------------------- wrapper
def pallas_forward(x, p):
    # x: (B, C_IN, T) channels-first, exactly like the PyTorch module input.
    bn = x.shape[0]
    x_btc = jnp.transpose(x, (0, 2, 1)).astype(jnp.float32)            # permute(0,2,1)
    x_pad = jnp.zeros((BP, T, C_IN), jnp.float32).at[:bn].set(x_btc)   # pad batch -> 8
    x_flat = jnp.transpose(x_pad, (1, 0, 2)).reshape(T * BP, C_IN)     # row = t*BP + b

    wih0_t = p["w_ih"][0].T                                            # (C_IN, 4H)
    wihr_t = jnp.stack([p["w_ih"][l].T for l in range(1, L)])          # (L-1, H, 4H)
    whh_t = jnp.stack([p["w_hh"][l].T for l in range(L)])              # (L, H, 4H)
    bias = jnp.stack([(p["b_ih"][l] + p["b_hh"][l]).reshape(1, G)
                      for l in range(L)])                              # (L, 1, 4H)
    hw_pad = jnp.zeros((H, NCP), jnp.float32).at[:, :NC].set(p["head_w"].T)
    hb_pad = jnp.zeros((1, NCP), jnp.float32).at[:, :NC].set(p["head_b"].reshape(1, NC))

    out = pl.pallas_call(
        _lstm_kernel,
        out_shape=jax.ShapeDtypeStruct((BP, NCP), jnp.float32),
        in_specs=[pl.BlockSpec(memory_space=pltpu.MemorySpace.VMEM)] * 7,
        out_specs=pl.BlockSpec(memory_space=pltpu.MemorySpace.VMEM),
        scratch_shapes=[pltpu.VMEM((T * BP, G), jnp.float32),
                        pltpu.VMEM((T * BP, H), jnp.float32)],
    )(x_flat, wih0_t, wihr_t, whh_t, bias, hw_pad, hb_pad)
    return out[:bn, :NC]                                               # drop padding


# -------------------------------------------------------------------- reference
def reference_forward(x, p):
    hp = jax.lax.Precision.HIGHEST
    h_in = jnp.transpose(x, (0, 2, 1)).astype(jnp.float32)             # (B, T, C)
    bn = h_in.shape[0]
    for l in range(L):
        w_ih, w_hh = p["w_ih"][l], p["w_hh"][l]
        b = p["b_ih"][l] + p["b_hh"][l]
        h_t = jnp.zeros((bn, H), jnp.float32)
        c_t = jnp.zeros((bn, H), jnp.float32)
        outs = []
        for t in range(T):
            g = (jnp.dot(h_in[:, t, :], w_ih.T, precision=hp)
                 + jnp.dot(h_t, w_hh.T, precision=hp) + b)
            i = jax.nn.sigmoid(g[:, :H])
            f = jax.nn.sigmoid(g[:, H:2 * H])
            gg = jnp.tanh(g[:, 2 * H:3 * H])
            o = jax.nn.sigmoid(g[:, 3 * H:])
            c_t = f * c_t + i * gg
            h_t = o * jnp.tanh(c_t)
            outs.append(h_t)
        h_in = jnp.stack(outs, axis=1)
    last = h_in[:, -1, :]
    return jnp.dot(last, p["head_w"].T, precision=hp) + p["head_b"]


# --------------------------------------------------------------------- params
def make_params(key):
    ks = iter(jax.random.split(key, 32))
    s = 1.0 / float(jnp.sqrt(jnp.float32(H)))

    def u(shape):
        return jax.random.uniform(next(ks), shape, jnp.float32, -s, s)

    p = {"w_ih": [], "w_hh": [], "b_ih": [], "b_hh": []}
    for l in range(L):
        cin = C_IN if l == 0 else H
        p["w_ih"].append(u((G, cin)))      # PyTorch weight_ih_l{k}: (4H, in)
        p["w_hh"].append(u((G, H)))        # PyTorch weight_hh_l{k}: (4H, H)
        p["b_ih"].append(u((G,)))
        p["b_hh"].append(u((G,)))
    p["head_w"] = u((NC, H))               # nn.Linear(H, NC)
    p["head_b"] = u((NC,))
    return p


# ----------------------------------------------------------------------- main
if __name__ == "__main__":
    key = jax.random.PRNGKey(0)
    kx, kp = jax.random.split(key)
    x = jax.random.normal(kx, (B, C_IN, T), dtype=jnp.float32)
    params = make_params(kp)

    out = pallas_forward(x, params)
    out = jax.block_until_ready(out)
    assert out.shape == (B, NC), out.shape

    ref = reference_forward(x, params)
    err = float(jnp.max(jnp.abs(out - ref)))
    scale = float(jnp.max(jnp.abs(ref))) + 1e-6
    assert err <= 2e-2 * scale + 2e-3, f"mismatch: max_err={err}, ref_scale={scale}"

    print("KERNEL_OK")
</pallas_src>

<mosaic_0001>
module attributes {stable_mosaic.version = 11 : i64} {
  func.func @_lstm_kernel(%arg0: memref<128x8xf32, #tpu.memory_space<vmem>>, %arg1: memref<8x128xf32, #tpu.memory_space<vmem>>, %arg2: memref<2x32x128xf32, #tpu.memory_space<vmem>>, %arg3: memref<3x32x128xf32, #tpu.memory_space<vmem>>, %arg4: memref<3x1x128xf32, #tpu.memory_space<vmem>>, %arg5: memref<32x128xf32, #tpu.memory_space<vmem>>, %arg6: memref<1x128xf32, #tpu.memory_space<vmem>>, %arg7: memref<8x128xf32, #tpu.memory_space<vmem>>, %arg8: memref<128x128xf32, #tpu.memory_space<vmem>>, %arg9: memref<128x32xf32, #tpu.memory_space<vmem>>) attributes {dimension_semantics = [], scalar_prefetch = 0 : i64, scratch_operands = 2 : i64, tpu.core_type = #tpu.core_type<tc>} {
    %c0 = arith.constant 0 : index
    %c0_0 = arith.constant 0 : index
    %0 = vector.load %arg0[%c0, %c0_0] : memref<128x8xf32, #tpu.memory_space<vmem>>, vector<128x8xf32>
    %c0_1 = arith.constant 0 : index
    %c0_2 = arith.constant 0 : index
    %1 = vector.load %arg1[%c0_1, %c0_2] : memref<8x128xf32, #tpu.memory_space<vmem>>, vector<8x128xf32>
    %cst = arith.constant dense<0.000000e+00> : vector<128x128xf32>
    %2 = tpu.matmul %0, %1, %cst {dimension_numbers = #tpu.dot_dimension_numbers<[1], [0], [0], [1], [0, 0, 1, 1], [], []>} : vector<128x8xf32>, vector<8x128xf32>, vector<128x128xf32> -> vector<128x128xf32>
    %c0_3 = arith.constant 0 : index
    %c0_4 = arith.constant 0 : index
    %c0_5 = arith.constant 0 : index
    %3 = vector.load %arg4[%c0_3, %c0_4, %c0_5] : memref<3x1x128xf32, #tpu.memory_space<vmem>>, vector<1x1x128xf32>
    %4 = vector.shape_cast %3 : vector<1x1x128xf32> to vector<1x128xf32>
    %5 = vector.broadcast %4 : vector<1x128xf32> to vector<128x128xf32>
    %6 = arith.addf %2, %5 : vector<128x128xf32>
    %c0_6 = arith.constant 0 : index
    %c0_7 = arith.constant 0 : index
    %7 = vector.load %arg8[%c0_6, %c0_7] : memref<128x128xf32, #tpu.memory_space<vmem>>, vector<128x128xf32>
    tpu.vector_store %arg8[%c0_6, %c0_7], %6 {strides = array<i32>} : memref<128x128xf32, #tpu.memory_space<vmem>>, vector<128x128xf32>,
    %c0_8 = arith.constant 0 : index
    %c0_9 = arith.constant 0 : index
    %c0_10 = arith.constant 0 : index
    %8 = vector.load %arg3[%c0_8, %c0_9, %c0_10] : memref<3x32x128xf32, #tpu.memory_space<vmem>>, vector<1x32x128xf32>
    %9 = vector.shape_cast %8 : vector<1x32x128xf32> to vector<32x128xf32>
    %c0_11 = arith.constant 0 : index
    %c0_12 = arith.constant 0 : index
    %10 = vector.load %arg8[%c0_11, %c0_12] : memref<128x128xf32, #tpu.memory_space<vmem>>, vector<8x128xf32>
    %cst_13 = arith.constant 0.000000e+00 : f32
    %11 = vector.broadcast %cst_13 : f32 to vector<8x32xf32>
    %12 = vector.extract_strided_slice %10 {offsets = [0, 0], sizes = [8, 32], strides = [1, 1]} : vector<8x128xf32> to vector<8x32xf32>
    %13 = arith.negf %12 : vector<8x32xf32>
    %14 = math.exp %13 : vector<8x32xf32>
    %cst_14 = arith.constant 1.000000e+00 : f32
    %15 = vector.broadcast %cst_14 : f32 to vector<8x32xf32>
    %16 = arith.addf %15, %14 : vector<8x32xf32>
    %17 = arith.divf %15, %16 : vector<8x32xf32>
    %18 = vector.extract_strided_slice %10 {offsets = [0, 32], sizes = [8, 32], strides = [1, 1]} : vector<8x128xf32> to vector<8x32xf32>
    %19 = arith.negf %18 : vector<8x32xf32>
    %20 = math.exp %19 : vector<8x32xf32>
    %cst_15 = arith.constant 1.000000e+00 : f32
    %21 = vector.broadcast %cst_15 : f32 to vector<8x32xf32>
    %22 = arith.addf %21, %20 : vector<8x32xf32>
    %23 = arith.divf %21, %22 : vector<8x32xf32>
    %24 = vector.extract_strided_slice %10 {offsets = [0, 64], sizes = [8, 32], strides = [1, 1]} : vector<8x128xf32> to vector<8x32xf32>
    %25 = math.tanh %24 : vector<8x32xf32>
    %26 = vector.extract_strided_slice %10 {offsets = [0, 96], sizes = [8, 32], strides = [1, 1]} : vector<8x128xf32> to vector<8x32xf32>
    %27 = arith.negf %26 : vector<8x32xf32>
    %28 = math.exp %27 : vector<8x32xf32>
    %cst_16 = arith.constant 1.000000e+00 : f32
    %29 = vector.broadcast %cst_16 : f32 to vector<8x32xf32>
    %30 = arith.addf %29, %28 : vector<8x32xf32>
    %31 = arith.divf %29, %30 : vector<8x32xf32>
    %32 = arith.mulf %23, %11 : vector<8x32xf32>
    %33 = arith.mulf %17, %25 : vector<8x32xf32>
    %34 = arith.addf %32, %33 : vector<8x32xf32>
    %35 = math.tanh %34 : vector<8x32xf32>
    %36 = arith.mulf %31, %35 : vector<8x32xf32>
    %c0_17 = arith.constant 0 : index
    %c0_18 = arith.constant 0 : index
    %37 = vector.load %arg9[%c0_17, %c0_18] : memref<128x32xf32, #tpu.memory_space<vmem>>, vector<8x32xf32>
    tpu.vector_store %arg9[%c0_17, %c0_18], %36 {strides = array<i32>} : memref<128x32xf32, #tpu.memory_space<vmem>>, vector<8x32xf32>,
    %c8 = arith.constant 8 : index
    %c0_19 = arith.constant 0 : index
    %38 = vector.load %arg8[%c8, %c0_19] : memref<128x128xf32, #tpu.memory_space<vmem>>, vector<8x128xf32>
    %cst_20 = arith.constant dense<0.000000e+00> : vector<8x128xf32>
    %39 = tpu.matmul %36, %9, %cst_20 {dimension_numbers = #tpu.dot_dimension_numbers<[1], [0], [0], [1], [0, 0, 1, 1], [], []>} : vector<8x32xf32>, vector<32x128xf32>, vector<8x128xf32> -> vector<8x128xf32>
    %40 = arith.addf %38, %39 : vector<8x128xf32>
    %41 = vector.extract_strided_slice %40 {offsets = [0, 0], sizes = [8, 32], strides = [1, 1]} : vector<8x128xf32> to vector<8x32xf32>
    %42 = arith.negf %41 : vector<8x32xf32>
    %43 = math.exp %42 : vector<8x32xf32>
    %cst_21 = arith.constant 1.000000e+00 : f32
    %44 = vector.broadcast %cst_21 : f32 to vector<8x32xf32>
    %45 = arith.addf %44, %43 : vector<8x32xf32>
    %46 = arith.divf %44, %45 : vector<8x32xf32>
    %47 = vector.extract_strided_slice %40 {offsets = [0, 32], sizes = [8, 32], strides = [1, 1]} : vector<8x128xf32> to vector<8x32xf32>
    %48 = arith.negf %47 : vector<8x32xf32>
    %49 = math.exp %48 : vector<8x32xf32>
    %cst_22 = arith.constant 1.000000e+00 : f32
    %50 = vector.broadcast %cst_22 : f32 to vector<8x32xf32>
    %51 = arith.addf %50, %49 : vector<8x32xf32>
    %52 = arith.divf %50, %51 : vector<8x32xf32>
    %53 = vector.extract_strided_slice %40 {offsets = [0, 64], sizes = [8, 32], strides = [1, 1]} : vector<8x128xf32> to vector<8x32xf32>
    %54 = math.tanh %53 : vector<8x32xf32>
    %55 = vector.extract_strided_slice %40 {offsets = [0, 96], sizes = [8, 32], strides = [1, 1]} : vector<8x128xf32> to vector<8x32xf32>
    %56 = arith.negf %55 : vector<8x32xf32>
    %57 = math.exp %56 : vector<8x32xf32>
    %cst_23 = arith.constant 1.000000e+00 : f32
    %58 = vector.broadcast %cst_23 : f32 to vector<8x32xf32>
    %59 = arith.addf %58, %57 : vector<8x32xf32>
    %60 = arith.divf %58, %59 : vector<8x32xf32>
    %61 = arith.mulf %52, %34 : vector<8x32xf32>
    %62 = arith.mulf %46, %54 : vector<8x32xf32>
    %63 = arith.addf %61, %62 : vector<8x32xf32>
    %64 = math.tanh %63 : vector<8x32xf32>
    %65 = arith.mulf %60, %64 : vector<8x32xf32>
    %c8_24 = arith.constant 8 : index
    %c0_25 = arith.constant 0 : index
    %66 = vector.load %arg9[%c8_24, %c0_25] : memref<128x32xf32, #tpu.memory_space<vmem>>, vector<8x32xf32>
    tpu.vector_store %arg9[%c8_24, %c0_25], %65 {strides = array<i32>} : memref<128x32xf32, #tpu.memory_space<vmem>>, vector<8x32xf32>,
    %c16 = arith.constant 16 : index
    %c0_26 = arith.constant 0 : index
    %67 = vector.load %arg8[%c16, %c0_26] : memref<128x128xf32, #tpu.memory_space<vmem>>, vector<8x128xf32>
    %cst_27 = arith.constant dense<0.000000e+00> : vector<8x128xf32>
    %68 = tpu.matmul %65, %9, %cst_27 {dimension_numbers = #tpu.dot_dimension_numbers<[1], [0], [0], [1], [0, 0, 1, 1], [], []>} : vector<8x32xf32>, vector<32x128xf32>, vector<8x128xf32> -> vector<8x128xf32>
    %69 = arith.addf %67, %68 : vector<8x128xf32>
    %70 = vector.extract_strided_slice %69 {offsets = [0, 0], sizes = [8, 32], strides = [1, 1]} : vector<8x128xf32> to vector<8x32xf32>
    %71 = arith.negf %70 : vector<8x32xf32>
    %72 = math.exp %71 : vector<8x32xf32>
    %cst_28 = arith.constant 1.000000e+00 : f32
    %73 = vector.broadcast %cst_28 : f32 to vector<8x32xf32>
    %74 = arith.addf %73, %72 : vector<8x32xf32>
    %75 = arith.divf %73, %74 : vector<8x32xf32>
    %76 = vector.extract_strided_slice %69 {offsets = [0, 32], sizes = [8, 32], strides = [1, 1]} : vector<8x128xf32> to vector<8x32xf32>
    %77 = arith.negf %76 : vector<8x32xf32>
    %78 = math.exp %77 : vector<8x32xf32>
    %cst_29 = arith.constant 1.000000e+00 : f32
    %79 = vector.broadcast %cst_29 : f32 to vector<8x32xf32>
    %80 = arith.addf %79, %78 : vector<8x32xf32>
    %81 = arith.divf %79, %80 : vector<8x32xf32>
    %82 = vector.extract_strided_slice %69 {offsets = [0, 64], sizes = [8, 32], strides = [1, 1]} : vector<8x128xf32> to vector<8x32xf32>
    %83 = math.tanh %82 : vector<8x32xf32>
    %84 = vector.extract_strided_slice %69 {offsets = [0, 96], sizes = [8, 32], strides = [1, 1]} : vector<8x128xf32> to vector<8x32xf32>
    %85 = arith.negf %84 : vector<8x32xf32>
    %86 = math.exp %85 : vector<8x32xf32>
    %cst_30 = arith.constant 1.000000e+00 : f32
    %87 = vector.broadcast %cst_30 : f32 to vector<8x32xf32>
    %88 = arith.addf %87, %86 : vector<8x32xf32>
    %89 = arith.divf %87, %88 : vector<8x32xf32>
    %90 = arith.mulf %81, %63 : vector<8x32xf32>
    %91 = arith.mulf %75, %83 : vector<8x32xf32>
    %92 = arith.addf %90, %91 : vector<8x32xf32>
    %93 = math.tanh %92 : vector<8x32xf32>
    %94 = arith.mulf %89, %93 : vector<8x32xf32>
    %c16_31 = arith.constant 16 : index
    %c0_32 = arith.constant 0 : index
    %95 = vector.load %arg9[%c16_31, %c0_32] : memref<128x32xf32, #tpu.memory_space<vmem>>, vector<8x32xf32>
    tpu.vector_store %arg9[%c16_31, %c0_32], %94 {strides = array<i32>} : memref<128x32xf32, #tpu.memory_space<vmem>>, vector<8x32xf32>,
    %c24 = arith.constant 24 : index
    %c0_33 = arith.constant 0 : index
    %96 = vector.load %arg8[%c24, %c0_33] : memref<128x128xf32, #tpu.memory_space<vmem>>, vector<8x128xf32>
    %cst_34 = arith.constant dense<0.000000e+00> : vector<8x128xf32>
    %97 = tpu.matmul %94, %9, %cst_34 {dimension_numbers = #tpu.dot_dimension_numbers<[1], [0], [0], [1], [0, 0, 1, 1], [], []>} : vector<8x32xf32>, vector<32x128xf32>, vector<8x128xf32> -> vector<8x128xf32>
    %98 = arith.addf %96, %97 : vector<8x128xf32>
    %99 = vector.extract_strided_slice %98 {offsets = [0, 0], sizes = [8, 32], strides = [1, 1]} : vector<8x128xf32> to vector<8x32xf32>
    %100 = arith.negf %99 : vector<8x32xf32>
    %101 = math.exp %100 : vector<8x32xf32>
    %cst_35 = arith.constant 1.000000e+00 : f32
    %102 = vector.broadcast %cst_35 : f32 to vector<8x32xf32>
    %103 = arith.addf %102, %101 : vector<8x32xf32>
    %104 = arith.divf %102, %103 : vector<8x32xf32>
    %105 = vector.extract_strided_slice %98 {offsets = [0, 32], sizes = [8, 32], strides = [1, 1]} : vector<8x128xf32> to vector<8x32xf32>
    %106 = arith.negf %105 : vector<8x32xf32>
    %107 = math.exp %106 : vector<8x32xf32>
    %cst_36 = arith.constant 1.000000e+00 : f32
    %108 = vector.broadcast %cst_36 : f32 to vector<8x32xf32>
    %109 = arith.addf %108, %107 : vector<8x32xf32>
    %110 = arith.divf %108, %109 : vector<8x32xf32>
    %111 = vector.extract_strided_slice %98 {offsets = [0, 64], sizes = [8, 32], strides = [1, 1]} : vector<8x128xf32> to vector<8x32xf32>
    %112 = math.tanh %111 : vector<8x32xf32>
    %113 = vector.extract_strided_slice %98 {offsets = [0, 96], sizes = [8, 32], strides = [1, 1]} : vector<8x128xf32> to vector<8x32xf32>
    %114 = arith.negf %113 : vector<8x32xf32>
    %115 = math.exp %114 : vector<8x32xf32>
    %cst_37 = arith.constant 1.000000e+00 : f32
    %116 = vector.broadcast %cst_37 : f32 to vector<8x32xf32>
    %117 = arith.addf %116, %115 : vector<8x32xf32>
    %118 = arith.divf %116, %117 : vector<8x32xf32>
    %119 = arith.mulf %110, %92 : vector<8x32xf32>
    %120 = arith.mulf %104, %112 : vector<8x32xf32>
    %121 = arith.addf %119, %120 : vector<8x32xf32>
    %122 = math.tanh %121 : vector<8x32xf32>
    %123 = arith.mulf %118, %122 : vector<8x32xf32>
    %c24_38 = arith.constant 24 : index
    %c0_39 = arith.constant 0 : index
    %124 = vector.load %arg9[%c24_38, %c0_39] : memref<128x32xf32, #tpu.memory_space<vmem>>, vector<8x32xf32>
    tpu.vector_store %arg9[%c24_38, %c0_39], %123 {strides = array<i32>} : memref<128x32xf32, #tpu.memory_space<vmem>>, vector<8x32xf32>,
    %c32 = arith.constant 32 : index
    %c0_40 = arith.constant 0 : index
    %125 = vector.load %arg8[%c32, %c0_40] : memref<128x128xf32, #tpu.memory_space<vmem>>, vector<8x128xf32>
    %cst_41 = arith.constant dense<0.000000e+00> : vector<8x128xf32>
    %126 = tpu.matmul %123, %9, %cst_41 {dimension_numbers = #tpu.dot_dimension_numbers<[1], [0], [0], [1], [0, 0, 1, 1], [], []>} : vector<8x32xf32>, vector<32x128xf32>, vector<8x128xf32> -> vector<8x128xf32>
    %127 = arith.addf %125, %126 : vector<8x128xf32>
    %128 = vector.extract_strided_slice %127 {offsets = [0, 0], sizes = [8, 32], strides = [1, 1]} : vector<8x128xf32> to vector<8x32xf32>
    %129 = arith.negf %128 : vector<8x32xf32>
    %130 = math.exp %129 : vector<8x32xf32>
    %cst_42 = arith.constant 1.000000e+00 : f32
    %131 = vector.broadcast %cst_42 : f32 to vector<8x32xf32>
    %132 = arith.addf %131, %130 : vector<8x32xf32>
    %133 = arith.divf %131, %132 : vector<8x32xf32>
    %134 = vector.extract_strided_slice %127 {offsets = [0, 32], sizes = [8, 32], strides = [1, 1]} : vector<8x128xf32> to vector<8x32xf32>
    %135 = arith.negf %134 : vector<8x32xf32>
    %136 = math.exp %135 : vector<8x32xf32>
    %cst_43 = arith.constant 1.000000e+00 : f32
    %137 = vector.broadcast %cst_43 : f32 to vector<8x32xf32>
    %138 = arith.addf %137, %136 : vector<8x32xf32>
    %139 = arith.divf %137, %138 : vector<8x32xf32>
    %140 = vector.extract_strided_slice %127 {offsets = [0, 64], sizes = [8, 32], strides = [1, 1]} : vector<8x128xf32> to vector<8x32xf32>
    %141 = math.tanh %140 : vector<8x32xf32>
    %142 = vector.extract_strided_slice %127 {offsets = [0, 96], sizes = [8, 32], strides = [1, 1]} : vector<8x128xf32> to vector<8x32xf32>
    %143 = arith.negf %142 : vector<8x32xf32>
    %144 = math.exp %143 : vector<8x32xf32>
    %cst_44 = arith.constant 1.000000e+00 : f32
    %145 = vector.broadcast %cst_44 : f32 to vector<8x32xf32>
    %146 = arith.addf %145, %144 : vector<8x32xf32>
    %147 = arith.divf %145, %146 : vector<8x32xf32>
    %148 = arith.mulf %139, %121 : vector<8x32xf32>
    %149 = arith.mulf %133, %141 : vector<8x32xf32>
    %150 = arith.addf %148, %149 : vector<8x32xf32>
    %151 = math.tanh %150 : vector<8x32xf32>
    %152 = arith.mulf %147, %151 : vector<8x32xf32>
    %c32_45 = arith.constant 32 : index
    %c0_46 = arith.constant 0 : index
    %153 = vector.load %arg9[%c32_45, %c0_46] : memref<128x32xf32, #tpu.memory_space<vmem>>, vector<8x32xf32>
    tpu.vector_store %arg9[%c32_45, %c0_46], %152 {strides = array<i32>} : memref<128x32xf32, #tpu.memory_space<vmem>>, vector<8x32xf32>,
    %c40 = arith.constant 40 : index
    %c0_47 = arith.constant 0 : index
    %154 = vector.load %arg8[%c40, %c0_47] : memref<128x128xf32, #tpu.memory_space<vmem>>, vector<8x128xf32>
    %cst_48 = arith.constant dense<0.000000e+00> : vector<8x128xf32>
    %155 = tpu.matmul %152, %9, %cst_48 {dimension_numbers = #tpu.dot_dimension_numbers<[1], [0], [0], [1], [0, 0, 1, 1], [], []>} : vector<8x32xf32>, vector<32x128xf32>, vector<8x128xf32> -> vector<8x128xf32>
    %156 = arith.addf %154, %155 : vector<8x128xf32>
    %157 = vector.extract_strided_slice %156 {offsets = [0, 0], sizes = [8, 32], strides = [1, 1]} : vector<8x128xf32> to vector<8x32xf32>
    %158 = arith.negf %157 : vector<8x32xf32>
    %159 = math.exp %158 : vector<8x32xf32>
    %cst_49 = arith.constant 1.000000e+00 : f32
    %160 = vector.broadcast %cst_49 : f32 to vector<8x32xf32>
    %161 = arith.addf %160, %159 : vector<8x32xf32>
    %162 = arith.divf %160, %161 : vector<8x32xf32>
    %163 = vector.extract_strided_slice %156 {offsets = [0, 32], sizes = [8, 32], strides = [1, 1]} : vector<8x128xf32> to vector<8x32xf32>
    %164 = arith.negf %163 : vector<8x32xf32>
    %165 = math.exp %164 : vector<8x32xf32>
    %cst_50 = arith.constant 1.000000e+00 : f32
    %166 = vector.broadcast %cst_50 : f32 to vector<8x32xf32>
    %167 = arith.addf %166, %165 : vector<8x32xf32>
    %168 = arith.divf %166, %167 : vector<8x32xf32>
    %169 = vector.extract_strided_slice %156 {offsets = [0, 64], sizes = [8, 32], strides = [1, 1]} : vector<8x128xf32> to vector<8x32xf32>
    %170 = math.tanh %169 : vector<8x32xf32>
    %171 = vector.extract_strided_slice %156 {offsets = [0, 96], sizes = [8, 32], strides = [1, 1]} : vector<8x128xf32> to vector<8x32xf32>
    %172 = arith.negf %171 : vector<8x32xf32>
    %173 = math.exp %172 : vector<8x32xf32>
    %cst_51 = arith.constant 1.000000e+00 : f32
    %174 = vector.broadcast %cst_51 : f32 to vector<8x32xf32>
    %175 = arith.addf %174, %173 : vector<8x32xf32>
    %176 = arith.divf %174, %175 : vector<8x32xf32>
    %177 = arith.mulf %168, %150 : vector<8x32xf32>
    %178 = arith.mulf %162, %170 : vector<8x32xf32>
    %179 = arith.addf %177, %178 : vector<8x32xf32>
    %180 = math.tanh %179 : vector<8x32xf32>
    %181 = arith.mulf %176, %180 : vector<8x32xf32>
    %c40_52 = arith.constant 40 : index
    %c0_53 = arith.constant 0 : index
    %182 = vector.load %arg9[%c40_52, %c0_53] : memref<128x32xf32, #tpu.memory_space<vmem>>, vector<8x32xf32>
    tpu.vector_store %arg9[%c40_52, %c0_53], %181 {strides = array<i32>} : memref<128x32xf32, #tpu.memory_space<vmem>>, vector<8x32xf32>,
    %c48 = arith.constant 48 : index
    %c0_54 = arith.constant 0 : index
    %183 = vector.load %arg8[%c48, %c0_54] : memref<128x128xf32, #tpu.memory_space<vmem>>, vector<8x128xf32>
    %cst_55 = arith.constant dense<0.000000e+00> : vector<8x128xf32>
    %184 = tpu.matmul %181, %9, %cst_55 {dimension_numbers = #tpu.dot_dimension_numbers<[1], [0], [0], [1], [0, 0, 1, 1], [], []>} : vector<8x32xf32>, vector<32x128xf32>, vector<8x128xf32> -> vector<8x128xf32>
    %185 = arith.addf %183, %184 : vector<8x128xf32>
    %186 = vector.extract_strided_slice %185 {offsets = [0, 0], sizes = [8, 32], strides = [1, 1]} : vector<8x128xf32> to vector<8x32xf32>
    %187 = arith.negf %186 : vector<8x32xf32>
    %188 = math.exp %187 : vector<8x32xf32>
    %cst_56 = arith.constant 1.000000e+00 : f32
    %189 = vector.broadcast %cst_56 : f32 to vector<8x32xf32>
    %190 = arith.addf %189, %188 : vector<8x32xf32>
    %191 = arith.divf %189, %190 : vector<8x32xf32>
    %192 = vector.extract_strided_slice %185 {offsets = [0, 32], sizes = [8, 32], strides = [1, 1]} : vector<8x128xf32> to vector<8x32xf32>
    %193 = arith.negf %192 : vector<8x32xf32>
    %194 = math.exp %193 : vector<8x32xf32>
    %cst_57 = arith.constant 1.000000e+00 : f32
    %195 = vector.broadcast %cst_57 : f32 to vector<8x32xf32>
    %196 = arith.addf %195, %194 : vector<8x32xf32>
    %197 = arith.divf %195, %196 : vector<8x32xf32>
    %198 = vector.extract_strided_slice %185 {offsets = [0, 64], sizes = [8, 32], strides = [1, 1]} : vector<8x128xf32> to vector<8x32xf32>
    %199 = math.tanh %198 : vector<8x32xf32>
    %200 = vector.extract_strided_slice %185 {offsets = [0, 96], sizes = [8, 32], strides = [1, 1]} : vector<8x128xf32> to vector<8x32xf32>
    %201 = arith.negf %200 : vector<8x32xf32>
    %202 = math.exp %201 : vector<8x32xf32>
    %cst_58 = arith.constant 1.000000e+00 : f32
    %203 = vector.broadcast %cst_58 : f32 to vector<8x32xf32>
    %204 = arith.addf %203, %202 : vector<8x32xf32>
    %205 = arith.divf %203, %204 : vector<8x32xf32>
    %206 = arith.mulf %197, %179 : vector<8x32xf32>
    %207 = arith.mulf %191, %199 : vector<8x32xf32>
    %208 = arith.addf %206, %207 : vector<8x32xf32>
    %209 = math.tanh %208 : vector<8x32xf32>
    %210 = arith.mulf %205, %209 : vector<8x32xf32>
    %c48_59 = arith.constant 48 : index
    %c0_60 = arith.constant 0 : index
    %211 = vector.load %arg9[%c48_59, %c0_60] : memref<128x32xf32, #tpu.memory_space<vmem>>, vector<8x32xf32>
    tpu.vector_store %arg9[%c48_59, %c0_60], %210 {strides = array<i32>} : memref<128x32xf32, #tpu.memory_space<vmem>>, vector<8x32xf32>,
    %c56 = arith.constant 56 : index
    %c0_61 = arith.constant 0 : index
    %212 = vector.load %arg8[%c56, %c0_61] : memref<128x128xf32, #tpu.memory_space<vmem>>, vector<8x128xf32>
    %cst_62 = arith.constant dense<0.000000e+00> : vector<8x128xf32>
    %213 = tpu.matmul %210, %9, %cst_62 {dimension_numbers = #tpu.dot_dimension_numbers<[1], [0], [0], [1], [0, 0, 1, 1], [], []>} : vector<8x32xf32>, vector<32x128xf32>, vector<8x128xf32> -> vector<8x128xf32>
    %214 = arith.addf %212, %213 : vector<8x128xf32>
    %215 = vector.extract_strided_slice %214 {offsets = [0, 0], sizes = [8, 32], strides = [1, 1]} : vector<8x128xf32> to vector<8x32xf32>
    %216 = arith.negf %215 : vector<8x32xf32>
    %217 = math.exp %216 : vector<8x32xf32>
    %cst_63 = arith.constant 1.000000e+00 : f32
    %218 = vector.broadcast %cst_63 : f32 to vector<8x32xf32>
    %219 = arith.addf %218, %217 : vector<8x32xf32>
    %220 = arith.divf %218, %219 : vector<8x32xf32>
    %221 = vector.extract_strided_slice %214 {offsets = [0, 32], sizes = [8, 32], strides = [1, 1]} : vector<8x128xf32> to vector<8x32xf32>
    %222 = arith.negf %221 : vector<8x32xf32>
    %223 = math.exp %222 : vector<8x32xf32>
    %cst_64 = arith.constant 1.000000e+00 : f32
    %224 = vector.broadcast %cst_64 : f32 to vector<8x32xf32>
    %225 = arith.addf %224, %223 : vector<8x32xf32>
    %226 = arith.divf %224, %225 : vector<8x32xf32>
    %227 = vector.extract_strided_slice %214 {offsets = [0, 64], sizes = [8, 32], strides = [1, 1]} : vector<8x128xf32> to vector<8x32xf32>
    %228 = math.tanh %227 : vector<8x32xf32>
    %229 = vector.extract_strided_slice %214 {offsets = [0, 96], sizes = [8, 32], strides = [1, 1]} : vector<8x128xf32> to vector<8x32xf32>
    %230 = arith.negf %229 : vector<8x32xf32>
    %231 = math.exp %230 : vector<8x32xf32>
    %cst_65 = arith.constant 1.000000e+00 : f32
    %232 = vector.broadcast %cst_65 : f32 to vector<8x32xf32>
    %233 = arith.addf %232, %231 : vector<8x32xf32>
    %234 = arith.divf %232, %233 : vector<8x32xf32>
    %235 = arith.mulf %226, %208 : vector<8x32xf32>
    %236 = arith.mulf %220, %228 : vector<8x32xf32>
    %237 = arith.addf %235, %236 : vector<8x32xf32>
    %238 = math.tanh %237 : vector<8x32xf32>
    %239 = arith.mulf %234, %238 : vector<8x32xf32>
    %c56_66 = arith.constant 56 : index
    %c0_67 = arith.constant 0 : index
    %240 = vector.load %arg9[%c56_66, %c0_67] : memref<128x32xf32, #tpu.memory_space<vmem>>, vector<8x32xf32>
    tpu.vector_store %arg9[%c56_66, %c0_67], %239 {strides = array<i32>} : memref<128x32xf32, #tpu.memory_space<vmem>>, vector<8x32xf32>,
    %c64 = arith.constant 64 : index
    %c0_68 = arith.constant 0 : index
    %241 = vector.load %arg8[%c64, %c0_68] : memref<128x128xf32, #tpu.memory_space<vmem>>, vector<8x128xf32>
    %cst_69 = arith.constant dense<0.000000e+00> : vector<8x128xf32>
    %242 = tpu.matmul %239, %9, %cst_69 {dimension_numbers = #tpu.dot_dimension_numbers<[1], [0], [0], [1], [0, 0, 1, 1], [], []>} : vector<8x32xf32>, vector<32x128xf32>, vector<8x128xf32> -> vector<8x128xf32>
    %243 = arith.addf %241, %242 : vector<8x128xf32>
    %244 = vector.extract_strided_slice %243 {offsets = [0, 0], sizes = [8, 32], strides = [1, 1]} : vector<8x128xf32> to vector<8x32xf32>
    %245 = arith.negf %244 : vector<8x32xf32>
    %246 = math.exp %245 : vector<8x32xf32>
    %cst_70 = arith.constant 1.000000e+00 : f32
    %247 = vector.broadcast %cst_70 : f32 to vector<8x32xf32>
    %248 = arith.addf %247, %246 : vector<8x32xf32>
    %249 = arith.divf %247, %248 : vector<8x32xf32>
    %250 = vector.extract_strided_slice %243 {offsets = [0, 32], sizes = [8, 32], strides = [1, 1]} : vector<8x128xf32> to vector<8x32xf32>
    %251 = arith.negf %250 : vector<8x32xf32>
    %252 = math.exp %251 : vector<8x32xf32>
    %cst_71 = arith.constant 1.000000e+00 : f32
    %253 = vector.broadcast %cst_71 : f32 to vector<8x32xf32>
    %254 = arith.addf %253, %252 : vector<8x32xf32>
    %255 = arith.divf %253, %254 : vector<8x32xf32>
    %256 = vector.extract_strided_slice %243 {offsets = [0, 64], sizes = [8, 32], strides = [1, 1]} : vector<8x128xf32> to vector<8x32xf32>
    %257 = math.tanh %256 : vector<8x32xf32>
    %258 = vector.extract_strided_slice %243 {offsets = [0, 96], sizes = [8, 32], strides = [1, 1]} : vector<8x128xf32> to vector<8x32xf32>
    %259 = arith.negf %258 : vector<8x32xf32>
    %260 = math.exp %259 : vector<8x32xf32>
    %cst_72 = arith.constant 1.000000e+00 : f32
    %261 = vector.broadcast %cst_72 : f32 to vector<8x32xf32>
    %262 = arith.addf %261, %260 : vector<8x32xf32>
    %263 = arith.divf %261, %262 : vector<8x32xf32>
    %264 = arith.mulf %255, %237 : vector<8x32xf32>
    %265 = arith.mulf %249, %257 : vector<8x32xf32>
    %266 = arith.addf %264, %265 : vector<8x32xf32>
    %267 = math.tanh %266 : vector<8x32xf32>
    %268 = arith.mulf %263, %267 : vector<8x32xf32>
    %c64_73 = arith.constant 64 : index
    %c0_74 = arith.constant 0 : index
    %269 = vector.load %arg9[%c64_73, %c0_74] : memref<128x32xf32, #tpu.memory_space<vmem>>, vector<8x32xf32>
    tpu.vector_store %arg9[%c64_73, %c0_74], %268 {strides = array<i32>} : memref<128x32xf32, #tpu.memory_space<vmem>>, vector<8x32xf32>,
    %c72 = arith.constant 72 : index
    %c0_75 = arith.constant 0 : index
    %270 = vector.load %arg8[%c72, %c0_75] : memref<128x128xf32, #tpu.memory_space<vmem>>, vector<8x128xf32>
    %cst_76 = arith.constant dense<0.000000e+00> : vector<8x128xf32>
    %271 = tpu.matmul %268, %9, %cst_76 {dimension_numbers = #tpu.dot_dimension_numbers<[1], [0], [0], [1], [0, 0, 1, 1], [], []>} : vector<8x32xf32>, vector<32x128xf32>, vector<8x128xf32> -> vector<8x128xf32>
    %272 = arith.addf %270, %271 : vector<8x128xf32>
    %273 = vector.extract_strided_slice %272 {offsets = [0, 0], sizes = [8, 32], strides = [1, 1]} : vector<8x128xf32> to vector<8x32xf32>
    %274 = arith.negf %273 : vector<8x32xf32>
    %275 = math.exp %274 : vector<8x32xf32>
    %cst_77 = arith.constant 1.000000e+00 : f32
    %276 = vector.broadcast %cst_77 : f32 to vector<8x32xf32>
    %277 = arith.addf %276, %275 : vector<8x32xf32>
    %278 = arith.divf %276, %277 : vector<8x32xf32>
    %279 = vector.extract_strided_slice %272 {offsets = [0, 32], sizes = [8, 32], strides = [1, 1]} : vector<8x128xf32> to vector<8x32xf32>
    %280 = arith.negf %279 : vector<8x32xf32>
    %281 = math.exp %280 : vector<8x32xf32>
    %cst_78 = arith.constant 1.000000e+00 : f32
    %282 = vector.broadcast %cst_78 : f32 to vector<8x32xf32>
    %283 = arith.addf %282, %281 : vector<8x32xf32>
    %284 = arith.divf %282, %283 : vector<8x32xf32>
    %285 = vector.extract_strided_slice %272 {offsets = [0, 64], sizes = [8, 32], strides = [1, 1]} : vector<8x128xf32> to vector<8x32xf32>
    %286 = math.tanh %285 : vector<8x32xf32>
    %287 = vector.extract_strided_slice %272 {offsets = [0, 96], sizes = [8, 32], strides = [1, 1]} : vector<8x128xf32> to vector<8x32xf32>
    %288 = arith.negf %287 : vector<8x32xf32>
    %289 = math.exp %288 : vector<8x32xf32>
    %cst_79 = arith.constant 1.000000e+00 : f32
    %290 = vector.broadcast %cst_79 : f32 to vector<8x32xf32>
    %291 = arith.addf %290, %289 : vector<8x32xf32>
    %292 = arith.divf %290, %291 : vector<8x32xf32>
    %293 = arith.mulf %284, %266 : vector<8x32xf32>
    %294 = arith.mulf %278, %286 : vector<8x32xf32>
    %295 = arith.addf %293, %294 : vector<8x32xf32>
    %296 = math.tanh %295 : vector<8x32xf32>
    %297 = arith.mulf %292, %296 : vector<8x32xf32>
    %c72_80 = arith.constant 72 : index
    %c0_81 = arith.constant 0 : index
    %298 = vector.load %arg9[%c72_80, %c0_81] : memref<128x32xf32, #tpu.memory_space<vmem>>, vector<8x32xf32>
    tpu.vector_store %arg9[%c72_80, %c0_81], %297 {strides = array<i32>} : memref<128x32xf32, #tpu.memory_space<vmem>>, vector<8x32xf32>,
    %c80 = arith.constant 80 : index
    %c0_82 = arith.constant 0 : index
    %299 = vector.load %arg8[%c80, %c0_82] : memref<128x128xf32, #tpu.memory_space<vmem>>, vector<8x128xf32>
    %cst_83 = arith.constant dense<0.000000e+00> : vector<8x128xf32>
    %300 = tpu.matmul %297, %9, %cst_83 {dimension_numbers = #tpu.dot_dimension_numbers<[1], [0], [0], [1], [0, 0, 1, 1], [], []>} : vector<8x32xf32>, vector<32x128xf32>, vector<8x128xf32> -> vector<8x128xf32>
    %301 = arith.addf %299, %300 : vector<8x128xf32>
    %302 = vector.extract_strided_slice %301 {offsets = [0, 0], sizes = [8, 32], strides = [1, 1]} : vector<8x128xf32> to vector<8x32xf32>
    %303 = arith.negf %302 : vector<8x32xf32>
    %304 = math.exp %303 : vector<8x32xf32>
    %cst_84 = arith.constant 1.000000e+00 : f32
    %305 = vector.broadcast %cst_84 : f32 to vector<8x32xf32>
    %306 = arith.addf %305, %304 : vector<8x32xf32>
    %307 = arith.divf %305, %306 : vector<8x32xf32>
    %308 = vector.extract_strided_slice %301 {offsets = [0, 32], sizes = [8, 32], strides = [1, 1]} : vector<8x128xf32> to vector<8x32xf32>
    %309 = arith.negf %308 : vector<8x32xf32>
    %310 = math.exp %309 : vector<8x32xf32>
    %cst_85 = arith.constant 1.000000e+00 : f32
    %311 = vector.broadcast %cst_85 : f32 to vector<8x32xf32>
    %312 = arith.addf %311, %310 : vector<8x32xf32>
    %313 = arith.divf %311, %312 : vector<8x32xf32>
    %314 = vector.extract_strided_slice %301 {offsets = [0, 64], sizes = [8, 32], strides = [1, 1]} : vector<8x128xf32> to vector<8x32xf32>
    %315 = math.tanh %314 : vector<8x32xf32>
    %316 = vector.extract_strided_slice %301 {offsets = [0, 96], sizes = [8, 32], strides = [1, 1]} : vector<8x128xf32> to vector<8x32xf32>
    %317 = arith.negf %316 : vector<8x32xf32>
    %318 = math.exp %317 : vector<8x32xf32>
    %cst_86 = arith.constant 1.000000e+00 : f32
    %319 = vector.broadcast %cst_86 : f32 to vector<8x32xf32>
    %320 = arith.addf %319, %318 : vector<8x32xf32>
    %321 = arith.divf %319, %320 : vector<8x32xf32>
    %322 = arith.mulf %313, %295 : vector<8x32xf32>
    %323 = arith.mulf %307, %315 : vector<8x32xf32>
    %324 = arith.addf %322, %323 : vector<8x32xf32>
    %325 = math.tanh %324 : vector<8x32xf32>
    %326 = arith.mulf %321, %325 : vector<8x32xf32>
    %c80_87 = arith.constant 80 : index
    %c0_88 = arith.constant 0 : index
    %327 = vector.load %arg9[%c80_87, %c0_88] : memref<128x32xf32, #tpu.memory_space<vmem>>, vector<8x32xf32>
    tpu.vector_store %arg9[%c80_87, %c0_88], %326 {strides = array<i32>} : memref<128x32xf32, #tpu.memory_space<vmem>>, vector<8x32xf32>,
    %c88 = arith.constant 88 : index
    %c0_89 = arith.constant 0 : index
    %328 = vector.load %arg8[%c88, %c0_89] : memref<128x128xf32, #tpu.memory_space<vmem>>, vector<8x128xf32>
    %cst_90 = arith.constant dense<0.000000e+00> : vector<8x128xf32>
    %329 = tpu.matmul %326, %9, %cst_90 {dimension_numbers = #tpu.dot_dimension_numbers<[1], [0], [0], [1], [0, 0, 1, 1], [], []>} : vector<8x32xf32>, vector<32x128xf32>, vector<8x128xf32> -> vector<8x128xf32>
    %330 = arith.addf %328, %329 : vector<8x128xf32>
    %331 = vector.extract_strided_slice %330 {offsets = [0, 0], sizes = [8, 32], strides = [1, 1]} : vector<8x128xf32> to vector<8x32xf32>
    %332 = arith.negf %331 : vector<8x32xf32>
    %333 = math.exp %332 : vector<8x32xf32>
    %cst_91 = arith.constant 1.000000e+00 : f32
    %334 = vector.broadcast %cst_91 : f32 to vector<8x32xf32>
    %335 = arith.addf %334, %333 : vector<8x32xf32>
    %336 = arith.divf %334, %335 : vector<8x32xf32>
    %337 = vector.extract_strided_slice %330 {offsets = [0, 32], sizes = [8, 32], strides = [1, 1]} : vector<8x128xf32> to vector<8x32xf32>
    %338 = arith.negf %337 : vector<8x32xf32>
    %339 = math.exp %338 : vector<8x32xf32>
    %cst_92 = arith.constant 1.000000e+00 : f32
    %340 = vector.broadcast %cst_92 : f32 to vector<8x32xf32>
    %341 = arith.addf %340, %339 : vector<8x32xf32>
    %342 = arith.divf %340, %341 : vector<8x32xf32>
    %343 = vector.extract_strided_slice %330 {offsets = [0, 64], sizes = [8, 32], strides = [1, 1]} : vector<8x128xf32> to vector<8x32xf32>
    %344 = math.tanh %343 : vector<8x32xf32>
    %345 = vector.extract_strided_slice %330 {offsets = [0, 96], sizes = [8, 32], strides = [1, 1]} : vector<8x128xf32> to vector<8x32xf32>
    %346 = arith.negf %345 : vector<8x32xf32>
    %347 = math.exp %346 : vector<8x32xf32>
    %cst_93 = arith.constant 1.000000e+00 : f32
    %348 = vector.broadcast %cst_93 : f32 to vector<8x32xf32>
    %349 = arith.addf %348, %347 : vector<8x32xf32>
    %350 = arith.divf %348, %349 : vector<8x32xf32>
    %351 = arith.mulf %342, %324 : vector<8x32xf32>
    %352 = arith.mulf %336, %344 : vector<8x32xf32>
    %353 = arith.addf %351, %352 : vector<8x32xf32>
    %354 = math.tanh %353 : vector<8x32xf32>
    %355 = arith.mulf %350, %354 : vector<8x32xf32>
    %c88_94 = arith.constant 88 : index
    %c0_95 = arith.constant 0 : index
    %356 = vector.load %arg9[%c88_94, %c0_95] : memref<128x32xf32, #tpu.memory_space<vmem>>, vector<8x32xf32>
    tpu.vector_store %arg9[%c88_94, %c0_95], %355 {strides = array<i32>} : memref<128x32xf32, #tpu.memory_space<vmem>>, vector<8x32xf32>,
    %c96 = arith.constant 96 : index
    %c0_96 = arith.constant 0 : index
    %357 = vector.load %arg8[%c96, %c0_96] : memref<128x128xf32, #tpu.memory_space<vmem>>, vector<8x128xf32>
    %cst_97 = arith.constant dense<0.000000e+00> : vector<8x128xf32>
    %358 = tpu.matmul %355, %9, %cst_97 {dimension_numbers = #tpu.dot_dimension_numbers<[1], [0], [0], [1], [0, 0, 1, 1], [], []>} : vector<8x32xf32>, vector<32x128xf32>, vector<8x128xf32> -> vector<8x128xf32>
    %359 = arith.addf %357, %358 : vector<8x128xf32>
    %360 = vector.extract_strided_slice %359 {offsets = [0, 0], sizes = [8, 32], strides = [1, 1]} : vector<8x128xf32> to vector<8x32xf32>
    %361 = arith.negf %360 : vector<8x32xf32>
    %362 = math.exp %361 : vector<8x32xf32>
    %cst_98 = arith.constant 1.000000e+00 : f32
    %363 = vector.broadcast %cst_98 : f32 to vector<8x32xf32>
    %364 = arith.addf %363, %362 : vector<8x32xf32>
    %365 = arith.divf %363, %364 : vector<8x32xf32>
    %366 = vector.extract_strided_slice %359 {offsets = [0, 32], sizes = [8, 32], strides = [1, 1]} : vector<8x128xf32> to vector<8x32xf32>
    %367 = arith.negf %366 : vector<8x32xf32>
    %368 = math.exp %367 : vector<8x32xf32>
    %cst_99 = arith.constant 1.000000e+00 : f32
    %369 = vector.broadcast %cst_99 : f32 to vector<8x32xf32>
    %370 = arith.addf %369, %368 : vector<8x32xf32>
    %371 = arith.divf %369, %370 : vector<8x32xf32>
    %372 = vector.extract_strided_slice %359 {offsets = [0, 64], sizes = [8, 32], strides = [1, 1]} : vector<8x128xf32> to vector<8x32xf32>
    %373 = math.tanh %372 : vector<8x32xf32>
    %374 = vector.extract_strided_slice %359 {offsets = [0, 96], sizes = [8, 32], strides = [1, 1]} : vector<8x128xf32> to vector<8x32xf32>
    %375 = arith.negf %374 : vector<8x32xf32>
    %376 = math.exp %375 : vector<8x32xf32>
    %cst_100 = arith.constant 1.000000e+00 : f32
    %377 = vector.broadcast %cst_100 : f32 to vector<8x32xf32>
    %378 = arith.addf %377, %376 : vector<8x32xf32>
    %379 = arith.divf %377, %378 : vector<8x32xf32>
    %380 = arith.mulf %371, %353 : vector<8x32xf32>
    %381 = arith.mulf %365, %373 : vector<8x32xf32>
    %382 = arith.addf %380, %381 : vector<8x32xf32>
    %383 = math.tanh %382 : vector<8x32xf32>
    %384 = arith.mulf %379, %383 : vector<8x32xf32>
    %c96_101 = arith.constant 96 : index
    %c0_102 = arith.constant 0 : index
    %385 = vector.load %arg9[%c96_101, %c0_102] : memref<128x32xf32, #tpu.memory_space<vmem>>, vector<8x32xf32>
    tpu.vector_store %arg9[%c96_101, %c0_102], %384 {strides = array<i32>} : memref<128x32xf32, #tpu.memory_space<vmem>>, vector<8x32xf32>,
    %c104 = arith.constant 104 : index
    %c0_103 = arith.constant 0 : index
    %386 = vector.load %arg8[%c104, %c0_103] : memref<128x128xf32, #tpu.memory_space<vmem>>, vector<8x128xf32>
    %cst_104 = arith.constant dense<0.000000e+00> : vector<8x128xf32>
    %387 = tpu.matmul %384, %9, %cst_104 {dimension_numbers = #tpu.dot_dimension_numbers<[1], [0], [0], [1], [0, 0, 1, 1], [], []>} : vector<8x32xf32>, vector<32x128xf32>, vector<8x128xf32> -> vector<8x128xf32>
    %388 = arith.addf %386, %387 : vector<8x128xf32>
    %389 = vector.extract_strided_slice %388 {offsets = [0, 0], sizes = [8, 32], strides = [1, 1]} : vector<8x128xf32> to vector<8x32xf32>
    %390 = arith.negf %389 : vector<8x32xf32>
    %391 = math.exp %390 : vector<8x32xf32>
    %cst_105 = arith.constant 1.000000e+00 : f32
    %392 = vector.broadcast %cst_105 : f32 to vector<8x32xf32>
    %393 = arith.addf %392, %391 : vector<8x32xf32>
    %394 = arith.divf %392, %393 : vector<8x32xf32>
    %395 = vector.extract_strided_slice %388 {offsets = [0, 32], sizes = [8, 32], strides = [1, 1]} : vector<8x128xf32> to vector<8x32xf32>
    %396 = arith.negf %395 : vector<8x32xf32>
    %397 = math.exp %396 : vector<8x32xf32>
    %cst_106 = arith.constant 1.000000e+00 : f32
    %398 = vector.broadcast %cst_106 : f32 to vector<8x32xf32>
    %399 = arith.addf %398, %397 : vector<8x32xf32>
    %400 = arith.divf %398, %399 : vector<8x32xf32>
    %401 = vector.extract_strided_slice %388 {offsets = [0, 64], sizes = [8, 32], strides = [1, 1]} : vector<8x128xf32> to vector<8x32xf32>
    %402 = math.tanh %401 : vector<8x32xf32>
    %403 = vector.extract_strided_slice %388 {offsets = [0, 96], sizes = [8, 32], strides = [1, 1]} : vector<8x128xf32> to vector<8x32xf32>
    %404 = arith.negf %403 : vector<8x32xf32>
    %405 = math.exp %404 : vector<8x32xf32>
    %cst_107 = arith.constant 1.000000e+00 : f32
    %406 = vector.broadcast %cst_107 : f32 to vector<8x32xf32>
    %407 = arith.addf %406, %405 : vector<8x32xf32>
    %408 = arith.divf %406, %407 : vector<8x32xf32>
    %409 = arith.mulf %400, %382 : vector<8x32xf32>
    %410 = arith.mulf %394, %402 : vector<8x32xf32>
    %411 = arith.addf %409, %410 : vector<8x32xf32>
    %412 = math.tanh %411 : vector<8x32xf32>
    %413 = arith.mulf %408, %412 : vector<8x32xf32>
    %c104_108 = arith.constant 104 : index
    %c0_109 = arith.constant 0 : index
    %414 = vector.load %arg9[%c104_108, %c0_109] : memref<128x32xf32, #tpu.memory_space<vmem>>, vector<8x32xf32>
    tpu.vector_store %arg9[%c104_108, %c0_109], %413 {strides = array<i32>} : memref<128x32xf32, #tpu.memory_space<vmem>>, vector<8x32xf32>,
    %c112 = arith.constant 112 : index
    %c0_110 = arith.constant 0 : index
    %415 = vector.load %arg8[%c112, %c0_110] : memref<128x128xf32, #tpu.memory_space<vmem>>, vector<8x128xf32>
    %cst_111 = arith.constant dense<0.000000e+00> : vector<8x128xf32>
    %416 = tpu.matmul %413, %9, %cst_111 {dimension_numbers = #tpu.dot_dimension_numbers<[1], [0], [0], [1], [0, 0, 1, 1], [], []>} : vector<8x32xf32>, vector<32x128xf32>, vector<8x128xf32> -> vector<8x128xf32>
    %417 = arith.addf %415, %416 : vector<8x128xf32>
    %418 = vector.extract_strided_slice %417 {offsets = [0, 0], sizes = [8, 32], strides = [1, 1]} : vector<8x128xf32> to vector<8x32xf32>
    %419 = arith.negf %418 : vector<8x32xf32>
    %420 = math.exp %419 : vector<8x32xf32>
    %cst_112 = arith.constant 1.000000e+00 : f32
    %421 = vector.broadcast %cst_112 : f32 to vector<8x32xf32>
    %422 = arith.addf %421, %420 : vector<8x32xf32>
    %423 = arith.divf %421, %422 : vector<8x32xf32>
    %424 = vector.extract_strided_slice %417 {offsets = [0, 32], sizes = [8, 32], strides = [1, 1]} : vector<8x128xf32> to vector<8x32xf32>
    %425 = arith.negf %424 : vector<8x32xf32>
    %426 = math.exp %425 : vector<8x32xf32>
    %cst_113 = arith.constant 1.000000e+00 : f32
    %427 = vector.broadcast %cst_113 : f32 to vector<8x32xf32>
    %428 = arith.addf %427, %426 : vector<8x32xf32>
    %429 = arith.divf %427, %428 : vector<8x32xf32>
    %430 = vector.extract_strided_slice %417 {offsets = [0, 64], sizes = [8, 32], strides = [1, 1]} : vector<8x128xf32> to vector<8x32xf32>
    %431 = math.tanh %430 : vector<8x32xf32>
    %432 = vector.extract_strided_slice %417 {offsets = [0, 96], sizes = [8, 32], strides = [1, 1]} : vector<8x128xf32> to vector<8x32xf32>
    %433 = arith.negf %432 : vector<8x32xf32>
    %434 = math.exp %433 : vector<8x32xf32>
    %cst_114 = arith.constant 1.000000e+00 : f32
    %435 = vector.broadcast %cst_114 : f32 to vector<8x32xf32>
    %436 = arith.addf %435, %434 : vector<8x32xf32>
    %437 = arith.divf %435, %436 : vector<8x32xf32>
    %438 = arith.mulf %429, %411 : vector<8x32xf32>
    %439 = arith.mulf %423, %431 : vector<8x32xf32>
    %440 = arith.addf %438, %439 : vector<8x32xf32>
    %441 = math.tanh %440 : vector<8x32xf32>
    %442 = arith.mulf %437, %441 : vector<8x32xf32>
    %c112_115 = arith.constant 112 : index
    %c0_116 = arith.constant 0 : index
    %443 = vector.load %arg9[%c112_115, %c0_116] : memref<128x32xf32, #tpu.memory_space<vmem>>, vector<8x32xf32>
    tpu.vector_store %arg9[%c112_115, %c0_116], %442 {strides = array<i32>} : memref<128x32xf32, #tpu.memory_space<vmem>>, vector<8x32xf32>,
    %c120 = arith.constant 120 : index
    %c0_117 = arith.constant 0 : index
    %444 = vector.load %arg8[%c120, %c0_117] : memref<128x128xf32, #tpu.memory_space<vmem>>, vector<8x128xf32>
    %cst_118 = arith.constant dense<0.000000e+00> : vector<8x128xf32>
    %445 = tpu.matmul %442, %9, %cst_118 {dimension_numbers = #tpu.dot_dimension_numbers<[1], [0], [0], [1], [0, 0, 1, 1], [], []>} : vector<8x32xf32>, vector<32x128xf32>, vector<8x128xf32> -> vector<8x128xf32>
    %446 = arith.addf %444, %445 : vector<8x128xf32>
    %447 = vector.extract_strided_slice %446 {offsets = [0, 0], sizes = [8, 32], strides = [1, 1]} : vector<8x128xf32> to vector<8x32xf32>
    %448 = arith.negf %447 : vector<8x32xf32>
    %449 = math.exp %448 : vector<8x32xf32>
    %cst_119 = arith.constant 1.000000e+00 : f32
    %450 = vector.broadcast %cst_119 : f32 to vector<8x32xf32>
    %451 = arith.addf %450, %449 : vector<8x32xf32>
    %452 = arith.divf %450, %451 : vector<8x32xf32>
    %453 = vector.extract_strided_slice %446 {offsets = [0, 32], sizes = [8, 32], strides = [1, 1]} : vector<8x128xf32> to vector<8x32xf32>
    %454 = arith.negf %453 : vector<8x32xf32>
    %455 = math.exp %454 : vector<8x32xf32>
    %cst_120 = arith.constant 1.000000e+00 : f32
    %456 = vector.broadcast %cst_120 : f32 to vector<8x32xf32>
    %457 = arith.addf %456, %455 : vector<8x32xf32>
    %458 = arith.divf %456, %457 : vector<8x32xf32>
    %459 = vector.extract_strided_slice %446 {offsets = [0, 64], sizes = [8, 32], strides = [1, 1]} : vector<8x128xf32> to vector<8x32xf32>
    %460 = math.tanh %459 : vector<8x32xf32>
    %461 = vector.extract_strided_slice %446 {offsets = [0, 96], sizes = [8, 32], strides = [1, 1]} : vector<8x128xf32> to vector<8x32xf32>
    %462 = arith.negf %461 : vector<8x32xf32>
    %463 = math.exp %462 : vector<8x32xf32>
    %cst_121 = arith.constant 1.000000e+00 : f32
    %464 = vector.broadcast %cst_121 : f32 to vector<8x32xf32>
    %465 = arith.addf %464, %463 : vector<8x32xf32>
    %466 = arith.divf %464, %465 : vector<8x32xf32>
    %467 = arith.mulf %458, %440 : vector<8x32xf32>
    %468 = arith.mulf %452, %460 : vector<8x32xf32>
    %469 = arith.addf %467, %468 : vector<8x32xf32>
    %470 = math.tanh %469 : vector<8x32xf32>
    %471 = arith.mulf %466, %470 : vector<8x32xf32>
    %c120_122 = arith.constant 120 : index
    %c0_123 = arith.constant 0 : index
    %472 = vector.load %arg9[%c120_122, %c0_123] : memref<128x32xf32, #tpu.memory_space<vmem>>, vector<8x32xf32>
    tpu.vector_store %arg9[%c120_122, %c0_123], %471 {strides = array<i32>} : memref<128x32xf32, #tpu.memory_space<vmem>>, vector<8x32xf32>,
    %c0_124 = arith.constant 0 : index
    %c0_125 = arith.constant 0 : index
    %473 = vector.load %arg9[%c0_124, %c0_125] : memref<128x32xf32, #tpu.memory_space<vmem>>, vector<128x32xf32>
    %c0_126 = arith.constant 0 : index
    %c0_127 = arith.constant 0 : index
    %c0_128 = arith.constant 0 : index
    %474 = vector.load %arg2[%c0_126, %c0_127, %c0_128] : memref<2x32x128xf32, #tpu.memory_space<vmem>>, vector<1x32x128xf32>
    %475 = vector.shape_cast %474 : vector<1x32x128xf32> to vector<32x128xf32>
    %cst_129 = arith.constant dense<0.000000e+00> : vector<128x128xf32>
    %476 = tpu.matmul %473, %475, %cst_129 {dimension_numbers = #tpu.dot_dimension_numbers<[1], [0], [0], [1], [0, 0, 1, 1], [], []>} : vector<128x32xf32>, vector<32x128xf32>, vector<128x128xf32> -> vector<128x128xf32>
    %c1 = arith.constant 1 : index
    %c0_130 = arith.constant 0 : index
    %c0_131 = arith.constant 0 : index
    %477 = vector.load %arg4[%c1, %c0_130, %c0_131] : memref<3x1x128xf32, #tpu.memory_space<vmem>>, vector<1x1x128xf32>
    %478 = vector.shape_cast %477 : vector<1x1x128xf32> to vector<1x128xf32>
    %479 = vector.broadcast %478 : vector<1x128xf32> to vector<128x128xf32>
    %480 = arith.addf %476, %479 : vector<128x128xf32>
    %c0_132 = arith.constant 0 : index
    %c0_133 = arith.constant 0 : index
    %481 = vector.load %arg8[%c0_132, %c0_133] : memref<128x128xf32, #tpu.memory_space<vmem>>, vector<128x128xf32>
    tpu.vector_store %arg8[%c0_132, %c0_133], %480 {strides = array<i32>} : memref<128x128xf32, #tpu.memory_space<vmem>>, vector<128x128xf32>,
    %c1_134 = arith.constant 1 : index
    %c0_135 = arith.constant 0 : index
    %c0_136 = arith.constant 0 : index
    %482 = vector.load %arg3[%c1_134, %c0_135, %c0_136] : memref<3x32x128xf32, #tpu.memory_space<vmem>>, vector<1x32x128xf32>
    %483 = vector.shape_cast %482 : vector<1x32x128xf32> to vector<32x128xf32>
    %c0_137 = arith.constant 0 : index
    %c0_138 = arith.constant 0 : index
    %484 = vector.load %arg8[%c0_137, %c0_138] : memref<128x128xf32, #tpu.memory_space<vmem>>, vector<8x128xf32>
    %cst_139 = arith.constant 0.000000e+00 : f32
    %485 = vector.broadcast %cst_139 : f32 to vector<8x32xf32>
    %486 = vector.extract_strided_slice %484 {offsets = [0, 0], sizes = [8, 32], strides = [1, 1]} : vector<8x128xf32> to vector<8x32xf32>
    %487 = arith.negf %486 : vector<8x32xf32>
    %488 = math.exp %487 : vector<8x32xf32>
    %cst_140 = arith.constant 1.000000e+00 : f32
    %489 = vector.broadcast %cst_140 : f32 to vector<8x32xf32>
    %490 = arith.addf %489, %488 : vector<8x32xf32>
    %491 = arith.divf %489, %490 : vector<8x32xf32>
    %492 = vector.extract_strided_slice %484 {offsets = [0, 32], sizes = [8, 32], strides = [1, 1]} : vector<8x128xf32> to vector<8x32xf32>
    %493 = arith.negf %492 : vector<8x32xf32>
    %494 = math.exp %493 : vector<8x32xf32>
    %cst_141 = arith.constant 1.000000e+00 : f32
    %495 = vector.broadcast %cst_141 : f32 to vector<8x32xf32>
    %496 = arith.addf %495, %494 : vector<8x32xf32>
    %497 = arith.divf %495, %496 : vector<8x32xf32>
    %498 = vector.extract_strided_slice %484 {offsets = [0, 64], sizes = [8, 32], strides = [1, 1]} : vector<8x128xf32> to vector<8x32xf32>
    %499 = math.tanh %498 : vector<8x32xf32>
    %500 = vector.extract_strided_slice %484 {offsets = [0, 96], sizes = [8, 32], strides = [1, 1]} : vector<8x128xf32> to vector<8x32xf32>
    %501 = arith.negf %500 : vector<8x32xf32>
    %502 = math.exp %501 : vector<8x32xf32>
    %cst_142 = arith.constant 1.000000e+00 : f32
    %503 = vector.broadcast %cst_142 : f32 to vector<8x32xf32>
    %504 = arith.addf %503, %502 : vector<8x32xf32>
    %505 = arith.divf %503, %504 : vector<8x32xf32>
    %506 = arith.mulf %497, %485 : vector<8x32xf32>
    %507 = arith.mulf %491, %499 : vector<8x32xf32>
    %508 = arith.addf %506, %507 : vector<8x32xf32>
    %509 = math.tanh %508 : vector<8x32xf32>
    %510 = arith.mulf %505, %509 : vector<8x32xf32>
    %c0_143 = arith.constant 0 : index
    %c0_144 = arith.constant 0 : index
    %511 = vector.load %arg9[%c0_143, %c0_144] : memref<128x32xf32, #tpu.memory_space<vmem>>, vector<8x32xf32>
    tpu.vector_store %arg9[%c0_143, %c0_144], %510 {strides = array<i32>} : memref<128x32xf32, #tpu.memory_space<vmem>>, vector<8x32xf32>,
    %c8_145 = arith.constant 8 : index
    %c0_146 = arith.constant 0 : index
    %512 = vector.load %arg8[%c8_145, %c0_146] : memref<128x128xf32, #tpu.memory_space<vmem>>, vector<8x128xf32>
    %cst_147 = arith.constant dense<0.000000e+00> : vector<8x128xf32>
    %513 = tpu.matmul %510, %483, %cst_147 {dimension_numbers = #tpu.dot_dimension_numbers<[1], [0], [0], [1], [0, 0, 1, 1], [], []>} : vector<8x32xf32>, vector<32x128xf32>, vector<8x128xf32> -> vector<8x128xf32>
    %514 = arith.addf %512, %513 : vector<8x128xf32>
    %515 = vector.extract_strided_slice %514 {offsets = [0, 0], sizes = [8, 32], strides = [1, 1]} : vector<8x128xf32> to vector<8x32xf32>
    %516 = arith.negf %515 : vector<8x32xf32>
    %517 = math.exp %516 : vector<8x32xf32>
    %cst_148 = arith.constant 1.000000e+00 : f32
    %518 = vector.broadcast %cst_148 : f32 to vector<8x32xf32>
    %519 = arith.addf %518, %517 : vector<8x32xf32>
    %520 = arith.divf %518, %519 : vector<8x32xf32>
    %521 = vector.extract_strided_slice %514 {offsets = [0, 32], sizes = [8, 32], strides = [1, 1]} : vector<8x128xf32> to vector<8x32xf32>
    %522 = arith.negf %521 : vector<8x32xf32>
    %523 = math.exp %522 : vector<8x32xf32>
    %cst_149 = arith.constant 1.000000e+00 : f32
    %524 = vector.broadcast %cst_149 : f32 to vector<8x32xf32>
    %525 = arith.addf %524, %523 : vector<8x32xf32>
    %526 = arith.divf %524, %525 : vector<8x32xf32>
    %527 = vector.extract_strided_slice %514 {offsets = [0, 64], sizes = [8, 32], strides = [1, 1]} : vector<8x128xf32> to vector<8x32xf32>
    %528 = math.tanh %527 : vector<8x32xf32>
    %529 = vector.extract_strided_slice %514 {offsets = [0, 96], sizes = [8, 32], strides = [1, 1]} : vector<8x128xf32> to vector<8x32xf32>
    %530 = arith.negf %529 : vector<8x32xf32>
    %531 = math.exp %530 : vector<8x32xf32>
    %cst_150 = arith.constant 1.000000e+00 : f32
    %532 = vector.broadcast %cst_150 : f32 to vector<8x32xf32>
    %533 = arith.addf %532, %531 : vector<8x32xf32>
    %534 = arith.divf %532, %533 : vector<8x32xf32>
    %535 = arith.mulf %526, %508 : vector<8x32xf32>
    %536 = arith.mulf %520, %528 : vector<8x32xf32>
    %537 = arith.addf %535, %536 : vector<8x32xf32>
    %538 = math.tanh %537 : vector<8x32xf32>
    %539 = arith.mulf %534, %538 : vector<8x32xf32>
    %c8_151 = arith.constant 8 : index
    %c0_152 = arith.constant 0 : index
    %540 = vector.load %arg9[%c8_151, %c0_152] : memref<128x32xf32, #tpu.memory_space<vmem>>, vector<8x32xf32>
    tpu.vector_store %arg9[%c8_151, %c0_152], %539 {strides = array<i32>} : memref<128x32xf32, #tpu.memory_space<vmem>>, vector<8x32xf32>,
    %c16_153 = arith.constant 16 : index
    %c0_154 = arith.constant 0 : index
    %541 = vector.load %arg8[%c16_153, %c0_154] : memref<128x128xf32, #tpu.memory_space<vmem>>, vector<8x128xf32>
    %cst_155 = arith.constant dense<0.000000e+00> : vector<8x128xf32>
    %542 = tpu.matmul %539, %483, %cst_155 {dimension_numbers = #tpu.dot_dimension_numbers<[1], [0], [0], [1], [0, 0, 1, 1], [], []>} : vector<8x32xf32>, vector<32x128xf32>, vector<8x128xf32> -> vector<8x128xf32>
    %543 = arith.addf %541, %542 : vector<8x128xf32>
    %544 = vector.extract_strided_slice %543 {offsets = [0, 0], sizes = [8, 32], strides = [1, 1]} : vector<8x128xf32> to vector<8x32xf32>
    %545 = arith.negf %544 : vector<8x32xf32>
    %546 = math.exp %545 : vector<8x32xf32>
    %cst_156 = arith.constant 1.000000e+00 : f32
    %547 = vector.broadcast %cst_156 : f32 to vector<8x32xf32>
    %548 = arith.addf %547, %546 : vector<8x32xf32>
    %549 = arith.divf %547, %548 : vector<8x32xf32>
    %550 = vector.extract_strided_slice %543 {offsets = [0, 32], sizes = [8, 32], strides = [1, 1]} : vector<8x128xf32> to vector<8x32xf32>
    %551 = arith.negf %550 : vector<8x32xf32>
    %552 = math.exp %551 : vector<8x32xf32>
    %cst_157 = arith.constant 1.000000e+00 : f32
    %553 = vector.broadcast %cst_157 : f32 to vector<8x32xf32>
    %554 = arith.addf %553, %552 : vector<8x32xf32>
    %555 = arith.divf %553, %554 : vector<8x32xf32>
    %556 = vector.extract_strided_slice %543 {offsets = [0, 64], sizes = [8, 32], strides = [1, 1]} : vector<8x128xf32> to vector<8x32xf32>
    %557 = math.tanh %556 : vector<8x32xf32>
    %558 = vector.extract_strided_slice %543 {offsets = [0, 96], sizes = [8, 32], strides = [1, 1]} : vector<8x128xf32> to vector<8x32xf32>
    %559 = arith.negf %558 : vector<8x32xf32>
    %560 = math.exp %559 : vector<8x32xf32>
    %cst_158 = arith.constant 1.000000e+00 : f32
    %561 = vector.broadcast %cst_158 : f32 to vector<8x32xf32>
    %562 = arith.addf %561, %560 : vector<8x32xf32>
    %563 = arith.divf %561, %562 : vector<8x32xf32>
    %564 = arith.mulf %555, %537 : vector<8x32xf32>
    %565 = arith.mulf %549, %557 : vector<8x32xf32>
    %566 = arith.addf %564, %565 : vector<8x32xf32>
    %567 = math.tanh %566 : vector<8x32xf32>
    %568 = arith.mulf %563, %567 : vector<8x32xf32>
    %c16_159 = arith.constant 16 : index
    %c0_160 = arith.constant 0 : index
    %569 = vector.load %arg9[%c16_159, %c0_160] : memref<128x32xf32, #tpu.memory_space<vmem>>, vector<8x32xf32>
    tpu.vector_store %arg9[%c16_159, %c0_160], %568 {strides = array<i32>} : memref<128x32xf32, #tpu.memory_space<vmem>>, vector<8x32xf32>,
    %c24_161 = arith.constant 24 : index
    %c0_162 = arith.constant 0 : index
    %570 = vector.load %arg8[%c24_161, %c0_162] : memref<128x128xf32, #tpu.memory_space<vmem>>, vector<8x128xf32>
    %cst_163 = arith.constant dense<0.000000e+00> : vector<8x128xf32>
    %571 = tpu.matmul %568, %483, %cst_163 {dimension_numbers = #tpu.dot_dimension_numbers<[1], [0], [0], [1], [0, 0, 1, 1], [], []>} : vector<8x32xf32>, vector<32x128xf32>, vector<8x128xf32> -> vector<8x128xf32>
    %572 = arith.addf %570, %571 : vector<8x128xf32>
    %573 = vector.extract_strided_slice %572 {offsets = [0, 0], sizes = [8, 32], strides = [1, 1]} : vector<8x128xf32> to vector<8x32xf32>
    %574 = arith.negf %573 : vector<8x32xf32>
    %575 = math.exp %574 : vector<8x32xf32>
    %cst_164 = arith.constant 1.000000e+00 : f32
    %576 = vector.broadcast %cst_164 : f32 to vector<8x32xf32>
    %577 = arith.addf %576, %575 : vector<8x32xf32>
    %578 = arith.divf %576, %577 : vector<8x32xf32>
    %579 = vector.extract_strided_slice %572 {offsets = [0, 32], sizes = [8, 32], strides = [1, 1]} : vector<8x128xf32> to vector<8x32xf32>
    %580 = arith.negf %579 : vector<8x32xf32>
    %581 = math.exp %580 : vector<8x32xf32>
    %cst_165 = arith.constant 1.000000e+00 : f32
    %582 = vector.broadcast %cst_165 : f32 to vector<8x32xf32>
    %583 = arith.addf %582, %581 : vector<8x32xf32>
    %584 = arith.divf %582, %583 : vector<8x32xf32>
    %585 = vector.extract_strided_slice %572 {offsets = [0, 64], sizes = [8, 32], strides = [1, 1]} : vector<8x128xf32> to vector<8x32xf32>
    %586 = math.tanh %585 : vector<8x32xf32>
    %587 = vector.extract_strided_slice %572 {offsets = [0, 96], sizes = [8, 32], strides = [1, 1]} : vector<8x128xf32> to vector<8x32xf32>
    %588 = arith.negf %587 : vector<8x32xf32>
    %589 = math.exp %588 : vector<8x32xf32>
    %cst_166 = arith.constant 1.000000e+00 : f32
    %590 = vector.broadcast %cst_166 : f32 to vector<8x32xf32>
    %591 = arith.addf %590, %589 : vector<8x32xf32>
    %592 = arith.divf %590, %591 : vector<8x32xf32>
    %593 = arith.mulf %584, %566 : vector<8x32xf32>
    %594 = arith.mulf %578, %586 : vector<8x32xf32>
    %595 = arith.addf %593, %594 : vector<8x32xf32>
    %596 = math.tanh %595 : vector<8x32xf32>
    %597 = arith.mulf %592, %596 : vector<8x32xf32>
    %c24_167 = arith.constant 24 : index
    %c0_168 = arith.constant 0 : index
    %598 = vector.load %arg9[%c24_167, %c0_168] : memref<128x32xf32, #tpu.memory_space<vmem>>, vector<8x32xf32>
    tpu.vector_store %arg9[%c24_167, %c0_168], %597 {strides = array<i32>} : memref<128x32xf32, #tpu.memory_space<vmem>>, vector<8x32xf32>,
    %c32_169 = arith.constant 32 : index
    %c0_170 = arith.constant 0 : index
    %599 = vector.load %arg8[%c32_169, %c0_170] : memref<128x128xf32, #tpu.memory_space<vmem>>, vector<8x128xf32>
    %cst_171 = arith.constant dense<0.000000e+00> : vector<8x128xf32>
    %600 = tpu.matmul %597, %483, %cst_171 {dimension_numbers = #tpu.dot_dimension_numbers<[1], [0], [0], [1], [0, 0, 1, 1], [], []>} : vector<8x32xf32>, vector<32x128xf32>, vector<8x128xf32> -> vector<8x128xf32>
    %601 = arith.addf %599, %600 : vector<8x128xf32>
    %602 = vector.extract_strided_slice %601 {offsets = [0, 0], sizes = [8, 32], strides = [1, 1]} : vector<8x128xf32> to vector<8x32xf32>
    %603 = arith.negf %602 : vector<8x32xf32>
    %604 = math.exp %603 : vector<8x32xf32>
    %cst_172 = arith.constant 1.000000e+00 : f32
    %605 = vector.broadcast %cst_172 : f32 to vector<8x32xf32>
    %606 = arith.addf %605, %604 : vector<8x32xf32>
    %607 = arith.divf %605, %606 : vector<8x32xf32>
    %608 = vector.extract_strided_slice %601 {offsets = [0, 32], sizes = [8, 32], strides = [1, 1]} : vector<8x128xf32> to vector<8x32xf32>
    %609 = arith.negf %608 : vector<8x32xf32>
    %610 = math.exp %609 : vector<8x32xf32>
    %cst_173 = arith.constant 1.000000e+00 : f32
    %611 = vector.broadcast %cst_173 : f32 to vector<8x32xf32>
    %612 = arith.addf %611, %610 : vector<8x32xf32>
    %613 = arith.divf %611, %612 : vector<8x32xf32>
    %614 = vector.extract_strided_slice %601 {offsets = [0, 64], sizes = [8, 32], strides = [1, 1]} : vector<8x128xf32> to vector<8x32xf32>
    %615 = math.tanh %614 : vector<8x32xf32>
    %616 = vector.extract_strided_slice %601 {offsets = [0, 96], sizes = [8, 32], strides = [1, 1]} : vector<8x128xf32> to vector<8x32xf32>
    %617 = arith.negf %616 : vector<8x32xf32>
    %618 = math.exp %617 : vector<8x32xf32>
    %cst_174 = arith.constant 1.000000e+00 : f32
    %619 = vector.broadcast %cst_174 : f32 to vector<8x32xf32>
    %620 = arith.addf %619, %618 : vector<8x32xf32>
    %621 = arith.divf %619, %620 : vector<8x32xf32>
    %622 = arith.mulf %613, %595 : vector<8x32xf32>
    %623 = arith.mulf %607, %615 : vector<8x32xf32>
    %624 = arith.addf %622, %623 : vector<8x32xf32>
    %625 = math.tanh %624 : vector<8x32xf32>
    %626 = arith.mulf %621, %625 : vector<8x32xf32>
    %c32_175 = arith.constant 32 : index
    %c0_176 = arith.constant 0 : index
    %627 = vector.load %arg9[%c32_175, %c0_176] : memref<128x32xf32, #tpu.memory_space<vmem>>, vector<8x32xf32>
    tpu.vector_store %arg9[%c32_175, %c0_176], %626 {strides = array<i32>} : memref<128x32xf32, #tpu.memory_space<vmem>>, vector<8x32xf32>,
    %c40_177 = arith.constant 40 : index
    %c0_178 = arith.constant 0 : index
    %628 = vector.load %arg8[%c40_177, %c0_178] : memref<128x128xf32, #tpu.memory_space<vmem>>, vector<8x128xf32>
    %cst_179 = arith.constant dense<0.000000e+00> : vector<8x128xf32>
    %629 = tpu.matmul %626, %483, %cst_179 {dimension_numbers = #tpu.dot_dimension_numbers<[1], [0], [0], [1], [0, 0, 1, 1], [], []>} : vector<8x32xf32>, vector<32x128xf32>, vector<8x128xf32> -> vector<8x128xf32>
    %630 = arith.addf %628, %629 : vector<8x128xf32>
    %631 = vector.extract_strided_slice %630 {offsets = [0, 0], sizes = [8, 32], strides = [1, 1]} : vector<8x128xf32> to vector<8x32xf32>
    %632 = arith.negf %631 : vector<8x32xf32>
    %633 = math.exp %632 : vector<8x32xf32>
    %cst_180 = arith.constant 1.000000e+00 : f32
    %634 = vector.broadcast %cst_180 : f32 to vector<8x32xf32>
    %635 = arith.addf %634, %633 : vector<8x32xf32>
    %636 = arith.divf %634, %635 : vector<8x32xf32>
    %637 = vector.extract_strided_slice %630 {offsets = [0, 32], sizes = [8, 32], strides = [1, 1]} : vector<8x128xf32> to vector<8x32xf32>
    %638 = arith.negf %637 : vector<8x32xf32>
    %639 = math.exp %638 : vector<8x32xf32>
    %cst_181 = arith.constant 1.000000e+00 : f32
    %640 = vector.broadcast %cst_181 : f32 to vector<8x32xf32>
    %641 = arith.addf %640, %639 : vector<8x32xf32>
    %642 = arith.divf %640, %641 : vector<8x32xf32>
    %643 = vector.extract_strided_slice %630 {offsets = [0, 64], sizes = [8, 32], strides = [1, 1]} : vector<8x128xf32> to vector<8x32xf32>
    %644 = math.tanh %643 : vector<8x32xf32>
    %645 = vector.extract_strided_slice %630 {offsets = [0, 96], sizes = [8, 32], strides = [1, 1]} : vector<8x128xf32> to vector<8x32xf32>
    %646 = arith.negf %645 : vector<8x32xf32>
    %647 = math.exp %646 : vector<8x32xf32>
    %cst_182 = arith.constant 1.000000e+00 : f32
    %648 = vector.broadcast %cst_182 : f32 to vector<8x32xf32>
    %649 = arith.addf %648, %647 : vector<8x32xf32>
    %650 = arith.divf %648, %649 : vector<8x32xf32>
    %651 = arith.mulf %642, %624 : vector<8x32xf32>
    %652 = arith.mulf %636, %644 : vector<8x32xf32>
    %653 = arith.addf %651, %652 : vector<8x32xf32>
    %654 = math.tanh %653 : vector<8x32xf32>
    %655 = arith.mulf %650, %654 : vector<8x32xf32>
    %c40_183 = arith.constant 40 : index
    %c0_184 = arith.constant 0 : index
    %656 = vector.load %arg9[%c40_183, %c0_184] : memref<128x32xf32, #tpu.memory_space<vmem>>, vector<8x32xf32>
    tpu.vector_store %arg9[%c40_183, %c0_184], %655 {strides = array<i32>} : memref<128x32xf32, #tpu.memory_space<vmem>>, vector<8x32xf32>,
    %c48_185 = arith.constant 48 : index
    %c0_186 = arith.constant 0 : index
    %657 = vector.load %arg8[%c48_185, %c0_186] : memref<128x128xf32, #tpu.memory_space<vmem>>, vector<8x128xf32>
    %cst_187 = arith.constant dense<0.000000e+00> : vector<8x128xf32>
    %658 = tpu.matmul %655, %483, %cst_187 {dimension_numbers = #tpu.dot_dimension_numbers<[1], [0], [0], [1], [0, 0, 1, 1], [], []>} : vector<8x32xf32>, vector<32x128xf32>, vector<8x128xf32> -> vector<8x128xf32>
    %659 = arith.addf %657, %658 : vector<8x128xf32>
    %660 = vector.extract_strided_slice %659 {offsets = [0, 0], sizes = [8, 32], strides = [1, 1]} : vector<8x128xf32> to vector<8x32xf32>
    %661 = arith.negf %660 : vector<8x32xf32>
    %662 = math.exp %661 : vector<8x32xf32>
    %cst_188 = arith.constant 1.000000e+00 : f32
    %663 = vector.broadcast %cst_188 : f32 to vector<8x32xf32>
    %664 = arith.addf %663, %662 : vector<8x32xf32>
    %665 = arith.divf %663, %664 : vector<8x32xf32>
    %666 = vector.extract_strided_slice %659 {offsets = [0, 32], sizes = [8, 32], strides = [1, 1]} : vector<8x128xf32> to vector<8x32xf32>
    %667 = arith.negf %666 : vector<8x32xf32>
    %668 = math.exp %667 : vector<8x32xf32>
    %cst_189 = arith.constant 1.000000e+00 : f32
    %669 = vector.broadcast %cst_189 : f32 to vector<8x32xf32>
    %670 = arith.addf %669, %668 : vector<8x32xf32>
    %671 = arith.divf %669, %670 : vector<8x32xf32>
    %672 = vector.extract_strided_slice %659 {offsets = [0, 64], sizes = [8, 32], strides = [1, 1]} : vector<8x128xf32> to vector<8x32xf32>
    %673 = math.tanh %672 : vector<8x32xf32>
    %674 = vector.extract_strided_slice %659 {offsets = [0, 96], sizes = [8, 32], strides = [1, 1]} : vector<8x128xf32> to vector<8x32xf32>
    %675 = arith.negf %674 : vector<8x32xf32>
    %676 = math.exp %675 : vector<8x32xf32>
    %cst_190 = arith.constant 1.000000e+00 : f32
    %677 = vector.broadcast %cst_190 : f32 to vector<8x32xf32>
    %678 = arith.addf %677, %676 : vector<8x32xf32>
    %679 = arith.divf %677, %678 : vector<8x32xf32>
    %680 = arith.mulf %671, %653 : vector<8x32xf32>
    %681 = arith.mulf %665, %673 : vector<8x32xf32>
    %682 = arith.addf %680, %681 : vector<8x32xf32>
    %683 = math.tanh %682 : vector<8x32xf32>
    %684 = arith.mulf %679, %683 : vector<8x32xf32>
    %c48_191 = arith.constant 48 : index
    %c0_192 = arith.constant 0 : index
    %685 = vector.load %arg9[%c48_191, %c0_192] : memref<128x32xf32, #tpu.memory_space<vmem>>, vector<8x32xf32>
    tpu.vector_store %arg9[%c48_191, %c0_192], %684 {strides = array<i32>} : memref<128x32xf32, #tpu.memory_space<vmem>>, vector<8x32xf32>,
    %c56_193 = arith.constant 56 : index
    %c0_194 = arith.constant 0 : index
    %686 = vector.load %arg8[%c56_193, %c0_194] : memref<128x128xf32, #tpu.memory_space<vmem>>, vector<8x128xf32>
    %cst_195 = arith.constant dense<0.000000e+00> : vector<8x128xf32>
    %687 = tpu.matmul %684, %483, %cst_195 {dimension_numbers = #tpu.dot_dimension_numbers<[1], [0], [0], [1], [0, 0, 1, 1], [], []>} : vector<8x32xf32>, vector<32x128xf32>, vector<8x128xf32> -> vector<8x128xf32>
    %688 = arith.addf %686, %687 : vector<8x128xf32>
    %689 = vector.extract_strided_slice %688 {offsets = [0, 0], sizes = [8, 32], strides = [1, 1]} : vector<8x128xf32> to vector<8x32xf32>
    %690 = arith.negf %689 : vector<8x32xf32>
    %691 = math.exp %690 : vector<8x32xf32>
    %cst_196 = arith.constant 1.000000e+00 : f32
    %692 = vector.broadcast %cst_196 : f32 to vector<8x32xf32>
    %693 = arith.addf %692, %691 : vector<8x32xf32>
    %694 = arith.divf %692, %693 : vector<8x32xf32>
    %695 = vector.extract_strided_slice %688 {offsets = [0, 32], sizes = [8, 32], strides = [1, 1]} : vector<8x128xf32> to vector<8x32xf32>
    %696 = arith.negf %695 : vector<8x32xf32>
    %697 = math.exp %696 : vector<8x32xf32>
    %cst_197 = arith.constant 1.000000e+00 : f32
    %698 = vector.broadcast %cst_197 : f32 to vector<8x32xf32>
    %699 = arith.addf %698, %697 : vector<8x32xf32>
    %700 = arith.divf %698, %699 : vector<8x32xf32>
    %701 = vector.extract_strided_slice %688 {offsets = [0, 64], sizes = [8, 32], strides = [1, 1]} : vector<8x128xf32> to vector<8x32xf32>
    %702 = math.tanh %701 : vector<8x32xf32>
    %703 = vector.extract_strided_slice %688 {offsets = [0, 96], sizes = [8, 32], strides = [1, 1]} : vector<8x128xf32> to vector<8x32xf32>
    %704 = arith.negf %703 : vector<8x32xf32>
    %705 = math.exp %704 : vector<8x32xf32>
    %cst_198 = arith.constant 1.000000e+00 : f32
    %706 = vector.broadcast %cst_198 : f32 to vector<8x32xf32>
    %707 = arith.addf %706, %705 : vector<8x32xf32>
    %708 = arith.divf %706, %707 : vector<8x32xf32>
    %709 = arith.mulf %700, %682 : vector<8x32xf32>
    %710 = arith.mulf %694, %702 : vector<8x32xf32>
    %711 = arith.addf %709, %710 : vector<8x32xf32>
    %712 = math.tanh %711 : vector<8x32xf32>
    %713 = arith.mulf %708, %712 : vector<8x32xf32>
    %c56_199 = arith.constant 56 : index
    %c0_200 = arith.constant 0 : index
    %714 = vector.load %arg9[%c56_199, %c0_200] : memref<128x32xf32, #tpu.memory_space<vmem>>, vector<8x32xf32>
    tpu.vector_store %arg9[%c56_199, %c0_200], %713 {strides = array<i32>} : memref<128x32xf32, #tpu.memory_space<vmem>>, vector<8x32xf32>,
    %c64_201 = arith.constant 64 : index
    %c0_202 = arith.constant 0 : index
    %715 = vector.load %arg8[%c64_201, %c0_202] : memref<128x128xf32, #tpu.memory_space<vmem>>, vector<8x128xf32>
    %cst_203 = arith.constant dense<0.000000e+00> : vector<8x128xf32>
    %716 = tpu.matmul %713, %483, %cst_203 {dimension_numbers = #tpu.dot_dimension_numbers<[1], [0], [0], [1], [0, 0, 1, 1], [], []>} : vector<8x32xf32>, vector<32x128xf32>, vector<8x128xf32> -> vector<8x128xf32>
    %717 = arith.addf %715, %716 : vector<8x128xf32>
    %718 = vector.extract_strided_slice %717 {offsets = [0, 0], sizes = [8, 32], strides = [1, 1]} : vector<8x128xf32> to vector<8x32xf32>
    %719 = arith.negf %718 : vector<8x32xf32>
    %720 = math.exp %719 : vector<8x32xf32>
    %cst_204 = arith.constant 1.000000e+00 : f32
    %721 = vector.broadcast %cst_204 : f32 to vector<8x32xf32>
    %722 = arith.addf %721, %720 : vector<8x32xf32>
    %723 = arith.divf %721, %722 : vector<8x32xf32>
    %724 = vector.extract_strided_slice %717 {offsets = [0, 32], sizes = [8, 32], strides = [1, 1]} : vector<8x128xf32> to vector<8x32xf32>
    %725 = arith.negf %724 : vector<8x32xf32>
    %726 = math.exp %725 : vector<8x32xf32>
    %cst_205 = arith.constant 1.000000e+00 : f32
    %727 = vector.broadcast %cst_205 : f32 to vector<8x32xf32>
    %728 = arith.addf %727, %726 : vector<8x32xf32>
    %729 = arith.divf %727, %728 : vector<8x32xf32>
    %730 = vector.extract_strided_slice %717 {offsets = [0, 64], sizes = [8, 32], strides = [1, 1]} : vector<8x128xf32> to vector<8x32xf32>
    %731 = math.tanh %730 : vector<8x32xf32>
    %732 = vector.extract_strided_slice %717 {offsets = [0, 96], sizes = [8, 32], strides = [1, 1]} : vector<8x128xf32> to vector<8x32xf32>
    %733 = arith.negf %732 : vector<8x32xf32>
    %734 = math.exp %733 : vector<8x32xf32>
    %cst_206 = arith.constant 1.000000e+00 : f32
    %735 = vector.broadcast %cst_206 : f32 to vector<8x32xf32>
    %736 = arith.addf %735, %734 : vector<8x32xf32>
    %737 = arith.divf %735, %736 : vector<8x32xf32>
    %738 = arith.mulf %729, %711 : vector<8x32xf32>
    %739 = arith.mulf %723, %731 : vector<8x32xf32>
    %740 = arith.addf %738, %739 : vector<8x32xf32>
    %741 = math.tanh %740 : vector<8x32xf32>
    %742 = arith.mulf %737, %741 : vector<8x32xf32>
    %c64_207 = arith.constant 64 : index
    %c0_208 = arith.constant 0 : index
    %743 = vector.load %arg9[%c64_207, %c0_208] : memref<128x32xf32, #tpu.memory_space<vmem>>, vector<8x32xf32>
    tpu.vector_store %arg9[%c64_207, %c0_208], %742 {strides = array<i32>} : memref<128x32xf32, #tpu.memory_space<vmem>>, vector<8x32xf32>,
    %c72_209 = arith.constant 72 : index
    %c0_210 = arith.constant 0 : index
    %744 = vector.load %arg8[%c72_209, %c0_210] : memref<128x128xf32, #tpu.memory_space<vmem>>, vector<8x128xf32>
    %cst_211 = arith.constant dense<0.000000e+00> : vector<8x128xf32>
    %745 = tpu.matmul %742, %483, %cst_211 {dimension_numbers = #tpu.dot_dimension_numbers<[1], [0], [0], [1], [0, 0, 1, 1], [], []>} : vector<8x32xf32>, vector<32x128xf32>, vector<8x128xf32> -> vector<8x128xf32>
    %746 = arith.addf %744, %745 : vector<8x128xf32>
    %747 = vector.extract_strided_slice %746 {offsets = [0, 0], sizes = [8, 32], strides = [1, 1]} : vector<8x128xf32> to vector<8x32xf32>
    %748 = arith.negf %747 : vector<8x32xf32>
    %749 = math.exp %748 : vector<8x32xf32>
    %cst_212 = arith.constant 1.000000e+00 : f32
    %750 = vector.broadcast %cst_212 : f32 to vector<8x32xf32>
    %751 = arith.addf %750, %749 : vector<8x32xf32>
    %752 = arith.divf %750, %751 : vector<8x32xf32>
    %753 = vector.extract_strided_slice %746 {offsets = [0, 32], sizes = [8, 32], strides = [1, 1]} : vector<8x128xf32> to vector<8x32xf32>
    %754 = arith.negf %753 : vector<8x32xf32>
    %755 = math.exp %754 : vector<8x32xf32>
    %cst_213 = arith.constant 1.000000e+00 : f32
    %756 = vector.broadcast %cst_213 : f32 to vector<8x32xf32>
    %757 = arith.addf %756, %755 : vector<8x32xf32>
    %758 = arith.divf %756, %757 : vector<8x32xf32>
    %759 = vector.extract_strided_slice %746 {offsets = [0, 64], sizes = [8, 32], strides = [1, 1]} : vector<8x128xf32> to vector<8x32xf32>
    %760 = math.tanh %759 : vector<8x32xf32>
    %761 = vector.extract_strided_slice %746 {offsets = [0, 96], sizes = [8, 32], strides = [1, 1]} : vector<8x128xf32> to vector<8x32xf32>
    %762 = arith.negf %761 : vector<8x32xf32>
    %763 = math.exp %762 : vector<8x32xf32>
    %cst_214 = arith.constant 1.000000e+00 : f32
    %764 = vector.broadcast %cst_214 : f32 to vector<8x32xf32>
    %765 = arith.addf %764, %763 : vector<8x32xf32>
    %766 = arith.divf %764, %765 : vector<8x32xf32>
    %767 = arith.mulf %758, %740 : vector<8x32xf32>
    %768 = arith.mulf %752, %760 : vector<8x32xf32>
    %769 = arith.addf %767, %768 : vector<8x32xf32>
    %770 = math.tanh %769 : vector<8x32xf32>
    %771 = arith.mulf %766, %770 : vector<8x32xf32>
    %c72_215 = arith.constant 72 : index
    %c0_216 = arith.constant 0 : index
    %772 = vector.load %arg9[%c72_215, %c0_216] : memref<128x32xf32, #tpu.memory_space<vmem>>, vector<8x32xf32>
    tpu.vector_store %arg9[%c72_215, %c0_216], %771 {strides = array<i32>} : memref<128x32xf32, #tpu.memory_space<vmem>>, vector<8x32xf32>,
    %c80_217 = arith.constant 80 : index
    %c0_218 = arith.constant 0 : index
    %773 = vector.load %arg8[%c80_217, %c0_218] : memref<128x128xf32, #tpu.memory_space<vmem>>, vector<8x128xf32>
    %cst_219 = arith.constant dense<0.000000e+00> : vector<8x128xf32>
    %774 = tpu.matmul %771, %483, %cst_219 {dimension_numbers = #tpu.dot_dimension_numbers<[1], [0], [0], [1], [0, 0, 1, 1], [], []>} : vector<8x32xf32>, vector<32x128xf32>, vector<8x128xf32> -> vector<8x128xf32>
    %775 = arith.addf %773, %774 : vector<8x128xf32>
    %776 = vector.extract_strided_slice %775 {offsets = [0, 0], sizes = [8, 32], strides = [1, 1]} : vector<8x128xf32> to vector<8x32xf32>
    %777 = arith.negf %776 : vector<8x32xf32>
    %778 = math.exp %777 : vector<8x32xf32>
    %cst_220 = arith.constant 1.000000e+00 : f32
    %779 = vector.broadcast %cst_220 : f32 to vector<8x32xf32>
    %780 = arith.addf %779, %778 : vector<8x32xf32>
    %781 = arith.divf %779, %780 : vector<8x32xf32>
    %782 = vector.extract_strided_slice %775 {offsets = [0, 32], sizes = [8, 32], strides = [1, 1]} : vector<8x128xf32> to vector<8x32xf32>
    %783 = arith.negf %782 : vector<8x32xf32>
    %784 = math.exp %783 : vector<8x32xf32>
    %cst_221 = arith.constant 1.000000e+00 : f32
    %785 = vector.broadcast %cst_221 : f32 to vector<8x32xf32>
    %786 = arith.addf %785, %784 : vector<8x32xf32>
    %787 = arith.divf %785, %786 : vector<8x32xf32>
    %788 = vector.extract_strided_slice %775 {offsets = [0, 64], sizes = [8, 32], strides = [1, 1]} : vector<8x128xf32> to vector<8x32xf32>
    %789 = math.tanh %788 : vector<8x32xf32>
    %790 = vector.extract_strided_slice %775 {offsets = [0, 96], sizes = [8, 32], strides = [1, 1]} : vector<8x128xf32> to vector<8x32xf32>
    %791 = arith.negf %790 : vector<8x32xf32>
    %792 = math.exp %791 : vector<8x32xf32>
    %cst_222 = arith.constant 1.000000e+00 : f32
    %793 = vector.broadcast %cst_222 : f32 to vector<8x32xf32>
    %794 = arith.addf %793, %792 : vector<8x32xf32>
    %795 = arith.divf %793, %794 : vector<8x32xf32>
    %796 = arith.mulf %787, %769 : vector<8x32xf32>
    %797 = arith.mulf %781, %789 : vector<8x32xf32>
    %798 = arith.addf %796, %797 : vector<8x32xf32>
    %799 = math.tanh %798 : vector<8x32xf32>
    %800 = arith.mulf %795, %799 : vector<8x32xf32>
    %c80_223 = arith.constant 80 : index
    %c0_224 = arith.constant 0 : index
    %801 = vector.load %arg9[%c80_223, %c0_224] : memref<128x32xf32, #tpu.memory_space<vmem>>, vector<8x32xf32>
    tpu.vector_store %arg9[%c80_223, %c0_224], %800 {strides = array<i32>} : memref<128x32xf32, #tpu.memory_space<vmem>>, vector<8x32xf32>,
    %c88_225 = arith.constant 88 : index
    %c0_226 = arith.constant 0 : index
    %802 = vector.load %arg8[%c88_225, %c0_226] : memref<128x128xf32, #tpu.memory_space<vmem>>, vector<8x128xf32>
    %cst_227 = arith.constant dense<0.000000e+00> : vector<8x128xf32>
    %803 = tpu.matmul %800, %483, %cst_227 {dimension_numbers = #tpu.dot_dimension_numbers<[1], [0], [0], [1], [0, 0, 1, 1], [], []>} : vector<8x32xf32>, vector<32x128xf32>, vector<8x128xf32> -> vector<8x128xf32>
    %804 = arith.addf %802, %803 : vector<8x128xf32>
    %805 = vector.extract_strided_slice %804 {offsets = [0, 0], sizes = [8, 32], strides = [1, 1]} : vector<8x128xf32> to vector<8x32xf32>
    %806 = arith.negf %805 : vector<8x32xf32>
    %807 = math.exp %806 : vector<8x32xf32>
    %cst_228 = arith.constant 1.000000e+00 : f32
    %808 = vector.broadcast %cst_228 : f32 to vector<8x32xf32>
    %809 = arith.addf %808, %807 : vector<8x32xf32>
    %810 = arith.divf %808, %809 : vector<8x32xf32>
    %811 = vector.extract_strided_slice %804 {offsets = [0, 32], sizes = [8, 32], strides = [1, 1]} : vector<8x128xf32> to vector<8x32xf32>
    %812 = arith.negf %811 : vector<8x32xf32>
    %813 = math.exp %812 : vector<8x32xf32>
    %cst_229 = arith.constant 1.000000e+00 : f32
    %814 = vector.broadcast %cst_229 : f32 to vector<8x32xf32>
    %815 = arith.addf %814, %813 : vector<8x32xf32>
    %816 = arith.divf %814, %815 : vector<8x32xf32>
    %817 = vector.extract_strided_slice %804 {offsets = [0, 64], sizes = [8, 32], strides = [1, 1]} : vector<8x128xf32> to vector<8x32xf32>
    %818 = math.tanh %817 : vector<8x32xf32>
    %819 = vector.extract_strided_slice %804 {offsets = [0, 96], sizes = [8, 32], strides = [1, 1]} : vector<8x128xf32> to vector<8x32xf32>
    %820 = arith.negf %819 : vector<8x32xf32>
    %821 = math.exp %820 : vector<8x32xf32>
    %cst_230 = arith.constant 1.000000e+00 : f32
    %822 = vector.broadcast %cst_230 : f32 to vector<8x32xf32>
    %823 = arith.addf %822, %821 : vector<8x32xf32>
    %824 = arith.divf %822, %823 : vector<8x32xf32>
    %825 = arith.mulf %816, %798 : vector<8x32xf32>
    %826 = arith.mulf %810, %818 : vector<8x32xf32>
    %827 = arith.addf %825, %826 : vector<8x32xf32>
    %828 = math.tanh %827 : vector<8x32xf32>
    %829 = arith.mulf %824, %828 : vector<8x32xf32>
    %c88_231 = arith.constant 88 : index
    %c0_232 = arith.constant 0 : index
    %830 = vector.load %arg9[%c88_231, %c0_232] : memref<128x32xf32, #tpu.memory_space<vmem>>, vector<8x32xf32>
    tpu.vector_store %arg9[%c88_231, %c0_232], %829 {strides = array<i32>} : memref<128x32xf32, #tpu.memory_space<vmem>>, vector<8x32xf32>,
    %c96_233 = arith.constant 96 : index
    %c0_234 = arith.constant 0 : index
    %831 = vector.load %arg8[%c96_233, %c0_234] : memref<128x128xf32, #tpu.memory_space<vmem>>, vector<8x128xf32>
    %cst_235 = arith.constant dense<0.000000e+00> : vector<8x128xf32>
    %832 = tpu.matmul %829, %483, %cst_235 {dimension_numbers = #tpu.dot_dimension_numbers<[1], [0], [0], [1], [0, 0, 1, 1], [], []>} : vector<8x32xf32>, vector<32x128xf32>, vector<8x128xf32> -> vector<8x128xf32>
    %833 = arith.addf %831, %832 : vector<8x128xf32>
    %834 = vector.extract_strided_slice %833 {offsets = [0, 0], sizes = [8, 32], strides = [1, 1]} : vector<8x128xf32> to vector<8x32xf32>
    %835 = arith.negf %834 : vector<8x32xf32>
    %836 = math.exp %835 : vector<8x32xf32>
    %cst_236 = arith.constant 1.000000e+00 : f32
    %837 = vector.broadcast %cst_236 : f32 to vector<8x32xf32>
    %838 = arith.addf %837, %836 : vector<8x32xf32>
    %839 = arith.divf %837, %838 : vector<8x32xf32>
    %840 = vector.extract_strided_slice %833 {offsets = [0, 32], sizes = [8, 32], strides = [1, 1]} : vector<8x128xf32> to vector<8x32xf32>
    %841 = arith.negf %840 : vector<8x32xf32>
    %842 = math.exp %841 : vector<8x32xf32>
    %cst_237 = arith.constant 1.000000e+00 : f32
    %843 = vector.broadcast %cst_237 : f32 to vector<8x32xf32>
    %844 = arith.addf %843, %842 : vector<8x32xf32>
    %845 = arith.divf %843, %844 : vector<8x32xf32>
    %846 = vector.extract_strided_slice %833 {offsets = [0, 64], sizes = [8, 32], strides = [1, 1]} : vector<8x128xf32> to vector<8x32xf32>
    %847 = math.tanh %846 : vector<8x32xf32>
    %848 = vector.extract_strided_slice %833 {offsets = [0, 96], sizes = [8, 32], strides = [1, 1]} : vector<8x128xf32> to vector<8x32xf32>
    %849 = arith.negf %848 : vector<8x32xf32>
    %850 = math.exp %849 : vector<8x32xf32>
    %cst_238 = arith.constant 1.000000e+00 : f32
    %851 = vector.broadcast %cst_238 : f32 to vector<8x32xf32>
    %852 = arith.addf %851, %850 : vector<8x32xf32>
    %853 = arith.divf %851, %852 : vector<8x32xf32>
    %854 = arith.mulf %845, %827 : vector<8x32xf32>
    %855 = arith.mulf %839, %847 : vector<8x32xf32>
    %856 = arith.addf %854, %855 : vector<8x32xf32>
    %857 = math.tanh %856 : vector<8x32xf32>
    %858 = arith.mulf %853, %857 : vector<8x32xf32>
    %c96_239 = arith.constant 96 : index
    %c0_240 = arith.constant 0 : index
    %859 = vector.load %arg9[%c96_239, %c0_240] : memref<128x32xf32, #tpu.memory_space<vmem>>, vector<8x32xf32>
    tpu.vector_store %arg9[%c96_239, %c0_240], %858 {strides = array<i32>} : memref<128x32xf32, #tpu.memory_space<vmem>>, vector<8x32xf32>,
    %c104_241 = arith.constant 104 : index
    %c0_242 = arith.constant 0 : index
    %860 = vector.load %arg8[%c104_241, %c0_242] : memref<128x128xf32, #tpu.memory_space<vmem>>, vector<8x128xf32>
    %cst_243 = arith.constant dense<0.000000e+00> : vector<8x128xf32>
    %861 = tpu.matmul %858, %483, %cst_243 {dimension_numbers = #tpu.dot_dimension_numbers<[1], [0], [0], [1], [0, 0, 1, 1], [], []>} : vector<8x32xf32>, vector<32x128xf32>, vector<8x128xf32> -> vector<8x128xf32>
    %862 = arith.addf %860, %861 : vector<8x128xf32>
    %863 = vector.extract_strided_slice %862 {offsets = [0, 0], sizes = [8, 32], strides = [1, 1]} : vector<8x128xf32> to vector<8x32xf32>
    %864 = arith.negf %863 : vector<8x32xf32>
    %865 = math.exp %864 : vector<8x32xf32>
    %cst_244 = arith.constant 1.000000e+00 : f32
    %866 = vector.broadcast %cst_244 : f32 to vector<8x32xf32>
    %867 = arith.addf %866, %865 : vector<8x32xf32>
    %868 = arith.divf %866, %867 : vector<8x32xf32>
    %869 = vector.extract_strided_slice %862 {offsets = [0, 32], sizes = [8, 32], strides = [1, 1]} : vector<8x128xf32> to vector<8x32xf32>
    %870 = arith.negf %869 : vector<8x32xf32>
    %871 = math.exp %870 : vector<8x32xf32>
    %cst_245 = arith.constant 1.000000e+00 : f32
    %872 = vector.broadcast %cst_245 : f32 to vector<8x32xf32>
    %873 = arith.addf %872, %871 : vector<8x32xf32>
    %874 = arith.divf %872, %873 : vector<8x32xf32>
    %875 = vector.extract_strided_slice %862 {offsets = [0, 64], sizes = [8, 32], strides = [1, 1]} : vector<8x128xf32> to vector<8x32xf32>
    %876 = math.tanh %875 : vector<8x32xf32>
    %877 = vector.extract_strided_slice %862 {offsets = [0, 96], sizes = [8, 32], strides = [1, 1]} : vector<8x128xf32> to vector<8x32xf32>
    %878 = arith.negf %877 : vector<8x32xf32>
    %879 = math.exp %878 : vector<8x32xf32>
    %cst_246 = arith.constant 1.000000e+00 : f32
    %880 = vector.broadcast %cst_246 : f32 to vector<8x32xf32>
    %881 = arith.addf %880, %879 : vector<8x32xf32>
    %882 = arith.divf %880, %881 : vector<8x32xf32>
    %883 = arith.mulf %874, %856 : vector<8x32xf32>
    %884 = arith.mulf %868, %876 : vector<8x32xf32>
    %885 = arith.addf %883, %884 : vector<8x32xf32>
    %886 = math.tanh %885 : vector<8x32xf32>
    %887 = arith.mulf %882, %886 : vector<8x32xf32>
    %c104_247 = arith.constant 104 : index
    %c0_248 = arith.constant 0 : index
    %888 = vector.load %arg9[%c104_247, %c0_248] : memref<128x32xf32, #tpu.memory_space<vmem>>, vector<8x32xf32>
    tpu.vector_store %arg9[%c104_247, %c0_248], %887 {strides = array<i32>} : memref<128x32xf32, #tpu.memory_space<vmem>>, vector<8x32xf32>,
    %c112_249 = arith.constant 112 : index
    %c0_250 = arith.constant 0 : index
    %889 = vector.load %arg8[%c112_249, %c0_250] : memref<128x128xf32, #tpu.memory_space<vmem>>, vector<8x128xf32>
    %cst_251 = arith.constant dense<0.000000e+00> : vector<8x128xf32>
    %890 = tpu.matmul %887, %483, %cst_251 {dimension_numbers = #tpu.dot_dimension_numbers<[1], [0], [0], [1], [0, 0, 1, 1], [], []>} : vector<8x32xf32>, vector<32x128xf32>, vector<8x128xf32> -> vector<8x128xf32>
    %891 = arith.addf %889, %890 : vector<8x128xf32>
    %892 = vector.extract_strided_slice %891 {offsets = [0, 0], sizes = [8, 32], strides = [1, 1]} : vector<8x128xf32> to vector<8x32xf32>
    %893 = arith.negf %892 : vector<8x32xf32>
    %894 = math.exp %893 : vector<8x32xf32>
    %cst_252 = arith.constant 1.000000e+00 : f32
    %895 = vector.broadcast %cst_252 : f32 to vector<8x32xf32>
    %896 = arith.addf %895, %894 : vector<8x32xf32>
    %897 = arith.divf %895, %896 : vector<8x32xf32>
    %898 = vector.extract_strided_slice %891 {offsets = [0, 32], sizes = [8, 32], strides = [1, 1]} : vector<8x128xf32> to vector<8x32xf32>
    %899 = arith.negf %898 : vector<8x32xf32>
    %900 = math.exp %899 : vector<8x32xf32>
    %cst_253 = arith.constant 1.000000e+00 : f32
    %901 = vector.broadcast %cst_253 : f32 to vector<8x32xf32>
    %902 = arith.addf %901, %900 : vector<8x32xf32>
    %903 = arith.divf %901, %902 : vector<8x32xf32>
    %904 = vector.extract_strided_slice %891 {offsets = [0, 64], sizes = [8, 32], strides = [1, 1]} : vector<8x128xf32> to vector<8x32xf32>
    %905 = math.tanh %904 : vector<8x32xf32>
    %906 = vector.extract_strided_slice %891 {offsets = [0, 96], sizes = [8, 32], strides = [1, 1]} : vector<8x128xf32> to vector<8x32xf32>
    %907 = arith.negf %906 : vector<8x32xf32>
    %908 = math.exp %907 : vector<8x32xf32>
    %cst_254 = arith.constant 1.000000e+00 : f32
    %909 = vector.broadcast %cst_254 : f32 to vector<8x32xf32>
    %910 = arith.addf %909, %908 : vector<8x32xf32>
    %911 = arith.divf %909, %910 : vector<8x32xf32>
    %912 = arith.mulf %903, %885 : vector<8x32xf32>
    %913 = arith.mulf %897, %905 : vector<8x32xf32>
    %914 = arith.addf %912, %913 : vector<8x32xf32>
    %915 = math.tanh %914 : vector<8x32xf32>
    %916 = arith.mulf %911, %915 : vector<8x32xf32>
    %c112_255 = arith.constant 112 : index
    %c0_256 = arith.constant 0 : index
    %917 = vector.load %arg9[%c112_255, %c0_256] : memref<128x32xf32, #tpu.memory_space<vmem>>, vector<8x32xf32>
    tpu.vector_store %arg9[%c112_255, %c0_256], %916 {strides = array<i32>} : memref<128x32xf32, #tpu.memory_space<vmem>>, vector<8x32xf32>,
    %c120_257 = arith.constant 120 : index
    %c0_258 = arith.constant 0 : index
    %918 = vector.load %arg8[%c120_257, %c0_258] : memref<128x128xf32, #tpu.memory_space<vmem>>, vector<8x128xf32>
    %cst_259 = arith.constant dense<0.000000e+00> : vector<8x128xf32>
    %919 = tpu.matmul %916, %483, %cst_259 {dimension_numbers = #tpu.dot_dimension_numbers<[1], [0], [0], [1], [0, 0, 1, 1], [], []>} : vector<8x32xf32>, vector<32x128xf32>, vector<8x128xf32> -> vector<8x128xf32>
    %920 = arith.addf %918, %919 : vector<8x128xf32>
    %921 = vector.extract_strided_slice %920 {offsets = [0, 0], sizes = [8, 32], strides = [1, 1]} : vector<8x128xf32> to vector<8x32xf32>
    %922 = arith.negf %921 : vector<8x32xf32>
    %923 = math.exp %922 : vector<8x32xf32>
    %cst_260 = arith.constant 1.000000e+00 : f32
    %924 = vector.broadcast %cst_260 : f32 to vector<8x32xf32>
    %925 = arith.addf %924, %923 : vector<8x32xf32>
    %926 = arith.divf %924, %925 : vector<8x32xf32>
    %927 = vector.extract_strided_slice %920 {offsets = [0, 32], sizes = [8, 32], strides = [1, 1]} : vector<8x128xf32> to vector<8x32xf32>
    %928 = arith.negf %927 : vector<8x32xf32>
    %929 = math.exp %928 : vector<8x32xf32>
    %cst_261 = arith.constant 1.000000e+00 : f32
    %930 = vector.broadcast %cst_261 : f32 to vector<8x32xf32>
    %931 = arith.addf %930, %929 : vector<8x32xf32>
    %932 = arith.divf %930, %931 : vector<8x32xf32>
    %933 = vector.extract_strided_slice %920 {offsets = [0, 64], sizes = [8, 32], strides = [1, 1]} : vector<8x128xf32> to vector<8x32xf32>
    %934 = math.tanh %933 : vector<8x32xf32>
    %935 = vector.extract_strided_slice %920 {offsets = [0, 96], sizes = [8, 32], strides = [1, 1]} : vector<8x128xf32> to vector<8x32xf32>
    %936 = arith.negf %935 : vector<8x32xf32>
    %937 = math.exp %936 : vector<8x32xf32>
    %cst_262 = arith.constant 1.000000e+00 : f32
    %938 = vector.broadcast %cst_262 : f32 to vector<8x32xf32>
    %939 = arith.addf %938, %937 : vector<8x32xf32>
    %940 = arith.divf %938, %939 : vector<8x32xf32>
    %941 = arith.mulf %932, %914 : vector<8x32xf32>
    %942 = arith.mulf %926, %934 : vector<8x32xf32>
    %943 = arith.addf %941, %942 : vector<8x32xf32>
    %944 = math.tanh %943 : vector<8x32xf32>
    %945 = arith.mulf %940, %944 : vector<8x32xf32>
    %c120_263 = arith.constant 120 : index
    %c0_264 = arith.constant 0 : index
    %946 = vector.load %arg9[%c120_263, %c0_264] : memref<128x32xf32, #tpu.memory_space<vmem>>, vector<8x32xf32>
    tpu.vector_store %arg9[%c120_263, %c0_264], %945 {strides = array<i32>} : memref<128x32xf32, #tpu.memory_space<vmem>>, vector<8x32xf32>,
    %c0_265 = arith.constant 0 : index
    %c0_266 = arith.constant 0 : index
    %947 = vector.load %arg9[%c0_265, %c0_266] : memref<128x32xf32, #tpu.memory_space<vmem>>, vector<128x32xf32>
    %c1_267 = arith.constant 1 : index
    %c0_268 = arith.constant 0 : index
    %c0_269 = arith.constant 0 : index
    %948 = vector.load %arg2[%c1_267, %c0_268, %c0_269] : memref<2x32x128xf32, #tpu.memory_space<vmem>>, vector<1x32x128xf32>
    %949 = vector.shape_cast %948 : vector<1x32x128xf32> to vector<32x128xf32>
    %cst_270 = arith.constant dense<0.000000e+00> : vector<128x128xf32>
    %950 = tpu.matmul %947, %949, %cst_270 {dimension_numbers = #tpu.dot_dimension_numbers<[1], [0], [0], [1], [0, 0, 1, 1], [], []>} : vector<128x32xf32>, vector<32x128xf32>, vector<128x128xf32> -> vector<128x128xf32>
    %c2 = arith.constant 2 : index
    %c0_271 = arith.constant 0 : index
    %c0_272 = arith.constant 0 : index
    %951 = vector.load %arg4[%c2, %c0_271, %c0_272] : memref<3x1x128xf32, #tpu.memory_space<vmem>>, vector<1x1x128xf32>
    %952 = vector.shape_cast %951 : vector<1x1x128xf32> to vector<1x128xf32>
    %953 = vector.broadcast %952 : vector<1x128xf32> to vector<128x128xf32>
    %954 = arith.addf %950, %953 : vector<128x128xf32>
    %c0_273 = arith.constant 0 : index
    %c0_274 = arith.constant 0 : index
    %955 = vector.load %arg8[%c0_273, %c0_274] : memref<128x128xf32, #tpu.memory_space<vmem>>, vector<128x128xf32>
    tpu.vector_store %arg8[%c0_273, %c0_274], %954 {strides = array<i32>} : memref<128x128xf32, #tpu.memory_space<vmem>>, vector<128x128xf32>,
    %c2_275 = arith.constant 2 : index
    %c0_276 = arith.constant 0 : index
    %c0_277 = arith.constant 0 : index
    %956 = vector.load %arg3[%c2_275, %c0_276, %c0_277] : memref<3x32x128xf32, #tpu.memory_space<vmem>>, vector<1x32x128xf32>
    %957 = vector.shape_cast %956 : vector<1x32x128xf32> to vector<32x128xf32>
    %c0_278 = arith.constant 0 : index
    %c0_279 = arith.constant 0 : index
    %958 = vector.load %arg8[%c0_278, %c0_279] : memref<128x128xf32, #tpu.memory_space<vmem>>, vector<8x128xf32>
    %cst_280 = arith.constant 0.000000e+00 : f32
    %959 = vector.broadcast %cst_280 : f32 to vector<8x32xf32>
    %960 = vector.extract_strided_slice %958 {offsets = [0, 0], sizes = [8, 32], strides = [1, 1]} : vector<8x128xf32> to vector<8x32xf32>
    %961 = arith.negf %960 : vector<8x32xf32>
    %962 = math.exp %961 : vector<8x32xf32>
    %cst_281 = arith.constant 1.000000e+00 : f32
    %963 = vector.broadcast %cst_281 : f32 to vector<8x32xf32>
    %964 = arith.addf %963, %962 : vector<8x32xf32>
    %965 = arith.divf %963, %964 : vector<8x32xf32>
    %966 = vector.extract_strided_slice %958 {offsets = [0, 32], sizes = [8, 32], strides = [1, 1]} : vector<8x128xf32> to vector<8x32xf32>
    %967 = arith.negf %966 : vector<8x32xf32>
    %968 = math.exp %967 : vector<8x32xf32>
    %cst_282 = arith.constant 1.000000e+00 : f32
    %969 = vector.broadcast %cst_282 : f32 to vector<8x32xf32>
    %970 = arith.addf %969, %968 : vector<8x32xf32>
    %971 = arith.divf %969, %970 : vector<8x32xf32>
    %972 = vector.extract_strided_slice %958 {offsets = [0, 64], sizes = [8, 32], strides = [1, 1]} : vector<8x128xf32> to vector<8x32xf32>
    %973 = math.tanh %972 : vector<8x32xf32>
    %974 = vector.extract_strided_slice %958 {offsets = [0, 96], sizes = [8, 32], strides = [1, 1]} : vector<8x128xf32> to vector<8x32xf32>
    %975 = arith.negf %974 : vector<8x32xf32>
    %976 = math.exp %975 : vector<8x32xf32>
    %cst_283 = arith.constant 1.000000e+00 : f32
    %977 = vector.broadcast %cst_283 : f32 to vector<8x32xf32>
    %978 = arith.addf %977, %976 : vector<8x32xf32>
    %979 = arith.divf %977, %978 : vector<8x32xf32>
    %980 = arith.mulf %971, %959 : vector<8x32xf32>
    %981 = arith.mulf %965, %973 : vector<8x32xf32>
    %982 = arith.addf %980, %981 : vector<8x32xf32>
    %983 = math.tanh %982 : vector<8x32xf32>
    %984 = arith.mulf %979, %983 : vector<8x32xf32>
    %c0_284 = arith.constant 0 : index
    %c0_285 = arith.constant 0 : index
    %985 = vector.load %arg9[%c0_284, %c0_285] : memref<128x32xf32, #tpu.memory_space<vmem>>, vector<8x32xf32>
    tpu.vector_store %arg9[%c0_284, %c0_285], %984 {strides = array<i32>} : memref<128x32xf32, #tpu.memory_space<vmem>>, vector<8x32xf32>,
    %c8_286 = arith.constant 8 : index
    %c0_287 = arith.constant 0 : index
    %986 = vector.load %arg8[%c8_286, %c0_287] : memref<128x128xf32, #tpu.memory_space<vmem>>, vector<8x128xf32>
    %cst_288 = arith.constant dense<0.000000e+00> : vector<8x128xf32>
    %987 = tpu.matmul %984, %957, %cst_288 {dimension_numbers = #tpu.dot_dimension_numbers<[1], [0], [0], [1], [0, 0, 1, 1], [], []>} : vector<8x32xf32>, vector<32x128xf32>, vector<8x128xf32> -> vector<8x128xf32>
    %988 = arith.addf %986, %987 : vector<8x128xf32>
    %989 = vector.extract_strided_slice %988 {offsets = [0, 0], sizes = [8, 32], strides = [1, 1]} : vector<8x128xf32> to vector<8x32xf32>
    %990 = arith.negf %989 : vector<8x32xf32>
    %991 = math.exp %990 : vector<8x32xf32>
    %cst_289 = arith.constant 1.000000e+00 : f32
    %992 = vector.broadcast %cst_289 : f32 to vector<8x32xf32>
    %993 = arith.addf %992, %991 : vector<8x32xf32>
    %994 = arith.divf %992, %993 : vector<8x32xf32>
    %995 = vector.extract_strided_slice %988 {offsets = [0, 32], sizes = [8, 32], strides = [1, 1]} : vector<8x128xf32> to vector<8x32xf32>
    %996 = arith.negf %995 : vector<8x32xf32>
    %997 = math.exp %996 : vector<8x32xf32>
    %cst_290 = arith.constant 1.000000e+00 : f32
    %998 = vector.broadcast %cst_290 : f32 to vector<8x32xf32>
    %999 = arith.addf %998, %997 : vector<8x32xf32>
    %1000 = arith.divf %998, %999 : vector<8x32xf32>
    %1001 = vector.extract_strided_slice %988 {offsets = [0, 64], sizes = [8, 32], strides = [1, 1]} : vector<8x128xf32> to vector<8x32xf32>
    %1002 = math.tanh %1001 : vector<8x32xf32>
    %1003 = vector.extract_strided_slice %988 {offsets = [0, 96], sizes = [8, 32], strides = [1, 1]} : vector<8x128xf32> to vector<8x32xf32>
    %1004 = arith.negf %1003 : vector<8x32xf32>
    %1005 = math.exp %1004 : vector<8x32xf32>
    %cst_291 = arith.constant 1.000000e+00 : f32
    %1006 = vector.broadcast %cst_291 : f32 to vector<8x32xf32>
    %1007 = arith.addf %1006, %1005 : vector<8x32xf32>
    %1008 = arith.divf %1006, %1007 : vector<8x32xf32>
    %1009 = arith.mulf %1000, %982 : vector<8x32xf32>
    %1010 = arith.mulf %994, %1002 : vector<8x32xf32>
    %1011 = arith.addf %1009, %1010 : vector<8x32xf32>
    %1012 = math.tanh %1011 : vector<8x32xf32>
    %1013 = arith.mulf %1008, %1012 : vector<8x32xf32>
    %c8_292 = arith.constant 8 : index
    %c0_293 = arith.constant 0 : index
    %1014 = vector.load %arg9[%c8_292, %c0_293] : memref<128x32xf32, #tpu.memory_space<vmem>>, vector<8x32xf32>
    tpu.vector_store %arg9[%c8_292, %c0_293], %1013 {strides = array<i32>} : memref<128x32xf32, #tpu.memory_space<vmem>>, vector<8x32xf32>,
    %c16_294 = arith.constant 16 : index
    %c0_295 = arith.constant 0 : index
    %1015 = vector.load %arg8[%c16_294, %c0_295] : memref<128x128xf32, #tpu.memory_space<vmem>>, vector<8x128xf32>
    %cst_296 = arith.constant dense<0.000000e+00> : vector<8x128xf32>
    %1016 = tpu.matmul %1013, %957, %cst_296 {dimension_numbers = #tpu.dot_dimension_numbers<[1], [0], [0], [1], [0, 0, 1, 1], [], []>} : vector<8x32xf32>, vector<32x128xf32>, vector<8x128xf32> -> vector<8x128xf32>
    %1017 = arith.addf %1015, %1016 : vector<8x128xf32>
    %1018 = vector.extract_strided_slice %1017 {offsets = [0, 0], sizes = [8, 32], strides = [1, 1]} : vector<8x128xf32> to vector<8x32xf32>
    %1019 = arith.negf %1018 : vector<8x32xf32>
    %1020 = math.exp %1019 : vector<8x32xf32>
    %cst_297 = arith.constant 1.000000e+00 : f32
    %1021 = vector.broadcast %cst_297 : f32 to vector<8x32xf32>
    %1022 = arith.addf %1021, %1020 : vector<8x32xf32>
    %1023 = arith.divf %1021, %1022 : vector<8x32xf32>
    %1024 = vector.extract_strided_slice %1017 {offsets = [0, 32], sizes = [8, 32], strides = [1, 1]} : vector<8x128xf32> to vector<8x32xf32>
    %1025 = arith.negf %1024 : vector<8x32xf32>
    %1026 = math.exp %1025 : vector<8x32xf32>
    %cst_298 = arith.constant 1.000000e+00 : f32
    %1027 = vector.broadcast %cst_298 : f32 to vector<8x32xf32>
    %1028 = arith.addf %1027, %1026 : vector<8x32xf32>
    %1029 = arith.divf %1027, %1028 : vector<8x32xf32>
    %1030 = vector.extract_strided_slice %1017 {offsets = [0, 64], sizes = [8, 32], strides = [1, 1]} : vector<8x128xf32> to vector<8x32xf32>
    %1031 = math.tanh %1030 : vector<8x32xf32>
    %1032 = vector.extract_strided_slice %1017 {offsets = [0, 96], sizes = [8, 32], strides = [1, 1]} : vector<8x128xf32> to vector<8x32xf32>
    %1033 = arith.negf %1032 : vector<8x32xf32>
    %1034 = math.exp %1033 : vector<8x32xf32>
    %cst_299 = arith.constant 1.000000e+00 : f32
    %1035 = vector.broadcast %cst_299 : f32 to vector<8x32xf32>
    %1036 = arith.addf %1035, %1034 : vector<8x32xf32>
    %1037 = arith.divf %1035, %1036 : vector<8x32xf32>
    %1038 = arith.mulf %1029, %1011 : vector<8x32xf32>
    %1039 = arith.mulf %1023, %1031 : vector<8x32xf32>
    %1040 = arith.addf %1038, %1039 : vector<8x32xf32>
    %1041 = math.tanh %1040 : vector<8x32xf32>
    %1042 = arith.mulf %1037, %1041 : vector<8x32xf32>
    %c16_300 = arith.constant 16 : index
    %c0_301 = arith.constant 0 : index
    %1043 = vector.load %arg9[%c16_300, %c0_301] : memref<128x32xf32, #tpu.memory_space<vmem>>, vector<8x32xf32>
    tpu.vector_store %arg9[%c16_300, %c0_301], %1042 {strides = array<i32>} : memref<128x32xf32, #tpu.memory_space<vmem>>, vector<8x32xf32>,
    %c24_302 = arith.constant 24 : index
    %c0_303 = arith.constant 0 : index
    %1044 = vector.load %arg8[%c24_302, %c0_303] : memref<128x128xf32, #tpu.memory_space<vmem>>, vector<8x128xf32>
    %cst_304 = arith.constant dense<0.000000e+00> : vector<8x128xf32>
    %1045 = tpu.matmul %1042, %957, %cst_304 {dimension_numbers = #tpu.dot_dimension_numbers<[1], [0], [0], [1], [0, 0, 1, 1], [], []>} : vector<8x32xf32>, vector<32x128xf32>, vector<8x128xf32> -> vector<8x128xf32>
    %1046 = arith.addf %1044, %1045 : vector<8x128xf32>
    %1047 = vector.extract_strided_slice %1046 {offsets = [0, 0], sizes = [8, 32], strides = [1, 1]} : vector<8x128xf32> to vector<8x32xf32>
    %1048 = arith.negf %1047 : vector<8x32xf32>
    %1049 = math.exp %1048 : vector<8x32xf32>
    %cst_305 = arith.constant 1.000000e+00 : f32
    %1050 = vector.broadcast %cst_305 : f32 to vector<8x32xf32>
    %1051 = arith.addf %1050, %1049 : vector<8x32xf32>
    %1052 = arith.divf %1050, %1051 : vector<8x32xf32>
    %1053 = vector.extract_strided_slice %1046 {offsets = [0, 32], sizes = [8, 32], strides = [1, 1]} : vector<8x128xf32> to vector<8x32xf32>
    %1054 = arith.negf %1053 : vector<8x32xf32>
    %1055 = math.exp %1054 : vector<8x32xf32>
    %cst_306 = arith.constant 1.000000e+00 : f32
    %1056 = vector.broadcast %cst_306 : f32 to vector<8x32xf32>
    %1057 = arith.addf %1056, %1055 : vector<8x32xf32>
    %1058 = arith.divf %1056, %1057 : vector<8x32xf32>
    %1059 = vector.extract_strided_slice %1046 {offsets = [0, 64], sizes = [8, 32], strides = [1, 1]} : vector<8x128xf32> to vector<8x32xf32>
    %1060 = math.tanh %1059 : vector<8x32xf32>
    %1061 = vector.extract_strided_slice %1046 {offsets = [0, 96], sizes = [8, 32], strides = [1, 1]} : vector<8x128xf32> to vector<8x32xf32>
    %1062 = arith.negf %1061 : vector<8x32xf32>
    %1063 = math.exp %1062 : vector<8x32xf32>
    %cst_307 = arith.constant 1.000000e+00 : f32
    %1064 = vector.broadcast %cst_307 : f32 to vector<8x32xf32>
    %1065 = arith.addf %1064, %1063 : vector<8x32xf32>
    %1066 = arith.divf %1064, %1065 : vector<8x32xf32>
    %1067 = arith.mulf %1058, %1040 : vector<8x32xf32>
    %1068 = arith.mulf %1052, %1060 : vector<8x32xf32>
    %1069 = arith.addf %1067, %1068 : vector<8x32xf32>
    %1070 = math.tanh %1069 : vector<8x32xf32>
    %1071 = arith.mulf %1066, %1070 : vector<8x32xf32>
    %c24_308 = arith.constant 24 : index
    %c0_309 = arith.constant 0 : index
    %1072 = vector.load %arg9[%c24_308, %c0_309] : memref<128x32xf32, #tpu.memory_space<vmem>>, vector<8x32xf32>
    tpu.vector_store %arg9[%c24_308, %c0_309], %1071 {strides = array<i32>} : memref<128x32xf32, #tpu.memory_space<vmem>>, vector<8x32xf32>,
    %c32_310 = arith.constant 32 : index
    %c0_311 = arith.constant 0 : index
    %1073 = vector.load %arg8[%c32_310, %c0_311] : memref<128x128xf32, #tpu.memory_space<vmem>>, vector<8x128xf32>
    %cst_312 = arith.constant dense<0.000000e+00> : vector<8x128xf32>
    %1074 = tpu.matmul %1071, %957, %cst_312 {dimension_numbers = #tpu.dot_dimension_numbers<[1], [0], [0], [1], [0, 0, 1, 1], [], []>} : vector<8x32xf32>, vector<32x128xf32>, vector<8x128xf32> -> vector<8x128xf32>
    %1075 = arith.addf %1073, %1074 : vector<8x128xf32>
    %1076 = vector.extract_strided_slice %1075 {offsets = [0, 0], sizes = [8, 32], strides = [1, 1]} : vector<8x128xf32> to vector<8x32xf32>
    %1077 = arith.negf %1076 : vector<8x32xf32>
    %1078 = math.exp %1077 : vector<8x32xf32>
    %cst_313 = arith.constant 1.000000e+00 : f32
    %1079 = vector.broadcast %cst_313 : f32 to vector<8x32xf32>
    %1080 = arith.addf %1079, %1078 : vector<8x32xf32>
    %1081 = arith.divf %1079, %1080 : vector<8x32xf32>
    %1082 = vector.extract_strided_slice %1075 {offsets = [0, 32], sizes = [8, 32], strides = [1, 1]} : vector<8x128xf32> to vector<8x32xf32>
    %1083 = arith.negf %1082 : vector<8x32xf32>
    %1084 = math.exp %1083 : vector<8x32xf32>
    %cst_314 = arith.constant 1.000000e+00 : f32
    %1085 = vector.broadcast %cst_314 : f32 to vector<8x32xf32>
    %1086 = arith.addf %1085, %1084 : vector<8x32xf32>
    %1087 = arith.divf %1085, %1086 : vector<8x32xf32>
    %1088 = vector.extract_strided_slice %1075 {offsets = [0, 64], sizes = [8, 32], strides = [1, 1]} : vector<8x128xf32> to vector<8x32xf32>
    %1089 = math.tanh %1088 : vector<8x32xf32>
    %1090 = vector.extract_strided_slice %1075 {offsets = [0, 96], sizes = [8, 32], strides = [1, 1]} : vector<8x128xf32> to vector<8x32xf32>
    %1091 = arith.negf %1090 : vector<8x32xf32>
    %1092 = math.exp %1091 : vector<8x32xf32>
    %cst_315 = arith.constant 1.000000e+00 : f32
    %1093 = vector.broadcast %cst_315 : f32 to vector<8x32xf32>
    %1094 = arith.addf %1093, %1092 : vector<8x32xf32>
    %1095 = arith.divf %1093, %1094 : vector<8x32xf32>
    %1096 = arith.mulf %1087, %1069 : vector<8x32xf32>
    %1097 = arith.mulf %1081, %1089 : vector<8x32xf32>
    %1098 = arith.addf %1096, %1097 : vector<8x32xf32>
    %1099 = math.tanh %1098 : vector<8x32xf32>
    %1100 = arith.mulf %1095, %1099 : vector<8x32xf32>
    %c32_316 = arith.constant 32 : index
    %c0_317 = arith.constant 0 : index
    %1101 = vector.load %arg9[%c32_316, %c0_317] : memref<128x32xf32, #tpu.memory_space<vmem>>, vector<8x32xf32>
    tpu.vector_store %arg9[%c32_316, %c0_317], %1100 {strides = array<i32>} : memref<128x32xf32, #tpu.memory_space<vmem>>, vector<8x32xf32>,
    %c40_318 = arith.constant 40 : index
    %c0_319 = arith.constant 0 : index
    %1102 = vector.load %arg8[%c40_318, %c0_319] : memref<128x128xf32, #tpu.memory_space<vmem>>, vector<8x128xf32>
    %cst_320 = arith.constant dense<0.000000e+00> : vector<8x128xf32>
    %1103 = tpu.matmul %1100, %957, %cst_320 {dimension_numbers = #tpu.dot_dimension_numbers<[1], [0], [0], [1], [0, 0, 1, 1], [], []>} : vector<8x32xf32>, vector<32x128xf32>, vector<8x128xf32> -> vector<8x128xf32>
    %1104 = arith.addf %1102, %1103 : vector<8x128xf32>
    %1105 = vector.extract_strided_slice %1104 {offsets = [0, 0], sizes = [8, 32], strides = [1, 1]} : vector<8x128xf32> to vector<8x32xf32>
    %1106 = arith.negf %1105 : vector<8x32xf32>
    %1107 = math.exp %1106 : vector<8x32xf32>
    %cst_321 = arith.constant 1.000000e+00 : f32
    %1108 = vector.broadcast %cst_321 : f32 to vector<8x32xf32>
    %1109 = arith.addf %1108, %1107 : vector<8x32xf32>
    %1110 = arith.divf %1108, %1109 : vector<8x32xf32>
    %1111 = vector.extract_strided_slice %1104 {offsets = [0, 32], sizes = [8, 32], strides = [1, 1]} : vector<8x128xf32> to vector<8x32xf32>
    %1112 = arith.negf %1111 : vector<8x32xf32>
    %1113 = math.exp %1112 : vector<8x32xf32>
    %cst_322 = arith.constant 1.000000e+00 : f32
    %1114 = vector.broadcast %cst_322 : f32 to vector<8x32xf32>
    %1115 = arith.addf %1114, %1113 : vector<8x32xf32>
    %1116 = arith.divf %1114, %1115 : vector<8x32xf32>
    %1117 = vector.extract_strided_slice %1104 {offsets = [0, 64], sizes = [8, 32], strides = [1, 1]} : vector<8x128xf32> to vector<8x32xf32>
    %1118 = math.tanh %1117 : vector<8x32xf32>
    %1119 = vector.extract_strided_slice %1104 {offsets = [0, 96], sizes = [8, 32], strides = [1, 1]} : vector<8x128xf32> to vector<8x32xf32>
    %1120 = arith.negf %1119 : vector<8x32xf32>
    %1121 = math.exp %1120 : vector<8x32xf32>
    %cst_323 = arith.constant 1.000000e+00 : f32
    %1122 = vector.broadcast %cst_323 : f32 to vector<8x32xf32>
    %1123 = arith.addf %1122, %1121 : vector<8x32xf32>
    %1124 = arith.divf %1122, %1123 : vector<8x32xf32>
    %1125 = arith.mulf %1116, %1098 : vector<8x32xf32>
    %1126 = arith.mulf %1110, %1118 : vector<8x32xf32>
    %1127 = arith.addf %1125, %1126 : vector<8x32xf32>
    %1128 = math.tanh %1127 : vector<8x32xf32>
    %1129 = arith.mulf %1124, %1128 : vector<8x32xf32>
    %c40_324 = arith.constant 40 : index
    %c0_325 = arith.constant 0 : index
    %1130 = vector.load %arg9[%c40_324, %c0_325] : memref<128x32xf32, #tpu.memory_space<vmem>>, vector<8x32xf32>
    tpu.vector_store %arg9[%c40_324, %c0_325], %1129 {strides = array<i32>} : memref<128x32xf32, #tpu.memory_space<vmem>>, vector<8x32xf32>,
    %c48_326 = arith.constant 48 : index
    %c0_327 = arith.constant 0 : index
    %1131 = vector.load %arg8[%c48_326, %c0_327] : memref<128x128xf32, #tpu.memory_space<vmem>>, vector<8x128xf32>
    %cst_328 = arith.constant dense<0.000000e+00> : vector<8x128xf32>
    %1132 = tpu.matmul %1129, %957, %cst_328 {dimension_numbers = #tpu.dot_dimension_numbers<[1], [0], [0], [1], [0, 0, 1, 1], [], []>} : vector<8x32xf32>, vector<32x128xf32>, vector<8x128xf32> -> vector<8x128xf32>
    %1133 = arith.addf %1131, %1132 : vector<8x128xf32>
    %1134 = vector.extract_strided_slice %1133 {offsets = [0, 0], sizes = [8, 32], strides = [1, 1]} : vector<8x128xf32> to vector<8x32xf32>
    %1135 = arith.negf %1134 : vector<8x32xf32>
    %1136 = math.exp %1135 : vector<8x32xf32>
    %cst_329 = arith.constant 1.000000e+00 : f32
    %1137 = vector.broadcast %cst_329 : f32 to vector<8x32xf32>
    %1138 = arith.addf %1137, %1136 : vector<8x32xf32>
    %1139 = arith.divf %1137, %1138 : vector<8x32xf32>
    %1140 = vector.extract_strided_slice %1133 {offsets = [0, 32], sizes = [8, 32], strides = [1, 1]} : vector<8x128xf32> to vector<8x32xf32>
    %1141 = arith.negf %1140 : vector<8x32xf32>
    %1142 = math.exp %1141 : vector<8x32xf32>
    %cst_330 = arith.constant 1.000000e+00 : f32
    %1143 = vector.broadcast %cst_330 : f32 to vector<8x32xf32>
    %1144 = arith.addf %1143, %1142 : vector<8x32xf32>
    %1145 = arith.divf %1143, %1144 : vector<8x32xf32>
    %1146 = vector.extract_strided_slice %1133 {offsets = [0, 64], sizes = [8, 32], strides = [1, 1]} : vector<8x128xf32> to vector<8x32xf32>
    %1147 = math.tanh %1146 : vector<8x32xf32>
    %1148 = vector.extract_strided_slice %1133 {offsets = [0, 96], sizes = [8, 32], strides = [1, 1]} : vector<8x128xf32> to vector<8x32xf32>
    %1149 = arith.negf %1148 : vector<8x32xf32>
    %1150 = math.exp %1149 : vector<8x32xf32>
    %cst_331 = arith.constant 1.000000e+00 : f32
    %1151 = vector.broadcast %cst_331 : f32 to vector<8x32xf32>
    %1152 = arith.addf %1151, %1150 : vector<8x32xf32>
    %1153 = arith.divf %1151, %1152 : vector<8x32xf32>
    %1154 = arith.mulf %1145, %1127 : vector<8x32xf32>
    %1155 = arith.mulf %1139, %1147 : vector<8x32xf32>
    %1156 = arith.addf %1154, %1155 : vector<8x32xf32>
    %1157 = math.tanh %1156 : vector<8x32xf32>
    %1158 = arith.mulf %1153, %1157 : vector<8x32xf32>
    %c48_332 = arith.constant 48 : index
    %c0_333 = arith.constant 0 : index
    %1159 = vector.load %arg9[%c48_332, %c0_333] : memref<128x32xf32, #tpu.memory_space<vmem>>, vector<8x32xf32>
    tpu.vector_store %arg9[%c48_332, %c0_333], %1158 {strides = array<i32>} : memref<128x32xf32, #tpu.memory_space<vmem>>, vector<8x32xf32>,
    %c56_334 = arith.constant 56 : index
    %c0_335 = arith.constant 0 : index
    %1160 = vector.load %arg8[%c56_334, %c0_335] : memref<128x128xf32, #tpu.memory_space<vmem>>, vector<8x128xf32>
    %cst_336 = arith.constant dense<0.000000e+00> : vector<8x128xf32>
    %1161 = tpu.matmul %1158, %957, %cst_336 {dimension_numbers = #tpu.dot_dimension_numbers<[1], [0], [0], [1], [0, 0, 1, 1], [], []>} : vector<8x32xf32>, vector<32x128xf32>, vector<8x128xf32> -> vector<8x128xf32>
    %1162 = arith.addf %1160, %1161 : vector<8x128xf32>
    %1163 = vector.extract_strided_slice %1162 {offsets = [0, 0], sizes = [8, 32], strides = [1, 1]} : vector<8x128xf32> to vector<8x32xf32>
    %1164 = arith.negf %1163 : vector<8x32xf32>
    %1165 = math.exp %1164 : vector<8x32xf32>
    %cst_337 = arith.constant 1.000000e+00 : f32
    %1166 = vector.broadcast %cst_337 : f32 to vector<8x32xf32>
    %1167 = arith.addf %1166, %1165 : vector<8x32xf32>
    %1168 = arith.divf %1166, %1167 : vector<8x32xf32>
    %1169 = vector.extract_strided_slice %1162 {offsets = [0, 32], sizes = [8, 32], strides = [1, 1]} : vector<8x128xf32> to vector<8x32xf32>
    %1170 = arith.negf %1169 : vector<8x32xf32>
    %1171 = math.exp %1170 : vector<8x32xf32>
    %cst_338 = arith.constant 1.000000e+00 : f32
    %1172 = vector.broadcast %cst_338 : f32 to vector<8x32xf32>
    %1173 = arith.addf %1172, %1171 : vector<8x32xf32>
    %1174 = arith.divf %1172, %1173 : vector<8x32xf32>
    %1175 = vector.extract_strided_slice %1162 {offsets = [0, 64], sizes = [8, 32], strides = [1, 1]} : vector<8x128xf32> to vector<8x32xf32>
    %1176 = math.tanh %1175 : vector<8x32xf32>
    %1177 = vector.extract_strided_slice %1162 {offsets = [0, 96], sizes = [8, 32], strides = [1, 1]} : vector<8x128xf32> to vector<8x32xf32>
    %1178 = arith.negf %1177 : vector<8x32xf32>
    %1179 = math.exp %1178 : vector<8x32xf32>
    %cst_339 = arith.constant 1.000000e+00 : f32
    %1180 = vector.broadcast %cst_339 : f32 to vector<8x32xf32>
    %1181 = arith.addf %1180, %1179 : vector<8x32xf32>
    %1182 = arith.divf %1180, %1181 : vector<8x32xf32>
    %1183 = arith.mulf %1174, %1156 : vector<8x32xf32>
    %1184 = arith.mulf %1168, %1176 : vector<8x32xf32>
    %1185 = arith.addf %1183, %1184 : vector<8x32xf32>
    %1186 = math.tanh %1185 : vector<8x32xf32>
    %1187 = arith.mulf %1182, %1186 : vector<8x32xf32>
    %c56_340 = arith.constant 56 : index
    %c0_341 = arith.constant 0 : index
    %1188 = vector.load %arg9[%c56_340, %c0_341] : memref<128x32xf32, #tpu.memory_space<vmem>>, vector<8x32xf32>
    tpu.vector_store %arg9[%c56_340, %c0_341], %1187 {strides = array<i32>} : memref<128x32xf32, #tpu.memory_space<vmem>>, vector<8x32xf32>,
    %c64_342 = arith.constant 64 : index
    %c0_343 = arith.constant 0 : index
    %1189 = vector.load %arg8[%c64_342, %c0_343] : memref<128x128xf32, #tpu.memory_space<vmem>>, vector<8x128xf32>
    %cst_344 = arith.constant dense<0.000000e+00> : vector<8x128xf32>
    %1190 = tpu.matmul %1187, %957, %cst_344 {dimension_numbers = #tpu.dot_dimension_numbers<[1], [0], [0], [1], [0, 0, 1, 1], [], []>} : vector<8x32xf32>, vector<32x128xf32>, vector<8x128xf32> -> vector<8x128xf32>
    %1191 = arith.addf %1189, %1190 : vector<8x128xf32>
    %1192 = vector.extract_strided_slice %1191 {offsets = [0, 0], sizes = [8, 32], strides = [1, 1]} : vector<8x128xf32> to vector<8x32xf32>
    %1193 = arith.negf %1192 : vector<8x32xf32>
    %1194 = math.exp %1193 : vector<8x32xf32>
    %cst_345 = arith.constant 1.000000e+00 : f32
    %1195 = vector.broadcast %cst_345 : f32 to vector<8x32xf32>
    %1196 = arith.addf %1195, %1194 : vector<8x32xf32>
    %1197 = arith.divf %1195, %1196 : vector<8x32xf32>
    %1198 = vector.extract_strided_slice %1191 {offsets = [0, 32], sizes = [8, 32], strides = [1, 1]} : vector<8x128xf32> to vector<8x32xf32>
    %1199 = arith.negf %1198 : vector<8x32xf32>
    %1200 = math.exp %1199 : vector<8x32xf32>
    %cst_346 = arith.constant 1.000000e+00 : f32
    %1201 = vector.broadcast %cst_346 : f32 to vector<8x32xf32>
    %1202 = arith.addf %1201, %1200 : vector<8x32xf32>
    %1203 = arith.divf %1201, %1202 : vector<8x32xf32>
    %1204 = vector.extract_strided_slice %1191 {offsets = [0, 64], sizes = [8, 32], strides = [1, 1]} : vector<8x128xf32> to vector<8x32xf32>
    %1205 = math.tanh %1204 : vector<8x32xf32>
    %1206 = vector.extract_strided_slice %1191 {offsets = [0, 96], sizes = [8, 32], strides = [1, 1]} : vector<8x128xf32> to vector<8x32xf32>
    %1207 = arith.negf %1206 : vector<8x32xf32>
    %1208 = math.exp %1207 : vector<8x32xf32>
    %cst_347 = arith.constant 1.000000e+00 : f32
    %1209 = vector.broadcast %cst_347 : f32 to vector<8x32xf32>
    %1210 = arith.addf %1209, %1208 : vector<8x32xf32>
    %1211 = arith.divf %1209, %1210 : vector<8x32xf32>
    %1212 = arith.mulf %1203, %1185 : vector<8x32xf32>
    %1213 = arith.mulf %1197, %1205 : vector<8x32xf32>
    %1214 = arith.addf %1212, %1213 : vector<8x32xf32>
    %1215 = math.tanh %1214 : vector<8x32xf32>
    %1216 = arith.mulf %1211, %1215 : vector<8x32xf32>
    %c64_348 = arith.constant 64 : index
    %c0_349 = arith.constant 0 : index
    %1217 = vector.load %arg9[%c64_348, %c0_349] : memref<128x32xf32, #tpu.memory_space<vmem>>, vector<8x32xf32>
    tpu.vector_store %arg9[%c64_348, %c0_349], %1216 {strides = array<i32>} : memref<128x32xf32, #tpu.memory_space<vmem>>, vector<8x32xf32>,
    %c72_350 = arith.constant 72 : index
    %c0_351 = arith.constant 0 : index
    %1218 = vector.load %arg8[%c72_350, %c0_351] : memref<128x128xf32, #tpu.memory_space<vmem>>, vector<8x128xf32>
    %cst_352 = arith.constant dense<0.000000e+00> : vector<8x128xf32>
    %1219 = tpu.matmul %1216, %957, %cst_352 {dimension_numbers = #tpu.dot_dimension_numbers<[1], [0], [0], [1], [0, 0, 1, 1], [], []>} : vector<8x32xf32>, vector<32x128xf32>, vector<8x128xf32> -> vector<8x128xf32>
    %1220 = arith.addf %1218, %1219 : vector<8x128xf32>
    %1221 = vector.extract_strided_slice %1220 {offsets = [0, 0], sizes = [8, 32], strides = [1, 1]} : vector<8x128xf32> to vector<8x32xf32>
    %1222 = arith.negf %1221 : vector<8x32xf32>
    %1223 = math.exp %1222 : vector<8x32xf32>
    %cst_353 = arith.constant 1.000000e+00 : f32
    %1224 = vector.broadcast %cst_353 : f32 to vector<8x32xf32>
    %1225 = arith.addf %1224, %1223 : vector<8x32xf32>
    %1226 = arith.divf %1224, %1225 : vector<8x32xf32>
    %1227 = vector.extract_strided_slice %1220 {offsets = [0, 32], sizes = [8, 32], strides = [1, 1]} : vector<8x128xf32> to vector<8x32xf32>
    %1228 = arith.negf %1227 : vector<8x32xf32>
    %1229 = math.exp %1228 : vector<8x32xf32>
    %cst_354 = arith.constant 1.000000e+00 : f32
    %1230 = vector.broadcast %cst_354 : f32 to vector<8x32xf32>
    %1231 = arith.addf %1230, %1229 : vector<8x32xf32>
    %1232 = arith.divf %1230, %1231 : vector<8x32xf32>
    %1233 = vector.extract_strided_slice %1220 {offsets = [0, 64], sizes = [8, 32], strides = [1, 1]} : vector<8x128xf32> to vector<8x32xf32>
    %1234 = math.tanh %1233 : vector<8x32xf32>
    %1235 = vector.extract_strided_slice %1220 {offsets = [0, 96], sizes = [8, 32], strides = [1, 1]} : vector<8x128xf32> to vector<8x32xf32>
    %1236 = arith.negf %1235 : vector<8x32xf32>
    %1237 = math.exp %1236 : vector<8x32xf32>
    %cst_355 = arith.constant 1.000000e+00 : f32
    %1238 = vector.broadcast %cst_355 : f32 to vector<8x32xf32>
    %1239 = arith.addf %1238, %1237 : vector<8x32xf32>
    %1240 = arith.divf %1238, %1239 : vector<8x32xf32>
    %1241 = arith.mulf %1232, %1214 : vector<8x32xf32>
    %1242 = arith.mulf %1226, %1234 : vector<8x32xf32>
    %1243 = arith.addf %1241, %1242 : vector<8x32xf32>
    %1244 = math.tanh %1243 : vector<8x32xf32>
    %1245 = arith.mulf %1240, %1244 : vector<8x32xf32>
    %c72_356 = arith.constant 72 : index
    %c0_357 = arith.constant 0 : index
    %1246 = vector.load %arg9[%c72_356, %c0_357] : memref<128x32xf32, #tpu.memory_space<vmem>>, vector<8x32xf32>
    tpu.vector_store %arg9[%c72_356, %c0_357], %1245 {strides = array<i32>} : memref<128x32xf32, #tpu.memory_space<vmem>>, vector<8x32xf32>,
    %c80_358 = arith.constant 80 : index
    %c0_359 = arith.constant 0 : index
    %1247 = vector.load %arg8[%c80_358, %c0_359] : memref<128x128xf32, #tpu.memory_space<vmem>>, vector<8x128xf32>
    %cst_360 = arith.constant dense<0.000000e+00> : vector<8x128xf32>
    %1248 = tpu.matmul %1245, %957, %cst_360 {dimension_numbers = #tpu.dot_dimension_numbers<[1], [0], [0], [1], [0, 0, 1, 1], [], []>} : vector<8x32xf32>, vector<32x128xf32>, vector<8x128xf32> -> vector<8x128xf32>
    %1249 = arith.addf %1247, %1248 : vector<8x128xf32>
    %1250 = vector.extract_strided_slice %1249 {offsets = [0, 0], sizes = [8, 32], strides = [1, 1]} : vector<8x128xf32> to vector<8x32xf32>
    %1251 = arith.negf %1250 : vector<8x32xf32>
    %1252 = math.exp %1251 : vector<8x32xf32>
    %cst_361 = arith.constant 1.000000e+00 : f32
    %1253 = vector.broadcast %cst_361 : f32 to vector<8x32xf32>
    %1254 = arith.addf %1253, %1252 : vector<8x32xf32>
    %1255 = arith.divf %1253, %1254 : vector<8x32xf32>
    %1256 = vector.extract_strided_slice %1249 {offsets = [0, 32], sizes = [8, 32], strides = [1, 1]} : vector<8x128xf32> to vector<8x32xf32>
    %1257 = arith.negf %1256 : vector<8x32xf32>
    %1258 = math.exp %1257 : vector<8x32xf32>
    %cst_362 = arith.constant 1.000000e+00 : f32
    %1259 = vector.broadcast %cst_362 : f32 to vector<8x32xf32>
    %1260 = arith.addf %1259, %1258 : vector<8x32xf32>
    %1261 = arith.divf %1259, %1260 : vector<8x32xf32>
    %1262 = vector.extract_strided_slice %1249 {offsets = [0, 64], sizes = [8, 32], strides = [1, 1]} : vector<8x128xf32> to vector<8x32xf32>
    %1263 = math.tanh %1262 : vector<8x32xf32>
    %1264 = vector.extract_strided_slice %1249 {offsets = [0, 96], sizes = [8, 32], strides = [1, 1]} : vector<8x128xf32> to vector<8x32xf32>
    %1265 = arith.negf %1264 : vector<8x32xf32>
    %1266 = math.exp %1265 : vector<8x32xf32>
    %cst_363 = arith.constant 1.000000e+00 : f32
    %1267 = vector.broadcast %cst_363 : f32 to vector<8x32xf32>
    %1268 = arith.addf %1267, %1266 : vector<8x32xf32>
    %1269 = arith.divf %1267, %1268 : vector<8x32xf32>
    %1270 = arith.mulf %1261, %1243 : vector<8x32xf32>
    %1271 = arith.mulf %1255, %1263 : vector<8x32xf32>
    %1272 = arith.addf %1270, %1271 : vector<8x32xf32>
    %1273 = math.tanh %1272 : vector<8x32xf32>
    %1274 = arith.mulf %1269, %1273 : vector<8x32xf32>
    %c80_364 = arith.constant 80 : index
    %c0_365 = arith.constant 0 : index
    %1275 = vector.load %arg9[%c80_364, %c0_365] : memref<128x32xf32, #tpu.memory_space<vmem>>, vector<8x32xf32>
    tpu.vector_store %arg9[%c80_364, %c0_365], %1274 {strides = array<i32>} : memref<128x32xf32, #tpu.memory_space<vmem>>, vector<8x32xf32>,
    %c88_366 = arith.constant 88 : index
    %c0_367 = arith.constant 0 : index
    %1276 = vector.load %arg8[%c88_366, %c0_367] : memref<128x128xf32, #tpu.memory_space<vmem>>, vector<8x128xf32>
    %cst_368 = arith.constant dense<0.000000e+00> : vector<8x128xf32>
    %1277 = tpu.matmul %1274, %957, %cst_368 {dimension_numbers = #tpu.dot_dimension_numbers<[1], [0], [0], [1], [0, 0, 1, 1], [], []>} : vector<8x32xf32>, vector<32x128xf32>, vector<8x128xf32> -> vector<8x128xf32>
    %1278 = arith.addf %1276, %1277 : vector<8x128xf32>
    %1279 = vector.extract_strided_slice %1278 {offsets = [0, 0], sizes = [8, 32], strides = [1, 1]} : vector<8x128xf32> to vector<8x32xf32>
    %1280 = arith.negf %1279 : vector<8x32xf32>
    %1281 = math.exp %1280 : vector<8x32xf32>
    %cst_369 = arith.constant 1.000000e+00 : f32
    %1282 = vector.broadcast %cst_369 : f32 to vector<8x32xf32>
    %1283 = arith.addf %1282, %1281 : vector<8x32xf32>
    %1284 = arith.divf %1282, %1283 : vector<8x32xf32>
    %1285 = vector.extract_strided_slice %1278 {offsets = [0, 32], sizes = [8, 32], strides = [1, 1]} : vector<8x128xf32> to vector<8x32xf32>
    %1286 = arith.negf %1285 : vector<8x32xf32>
    %1287 = math.exp %1286 : vector<8x32xf32>
    %cst_370 = arith.constant 1.000000e+00 : f32
    %1288 = vector.broadcast %cst_370 : f32 to vector<8x32xf32>
    %1289 = arith.addf %1288, %1287 : vector<8x32xf32>
    %1290 = arith.divf %1288, %1289 : vector<8x32xf32>
    %1291 = vector.extract_strided_slice %1278 {offsets = [0, 64], sizes = [8, 32], strides = [1, 1]} : vector<8x128xf32> to vector<8x32xf32>
    %1292 = math.tanh %1291 : vector<8x32xf32>
    %1293 = vector.extract_strided_slice %1278 {offsets = [0, 96], sizes = [8, 32], strides = [1, 1]} : vector<8x128xf32> to vector<8x32xf32>
    %1294 = arith.negf %1293 : vector<8x32xf32>
    %1295 = math.exp %1294 : vector<8x32xf32>
    %cst_371 = arith.constant 1.000000e+00 : f32
    %1296 = vector.broadcast %cst_371 : f32 to vector<8x32xf32>
    %1297 = arith.addf %1296, %1295 : vector<8x32xf32>
    %1298 = arith.divf %1296, %1297 : vector<8x32xf32>
    %1299 = arith.mulf %1290, %1272 : vector<8x32xf32>
    %1300 = arith.mulf %1284, %1292 : vector<8x32xf32>
    %1301 = arith.addf %1299, %1300 : vector<8x32xf32>
    %1302 = math.tanh %1301 : vector<8x32xf32>
    %1303 = arith.mulf %1298, %1302 : vector<8x32xf32>
    %c88_372 = arith.constant 88 : index
    %c0_373 = arith.constant 0 : index
    %1304 = vector.load %arg9[%c88_372, %c0_373] : memref<128x32xf32, #tpu.memory_space<vmem>>, vector<8x32xf32>
    tpu.vector_store %arg9[%c88_372, %c0_373], %1303 {strides = array<i32>} : memref<128x32xf32, #tpu.memory_space<vmem>>, vector<8x32xf32>,
    %c96_374 = arith.constant 96 : index
    %c0_375 = arith.constant 0 : index
    %1305 = vector.load %arg8[%c96_374, %c0_375] : memref<128x128xf32, #tpu.memory_space<vmem>>, vector<8x128xf32>
    %cst_376 = arith.constant dense<0.000000e+00> : vector<8x128xf32>
    %1306 = tpu.matmul %1303, %957, %cst_376 {dimension_numbers = #tpu.dot_dimension_numbers<[1], [0], [0], [1], [0, 0, 1, 1], [], []>} : vector<8x32xf32>, vector<32x128xf32>, vector<8x128xf32> -> vector<8x128xf32>
    %1307 = arith.addf %1305, %1306 : vector<8x128xf32>
    %1308 = vector.extract_strided_slice %1307 {offsets = [0, 0], sizes = [8, 32], strides = [1, 1]} : vector<8x128xf32> to vector<8x32xf32>
    %1309 = arith.negf %1308 : vector<8x32xf32>
    %1310 = math.exp %1309 : vector<8x32xf32>
    %cst_377 = arith.constant 1.000000e+00 : f32
    %1311 = vector.broadcast %cst_377 : f32 to vector<8x32xf32>
    %1312 = arith.addf %1311, %1310 : vector<8x32xf32>
    %1313 = arith.divf %1311, %1312 : vector<8x32xf32>
    %1314 = vector.extract_strided_slice %1307 {offsets = [0, 32], sizes = [8, 32], strides = [1, 1]} : vector<8x128xf32> to vector<8x32xf32>
    %1315 = arith.negf %1314 : vector<8x32xf32>
    %1316 = math.exp %1315 : vector<8x32xf32>
    %cst_378 = arith.constant 1.000000e+00 : f32
    %1317 = vector.broadcast %cst_378 : f32 to vector<8x32xf32>
    %1318 = arith.addf %1317, %1316 : vector<8x32xf32>
    %1319 = arith.divf %1317, %1318 : vector<8x32xf32>
    %1320 = vector.extract_strided_slice %1307 {offsets = [0, 64], sizes = [8, 32], strides = [1, 1]} : vector<8x128xf32> to vector<8x32xf32>
    %1321 = math.tanh %1320 : vector<8x32xf32>
    %1322 = vector.extract_strided_slice %1307 {offsets = [0, 96], sizes = [8, 32], strides = [1, 1]} : vector<8x128xf32> to vector<8x32xf32>
    %1323 = arith.negf %1322 : vector<8x32xf32>
    %1324 = math.exp %1323 : vector<8x32xf32>
    %cst_379 = arith.constant 1.000000e+00 : f32
    %1325 = vector.broadcast %cst_379 : f32 to vector<8x32xf32>
    %1326 = arith.addf %1325, %1324 : vector<8x32xf32>
    %1327 = arith.divf %1325, %1326 : vector<8x32xf32>
    %1328 = arith.mulf %1319, %1301 : vector<8x32xf32>
    %1329 = arith.mulf %1313, %1321 : vector<8x32xf32>
    %1330 = arith.addf %1328, %1329 : vector<8x32xf32>
    %1331 = math.tanh %1330 : vector<8x32xf32>
    %1332 = arith.mulf %1327, %1331 : vector<8x32xf32>
    %c96_380 = arith.constant 96 : index
    %c0_381 = arith.constant 0 : index
    %1333 = vector.load %arg9[%c96_380, %c0_381] : memref<128x32xf32, #tpu.memory_space<vmem>>, vector<8x32xf32>
    tpu.vector_store %arg9[%c96_380, %c0_381], %1332 {strides = array<i32>} : memref<128x32xf32, #tpu.memory_space<vmem>>, vector<8x32xf32>,
    %c104_382 = arith.constant 104 : index
    %c0_383 = arith.constant 0 : index
    %1334 = vector.load %arg8[%c104_382, %c0_383] : memref<128x128xf32, #tpu.memory_space<vmem>>, vector<8x128xf32>
    %cst_384 = arith.constant dense<0.000000e+00> : vector<8x128xf32>
    %1335 = tpu.matmul %1332, %957, %cst_384 {dimension_numbers = #tpu.dot_dimension_numbers<[1], [0], [0], [1], [0, 0, 1, 1], [], []>} : vector<8x32xf32>, vector<32x128xf32>, vector<8x128xf32> -> vector<8x128xf32>
    %1336 = arith.addf %1334, %1335 : vector<8x128xf32>
    %1337 = vector.extract_strided_slice %1336 {offsets = [0, 0], sizes = [8, 32], strides = [1, 1]} : vector<8x128xf32> to vector<8x32xf32>
    %1338 = arith.negf %1337 : vector<8x32xf32>
    %1339 = math.exp %1338 : vector<8x32xf32>
    %cst_385 = arith.constant 1.000000e+00 : f32
    %1340 = vector.broadcast %cst_385 : f32 to vector<8x32xf32>
    %1341 = arith.addf %1340, %1339 : vector<8x32xf32>
    %1342 = arith.divf %1340, %1341 : vector<8x32xf32>
    %1343 = vector.extract_strided_slice %1336 {offsets = [0, 32], sizes = [8, 32], strides = [1, 1]} : vector<8x128xf32> to vector<8x32xf32>
    %1344 = arith.negf %1343 : vector<8x32xf32>
    %1345 = math.exp %1344 : vector<8x32xf32>
    %cst_386 = arith.constant 1.000000e+00 : f32
    %1346 = vector.broadcast %cst_386 : f32 to vector<8x32xf32>
    %1347 = arith.addf %1346, %1345 : vector<8x32xf32>
    %1348 = arith.divf %1346, %1347 : vector<8x32xf32>
    %1349 = vector.extract_strided_slice %1336 {offsets = [0, 64], sizes = [8, 32], strides = [1, 1]} : vector<8x128xf32> to vector<8x32xf32>
    %1350 = math.tanh %1349 : vector<8x32xf32>
    %1351 = vector.extract_strided_slice %1336 {offsets = [0, 96], sizes = [8, 32], strides = [1, 1]} : vector<8x128xf32> to vector<8x32xf32>
    %1352 = arith.negf %1351 : vector<8x32xf32>
    %1353 = math.exp %1352 : vector<8x32xf32>
    %cst_387 = arith.constant 1.000000e+00 : f32
    %1354 = vector.broadcast %cst_387 : f32 to vector<8x32xf32>
    %1355 = arith.addf %1354, %1353 : vector<8x32xf32>
    %1356 = arith.divf %1354, %1355 : vector<8x32xf32>
    %1357 = arith.mulf %1348, %1330 : vector<8x32xf32>
    %1358 = arith.mulf %1342, %1350 : vector<8x32xf32>
    %1359 = arith.addf %1357, %1358 : vector<8x32xf32>
    %1360 = math.tanh %1359 : vector<8x32xf32>
    %1361 = arith.mulf %1356, %1360 : vector<8x32xf32>
    %c104_388 = arith.constant 104 : index
    %c0_389 = arith.constant 0 : index
    %1362 = vector.load %arg9[%c104_388, %c0_389] : memref<128x32xf32, #tpu.memory_space<vmem>>, vector<8x32xf32>
    tpu.vector_store %arg9[%c104_388, %c0_389], %1361 {strides = array<i32>} : memref<128x32xf32, #tpu.memory_space<vmem>>, vector<8x32xf32>,
    %c112_390 = arith.constant 112 : index
    %c0_391 = arith.constant 0 : index
    %1363 = vector.load %arg8[%c112_390, %c0_391] : memref<128x128xf32, #tpu.memory_space<vmem>>, vector<8x128xf32>
    %cst_392 = arith.constant dense<0.000000e+00> : vector<8x128xf32>
    %1364 = tpu.matmul %1361, %957, %cst_392 {dimension_numbers = #tpu.dot_dimension_numbers<[1], [0], [0], [1], [0, 0, 1, 1], [], []>} : vector<8x32xf32>, vector<32x128xf32>, vector<8x128xf32> -> vector<8x128xf32>
    %1365 = arith.addf %1363, %1364 : vector<8x128xf32>
    %1366 = vector.extract_strided_slice %1365 {offsets = [0, 0], sizes = [8, 32], strides = [1, 1]} : vector<8x128xf32> to vector<8x32xf32>
    %1367 = arith.negf %1366 : vector<8x32xf32>
    %1368 = math.exp %1367 : vector<8x32xf32>
    %cst_393 = arith.constant 1.000000e+00 : f32
    %1369 = vector.broadcast %cst_393 : f32 to vector<8x32xf32>
    %1370 = arith.addf %1369, %1368 : vector<8x32xf32>
    %1371 = arith.divf %1369, %1370 : vector<8x32xf32>
    %1372 = vector.extract_strided_slice %1365 {offsets = [0, 32], sizes = [8, 32], strides = [1, 1]} : vector<8x128xf32> to vector<8x32xf32>
    %1373 = arith.negf %1372 : vector<8x32xf32>
    %1374 = math.exp %1373 : vector<8x32xf32>
    %cst_394 = arith.constant 1.000000e+00 : f32
    %1375 = vector.broadcast %cst_394 : f32 to vector<8x32xf32>
    %1376 = arith.addf %1375, %1374 : vector<8x32xf32>
    %1377 = arith.divf %1375, %1376 : vector<8x32xf32>
    %1378 = vector.extract_strided_slice %1365 {offsets = [0, 64], sizes = [8, 32], strides = [1, 1]} : vector<8x128xf32> to vector<8x32xf32>
    %1379 = math.tanh %1378 : vector<8x32xf32>
    %1380 = vector.extract_strided_slice %1365 {offsets = [0, 96], sizes = [8, 32], strides = [1, 1]} : vector<8x128xf32> to vector<8x32xf32>
    %1381 = arith.negf %1380 : vector<8x32xf32>
    %1382 = math.exp %1381 : vector<8x32xf32>
    %cst_395 = arith.constant 1.000000e+00 : f32
    %1383 = vector.broadcast %cst_395 : f32 to vector<8x32xf32>
    %1384 = arith.addf %1383, %1382 : vector<8x32xf32>
    %1385 = arith.divf %1383, %1384 : vector<8x32xf32>
    %1386 = arith.mulf %1377, %1359 : vector<8x32xf32>
    %1387 = arith.mulf %1371, %1379 : vector<8x32xf32>
    %1388 = arith.addf %1386, %1387 : vector<8x32xf32>
    %1389 = math.tanh %1388 : vector<8x32xf32>
    %1390 = arith.mulf %1385, %1389 : vector<8x32xf32>
    %c112_396 = arith.constant 112 : index
    %c0_397 = arith.constant 0 : index
    %1391 = vector.load %arg9[%c112_396, %c0_397] : memref<128x32xf32, #tpu.memory_space<vmem>>, vector<8x32xf32>
    tpu.vector_store %arg9[%c112_396, %c0_397], %1390 {strides = array<i32>} : memref<128x32xf32, #tpu.memory_space<vmem>>, vector<8x32xf32>,
    %c120_398 = arith.constant 120 : index
    %c0_399 = arith.constant 0 : index
    %1392 = vector.load %arg8[%c120_398, %c0_399] : memref<128x128xf32, #tpu.memory_space<vmem>>, vector<8x128xf32>
    %cst_400 = arith.constant dense<0.000000e+00> : vector<8x128xf32>
    %1393 = tpu.matmul %1390, %957, %cst_400 {dimension_numbers = #tpu.dot_dimension_numbers<[1], [0], [0], [1], [0, 0, 1, 1], [], []>} : vector<8x32xf32>, vector<32x128xf32>, vector<8x128xf32> -> vector<8x128xf32>
    %1394 = arith.addf %1392, %1393 : vector<8x128xf32>
    %1395 = vector.extract_strided_slice %1394 {offsets = [0, 0], sizes = [8, 32], strides = [1, 1]} : vector<8x128xf32> to vector<8x32xf32>
    %1396 = arith.negf %1395 : vector<8x32xf32>
    %1397 = math.exp %1396 : vector<8x32xf32>
    %cst_401 = arith.constant 1.000000e+00 : f32
    %1398 = vector.broadcast %cst_401 : f32 to vector<8x32xf32>
    %1399 = arith.addf %1398, %1397 : vector<8x32xf32>
    %1400 = arith.divf %1398, %1399 : vector<8x32xf32>
    %1401 = vector.extract_strided_slice %1394 {offsets = [0, 32], sizes = [8, 32], strides = [1, 1]} : vector<8x128xf32> to vector<8x32xf32>
    %1402 = arith.negf %1401 : vector<8x32xf32>
    %1403 = math.exp %1402 : vector<8x32xf32>
    %cst_402 = arith.constant 1.000000e+00 : f32
    %1404 = vector.broadcast %cst_402 : f32 to vector<8x32xf32>
    %1405 = arith.addf %1404, %1403 : vector<8x32xf32>
    %1406 = arith.divf %1404, %1405 : vector<8x32xf32>
    %1407 = vector.extract_strided_slice %1394 {offsets = [0, 64], sizes = [8, 32], strides = [1, 1]} : vector<8x128xf32> to vector<8x32xf32>
    %1408 = math.tanh %1407 : vector<8x32xf32>
    %1409 = vector.extract_strided_slice %1394 {offsets = [0, 96], sizes = [8, 32], strides = [1, 1]} : vector<8x128xf32> to vector<8x32xf32>
    %1410 = arith.negf %1409 : vector<8x32xf32>
    %1411 = math.exp %1410 : vector<8x32xf32>
    %cst_403 = arith.constant 1.000000e+00 : f32
    %1412 = vector.broadcast %cst_403 : f32 to vector<8x32xf32>
    %1413 = arith.addf %1412, %1411 : vector<8x32xf32>
    %1414 = arith.divf %1412, %1413 : vector<8x32xf32>
    %1415 = arith.mulf %1406, %1388 : vector<8x32xf32>
    %1416 = arith.mulf %1400, %1408 : vector<8x32xf32>
    %1417 = arith.addf %1415, %1416 : vector<8x32xf32>
    %1418 = math.tanh %1417 : vector<8x32xf32>
    %1419 = arith.mulf %1414, %1418 : vector<8x32xf32>
    %c120_404 = arith.constant 120 : index
    %c0_405 = arith.constant 0 : index
    %1420 = vector.load %arg9[%c120_404, %c0_405] : memref<128x32xf32, #tpu.memory_space<vmem>>, vector<8x32xf32>
    tpu.vector_store %arg9[%c120_404, %c0_405], %1419 {strides = array<i32>} : memref<128x32xf32, #tpu.memory_space<vmem>>, vector<8x32xf32>,
    %c0_406 = arith.constant 0 : index
    %c0_407 = arith.constant 0 : index
    %1421 = vector.load %arg5[%c0_406, %c0_407] : memref<32x128xf32, #tpu.memory_space<vmem>>, vector<32x128xf32>
    %cst_408 = arith.constant dense<0.000000e+00> : vector<8x128xf32>
    %1422 = tpu.matmul %1419, %1421, %cst_408 {dimension_numbers = #tpu.dot_dimension_numbers<[1], [0], [0], [1], [0, 0, 1, 1], [], []>} : vector<8x32xf32>, vector<32x128xf32>, vector<8x128xf32> -> vector<8x128xf32>
    %c0_409 = arith.constant 0 : index
    %c0_410 = arith.constant 0 : index
    %1423 = vector.load %arg6[%c0_409, %c0_410] : memref<1x128xf32, #tpu.memory_space<vmem>>, vector<1x128xf32>
    %1424 = vector.broadcast %1423 : vector<1x128xf32> to vector<8x128xf32>
    %1425 = arith.addf %1422, %1424 : vector<8x128xf32>
    %c0_411 = arith.constant 0 : index
    %c0_412 = arith.constant 0 : index
    %1426 = vector.load %arg7[%c0_411, %c0_412] : memref<8x128xf32, #tpu.memory_space<vmem>>, vector<8x128xf32>
    tpu.vector_store %arg7[%c0_411, %c0_412], %1425 {strides = array<i32>} : memref<8x128xf32, #tpu.memory_space<vmem>>, vector<8x128xf32>,
    return
  }
}

</mosaic_0001>

<llo_original>
// kernel: tpu_custom_call.1
$region0: #{tpu_custom_call.1}
  #allocation0 [shape = 'u32[]', space=smem, size = 0x4, offset = 0x4, fixed_abs, tag = 'smem constant byte address 0x4 - core index']
  #allocation1 [shape = 'u32[144,128]{1,0:T(1,128)}', space=vmem, size = 0x12000, scoped, tag = 'internal scratch']
  #allocation2 [shape = 'f32[128,128]{1,0:T(8,128)}', space=vmem, size = 0x10000, scoped, tag = 'scratch operand']
  #allocation3 [shape = 'f32[128,32]{1,0:T(8,128)}', space=vmem, size = 0x10000, scoped, tag = 'scratch operand']
  %s0 = inlined_call_operand.vmem [shape: f32[128,8], index: 0, kind: input, shape index: {}]
  %s1 = inlined_call_operand.vmem [shape: f32[8,128], index: 1, kind: input, shape index: {}]
  %s2 = inlined_call_operand.hbm [shape: f32[2,32,128], index: 2, kind: input, shape index: {}]
  %s3 = inlined_call_operand.vmem [shape: f32[3,32,128], index: 3, kind: input, shape index: {}]
  %s4 = inlined_call_operand.vmem [shape: f32[3,1,128], index: 4, kind: input, shape index: {}]
  %s5 = inlined_call_operand.vmem [shape: f32[32,128], index: 5, kind: input, shape index: {}]
  %s6 = inlined_call_operand.vmem [shape: f32[1,128], index: 6, kind: input, shape index: {}]
  %s7 = inlined_call_operand.hbm [shape: f32[8,128], index: 7, kind: output, shape index: {}]
  %s8 = sld [smem:[#allocation0]]
  $region42: #{tpu_custom_call.1} parent=0
    _
  %s10 = ssub.s32 1, %s8
  %s11 = scalar_select 0, %s10, %s8
  $region1: #{tpu_custom_call.1} parent=0
    #allocation4 [shape = 'u8[32768]{0}', space=vmem, size = 0x8000, scoped, tag = 'input window, operand 2, single buffered']
    #allocation5 [shape = 's32[1]{0}', space=sflag, size = 0x4, scoped, tag = 'scoped memory for tpu_custom_call.1']
    #allocation6 [shape = 's32[1]{0}', space=sflag, size = 0x4, scoped, tag = 'scoped memory for tpu_custom_call.1']
    #allocation7 [shape = 'u8[4096]{0}', space=vmem, size = 0x1000, scoped, tag = 'output window, operand 0, single buffered']
    %12 = vsyncpa [#allocation5], 0
    %13 = vsyncpa [#allocation6], 0
    // Predicated region
    $region2: #{tpu_custom_call.1} parent=1 // pred_check
      _
    $region3: #{tpu_custom_call.1} parent=1 // pred_check_branch
      %15 = sbr.rel (0) target = $region5
    $region4: #{tpu_custom_call.1} parent=1 // pred_region
      _
    $region5: #{tpu_custom_call.1} parent=1 // pred_fallthru
      _
    // Predicated region
    $region6: #{tpu_custom_call.1} parent=1 // pred_check
      _
    $region7: #{tpu_custom_call.1} parent=1 // pred_check_branch
      %17 = sbr.rel (0) target = $region9
    $region8: #{tpu_custom_call.1} parent=1 // pred_region
      _
    $region9: #{tpu_custom_call.1} parent=1 // pred_fallthru
      _
    // Predicated region
    $region10: #{tpu_custom_call.1} parent=1 // pred_check
      _
    $region11: #{tpu_custom_call.1} parent=1 // pred_check_branch
      %19 = sbr.rel (0) target = $region13
    $region12: #{tpu_custom_call.1} parent=1 // pred_region
      %s21 = ssub.s32 1024, 1024
      %22 = vsyncadd [#allocation5], %s21
      %s23 = sshll.u32 [#allocation4], 4
      %s24 = int_to_ptr.vmem [resolvable:$true] %s23
      %29 = dma.hbm_to_vmem [thread:$0]  %s2, 1024, %s24, [#allocation5], 128, 128, 8
    $region13: #{tpu_custom_call.1} parent=1 // pred_fallthru
      _
    // Predicated region
    $region14: #{tpu_custom_call.1} parent=1 // pred_check
      _
    $region15: #{tpu_custom_call.1} parent=1 // pred_check_branch
      %31 = sbr.rel (0) target = $region17
    $region16: #{tpu_custom_call.1} parent=1 // pred_region
      _
    $region17: #{tpu_custom_call.1} parent=1 // pred_fallthru
      _
    // Predicated region
    $region18: #{tpu_custom_call.1} parent=1 // pred_check
      _
    $region19: #{tpu_custom_call.1} parent=1 // pred_check_branch
      %33 = sbr.rel (0) target = $region21
    $region20: #{tpu_custom_call.1} parent=1 // pred_region
      _
    $region21: #{tpu_custom_call.1} parent=1 // pred_fallthru
      _
    // Predicated region
    $region22: #{tpu_custom_call.1} parent=1 // pred_check
      _
    $region23: #{tpu_custom_call.1} parent=1 // pred_check_branch
      %35 = sbr.rel (0) target = $region25
    $region24: #{tpu_custom_call.1} parent=1 // pred_region
      _
    $region25: #{tpu_custom_call.1} parent=1 // pred_fallthru
      _
    // Predicated region
    $region26: #{tpu_custom_call.1} parent=1 // pred_check
      _
    $region27: #{tpu_custom_call.1} parent=1 // pred_check_branch
      %37 = sbr.rel (0) target = $region29
    $region28: #{tpu_custom_call.1} parent=1 // pred_region
      _
    $region29: #{tpu_custom_call.1} parent=1 // pred_fallthru
      _
    // Predicated region
    $region30: #{tpu_custom_call.1} parent=1 // pred_check
      _
    $region31: #{tpu_custom_call.1} parent=1 // pred_check_branch
      %39 = sbr.rel (0) target = $region33
    $region32: #{tpu_custom_call.1} parent=1 // pred_region
      %40 = dma.done [#allocation5], 1024
    $region33: #{tpu_custom_call.1} parent=1 // pred_fallthru
      _
    %v41 = vld [vmem:[%s0] sm:$0xff]
    %v42 = vld [vmem:[%s0 + $0x8] sm:$0xff]
    %v43 = vld [vmem:[%s0 + $0x10] sm:$0xff]
    %v44 = vld [vmem:[%s0 + $0x18] sm:$0xff]
    %v45 = vld [vmem:[%s0 + $0x20] sm:$0xff]
    %v46 = vld [vmem:[%s0 + $0x28] sm:$0xff]
    %v47 = vld [vmem:[%s0 + $0x30] sm:$0xff]
    %v48 = vld [vmem:[%s0 + $0x38] sm:$0xff]
    %v49 = vld [vmem:[%s0 + $0x40] sm:$0xff]
    %v50 = vld [vmem:[%s0 + $0x48] sm:$0xff]
    %v51 = vld [vmem:[%s0 + $0x50] sm:$0xff]
    %v52 = vld [vmem:[%s0 + $0x58] sm:$0xff]
    %v53 = vld [vmem:[%s0 + $0x60] sm:$0xff]
    %v54 = vld [vmem:[%s0 + $0x68] sm:$0xff]
    %v55 = vld [vmem:[%s0 + $0x70] sm:$0xff]
    %v56 = vld [vmem:[%s0 + $0x78] sm:$0xff]
    %v57 = vld [vmem:[%s1] sm:$0xff]
    %v58 = vld [vmem:[%s4] sm:$0x1]
    %v60 = vlaneseq
    %v61 = vshrl.u32 %v60, 7
    %v62 = vsub.s32 0, %v61
    %v63 = vrot.slane %v58, %v62
    %vm65 = vcmask 64512
    %v67 = vsel %vm65, %v41, 0
    %v70 = vsel %vm65, %v42, 0
    %v73 = vsel %vm65, %v43, 0
    %v76 = vsel %vm65, %v44, 0
    %v79 = vsel %vm65, %v45, 0
    %v82 = vsel %vm65, %v46, 0
    %v85 = vsel %vm65, %v47, 0
    %v88 = vsel %vm65, %v48, 0
    %v91 = vsel %vm65, %v49, 0
    %v94 = vsel %vm65, %v50, 0
    %v97 = vsel %vm65, %v51, 0
    %v100 = vsel %vm65, %v52, 0
    %v103 = vsel %vm65, %v53, 0
    %v106 = vsel %vm65, %v54, 0
    %v109 = vsel %vm65, %v55, 0
    %v112 = vsel %vm65, %v56, 0
    %114 = vmatprep.subr.mxu0 0.0
    %115 = vmatpush1.msra.mxu0 %v57
    %116 = vmatprep.subr.mxu0 0.0
    %117 = vmatpush1.msra.mxu0 0.0
    %118 = vmatprep.subr.mxu0 0.0
    %119 = vmatpush1.msra.mxu0 0.0
    %120 = vmatprep.subr.mxu0 0.0
    %121 = vmatpush1.msra.mxu0 0.0
    %122 = vmatprep.subr.mxu0 0.0
    %123 = vmatpush1.msra.mxu0 0.0
    %124 = vmatprep.subr.mxu0 0.0
    %125 = vmatpush1.msra.mxu0 0.0
    %126 = vmatprep.subr.mxu0 0.0
    %127 = vmatpush1.msra.mxu0 0.0
    %128 = vmatprep.subr.mxu0 0.0
    %129 = vmatpush1.msra.mxu0 0.0
    %130 = vmatprep.subr.mxu0 0.0
    %131 = vmatpush1.msra.mxu0 0.0
    %132 = vmatprep.subr.mxu0 0.0
    %133 = vmatpush1.msra.mxu0 0.0
    %134 = vmatprep.subr.mxu0 0.0
    %135 = vmatpush1.msra.mxu0 0.0
    %136 = vmatprep.subr.mxu0 0.0
    %137 = vmatpush1.msra.mxu0 0.0
    %138 = vmatprep.subr.mxu0 0.0
    %139 = vmatpush1.msra.mxu0 0.0
    %140 = vmatprep.subr.mxu0 0.0
    %141 = vmatpush1.msra.mxu0 0.0
    %142 = vmatprep.subr.mxu0 0.0
    %143 = vmatpush1.msra.mxu0 0.0
    %144 = vmatprep.subr.mxu0 0.0
    %145 = vmatpush1.msra.mxu0 0.0
    %146 = vmatprep.subr.mxu0 0.0
    %147 = vmatpush1.msra.mxu0 0.0
    %148 = vmatprep.subr.mxu0 0.0
    %149 = vmatpush1.msra.mxu0 0.0
    %150 = vmatprep.subr.mxu0 0.0
    %151 = vmatpush1.msra.mxu0 0.0
    %152 = vmatprep.subr.mxu0 0.0
    %153 = vmatpush1.msra.mxu0 0.0
    %154 = vmatprep.subr.mxu0 0.0
    %155 = vmatpush1.msra.mxu0 0.0
    %156 = vmatprep.subr.mxu0 0.0
    %157 = vmatpush1.msra.mxu0 0.0
    %158 = vmatprep.subr.mxu0 0.0
    %159 = vmatpush1.msra.mxu0 0.0
    %160 = vmatprep.subr.mxu0 0.0
    %161 = vmatpush1.msra.mxu0 0.0
    %162 = vmatprep.subr.mxu0 0.0
    %163 = vmatpush1.msra.mxu0 0.0
    %164 = vmatprep.subr.mxu0 0.0
    %165 = vmatpush1.msra.mxu0 0.0
    %166 = vmatprep.subr.mxu0 0.0
    %167 = vmatpush1.msra.mxu0 0.0
    %168 = vmatprep.subr.mxu0 0.0
    %169 = vmatpush1.msra.mxu0 0.0
    %170 = vmatprep.subr.mxu0 0.0
    %171 = vmatpush1.msra.mxu0 0.0
    %172 = vmatprep.subr.mxu0 0.0
    %173 = vmatpush1.msra.mxu0 0.0
    %174 = vmatprep.subr.mxu0 0.0
    %175 = vmatpush1.msra.mxu0 0.0
    %176 = vmatprep.subr.mxu0 0.0
    %177 = vmatpush1.msra.mxu0 0.0
    %178 = vmatprep.mubr.f32.mxu0 0.0
    %179 = vmatmul.mubr.f32.gmra.mrb[0].mxu0 %v67
    %v180 = vpop.f32.mrb[0].mxu0
    %v181 = vadd.f32 %v63, %v180
    %v182 = vpop.f32.mrb[0].mxu0
    %183 = vmatprep.mubr.f32.mxu0 0.0
    %184 = vmatmul.mubr.f32.gmra.mrb[0].mxu0 %v70
    %v185 = vpop.f32.mrb[0].mxu0
    %v186 = vadd.f32 %v63, %v185
    %v187 = vpop.f32.mrb[0].mxu0
    %188 = vmatprep.mubr.f32.mxu0 0.0
    %189 = vmatmul.mubr.f32.gmra.mrb[0].mxu0 %v73
    %v190 = vpop.f32.mrb[0].mxu0
    %v191 = vadd.f32 %v63, %v190
    %v192 = vpop.f32.mrb[0].mxu0
    %193 = vmatprep.mubr.f32.mxu0 0.0
    %194 = vmatmul.mubr.f32.gmra.mrb[0].mxu0 %v76
    %v195 = vpop.f32.mrb[0].mxu0
    %v196 = vadd.f32 %v63, %v195
    %v197 = vpop.f32.mrb[0].mxu0
    %198 = vmatprep.mubr.f32.mxu0 0.0
    %199 = vmatmul.mubr.f32.gmra.mrb[0].mxu0 %v79
    %v200 = vpop.f32.mrb[0].mxu0
    %v201 = vadd.f32 %v63, %v200
    %v202 = vpop.f32.mrb[0].mxu0
    %203 = vmatprep.mubr.f32.mxu0 0.0
    %204 = vmatmul.mubr.f32.gmra.mrb[0].mxu0 %v82
    %v205 = vpop.f32.mrb[0].mxu0
    %v206 = vadd.f32 %v63, %v205
    %v207 = vpop.f32.mrb[0].mxu0
    %208 = vmatprep.mubr.f32.mxu0 0.0
    %209 = vmatmul.mubr.f32.gmra.mrb[0].mxu0 %v85
    %v210 = vpop.f32.mrb[0].mxu0
    %v211 = vadd.f32 %v63, %v210
    %v212 = vpop.f32.mrb[0].mxu0
    %213 = vmatprep.mubr.f32.mxu0 0.0
    %214 = vmatmul.mubr.f32.gmra.mrb[0].mxu0 %v88
    %v215 = vpop.f32.mrb[0].mxu0
    %v216 = vadd.f32 %v63, %v215
    %v217 = vpop.f32.mrb[0].mxu0
    %218 = vmatprep.mubr.f32.mxu0 0.0
    %219 = vmatmul.mubr.f32.gmra.mrb[0].mxu0 %v91
    %v220 = vpop.f32.mrb[0].mxu0
    %v221 = vadd.f32 %v63, %v220
    %v222 = vpop.f32.mrb[0].mxu0
    %223 = vmatprep.mubr.f32.mxu0 0.0
    %224 = vmatmul.mubr.f32.gmra.mrb[0].mxu0 %v94
    %v225 = vpop.f32.mrb[0].mxu0
    %v226 = vadd.f32 %v63, %v225
    %v227 = vpop.f32.mrb[0].mxu0
    %228 = vmatprep.mubr.f32.mxu0 0.0
    %229 = vmatmul.mubr.f32.gmra.mrb[0].mxu0 %v97
    %v230 = vpop.f32.mrb[0].mxu0
    %v231 = vadd.f32 %v63, %v230
    %v232 = vpop.f32.mrb[0].mxu0
    %233 = vmatprep.mubr.f32.mxu0 0.0
    %234 = vmatmul.mubr.f32.gmra.mrb[0].mxu0 %v100
    %v235 = vpop.f32.mrb[0].mxu0
    %v236 = vadd.f32 %v63, %v235
    %v237 = vpop.f32.mrb[0].mxu0
    %238 = vmatprep.mubr.f32.mxu0 0.0
    %239 = vmatmul.mubr.f32.gmra.mrb[0].mxu0 %v103
    %v240 = vpop.f32.mrb[0].mxu0
    %v241 = vadd.f32 %v63, %v240
    %v242 = vpop.f32.mrb[0].mxu0
    %243 = vmatprep.mubr.f32.mxu0 0.0
    %244 = vmatmul.mubr.f32.gmra.mrb[0].mxu0 %v106
    %v245 = vpop.f32.mrb[0].mxu0
    %v246 = vadd.f32 %v63, %v245
    %v247 = vpop.f32.mrb[0].mxu0
    %248 = vmatprep.mubr.f32.mxu0 0.0
    %249 = vmatmul.mubr.f32.gmra.mrb[0].mxu0 %v109
    %v250 = vpop.f32.mrb[0].mxu0
    %v251 = vadd.f32 %v63, %v250
    %v252 = vpop.f32.mrb[0].mxu0
    %253 = vmatprep.mubr.f32.mxu0 0.0
    %254 = vmatmul.mubr.f32.gmra.mrb[0].mxu0 %v112
    %v255 = vpop.f32.mrb[0].mxu0
    %v256 = vadd.f32 %v63, %v255
    %v257 = vpop.f32.mrb[0].mxu0
    %258 = vdwg.mxu0
    %259 = vst [vmem:[#allocation2] sm:$0xff] %v181
    %260 = vst [vmem:[#allocation2 + $0x8] sm:$0xff] %v186
    %261 = vst [vmem:[#allocation2 + $0x10] sm:$0xff] %v191
    %262 = vst [vmem:[#allocation2 + $0x18] sm:$0xff] %v196
    %263 = vst [vmem:[#allocation2 + $0x20] sm:$0xff] %v201
    %264 = vst [vmem:[#allocation2 + $0x28] sm:$0xff] %v206
    %265 = vst [vmem:[#allocation2 + $0x30] sm:$0xff] %v211
    %266 = vst [vmem:[#allocation2 + $0x38] sm:$0xff] %v216
    %267 = vst [vmem:[#allocation2 + $0x40] sm:$0xff] %v221
    %268 = vst [vmem:[#allocation2 + $0x48] sm:$0xff] %v226
    %269 = vst [vmem:[#allocation2 + $0x50] sm:$0xff] %v231
    %270 = vst [vmem:[#allocation2 + $0x58] sm:$0xff] %v236
    %271 = vst [vmem:[#allocation2 + $0x60] sm:$0xff] %v241
    %272 = vst [vmem:[#allocation2 + $0x68] sm:$0xff] %v246
    %273 = vst [vmem:[#allocation2 + $0x70] sm:$0xff] %v251
    %274 = vst [vmem:[#allocation2 + $0x78] sm:$0xff] %v256
    %v275 = vld [vmem:[%s3] sm:$0xff]
    %v276 = vld [vmem:[%s3 + $0x8] sm:$0xff]
    %v277 = vld [vmem:[%s3 + $0x10] sm:$0xff]
    %v278 = vld [vmem:[%s3 + $0x18] sm:$0xff]
    %v279 = vld [vmem:[#allocation2] sm:$0xff]
    %v280 = vxor.u32 %v279, 2147483648
    %v281 = vmul.f32 %v280, 1.442695
    %v282 = vpow.pop %v281
    %v283 = vadd.f32 %v282, 1.0
    %v284 = vrcp.pop %v283
    %v285 = vmul.f32 1.0, %v284
    %v286 = vtanh.pop %v279
    %v287 = vmul.f32 %v285, 0.0
    %289 = vrot.lane.b32.xlu0 %v286, 64
    %v290 = vpop.permute.xlu0 %289
    %v292 = vmul.f32 %v285, %v290
    %294 = vrot.lane.b32.xlu0 %v292, 32
    %v295 = vpop.permute.xlu0 %294
    %v297 = vadd.f32 %v287, %v295
    %v298 = vtanh.pop %v297
    %300 = vrot.lane.b32.xlu0 %v298, 64
    %v301 = vpop.permute.xlu0 %300
    %v303 = vmul.f32 %v285, %v301
    %305 = vrot.lane.b32.xlu0 %v303, 32
    %v306 = vpop.permute.xlu0 %305
    %vm308 = vcmask 261120
    %309 = vst.msk [vmem:[#allocation3] sm:$0xff] %vm308, %v306
    %v310 = vld [vmem:[#allocation2 + $0x8] sm:$0xff]
    %v311 = vsel %vm308, %v306, 0
    %313 = vmatprep.subr.mxu0 0.0
    %314 = vmatpush1.msra.mxu0 %v275
    %315 = vmatprep.subr.mxu0 0.0
    %316 = vmatpush1.msra.mxu0 %v276
    %317 = vmatprep.subr.mxu0 0.0
    %318 = vmatpush1.msra.mxu0 %v277
    %319 = vmatprep.subr.mxu0 0.0
    %320 = vmatpush1.msra.mxu0 %v278
    %321 = vmatprep.subr.mxu0 0.0
    %322 = vmatpush1.msra.mxu0 0.0
    %323 = vmatprep.subr.mxu0 0.0
    %324 = vmatpush1.msra.mxu0 0.0
    %325 = vmatprep.subr.mxu0 0.0
    %326 = vmatpush1.msra.mxu0 0.0
    %327 = vmatprep.subr.mxu0 0.0
    %328 = vmatpush1.msra.mxu0 0.0
    %329 = vmatprep.subr.mxu0 0.0
    %330 = vmatpush1.msra.mxu0 0.0
    %331 = vmatprep.subr.mxu0 0.0
    %332 = vmatpush1.msra.mxu0 0.0
    %333 = vmatprep.subr.mxu0 0.0
    %334 = vmatpush1.msra.mxu0 0.0
    %335 = vmatprep.subr.mxu0 0.0
    %336 = vmatpush1.msra.mxu0 0.0
    %337 = vmatprep.subr.mxu0 0.0
    %338 = vmatpush1.msra.mxu0 0.0
    %339 = vmatprep.subr.mxu0 0.0
    %340 = vmatpush1.msra.mxu0 0.0
    %341 = vmatprep.subr.mxu0 0.0
    %342 = vmatpush1.msra.mxu0 0.0
    %343 = vmatprep.subr.mxu0 0.0
    %344 = vmatpush1.msra.mxu0 0.0
    %345 = vmatprep.subr.mxu0 0.0
    %346 = vmatpush1.msra.mxu0 0.0
    %347 = vmatprep.subr.mxu0 0.0
    %348 = vmatpush1.msra.mxu0 0.0
    %349 = vmatprep.subr.mxu0 0.0
    %350 = vmatpush1.msra.mxu0 0.0
    %351 = vmatprep.subr.mxu0 0.0
    %352 = vmatpush1.msra.mxu0 0.0
    %353 = vmatprep.subr.mxu0 0.0
    %354 = vmatpush1.msra.mxu0 0.0
    %355 = vmatprep.subr.mxu0 0.0
    %356 = vmatpush1.msra.mxu0 0.0
    %357 = vmatprep.subr.mxu0 0.0
    %358 = vmatpush1.msra.mxu0 0.0
    %359 = vmatprep.subr.mxu0 0.0
    %360 = vmatpush1.msra.mxu0 0.0
    %361 = vmatprep.subr.mxu0 0.0
    %362 = vmatpush1.msra.mxu0 0.0
    %363 = vmatprep.subr.mxu0 0.0
    %364 = vmatpush1.msra.mxu0 0.0
    %365 = vmatprep.subr.mxu0 0.0
    %366 = vmatpush1.msra.mxu0 0.0
    %367 = vmatprep.subr.mxu0 0.0
    %368 = vmatpush1.msra.mxu0 0.0
    %369 = vmatprep.subr.mxu0 0.0
    %370 = vmatpush1.msra.mxu0 0.0
    %371 = vmatprep.subr.mxu0 0.0
    %372 = vmatpush1.msra.mxu0 0.0
    %373 = vmatprep.subr.mxu0 0.0
    %374 = vmatpush1.msra.mxu0 0.0
    %375 = vmatprep.subr.mxu0 0.0
    %376 = vmatpush1.msra.mxu0 0.0
    %377 = vmatprep.mubr.f32.mxu0 0.0
    %378 = vmatmul.mubr.f32.gmra.mrb[0].mxu0 %v311
    %v379 = vpop.f32.mrb[0].mxu0
    %v380 = vadd.f32 0.0, %v379
    %v381 = vpop.f32.mrb[0].mxu0
    %382 = vdwg.mxu0
    %v383 = vadd.f32 %v310, %v380
    %v384 = vxor.u32 %v383, 2147483648
    %v385 = vmul.f32 %v384, 1.442695
    %v386 = vpow.pop %v385
    %v387 = vadd.f32 %v386, 1.0
    %v388 = vrcp.pop %v387
    %v389 = vmul.f32 1.0, %v388
    %v390 = vtanh.pop %v383
    %v391 = vmul.f32 %v389, %v297
    %393 = vrot.lane.b32.xlu0 %v390, 64
    %v394 = vpop.permute.xlu0 %393
    %v396 = vmul.f32 %v389, %v394
    %398 = vrot.lane.b32.xlu0 %v396, 32
    %v399 = vpop.permute.xlu0 %398
    %v401 = vadd.f32 %v391, %v399
    %v402 = vtanh.pop %v401
    %404 = vrot.lane.b32.xlu0 %v402, 64
    %v405 = vpop.permute.xlu0 %404
    %v407 = vmul.f32 %v389, %v405
    %409 = vrot.lane.b32.xlu0 %v407, 32
    %v410 = vpop.permute.xlu0 %409
    %412 = vst.msk [vmem:[#allocation3 + $0x8] sm:$0xff] %vm308, %v410
    %v413 = vld [vmem:[#allocation2 + $0x10] sm:$0xff]
    %v414 = vsel %vm308, %v410, 0
    %416 = vmatprep.subr.mxu0 0.0
    %417 = vmatpush1.msra.mxu0 %v275
    %418 = vmatprep.subr.mxu0 0.0
    %419 = vmatpush1.msra.mxu0 %v276
    %420 = vmatprep.subr.mxu0 0.0
    %421 = vmatpush1.msra.mxu0 %v277
    %422 = vmatprep.subr.mxu0 0.0
    %423 = vmatpush1.msra.mxu0 %v278
    %424 = vmatprep.subr.mxu0 0.0
    %425 = vmatpush1.msra.mxu0 0.0
    %426 = vmatprep.subr.mxu0 0.0
    %427 = vmatpush1.msra.mxu0 0.0
    %428 = vmatprep.subr.mxu0 0.0
    %429 = vmatpush1.msra.mxu0 0.0
    %430 = vmatprep.subr.mxu0 0.0
    %431 = vmatpush1.msra.mxu0 0.0
    %432 = vmatprep.subr.mxu0 0.0
    %433 = vmatpush1.msra.mxu0 0.0
    %434 = vmatprep.subr.mxu0 0.0
    %435 = vmatpush1.msra.mxu0 0.0
    %436 = vmatprep.subr.mxu0 0.0
    %437 = vmatpush1.msra.mxu0 0.0
    %438 = vmatprep.subr.mxu0 0.0
    %439 = vmatpush1.msra.mxu0 0.0
    %440 = vmatprep.subr.mxu0 0.0
    %441 = vmatpush1.msra.mxu0 0.0
    %442 = vmatprep.subr.mxu0 0.0
    %443 = vmatpush1.msra.mxu0 0.0
    %444 = vmatprep.subr.mxu0 0.0
    %445 = vmatpush1.msra.mxu0 0.0
    %446 = vmatprep.subr.mxu0 0.0
    %447 = vmatpush1.msra.mxu0 0.0
    %448 = vmatprep.subr.mxu0 0.0
    %449 = vmatpush1.msra.mxu0 0.0
    %450 = vmatprep.subr.mxu0 0.0
    %451 = vmatpush1.msra.mxu0 0.0
    %452 = vmatprep.subr.mxu0 0.0
    %453 = vmatpush1.msra.mxu0 0.0
    %454 = vmatprep.subr.mxu0 0.0
    %455 = vmatpush1.msra.mxu0 0.0
    %456 = vmatprep.subr.mxu0 0.0
    %457 = vmatpush1.msra.mxu0 0.0
    %458 = vmatprep.subr.mxu0 0.0
    %459 = vmatpush1.msra.mxu0 0.0
    %460 = vmatprep.subr.mxu0 0.0
    %461 = vmatpush1.msra.mxu0 0.0
    %462 = vmatprep.subr.mxu0 0.0
    %463 = vmatpush1.msra.mxu0 0.0
    %464 = vmatprep.subr.mxu0 0.0
    %465 = vmatpush1.msra.mxu0 0.0
    %466 = vmatprep.subr.mxu0 0.0
    %467 = vmatpush1.msra.mxu0 0.0
    %468 = vmatprep.subr.mxu0 0.0
    %469 = vmatpush1.msra.mxu0 0.0
    %470 = vmatprep.subr.mxu0 0.0
    %471 = vmatpush1.msra.mxu0 0.0
    %472 = vmatprep.subr.mxu0 0.0
    %473 = vmatpush1.msra.mxu0 0.0
    %474 = vmatprep.subr.mxu0 0.0
    %475 = vmatpush1.msra.mxu0 0.0
    %476 = vmatprep.subr.mxu0 0.0
    %477 = vmatpush1.msra.mxu0 0.0
    %478 = vmatprep.subr.mxu0 0.0
    %479 = vmatpush1.msra.mxu0 0.0
    %480 = vmatprep.mubr.f32.mxu0 0.0
    %481 = vmatmul.mubr.f32.gmra.mrb[0].mxu0 %v414
    %v482 = vpop.f32.mrb[0].mxu0
    %v483 = vadd.f32 0.0, %v482
    %v484 = vpop.f32.mrb[0].mxu0
    %485 = vdwg.mxu0
    %v486 = vadd.f32 %v413, %v483
    %v487 = vxor.u32 %v486, 2147483648
    %v488 = vmul.f32 %v487, 1.442695
    %v489 = vpow.pop %v488
    %v490 = vadd.f32 %v489, 1.0
    %v491 = vrcp.pop %v490
    %v492 = vmul.f32 1.0, %v491
    %v493 = vtanh.pop %v486
    %v494 = vmul.f32 %v492, %v401
    %496 = vrot.lane.b32.xlu0 %v493, 64
    %v497 = vpop.permute.xlu0 %496
    %v499 = vmul.f32 %v492, %v497
    %501 = vrot.lane.b32.xlu0 %v499, 32
    %v502 = vpop.permute.xlu0 %501
    %v504 = vadd.f32 %v494, %v502
    %v505 = vtanh.pop %v504
    %507 = vrot.lane.b32.xlu0 %v505, 64
    %v508 = vpop.permute.xlu0 %507
    %v510 = vmul.f32 %v492, %v508
    %512 = vrot.lane.b32.xlu0 %v510, 32
    %v513 = vpop.permute.xlu0 %512
    %515 = vst.msk [vmem:[#allocation3 + $0x10] sm:$0xff] %vm308, %v513
    %v516 = vld [vmem:[#allocation2 + $0x18] sm:$0xff]
    %v517 = vsel %vm308, %v513, 0
    %519 = vmatprep.subr.mxu0 0.0
    %520 = vmatpush1.msra.mxu0 %v275
    %521 = vmatprep.subr.mxu0 0.0
    %522 = vmatpush1.msra.mxu0 %v276
    %523 = vmatprep.subr.mxu0 0.0
    %524 = vmatpush1.msra.mxu0 %v277
    %525 = vmatprep.subr.mxu0 0.0
    %526 = vmatpush1.msra.mxu0 %v278
    %527 = vmatprep.subr.mxu0 0.0
    %528 = vmatpush1.msra.mxu0 0.0
    %529 = vmatprep.subr.mxu0 0.0
    %530 = vmatpush1.msra.mxu0 0.0
    %531 = vmatprep.subr.mxu0 0.0
    %532 = vmatpush1.msra.mxu0 0.0
    %533 = vmatprep.subr.mxu0 0.0
    %534 = vmatpush1.msra.mxu0 0.0
    %535 = vmatprep.subr.mxu0 0.0
    %536 = vmatpush1.msra.mxu0 0.0
    %537 = vmatprep.subr.mxu0 0.0
    %538 = vmatpush1.msra.mxu0 0.0
    %539 = vmatprep.subr.mxu0 0.0
    %540 = vmatpush1.msra.mxu0 0.0
    %541 = vmatprep.subr.mxu0 0.0
    %542 = vmatpush1.msra.mxu0 0.0
    %543 = vmatprep.subr.mxu0 0.0
    %544 = vmatpush1.msra.mxu0 0.0
    %545 = vmatprep.subr.mxu0 0.0
    %546 = vmatpush1.msra.mxu0 0.0
    %547 = vmatprep.subr.mxu0 0.0
    %548 = vmatpush1.msra.mxu0 0.0
    %549 = vmatprep.subr.mxu0 0.0
    %550 = vmatpush1.msra.mxu0 0.0
    %551 = vmatprep.subr.mxu0 0.0
    %552 = vmatpush1.msra.mxu0 0.0
    %553 = vmatprep.subr.mxu0 0.0
    %554 = vmatpush1.msra.mxu0 0.0
    %555 = vmatprep.subr.mxu0 0.0
    %556 = vmatpush1.msra.mxu0 0.0
    %557 = vmatprep.subr.mxu0 0.0
    %558 = vmatpush1.msra.mxu0 0.0
    %559 = vmatprep.subr.mxu0 0.0
    %560 = vmatpush1.msra.mxu0 0.0
    %561 = vmatprep.subr.mxu0 0.0
    %562 = vmatpush1.msra.mxu0 0.0
    %563 = vmatprep.subr.mxu0 0.0
    %564 = vmatpush1.msra.mxu0 0.0
    %565 = vmatprep.subr.mxu0 0.0
    %566 = vmatpush1.msra.mxu0 0.0
    %567 = vmatprep.subr.mxu0 0.0
    %568 = vmatpush1.msra.mxu0 0.0
    %569 = vmatprep.subr.mxu0 0.0
    %570 = vmatpush1.msra.mxu0 0.0
    %571 = vmatprep.subr.mxu0 0.0
    %572 = vmatpush1.msra.mxu0 0.0
    %573 = vmatprep.subr.mxu0 0.0
    %574 = vmatpush1.msra.mxu0 0.0
    %575 = vmatprep.subr.mxu0 0.0
    %576 = vmatpush1.msra.mxu0 0.0
    %577 = vmatprep.subr.mxu0 0.0
    %578 = vmatpush1.msra.mxu0 0.0
    %579 = vmatprep.subr.mxu0 0.0
    %580 = vmatpush1.msra.mxu0 0.0
    %581 = vmatprep.subr.mxu0 0.0
    %582 = vmatpush1.msra.mxu0 0.0
    %583 = vmatprep.mubr.f32.mxu0 0.0
    %584 = vmatmul.mubr.f32.gmra.mrb[0].mxu0 %v517
    %v585 = vpop.f32.mrb[0].mxu0
    %v586 = vadd.f32 0.0, %v585
    %v587 = vpop.f32.mrb[0].mxu0
    %588 = vdwg.mxu0
    %v589 = vadd.f32 %v516, %v586
    %v590 = vxor.u32 %v589, 2147483648
    %v591 = vmul.f32 %v590, 1.442695
    %v592 = vpow.pop %v591
    %v593 = vadd.f32 %v592, 1.0
    %v594 = vrcp.pop %v593
    %v595 = vmul.f32 1.0, %v594
    %v596 = vtanh.pop %v589
    %v597 = vmul.f32 %v595, %v504
    %599 = vrot.lane.b32.xlu0 %v596, 64
    %v600 = vpop.permute.xlu0 %599
    %v602 = vmul.f32 %v595, %v600
    %604 = vrot.lane.b32.xlu0 %v602, 32
    %v605 = vpop.permute.xlu0 %604
    %v607 = vadd.f32 %v597, %v605
    %v608 = vtanh.pop %v607
    %610 = vrot.lane.b32.xlu0 %v608, 64
    %v611 = vpop.permute.xlu0 %610
    %v613 = vmul.f32 %v595, %v611
    %615 = vrot.lane.b32.xlu0 %v613, 32
    %v616 = vpop.permute.xlu0 %615
    %618 = vst.msk [vmem:[#allocation3 + $0x18] sm:$0xff] %vm308, %v616
    %v619 = vld [vmem:[#allocation2 + $0x20] sm:$0xff]
    %v620 = vsel %vm308, %v616, 0
    %622 = vmatprep.subr.mxu0 0.0
    %623 = vmatpush1.msra.mxu0 %v275
    %624 = vmatprep.subr.mxu0 0.0
    %625 = vmatpush1.msra.mxu0 %v276
    %626 = vmatprep.subr.mxu0 0.0
    %627 = vmatpush1.msra.mxu0 %v277
    %628 = vmatprep.subr.mxu0 0.0
    %629 = vmatpush1.msra.mxu0 %v278
    %630 = vmatprep.subr.mxu0 0.0
    %631 = vmatpush1.msra.mxu0 0.0
    %632 = vmatprep.subr.mxu0 0.0
    %633 = vmatpush1.msra.mxu0 0.0
    %634 = vmatprep.subr.mxu0 0.0
    %635 = vmatpush1.msra.mxu0 0.0
    %636 = vmatprep.subr.mxu0 0.0
    %637 = vmatpush1.msra.mxu0 0.0
    %638 = vmatprep.subr.mxu0 0.0
    %639 = vmatpush1.msra.mxu0 0.0
    %640 = vmatprep.subr.mxu0 0.0
    %641 = vmatpush1.msra.mxu0 0.0
    %642 = vmatprep.subr.mxu0 0.0
    %643 = vmatpush1.msra.mxu0 0.0
    %644 = vmatprep.subr.mxu0 0.0
    %645 = vmatpush1.msra.mxu0 0.0
    %646 = vmatprep.subr.mxu0 0.0
    %647 = vmatpush1.msra.mxu0 0.0
    %648 = vmatprep.subr.mxu0 0.0
    %649 = vmatpush1.msra.mxu0 0.0
    %650 = vmatprep.subr.mxu0 0.0
    %651 = vmatpush1.msra.mxu0 0.0
    %652 = vmatprep.subr.mxu0 0.0
    %653 = vmatpush1.msra.mxu0 0.0
    %654 = vmatprep.subr.mxu0 0.0
    %655 = vmatpush1.msra.mxu0 0.0
    %656 = vmatprep.subr.mxu0 0.0
    %657 = vmatpush1.msra.mxu0 0.0
    %658 = vmatprep.subr.mxu0 0.0
    %659 = vmatpush1.msra.mxu0 0.0
    %660 = vmatprep.subr.mxu0 0.0
    %661 = vmatpush1.msra.mxu0 0.0
    %662 = vmatprep.subr.mxu0 0.0
    %663 = vmatpush1.msra.mxu0 0.0
    %664 = vmatprep.subr.mxu0 0.0
    %665 = vmatpush1.msra.mxu0 0.0
    %666 = vmatprep.subr.mxu0 0.0
    %667 = vmatpush1.msra.mxu0 0.0
    %668 = vmatprep.subr.mxu0 0.0
    %669 = vmatpush1.msra.mxu0 0.0
    %670 = vmatprep.subr.mxu0 0.0
    %671 = vmatpush1.msra.mxu0 0.0
    %672 = vmatprep.subr.mxu0 0.0
    %673 = vmatpush1.msra.mxu0 0.0
    %674 = vmatprep.subr.mxu0 0.0
    %675 = vmatpush1.msra.mxu0 0.0
    %676 = vmatprep.subr.mxu0 0.0
    %677 = vmatpush1.msra.mxu0 0.0
    %678 = vmatprep.subr.mxu0 0.0
    %679 = vmatpush1.msra.mxu0 0.0
    %680 = vmatprep.subr.mxu0 0.0
    %681 = vmatpush1.msra.mxu0 0.0
    %682 = vmatprep.subr.mxu0 0.0
    %683 = vmatpush1.msra.mxu0 0.0
    %684 = vmatprep.subr.mxu0 0.0
    %685 = vmatpush1.msra.mxu0 0.0
    %686 = vmatprep.mubr.f32.mxu0 0.0
    %687 = vmatmul.mubr.f32.gmra.mrb[0].mxu0 %v620
    %v688 = vpop.f32.mrb[0].mxu0
    %v689 = vadd.f32 0.0, %v688
    %v690 = vpop.f32.mrb[0].mxu0
    %691 = vdwg.mxu0
    %v692 = vadd.f32 %v619, %v689
    %v693 = vxor.u32 %v692, 2147483648
    %v694 = vmul.f32 %v693, 1.442695
    %v695 = vpow.pop %v694
    %v696 = vadd.f32 %v695, 1.0
    %v697 = vrcp.pop %v696
    %v698 = vmul.f32 1.0, %v697
    %v699 = vtanh.pop %v692
    %v700 = vmul.f32 %v698, %v607
    %702 = vrot.lane.b32.xlu0 %v699, 64
    %v703 = vpop.permute.xlu0 %702
    %v705 = vmul.f32 %v698, %v703
    %707 = vrot.lane.b32.xlu0 %v705, 32
    %v708 = vpop.permute.xlu0 %707
    %v710 = vadd.f32 %v700, %v708
    %v711 = vtanh.pop %v710
    %713 = vrot.lane.b32.xlu0 %v711, 64
    %v714 = vpop.permute.xlu0 %713
    %v716 = vmul.f32 %v698, %v714
    %718 = vrot.lane.b32.xlu0 %v716, 32
    %v719 = vpop.permute.xlu0 %718
    %721 = vst.msk [vmem:[#allocation3 + $0x20] sm:$0xff] %vm308, %v719
    %v722 = vld [vmem:[#allocation2 + $0x28] sm:$0xff]
    %v723 = vsel %vm308, %v719, 0
    %725 = vmatprep.subr.mxu0 0.0
    %726 = vmatpush1.msra.mxu0 %v275
    %727 = vmatprep.subr.mxu0 0.0
    %728 = vmatpush1.msra.mxu0 %v276
    %729 = vmatprep.subr.mxu0 0.0
    %730 = vmatpush1.msra.mxu0 %v277
    %731 = vmatprep.subr.mxu0 0.0
    %732 = vmatpush1.msra.mxu0 %v278
    %733 = vmatprep.subr.mxu0 0.0
    %734 = vmatpush1.msra.mxu0 0.0
    %735 = vmatprep.subr.mxu0 0.0
    %736 = vmatpush1.msra.mxu0 0.0
    %737 = vmatprep.subr.mxu0 0.0
    %738 = vmatpush1.msra.mxu0 0.0
    %739 = vmatprep.subr.mxu0 0.0
    %740 = vmatpush1.msra.mxu0 0.0
    %741 = vmatprep.subr.mxu0 0.0
    %742 = vmatpush1.msra.mxu0 0.0
    %743 = vmatprep.subr.mxu0 0.0
    %744 = vmatpush1.msra.mxu0 0.0
    %745 = vmatprep.subr.mxu0 0.0
    %746 = vmatpush1.msra.mxu0 0.0
    %747 = vmatprep.subr.mxu0 0.0
    %748 = vmatpush1.msra.mxu0 0.0
    %749 = vmatprep.subr.mxu0 0.0
    %750 = vmatpush1.msra.mxu0 0.0
    %751 = vmatprep.subr.mxu0 0.0
    %752 = vmatpush1.msra.mxu0 0.0
    %753 = vmatprep.subr.mxu0 0.0
    %754 = vmatpush1.msra.mxu0 0.0
    %755 = vmatprep.subr.mxu0 0.0
    %756 = vmatpush1.msra.mxu0 0.0
    %757 = vmatprep.subr.mxu0 0.0
    %758 = vmatpush1.msra.mxu0 0.0
    %759 = vmatprep.subr.mxu0 0.0
    %760 = vmatpush1.msra.mxu0 0.0
    %761 = vmatprep.subr.mxu0 0.0
    %762 = vmatpush1.msra.mxu0 0.0
    %763 = vmatprep.subr.mxu0 0.0
    %764 = vmatpush1.msra.mxu0 0.0
    %765 = vmatprep.subr.mxu0 0.0
    %766 = vmatpush1.msra.mxu0 0.0
    %767 = vmatprep.subr.mxu0 0.0
    %768 = vmatpush1.msra.mxu0 0.0
    %769 = vmatprep.subr.mxu0 0.0
    %770 = vmatpush1.msra.mxu0 0.0
    %771 = vmatprep.subr.mxu0 0.0
    %772 = vmatpush1.msra.mxu0 0.0
    %773 = vmatprep.subr.mxu0 0.0
    %774 = vmatpush1.msra.mxu0 0.0
    %775 = vmatprep.subr.mxu0 0.0
    %776 = vmatpush1.msra.mxu0 0.0
    %777 = vmatprep.subr.mxu0 0.0
    %778 = vmatpush1.msra.mxu0 0.0
    %779 = vmatprep.subr.mxu0 0.0
    %780 = vmatpush1.msra.mxu0 0.0
    %781 = vmatprep.subr.mxu0 0.0
    %782 = vmatpush1.msra.mxu0 0.0
    %783 = vmatprep.subr.mxu0 0.0
    %784 = vmatpush1.msra.mxu0 0.0
    %785 = vmatprep.subr.mxu0 0.0
    %786 = vmatpush1.msra.mxu0 0.0
    %787 = vmatprep.subr.mxu0 0.0
    %788 = vmatpush1.msra.mxu0 0.0
    %789 = vmatprep.mubr.f32.mxu0 0.0
    %790 = vmatmul.mubr.f32.gmra.mrb[0].mxu0 %v723
    %v791 = vpop.f32.mrb[0].mxu0
    %v792 = vadd.f32 0.0, %v791
    %v793 = vpop.f32.mrb[0].mxu0
    %794 = vdwg.mxu0
    %v795 = vadd.f32 %v722, %v792
    %v796 = vxor.u32 %v795, 2147483648
    %v797 = vmul.f32 %v796, 1.442695
    %v798 = vpow.pop %v797
    %v799 = vadd.f32 %v798, 1.0
    %v800 = vrcp.pop %v799
    %v801 = vmul.f32 1.0, %v800
    %v802 = vtanh.pop %v795
    %v803 = vmul.f32 %v801, %v710
    %805 = vrot.lane.b32.xlu0 %v802, 64
    %v806 = vpop.permute.xlu0 %805
    %v808 = vmul.f32 %v801, %v806
    %810 = vrot.lane.b32.xlu0 %v808, 32
    %v811 = vpop.permute.xlu0 %810
    %v813 = vadd.f32 %v803, %v811
    %v814 = vtanh.pop %v813
    %816 = vrot.lane.b32.xlu0 %v814, 64
    %v817 = vpop.permute.xlu0 %816
    %v819 = vmul.f32 %v801, %v817
    %821 = vrot.lane.b32.xlu0 %v819, 32
    %v822 = vpop.permute.xlu0 %821
    %824 = vst.msk [vmem:[#allocation3 + $0x28] sm:$0xff] %vm308, %v822
    %v825 = vld [vmem:[#allocation2 + $0x30] sm:$0xff]
    %v826 = vsel %vm308, %v822, 0
    %828 = vmatprep.subr.mxu0 0.0
    %829 = vmatpush1.msra.mxu0 %v275
    %830 = vmatprep.subr.mxu0 0.0
    %831 = vmatpush1.msra.mxu0 %v276
    %832 = vmatprep.subr.mxu0 0.0
    %833 = vmatpush1.msra.mxu0 %v277
    %834 = vmatprep.subr.mxu0 0.0
    %835 = vmatpush1.msra.mxu0 %v278
    %836 = vmatprep.subr.mxu0 0.0
    %837 = vmatpush1.msra.mxu0 0.0
    %838 = vmatprep.subr.mxu0 0.0
    %839 = vmatpush1.msra.mxu0 0.0
    %840 = vmatprep.subr.mxu0 0.0
    %841 = vmatpush1.msra.mxu0 0.0
    %842 = vmatprep.subr.mxu0 0.0
    %843 = vmatpush1.msra.mxu0 0.0
    %844 = vmatprep.subr.mxu0 0.0
    %845 = vmatpush1.msra.mxu0 0.0
    %846 = vmatprep.subr.mxu0 0.0
    %847 = vmatpush1.msra.mxu0 0.0
    %848 = vmatprep.subr.mxu0 0.0
    %849 = vmatpush1.msra.mxu0 0.0
    %850 = vmatprep.subr.mxu0 0.0
    %851 = vmatpush1.msra.mxu0 0.0
    %852 = vmatprep.subr.mxu0 0.0
    %853 = vmatpush1.msra.mxu0 0.0
    %854 = vmatprep.subr.mxu0 0.0
    %855 = vmatpush1.msra.mxu0 0.0
    %856 = vmatprep.subr.mxu0 0.0
    %857 = vmatpush1.msra.mxu0 0.0
    %858 = vmatprep.subr.mxu0 0.0
    %859 = vmatpush1.msra.mxu0 0.0
    %860 = vmatprep.subr.mxu0 0.0
    %861 = vmatpush1.msra.mxu0 0.0
    %862 = vmatprep.subr.mxu0 0.0
    %863 = vmatpush1.msra.mxu0 0.0
    %864 = vmatprep.subr.mxu0 0.0
    %865 = vmatpush1.msra.mxu0 0.0
    %866 = vmatprep.subr.mxu0 0.0
    %867 = vmatpush1.msra.mxu0 0.0
    %868 = vmatprep.subr.mxu0 0.0
    %869 = vmatpush1.msra.mxu0 0.0
    %870 = vmatprep.subr.mxu0 0.0
    %871 = vmatpush1.msra.mxu0 0.0
    %872 = vmatprep.subr.mxu0 0.0
    %873 = vmatpush1.msra.mxu0 0.0
    %874 = vmatprep.subr.mxu0 0.0
    %875 = vmatpush1.msra.mxu0 0.0
    %876 = vmatprep.subr.mxu0 0.0
    %877 = vmatpush1.msra.mxu0 0.0
    %878 = vmatprep.subr.mxu0 0.0
    %879 = vmatpush1.msra.mxu0 0.0
    %880 = vmatprep.subr.mxu0 0.0
    %881 = vmatpush1.msra.mxu0 0.0
    %882 = vmatprep.subr.mxu0 0.0
    %883 = vmatpush1.msra.mxu0 0.0
    %884 = vmatprep.subr.mxu0 0.0
    %885 = vmatpush1.msra.mxu0 0.0
    %886 = vmatprep.subr.mxu0 0.0
    %887 = vmatpush1.msra.mxu0 0.0
    %888 = vmatprep.subr.mxu0 0.0
    %889 = vmatpush1.msra.mxu0 0.0
    %890 = vmatprep.subr.mxu0 0.0
    %891 = vmatpush1.msra.mxu0 0.0
    %892 = vmatprep.mubr.f32.mxu0 0.0
    %893 = vmatmul.mubr.f32.gmra.mrb[0].mxu0 %v826
    %v894 = vpop.f32.mrb[0].mxu0
    %v895 = vadd.f32 0.0, %v894
    %v896 = vpop.f32.mrb[0].mxu0
    %897 = vdwg.mxu0
    %v898 = vadd.f32 %v825, %v895
    %v899 = vxor.u32 %v898, 2147483648
    %v900 = vmul.f32 %v899, 1.442695
    %v901 = vpow.pop %v900
    %v902 = vadd.f32 %v901, 1.0
    %v903 = vrcp.pop %v902
    %v904 = vmul.f32 1.0, %v903
    %v905 = vtanh.pop %v898
    %v906 = vmul.f32 %v904, %v813
    %908 = vrot.lane.b32.xlu0 %v905, 64
    %v909 = vpop.permute.xlu0 %908
    %v911 = vmul.f32 %v904, %v909
    %913 = vrot.lane.b32.xlu0 %v911, 32
    %v914 = vpop.permute.xlu0 %913
    %v916 = vadd.f32 %v906, %v914
    %v917 = vtanh.pop %v916
    %919 = vrot.lane.b32.xlu0 %v917, 64
    %v920 = vpop.permute.xlu0 %919
    %v922 = vmul.f32 %v904, %v920
    %924 = vrot.lane.b32.xlu0 %v922, 32
    %v925 = vpop.permute.xlu0 %924
    %927 = vst.msk [vmem:[#allocation3 + $0x30] sm:$0xff] %vm308, %v925
    %v928 = vld [vmem:[#allocation2 + $0x38] sm:$0xff]
    %v929 = vsel %vm308, %v925, 0
    %931 = vmatprep.subr.mxu0 0.0
    %932 = vmatpush1.msra.mxu0 %v275
    %933 = vmatprep.subr.mxu0 0.0
    %934 = vmatpush1.msra.mxu0 %v276
    %935 = vmatprep.subr.mxu0 0.0
    %936 = vmatpush1.msra.mxu0 %v277
    %937 = vmatprep.subr.mxu0 0.0
    %938 = vmatpush1.msra.mxu0 %v278
    %939 = vmatprep.subr.mxu0 0.0
    %940 = vmatpush1.msra.mxu0 0.0
    %941 = vmatprep.subr.mxu0 0.0
    %942 = vmatpush1.msra.mxu0 0.0
    %943 = vmatprep.subr.mxu0 0.0
    %944 = vmatpush1.msra.mxu0 0.0
    %945 = vmatprep.subr.mxu0 0.0
    %946 = vmatpush1.msra.mxu0 0.0
    %947 = vmatprep.subr.mxu0 0.0
    %948 = vmatpush1.msra.mxu0 0.0
    %949 = vmatprep.subr.mxu0 0.0
    %950 = vmatpush1.msra.mxu0 0.0
    %951 = vmatprep.subr.mxu0 0.0
    %952 = vmatpush1.msra.mxu0 0.0
    %953 = vmatprep.subr.mxu0 0.0
    %954 = vmatpush1.msra.mxu0 0.0
    %955 = vmatprep.subr.mxu0 0.0
    %956 = vmatpush1.msra.mxu0 0.0
    %957 = vmatprep.subr.mxu0 0.0
    %958 = vmatpush1.msra.mxu0 0.0
    %959 = vmatprep.subr.mxu0 0.0
    %960 = vmatpush1.msra.mxu0 0.0
    %961 = vmatprep.subr.mxu0 0.0
    %962 = vmatpush1.msra.mxu0 0.0
    %963 = vmatprep.subr.mxu0 0.0
    %964 = vmatpush1.msra.mxu0 0.0
    %965 = vmatprep.subr.mxu0 0.0
    %966 = vmatpush1.msra.mxu0 0.0
    %967 = vmatprep.subr.mxu0 0.0
    %968 = vmatpush1.msra.mxu0 0.0
    %969 = vmatprep.subr.mxu0 0.0
    %970 = vmatpush1.msra.mxu0 0.0
    %971 = vmatprep.subr.mxu0 0.0
    %972 = vmatpush1.msra.mxu0 0.0
    %973 = vmatprep.subr.mxu0 0.0
    %974 = vmatpush1.msra.mxu0 0.0
    %975 = vmatprep.subr.mxu0 0.0
    %976 = vmatpush1.msra.mxu0 0.0
    %977 = vmatprep.subr.mxu0 0.0
    %978 = vmatpush1.msra.mxu0 0.0
    %979 = vmatprep.subr.mxu0 0.0
    %980 = vmatpush1.msra.mxu0 0.0
    %981 = vmatprep.subr.mxu0 0.0
    %982 = vmatpush1.msra.mxu0 0.0
    %983 = vmatprep.subr.mxu0 0.0
    %984 = vmatpush1.msra.mxu0 0.0
    %985 = vmatprep.subr.mxu0 0.0
    %986 = vmatpush1.msra.mxu0 0.0
    %987 = vmatprep.subr.mxu0 0.0
    %988 = vmatpush1.msra.mxu0 0.0
    %989 = vmatprep.subr.mxu0 0.0
    %990 = vmatpush1.msra.mxu0 0.0
    %991 = vmatprep.subr.mxu0 0.0
    %992 = vmatpush1.msra.mxu0 0.0
    %993 = vmatprep.subr.mxu0 0.0
    %994 = vmatpush1.msra.mxu0 0.0
    %995 = vmatprep.mubr.f32.mxu0 0.0
    %996 = vmatmul.mubr.f32.gmra.mrb[0].mxu0 %v929
    %v997 = vpop.f32.mrb[0].mxu0
    %v998 = vadd.f32 0.0, %v997
    %v999 = vpop.f32.mrb[0].mxu0
    %1000 = vdwg.mxu0
    %v1001 = vadd.f32 %v928, %v998
    %v1002 = vxor.u32 %v1001, 2147483648
    %v1003 = vmul.f32 %v1002, 1.442695
    %v1004 = vpow.pop %v1003
    %v1005 = vadd.f32 %v1004, 1.0
    %v1006 = vrcp.pop %v1005
    %v1007 = vmul.f32 1.0, %v1006
    %v1008 = vtanh.pop %v1001
    %v1009 = vmul.f32 %v1007, %v916
    %1011 = vrot.lane.b32.xlu0 %v1008, 64
    %v1012 = vpop.permute.xlu0 %1011
    %v1014 = vmul.f32 %v1007, %v1012
    %1016 = vrot.lane.b32.xlu0 %v1014, 32
    %v1017 = vpop.permute.xlu0 %1016
    %v1019 = vadd.f32 %v1009, %v1017
    %v1020 = vtanh.pop %v1019
    %1022 = vrot.lane.b32.xlu0 %v1020, 64
    %v1023 = vpop.permute.xlu0 %1022
    %v1025 = vmul.f32 %v1007, %v1023
    %1027 = vrot.lane.b32.xlu0 %v1025, 32
    %v1028 = vpop.permute.xlu0 %1027
    %1030 = vst.msk [vmem:[#allocation3 + $0x38] sm:$0xff] %vm308, %v1028
    %v1031 = vld [vmem:[#allocation2 + $0x40] sm:$0xff]
    %v1032 = vsel %vm308, %v1028, 0
    %1034 = vmatprep.subr.mxu0 0.0
    %1035 = vmatpush1.msra.mxu0 %v275
    %1036 = vmatprep.subr.mxu0 0.0
    %1037 = vmatpush1.msra.mxu0 %v276
    %1038 = vmatprep.subr.mxu0 0.0
    %1039 = vmatpush1.msra.mxu0 %v277
    %1040 = vmatprep.subr.mxu0 0.0
    %1041 = vmatpush1.msra.mxu0 %v278
    %1042 = vmatprep.subr.mxu0 0.0
    %1043 = vmatpush1.msra.mxu0 0.0
    %1044 = vmatprep.subr.mxu0 0.0
    %1045 = vmatpush1.msra.mxu0 0.0
    %1046 = vmatprep.subr.mxu0 0.0
    %1047 = vmatpush1.msra.mxu0 0.0
    %1048 = vmatprep.subr.mxu0 0.0
    %1049 = vmatpush1.msra.mxu0 0.0
    %1050 = vmatprep.subr.mxu0 0.0
    %1051 = vmatpush1.msra.mxu0 0.0
    %1052 = vmatprep.subr.mxu0 0.0
    %1053 = vmatpush1.msra.mxu0 0.0
    %1054 = vmatprep.subr.mxu0 0.0
    %1055 = vmatpush1.msra.mxu0 0.0
    %1056 = vmatprep.subr.mxu0 0.0
    %1057 = vmatpush1.msra.mxu0 0.0
    %1058 = vmatprep.subr.mxu0 0.0
    %1059 = vmatpush1.msra.mxu0 0.0
    %1060 = vmatprep.subr.mxu0 0.0
    %1061 = vmatpush1.msra.mxu0 0.0
    %1062 = vmatprep.subr.mxu0 0.0
    %1063 = vmatpush1.msra.mxu0 0.0
    %1064 = vmatprep.subr.mxu0 0.0
    %1065 = vmatpush1.msra.mxu0 0.0
    %1066 = vmatprep.subr.mxu0 0.0
    %1067 = vmatpush1.msra.mxu0 0.0
    %1068 = vmatprep.subr.mxu0 0.0
    %1069 = vmatpush1.msra.mxu0 0.0
    %1070 = vmatprep.subr.mxu0 0.0
    %1071 = vmatpush1.msra.mxu0 0.0
    %1072 = vmatprep.subr.mxu0 0.0
    %1073 = vmatpush1.msra.mxu0 0.0
    %1074 = vmatprep.subr.mxu0 0.0
    %1075 = vmatpush1.msra.mxu0 0.0
    %1076 = vmatprep.subr.mxu0 0.0
    %1077 = vmatpush1.msra.mxu0 0.0
    %1078 = vmatprep.subr.mxu0 0.0
    %1079 = vmatpush1.msra.mxu0 0.0
    %1080 = vmatprep.subr.mxu0 0.0
    %1081 = vmatpush1.msra.mxu0 0.0
    %1082 = vmatprep.subr.mxu0 0.0
    %1083 = vmatpush1.msra.mxu0 0.0
    %1084 = vmatprep.subr.mxu0 0.0
    %1085 = vmatpush1.msra.mxu0 0.0
    %1086 = vmatprep.subr.mxu0 0.0
    %1087 = vmatpush1.msra.mxu0 0.0
    %1088 = vmatprep.subr.mxu0 0.0
    %1089 = vmatpush1.msra.mxu0 0.0
    %1090 = vmatprep.subr.mxu0 0.0
    %1091 = vmatpush1.msra.mxu0 0.0
    %1092 = vmatprep.subr.mxu0 0.0
    %1093 = vmatpush1.msra.mxu0 0.0
    %1094 = vmatprep.subr.mxu0 0.0
    %1095 = vmatpush1.msra.mxu0 0.0
    %1096 = vmatprep.subr.mxu0 0.0
    %1097 = vmatpush1.msra.mxu0 0.0
    %1098 = vmatprep.mubr.f32.mxu0 0.0
    %1099 = vmatmul.mubr.f32.gmra.mrb[0].mxu0 %v1032
    %v1100 = vpop.f32.mrb[0].mxu0
    %v1101 = vadd.f32 0.0, %v1100
    %v1102 = vpop.f32.mrb[0].mxu0
    %1103 = vdwg.mxu0
    %v1104 = vadd.f32 %v1031, %v1101
    %v1105 = vxor.u32 %v1104, 2147483648
    %v1106 = vmul.f32 %v1105, 1.442695
    %v1107 = vpow.pop %v1106
    %v1108 = vadd.f32 %v1107, 1.0
    %v1109 = vrcp.pop %v1108
    %v1110 = vmul.f32 1.0, %v1109
    %v1111 = vtanh.pop %v1104
    %v1112 = vmul.f32 %v1110, %v1019
    %1114 = vrot.lane.b32.xlu0 %v1111, 64
    %v1115 = vpop.permute.xlu0 %1114
    %v1117 = vmul.f32 %v1110, %v1115
    %1119 = vrot.lane.b32.xlu0 %v1117, 32
    %v1120 = vpop.permute.xlu0 %1119
    %v1122 = vadd.f32 %v1112, %v1120
    %v1123 = vtanh.pop %v1122
    %1125 = vrot.lane.b32.xlu0 %v1123, 64
    %v1126 = vpop.permute.xlu0 %1125
    %v1128 = vmul.f32 %v1110, %v1126
    %1130 = vrot.lane.b32.xlu0 %v1128, 32
    %v1131 = vpop.permute.xlu0 %1130
    %1133 = vst.msk [vmem:[#allocation3 + $0x40] sm:$0xff] %vm308, %v1131
    %v1134 = vld [vmem:[#allocation2 + $0x48] sm:$0xff]
    %v1135 = vsel %vm308, %v1131, 0
    %1137 = vmatprep.subr.mxu0 0.0
    %1138 = vmatpush1.msra.mxu0 %v275
    %1139 = vmatprep.subr.mxu0 0.0
    %1140 = vmatpush1.msra.mxu0 %v276
    %1141 = vmatprep.subr.mxu0 0.0
    %1142 = vmatpush1.msra.mxu0 %v277
    %1143 = vmatprep.subr.mxu0 0.0
    %1144 = vmatpush1.msra.mxu0 %v278
    %1145 = vmatprep.subr.mxu0 0.0
    %1146 = vmatpush1.msra.mxu0 0.0
    %1147 = vmatprep.subr.mxu0 0.0
    %1148 = vmatpush1.msra.mxu0 0.0
    %1149 = vmatprep.subr.mxu0 0.0
    %1150 = vmatpush1.msra.mxu0 0.0
    %1151 = vmatprep.subr.mxu0 0.0
    %1152 = vmatpush1.msra.mxu0 0.0
    %1153 = vmatprep.subr.mxu0 0.0
    %1154 = vmatpush1.msra.mxu0 0.0
    %1155 = vmatprep.subr.mxu0 0.0
    %1156 = vmatpush1.msra.mxu0 0.0
    %1157 = vmatprep.subr.mxu0 0.0
    %1158 = vmatpush1.msra.mxu0 0.0
    %1159 = vmatprep.subr.mxu0 0.0
    %1160 = vmatpush1.msra.mxu0 0.0
    %1161 = vmatprep.subr.mxu0 0.0
    %1162 = vmatpush1.msra.mxu0 0.0
    %1163 = vmatprep.subr.mxu0 0.0
    %1164 = vmatpush1.msra.mxu0 0.0
    %1165 = vmatprep.subr.mxu0 0.0
    %1166 = vmatpush1.msra.mxu0 0.0
    %1167 = vmatprep.subr.mxu0 0.0
    %1168 = vmatpush1.msra.mxu0 0.0
    %1169 = vmatprep.subr.mxu0 0.0
    %1170 = vmatpush1.msra.mxu0 0.0
    %1171 = vmatprep.subr.mxu0 0.0
    %1172 = vmatpush1.msra.mxu0 0.0
    %1173 = vmatprep.subr.mxu0 0.0
    %1174 = vmatpush1.msra.mxu0 0.0
    %1175 = vmatprep.subr.mxu0 0.0
    %1176 = vmatpush1.msra.mxu0 0.0
    %1177 = vmatprep.subr.mxu0 0.0
    %1178 = vmatpush1.msra.mxu0 0.0
    %1179 = vmatprep.subr.mxu0 0.0
    %1180 = vmatpush1.msra.mxu0 0.0
    %1181 = vmatprep.subr.mxu0 0.0
    %1182 = vmatpush1.msra.mxu0 0.0
    %1183 = vmatprep.subr.mxu0 0.0
    %1184 = vmatpush1.msra.mxu0 0.0
    %1185 = vmatprep.subr.mxu0 0.0
    %1186 = vmatpush1.msra.mxu0 0.0
    %1187 = vmatprep.subr.mxu0 0.0
    %1188 = vmatpush1.msra.mxu0 0.0
    %1189 = vmatprep.subr.mxu0 0.0
    %1190 = vmatpush1.msra.mxu0 0.0
    %1191 = vmatprep.subr.mxu0 0.0
    %1192 = vmatpush1.msra.mxu0 0.0
    %1193 = vmatprep.subr.mxu0 0.0
    %1194 = vmatpush1.msra.mxu0 0.0
    %1195 = vmatprep.subr.mxu0 0.0
    %1196 = vmatpush1.msra.mxu0 0.0
    %1197 = vmatprep.subr.mxu0 0.0
    %1198 = vmatpush1.msra.mxu0 0.0
    %1199 = vmatprep.subr.mxu0 0.0
    %1200 = vmatpush1.msra.mxu0 0.0
    %1201 = vmatprep.mubr.f32.mxu0 0.0
    %1202 = vmatmul.mubr.f32.gmra.mrb[0].mxu0 %v1135
    %v1203 = vpop.f32.mrb[0].mxu0
    %v1204 = vadd.f32 0.0, %v1203
    %v1205 = vpop.f32.mrb[0].mxu0
    %1206 = vdwg.mxu0
    %v1207 = vadd.f32 %v1134, %v1204
    %v1208 = vxor.u32 %v1207, 2147483648
    %v1209 = vmul.f32 %v1208, 1.442695
    %v1210 = vpow.pop %v1209
    %v1211 = vadd.f32 %v1210, 1.0
    %v1212 = vrcp.pop %v1211
    %v1213 = vmul.f32 1.0, %v1212
    %v1214 = vtanh.pop %v1207
    %v1215 = vmul.f32 %v1213, %v1122
    %1217 = vrot.lane.b32.xlu0 %v1214, 64
    %v1218 = vpop.permute.xlu0 %1217
    %v1220 = vmul.f32 %v1213, %v1218
    %1222 = vrot.lane.b32.xlu0 %v1220, 32
    %v1223 = vpop.permute.xlu0 %1222
    %v1225 = vadd.f32 %v1215, %v1223
    %v1226 = vtanh.pop %v1225
    %1228 = vrot.lane.b32.xlu0 %v1226, 64
    %v1229 = vpop.permute.xlu0 %1228
    %v1231 = vmul.f32 %v1213, %v1229
    %1233 = vrot.lane.b32.xlu0 %v1231, 32
    %v1234 = vpop.permute.xlu0 %1233
    %1236 = vst.msk [vmem:[#allocation3 + $0x48] sm:$0xff] %vm308, %v1234
    %v1237 = vld [vmem:[#allocation2 + $0x50] sm:$0xff]
    %v1238 = vsel %vm308, %v1234, 0
    %1240 = vmatprep.subr.mxu0 0.0
    %1241 = vmatpush1.msra.mxu0 %v275
    %1242 = vmatprep.subr.mxu0 0.0
    %1243 = vmatpush1.msra.mxu0 %v276
    %1244 = vmatprep.subr.mxu0 0.0
    %1245 = vmatpush1.msra.mxu0 %v277
    %1246 = vmatprep.subr.mxu0 0.0
    %1247 = vmatpush1.msra.mxu0 %v278
    %1248 = vmatprep.subr.mxu0 0.0
    %1249 = vmatpush1.msra.mxu0 0.0
    %1250 = vmatprep.subr.mxu0 0.0
    %1251 = vmatpush1.msra.mxu0 0.0
    %1252 = vmatprep.subr.mxu0 0.0
    %1253 = vmatpush1.msra.mxu0 0.0
    %1254 = vmatprep.subr.mxu0 0.0
    %1255 = vmatpush1.msra.mxu0 0.0
    %1256 = vmatprep.subr.mxu0 0.0
    %1257 = vmatpush1.msra.mxu0 0.0
    %1258 = vmatprep.subr.mxu0 0.0
    %1259 = vmatpush1.msra.mxu0 0.0
    %1260 = vmatprep.subr.mxu0 0.0
    %1261 = vmatpush1.msra.mxu0 0.0
    %1262 = vmatprep.subr.mxu0 0.0
    %1263 = vmatpush1.msra.mxu0 0.0
    %1264 = vmatprep.subr.mxu0 0.0
    %1265 = vmatpush1.msra.mxu0 0.0
    %1266 = vmatprep.subr.mxu0 0.0
    %1267 = vmatpush1.msra.mxu0 0.0
    %1268 = vmatprep.subr.mxu0 0.0
    %1269 = vmatpush1.msra.mxu0 0.0
    %1270 = vmatprep.subr.mxu0 0.0
    %1271 = vmatpush1.msra.mxu0 0.0
    %1272 = vmatprep.subr.mxu0 0.0
    %1273 = vmatpush1.msra.mxu0 0.0
    %1274 = vmatprep.subr.mxu0 0.0
    %1275 = vmatpush1.msra.mxu0 0.0
    %1276 = vmatprep.subr.mxu0 0.0
    %1277 = vmatpush1.msra.mxu0 0.0
    %1278 = vmatprep.subr.mxu0 0.0
    %1279 = vmatpush1.msra.mxu0 0.0
    %1280 = vmatprep.subr.mxu0 0.0
    %1281 = vmatpush1.msra.mxu0 0.0
    %1282 = vmatprep.subr.mxu0 0.0
    %1283 = vmatpush1.msra.mxu0 0.0
    %1284 = vmatprep.subr.mxu0 0.0
    %1285 = vmatpush1.msra.mxu0 0.0
    %1286 = vmatprep.subr.mxu0 0.0
    %1287 = vmatpush1.msra.mxu0 0.0
    %1288 = vmatprep.subr.mxu0 0.0
    %1289 = vmatpush1.msra.mxu0 0.0
    %1290 = vmatprep.subr.mxu0 0.0
    %1291 = vmatpush1.msra.mxu0 0.0
    %1292 = vmatprep.subr.mxu0 0.0
    %1293 = vmatpush1.msra.mxu0 0.0
    %1294 = vmatprep.subr.mxu0 0.0
    %1295 = vmatpush1.msra.mxu0 0.0
    %1296 = vmatprep.subr.mxu0 0.0
    %1297 = vmatpush1.msra.mxu0 0.0
    %1298 = vmatprep.subr.mxu0 0.0
    %1299 = vmatpush1.msra.mxu0 0.0
    %1300 = vmatprep.subr.mxu0 0.0
    %1301 = vmatpush1.msra.mxu0 0.0
    %1302 = vmatprep.subr.mxu0 0.0
    %1303 = vmatpush1.msra.mxu0 0.0
    %1304 = vmatprep.mubr.f32.mxu0 0.0
    %1305 = vmatmul.mubr.f32.gmra.mrb[0].mxu0 %v1238
    %v1306 = vpop.f32.mrb[0].mxu0
    %v1307 = vadd.f32 0.0, %v1306
    %v1308 = vpop.f32.mrb[0].mxu0
    %1309 = vdwg.mxu0
    %v1310 = vadd.f32 %v1237, %v1307
    %v1311 = vxor.u32 %v1310, 2147483648
    %v1312 = vmul.f32 %v1311, 1.442695
    %v1313 = vpow.pop %v1312
    %v1314 = vadd.f32 %v1313, 1.0
    %v1315 = vrcp.pop %v1314
    %v1316 = vmul.f32 1.0, %v1315
    %v1317 = vtanh.pop %v1310
    %v1318 = vmul.f32 %v1316, %v1225
    %1320 = vrot.lane.b32.xlu0 %v1317, 64
    %v1321 = vpop.permute.xlu0 %1320
    %v1323 = vmul.f32 %v1316, %v1321
    %1325 = vrot.lane.b32.xlu0 %v1323, 32
    %v1326 = vpop.permute.xlu0 %1325
    %v1328 = vadd.f32 %v1318, %v1326
    %v1329 = vtanh.pop %v1328
    %1331 = vrot.lane.b32.xlu0 %v1329, 64
    %v1332 = vpop.permute.xlu0 %1331
    %v1334 = vmul.f32 %v1316, %v1332
    %1336 = vrot.lane.b32.xlu0 %v1334, 32
    %v1337 = vpop.permute.xlu0 %1336
    %1339 = vst.msk [vmem:[#allocation3 + $0x50] sm:$0xff] %vm308, %v1337
    %v1340 = vld [vmem:[#allocation2 + $0x58] sm:$0xff]
    %v1341 = vsel %vm308, %v1337, 0
    %1343 = vmatprep.subr.mxu0 0.0
    %1344 = vmatpush1.msra.mxu0 %v275
    %1345 = vmatprep.subr.mxu0 0.0
    %1346 = vmatpush1.msra.mxu0 %v276
    %1347 = vmatprep.subr.mxu0 0.0
    %1348 = vmatpush1.msra.mxu0 %v277
    %1349 = vmatprep.subr.mxu0 0.0
    %1350 = vmatpush1.msra.mxu0 %v278
    %1351 = vmatprep.subr.mxu0 0.0
    %1352 = vmatpush1.msra.mxu0 0.0
    %1353 = vmatprep.subr.mxu0 0.0
    %1354 = vmatpush1.msra.mxu0 0.0
    %1355 = vmatprep.subr.mxu0 0.0
    %1356 = vmatpush1.msra.mxu0 0.0
    %1357 = vmatprep.subr.mxu0 0.0
    %1358 = vmatpush1.msra.mxu0 0.0
    %1359 = vmatprep.subr.mxu0 0.0
    %1360 = vmatpush1.msra.mxu0 0.0
    %1361 = vmatprep.subr.mxu0 0.0
    %1362 = vmatpush1.msra.mxu0 0.0
    %1363 = vmatprep.subr.mxu0 0.0
    %1364 = vmatpush1.msra.mxu0 0.0
    %1365 = vmatprep.subr.mxu0 0.0
    %1366 = vmatpush1.msra.mxu0 0.0
    %1367 = vmatprep.subr.mxu0 0.0
    %1368 = vmatpush1.msra.mxu0 0.0
    %1369 = vmatprep.subr.mxu0 0.0
    %1370 = vmatpush1.msra.mxu0 0.0
    %1371 = vmatprep.subr.mxu0 0.0
    %1372 = vmatpush1.msra.mxu0 0.0
    %1373 = vmatprep.subr.mxu0 0.0
    %1374 = vmatpush1.msra.mxu0 0.0
    %1375 = vmatprep.subr.mxu0 0.0
    %1376 = vmatpush1.msra.mxu0 0.0
    %1377 = vmatprep.subr.mxu0 0.0
    %1378 = vmatpush1.msra.mxu0 0.0
    %1379 = vmatprep.subr.mxu0 0.0
    %1380 = vmatpush1.msra.mxu0 0.0
    %1381 = vmatprep.subr.mxu0 0.0
    %1382 = vmatpush1.msra.mxu0 0.0
    %1383 = vmatprep.subr.mxu0 0.0
    %1384 = vmatpush1.msra.mxu0 0.0
    %1385 = vmatprep.subr.mxu0 0.0
    %1386 = vmatpush1.msra.mxu0 0.0
    %1387 = vmatprep.subr.mxu0 0.0
    %1388 = vmatpush1.msra.mxu0 0.0
    %1389 = vmatprep.subr.mxu0 0.0
    %1390 = vmatpush1.msra.mxu0 0.0
    %1391 = vmatprep.subr.mxu0 0.0
    %1392 = vmatpush1.msra.mxu0 0.0
    %1393 = vmatprep.subr.mxu0 0.0
    %1394 = vmatpush1.msra.mxu0 0.0
    %1395 = vmatprep.subr.mxu0 0.0
    %1396 = vmatpush1.msra.mxu0 0.0
    %1397 = vmatprep.subr.mxu0 0.0
    %1398 = vmatpush1.msra.mxu0 0.0
    %1399 = vmatprep.subr.mxu0 0.0
    %1400 = vmatpush1.msra.mxu0 0.0
    %1401 = vmatprep.subr.mxu0 0.0
    %1402 = vmatpush1.msra.mxu0 0.0
    %1403 = vmatprep.subr.mxu0 0.0
    %1404 = vmatpush1.msra.mxu0 0.0
    %1405 = vmatprep.subr.mxu0 0.0
    %1406 = vmatpush1.msra.mxu0 0.0
    %1407 = vmatprep.mubr.f32.mxu0 0.0
    %1408 = vmatmul.mubr.f32.gmra.mrb[0].mxu0 %v1341
    %v1409 = vpop.f32.mrb[0].mxu0
    %v1410 = vadd.f32 0.0, %v1409
    %v1411 = vpop.f32.mrb[0].mxu0
    %1412 = vdwg.mxu0
    %v1413 = vadd.f32 %v1340, %v1410
    %v1414 = vxor.u32 %v1413, 2147483648
    %v1415 = vmul.f32 %v1414, 1.442695
    %v1416 = vpow.pop %v1415
    %v1417 = vadd.f32 %v1416, 1.0
    %v1418 = vrcp.pop %v1417
    %v1419 = vmul.f32 1.0, %v1418
    %v1420 = vtanh.pop %v1413
    %v1421 = vmul.f32 %v1419, %v1328
    %1423 = vrot.lane.b32.xlu0 %v1420, 64
    %v1424 = vpop.permute.xlu0 %1423
    %v1426 = vmul.f32 %v1419, %v1424
    %1428 = vrot.lane.b32.xlu0 %v1426, 32
    %v1429 = vpop.permute.xlu0 %1428
    %v1431 = vadd.f32 %v1421, %v1429
    %v1432 = vtanh.pop %v1431
    %1434 = vrot.lane.b32.xlu0 %v1432, 64
    %v1435 = vpop.permute.xlu0 %1434
    %v1437 = vmul.f32 %v1419, %v1435
    %1439 = vrot.lane.b32.xlu0 %v1437, 32
    %v1440 = vpop.permute.xlu0 %1439
    %1442 = vst.msk [vmem:[#allocation3 + $0x58] sm:$0xff] %vm308, %v1440
    %v1443 = vld [vmem:[#allocation2 + $0x60] sm:$0xff]
    %v1444 = vsel %vm308, %v1440, 0
    %1446 = vmatprep.subr.mxu0 0.0
    %1447 = vmatpush1.msra.mxu0 %v275
    %1448 = vmatprep.subr.mxu0 0.0
    %1449 = vmatpush1.msra.mxu0 %v276
    %1450 = vmatprep.subr.mxu0 0.0
    %1451 = vmatpush1.msra.mxu0 %v277
    %1452 = vmatprep.subr.mxu0 0.0
    %1453 = vmatpush1.msra.mxu0 %v278
    %1454 = vmatprep.subr.mxu0 0.0
    %1455 = vmatpush1.msra.mxu0 0.0
    %1456 = vmatprep.subr.mxu0 0.0
    %1457 = vmatpush1.msra.mxu0 0.0
    %1458 = vmatprep.subr.mxu0 0.0
    %1459 = vmatpush1.msra.mxu0 0.0
    %1460 = vmatprep.subr.mxu0 0.0
    %1461 = vmatpush1.msra.mxu0 0.0
    %1462 = vmatprep.subr.mxu0 0.0
    %1463 = vmatpush1.msra.mxu0 0.0
    %1464 = vmatprep.subr.mxu0 0.0
    %1465 = vmatpush1.msra.mxu0 0.0
    %1466 = vmatprep.subr.mxu0 0.0
    %1467 = vmatpush1.msra.mxu0 0.0
    %1468 = vmatprep.subr.mxu0 0.0
    %1469 = vmatpush1.msra.mxu0 0.0
    %1470 = vmatprep.subr.mxu0 0.0
    %1471 = vmatpush1.msra.mxu0 0.0
    %1472 = vmatprep.subr.mxu0 0.0
    %1473 = vmatpush1.msra.mxu0 0.0
    %1474 = vmatprep.subr.mxu0 0.0
    %1475 = vmatpush1.msra.mxu0 0.0
    %1476 = vmatprep.subr.mxu0 0.0
    %1477 = vmatpush1.msra.mxu0 0.0
    %1478 = vmatprep.subr.mxu0 0.0
    %1479 = vmatpush1.msra.mxu0 0.0
    %1480 = vmatprep.subr.mxu0 0.0
    %1481 = vmatpush1.msra.mxu0 0.0
    %1482 = vmatprep.subr.mxu0 0.0
    %1483 = vmatpush1.msra.mxu0 0.0
    %1484 = vmatprep.subr.mxu0 0.0
    %1485 = vmatpush1.msra.mxu0 0.0
    %1486 = vmatprep.subr.mxu0 0.0
    %1487 = vmatpush1.msra.mxu0 0.0
    %1488 = vmatprep.subr.mxu0 0.0
    %1489 = vmatpush1.msra.mxu0 0.0
    %1490 = vmatprep.subr.mxu0 0.0
    %1491 = vmatpush1.msra.mxu0 0.0
    %1492 = vmatprep.subr.mxu0 0.0
    %1493 = vmatpush1.msra.mxu0 0.0
    %1494 = vmatprep.subr.mxu0 0.0
    %1495 = vmatpush1.msra.mxu0 0.0
    %1496 = vmatprep.subr.mxu0 0.0
    %1497 = vmatpush1.msra.mxu0 0.0
    %1498 = vmatprep.subr.mxu0 0.0
    %1499 = vmatpush1.msra.mxu0 0.0
    %1500 = vmatprep.subr.mxu0 0.0
    %1501 = vmatpush1.msra.mxu0 0.0
    %1502 = vmatprep.subr.mxu0 0.0
    %1503 = vmatpush1.msra.mxu0 0.0
    %1504 = vmatprep.subr.mxu0 0.0
    %1505 = vmatpush1.msra.mxu0 0.0
    %1506 = vmatprep.subr.mxu0 0.0
    %1507 = vmatpush1.msra.mxu0 0.0
    %1508 = vmatprep.subr.mxu0 0.0
    %1509 = vmatpush1.msra.mxu0 0.0
    %1510 = vmatprep.mubr.f32.mxu0 0.0
    %1511 = vmatmul.mubr.f32.gmra.mrb[0].mxu0 %v1444
    %v1512 = vpop.f32.mrb[0].mxu0
    %v1513 = vadd.f32 0.0, %v1512
    %v1514 = vpop.f32.mrb[0].mxu0
    %1515 = vdwg.mxu0
    %v1516 = vadd.f32 %v1443, %v1513
    %v1517 = vxor.u32 %v1516, 2147483648
    %v1518 = vmul.f32 %v1517, 1.442695
    %v1519 = vpow.pop %v1518
    %v1520 = vadd.f32 %v1519, 1.0
    %v1521 = vrcp.pop %v1520
    %v1522 = vmul.f32 1.0, %v1521
    %v1523 = vtanh.pop %v1516
    %v1524 = vmul.f32 %v1522, %v1431
    %1526 = vrot.lane.b32.xlu0 %v1523, 64
    %v1527 = vpop.permute.xlu0 %1526
    %v1529 = vmul.f32 %v1522, %v1527
    %1531 = vrot.lane.b32.xlu0 %v1529, 32
    %v1532 = vpop.permute.xlu0 %1531
    %v1534 = vadd.f32 %v1524, %v1532
    %v1535 = vtanh.pop %v1534
    %1537 = vrot.lane.b32.xlu0 %v1535, 64
    %v1538 = vpop.permute.xlu0 %1537
    %v1540 = vmul.f32 %v1522, %v1538
    %1542 = vrot.lane.b32.xlu0 %v1540, 32
    %v1543 = vpop.permute.xlu0 %1542
    %1545 = vst.msk [vmem:[#allocation3 + $0x60] sm:$0xff] %vm308, %v1543
    %v1546 = vld [vmem:[#allocation2 + $0x68] sm:$0xff]
    %v1547 = vsel %vm308, %v1543, 0
    %1549 = vmatprep.subr.mxu0 0.0
    %1550 = vmatpush1.msra.mxu0 %v275
    %1551 = vmatprep.subr.mxu0 0.0
    %1552 = vmatpush1.msra.mxu0 %v276
    %1553 = vmatprep.subr.mxu0 0.0
    %1554 = vmatpush1.msra.mxu0 %v277
    %1555 = vmatprep.subr.mxu0 0.0
    %1556 = vmatpush1.msra.mxu0 %v278
    %1557 = vmatprep.subr.mxu0 0.0
    %1558 = vmatpush1.msra.mxu0 0.0
    %1559 = vmatprep.subr.mxu0 0.0
    %1560 = vmatpush1.msra.mxu0 0.0
    %1561 = vmatprep.subr.mxu0 0.0
    %1562 = vmatpush1.msra.mxu0 0.0
    %1563 = vmatprep.subr.mxu0 0.0
    %1564 = vmatpush1.msra.mxu0 0.0
    %1565 = vmatprep.subr.mxu0 0.0
    %1566 = vmatpush1.msra.mxu0 0.0
    %1567 = vmatprep.subr.mxu0 0.0
    %1568 = vmatpush1.msra.mxu0 0.0
    %1569 = vmatprep.subr.mxu0 0.0
    %1570 = vmatpush1.msra.mxu0 0.0
    %1571 = vmatprep.subr.mxu0 0.0
    %1572 = vmatpush1.msra.mxu0 0.0
    %1573 = vmatprep.subr.mxu0 0.0
    %1574 = vmatpush1.msra.mxu0 0.0
    %1575 = vmatprep.subr.mxu0 0.0
    %1576 = vmatpush1.msra.mxu0 0.0
    %1577 = vmatprep.subr.mxu0 0.0
    %1578 = vmatpush1.msra.mxu0 0.0
    %1579 = vmatprep.subr.mxu0 0.0
    %1580 = vmatpush1.msra.mxu0 0.0
    %1581 = vmatprep.subr.mxu0 0.0
    %1582 = vmatpush1.msra.mxu0 0.0
    %1583 = vmatprep.subr.mxu0 0.0
    %1584 = vmatpush1.msra.mxu0 0.0
    %1585 = vmatprep.subr.mxu0 0.0
    %1586 = vmatpush1.msra.mxu0 0.0
    %1587 = vmatprep.subr.mxu0 0.0
    %1588 = vmatpush1.msra.mxu0 0.0
    %1589 = vmatprep.subr.mxu0 0.0
    %1590 = vmatpush1.msra.mxu0 0.0
    %1591 = vmatprep.subr.mxu0 0.0
    %1592 = vmatpush1.msra.mxu0 0.0
    %1593 = vmatprep.subr.mxu0 0.0
    %1594 = vmatpush1.msra.mxu0 0.0
    %1595 = vmatprep.subr.mxu0 0.0
    %1596 = vmatpush1.msra.mxu0 0.0
    %1597 = vmatprep.subr.mxu0 0.0
    %1598 = vmatpush1.msra.mxu0 0.0
    %1599 = vmatprep.subr.mxu0 0.0
    %1600 = vmatpush1.msra.mxu0 0.0
    %1601 = vmatprep.subr.mxu0 0.0
    %1602 = vmatpush1.msra.mxu0 0.0
    %1603 = vmatprep.subr.mxu0 0.0
    %1604 = vmatpush1.msra.mxu0 0.0
    %1605 = vmatprep.subr.mxu0 0.0
    %1606 = vmatpush1.msra.mxu0 0.0
    %1607 = vmatprep.subr.mxu0 0.0
    %1608 = vmatpush1.msra.mxu0 0.0
    %1609 = vmatprep.subr.mxu0 0.0
    %1610 = vmatpush1.msra.mxu0 0.0
    %1611 = vmatprep.subr.mxu0 0.0
    %1612 = vmatpush1.msra.mxu0 0.0
    %1613 = vmatprep.mubr.f32.mxu0 0.0
    %1614 = vmatmul.mubr.f32.gmra.mrb[0].mxu0 %v1547
    %v1615 = vpop.f32.mrb[0].mxu0
    %v1616 = vadd.f32 0.0, %v1615
    %v1617 = vpop.f32.mrb[0].mxu0
    %1618 = vdwg.mxu0
    %v1619 = vadd.f32 %v1546, %v1616
    %v1620 = vxor.u32 %v1619, 2147483648
    %v1621 = vmul.f32 %v1620, 1.442695
    %v1622 = vpow.pop %v1621
    %v1623 = vadd.f32 %v1622, 1.0
    %v1624 = vrcp.pop %v1623
    %v1625 = vmul.f32 1.0, %v1624
    %v1626 = vtanh.pop %v1619
    %v1627 = vmul.f32 %v1625, %v1534
    %1629 = vrot.lane.b32.xlu0 %v1626, 64
    %v1630 = vpop.permute.xlu0 %1629
    %v1632 = vmul.f32 %v1625, %v1630
    %1634 = vrot.lane.b32.xlu0 %v1632, 32
    %v1635 = vpop.permute.xlu0 %1634
    %v1637 = vadd.f32 %v1627, %v1635
    %v1638 = vtanh.pop %v1637
    %1640 = vrot.lane.b32.xlu0 %v1638, 64
    %v1641 = vpop.permute.xlu0 %1640
    %v1643 = vmul.f32 %v1625, %v1641
    %1645 = vrot.lane.b32.xlu0 %v1643, 32
    %v1646 = vpop.permute.xlu0 %1645
    %1648 = vst.msk [vmem:[#allocation3 + $0x68] sm:$0xff] %vm308, %v1646
    %v1649 = vld [vmem:[#allocation2 + $0x70] sm:$0xff]
    %v1650 = vsel %vm308, %v1646, 0
    %1652 = vmatprep.subr.mxu0 0.0
    %1653 = vmatpush1.msra.mxu0 %v275
    %1654 = vmatprep.subr.mxu0 0.0
    %1655 = vmatpush1.msra.mxu0 %v276
    %1656 = vmatprep.subr.mxu0 0.0
    %1657 = vmatpush1.msra.mxu0 %v277
    %1658 = vmatprep.subr.mxu0 0.0
    %1659 = vmatpush1.msra.mxu0 %v278
    %1660 = vmatprep.subr.mxu0 0.0
    %1661 = vmatpush1.msra.mxu0 0.0
    %1662 = vmatprep.subr.mxu0 0.0
    %1663 = vmatpush1.msra.mxu0 0.0
    %1664 = vmatprep.subr.mxu0 0.0
    %1665 = vmatpush1.msra.mxu0 0.0
    %1666 = vmatprep.subr.mxu0 0.0
    %1667 = vmatpush1.msra.mxu0 0.0
    %1668 = vmatprep.subr.mxu0 0.0
    %1669 = vmatpush1.msra.mxu0 0.0
    %1670 = vmatprep.subr.mxu0 0.0
    %1671 = vmatpush1.msra.mxu0 0.0
    %1672 = vmatprep.subr.mxu0 0.0
    %1673 = vmatpush1.msra.mxu0 0.0
    %1674 = vmatprep.subr.mxu0 0.0
    %1675 = vmatpush1.msra.mxu0 0.0
    %1676 = vmatprep.subr.mxu0 0.0
    %1677 = vmatpush1.msra.mxu0 0.0
    %1678 = vmatprep.subr.mxu0 0.0
    %1679 = vmatpush1.msra.mxu0 0.0
    %1680 = vmatprep.subr.mxu0 0.0
    %1681 = vmatpush1.msra.mxu0 0.0
    %1682 = vmatprep.subr.mxu0 0.0
    %1683 = vmatpush1.msra.mxu0 0.0
    %1684 = vmatprep.subr.mxu0 0.0
    %1685 = vmatpush1.msra.mxu0 0.0
    %1686 = vmatprep.subr.mxu0 0.0
    %1687 = vmatpush1.msra.mxu0 0.0
    %1688 = vmatprep.subr.mxu0 0.0
    %1689 = vmatpush1.msra.mxu0 0.0
    %1690 = vmatprep.subr.mxu0 0.0
    %1691 = vmatpush1.msra.mxu0 0.0
    %1692 = vmatprep.subr.mxu0 0.0
    %1693 = vmatpush1.msra.mxu0 0.0
    %1694 = vmatprep.subr.mxu0 0.0
    %1695 = vmatpush1.msra.mxu0 0.0
    %1696 = vmatprep.subr.mxu0 0.0
    %1697 = vmatpush1.msra.mxu0 0.0
    %1698 = vmatprep.subr.mxu0 0.0
    %1699 = vmatpush1.msra.mxu0 0.0
    %1700 = vmatprep.subr.mxu0 0.0
    %1701 = vmatpush1.msra.mxu0 0.0
    %1702 = vmatprep.subr.mxu0 0.0
    %1703 = vmatpush1.msra.mxu0 0.0
    %1704 = vmatprep.subr.mxu0 0.0
    %1705 = vmatpush1.msra.mxu0 0.0
    %1706 = vmatprep.subr.mxu0 0.0
    %1707 = vmatpush1.msra.mxu0 0.0
    %1708 = vmatprep.subr.mxu0 0.0
    %1709 = vmatpush1.msra.mxu0 0.0
    %1710 = vmatprep.subr.mxu0 0.0
    %1711 = vmatpush1.msra.mxu0 0.0
    %1712 = vmatprep.subr.mxu0 0.0
    %1713 = vmatpush1.msra.mxu0 0.0
    %1714 = vmatprep.subr.mxu0 0.0
    %1715 = vmatpush1.msra.mxu0 0.0
    %1716 = vmatprep.mubr.f32.mxu0 0.0
    %1717 = vmatmul.mubr.f32.gmra.mrb[0].mxu0 %v1650
    %v1718 = vpop.f32.mrb[0].mxu0
    %v1719 = vadd.f32 0.0, %v1718
    %v1720 = vpop.f32.mrb[0].mxu0
    %1721 = vdwg.mxu0
    %v1722 = vadd.f32 %v1649, %v1719
    %v1723 = vxor.u32 %v1722, 2147483648
    %v1724 = vmul.f32 %v1723, 1.442695
    %v1725 = vpow.pop %v1724
    %v1726 = vadd.f32 %v1725, 1.0
    %v1727 = vrcp.pop %v1726
    %v1728 = vmul.f32 1.0, %v1727
    %v1729 = vtanh.pop %v1722
    %v1730 = vmul.f32 %v1728, %v1637
    %1732 = vrot.lane.b32.xlu0 %v1729, 64
    %v1733 = vpop.permute.xlu0 %1732
    %v1735 = vmul.f32 %v1728, %v1733
    %1737 = vrot.lane.b32.xlu0 %v1735, 32
    %v1738 = vpop.permute.xlu0 %1737
    %v1740 = vadd.f32 %v1730, %v1738
    %v1741 = vtanh.pop %v1740
    %1743 = vrot.lane.b32.xlu0 %v1741, 64
    %v1744 = vpop.permute.xlu0 %1743
    %v1746 = vmul.f32 %v1728, %v1744
    %1748 = vrot.lane.b32.xlu0 %v1746, 32
    %v1749 = vpop.permute.xlu0 %1748
    %1751 = vst.msk [vmem:[#allocation3 + $0x70] sm:$0xff] %vm308, %v1749
    %v1752 = vld [vmem:[#allocation2 + $0x78] sm:$0xff]
    %v1753 = vsel %vm308, %v1749, 0
    %1755 = vmatprep.subr.mxu0 0.0
    %1756 = vmatpush1.msra.mxu0 %v275
    %1757 = vmatprep.subr.mxu0 0.0
    %1758 = vmatpush1.msra.mxu0 %v276
    %1759 = vmatprep.subr.mxu0 0.0
    %1760 = vmatpush1.msra.mxu0 %v277
    %1761 = vmatprep.subr.mxu0 0.0
    %1762 = vmatpush1.msra.mxu0 %v278
    %1763 = vmatprep.subr.mxu0 0.0
    %1764 = vmatpush1.msra.mxu0 0.0
    %1765 = vmatprep.subr.mxu0 0.0
    %1766 = vmatpush1.msra.mxu0 0.0
    %1767 = vmatprep.subr.mxu0 0.0
    %1768 = vmatpush1.msra.mxu0 0.0
    %1769 = vmatprep.subr.mxu0 0.0
    %1770 = vmatpush1.msra.mxu0 0.0
    %1771 = vmatprep.subr.mxu0 0.0
    %1772 = vmatpush1.msra.mxu0 0.0
    %1773 = vmatprep.subr.mxu0 0.0
    %1774 = vmatpush1.msra.mxu0 0.0
    %1775 = vmatprep.subr.mxu0 0.0
    %1776 = vmatpush1.msra.mxu0 0.0
    %1777 = vmatprep.subr.mxu0 0.0
    %1778 = vmatpush1.msra.mxu0 0.0
    %1779 = vmatprep.subr.mxu0 0.0
    %1780 = vmatpush1.msra.mxu0 0.0
    %1781 = vmatprep.subr.mxu0 0.0
    %1782 = vmatpush1.msra.mxu0 0.0
    %1783 = vmatprep.subr.mxu0 0.0
    %1784 = vmatpush1.msra.mxu0 0.0
    %1785 = vmatprep.subr.mxu0 0.0
    %1786 = vmatpush1.msra.mxu0 0.0
    %1787 = vmatprep.subr.mxu0 0.0
    %1788 = vmatpush1.msra.mxu0 0.0
    %1789 = vmatprep.subr.mxu0 0.0
    %1790 = vmatpush1.msra.mxu0 0.0
    %1791 = vmatprep.subr.mxu0 0.0
    %1792 = vmatpush1.msra.mxu0 0.0
    %1793 = vmatprep.subr.mxu0 0.0
    %1794 = vmatpush1.msra.mxu0 0.0
    %1795 = vmatprep.subr.mxu0 0.0
    %1796 = vmatpush1.msra.mxu0 0.0
    %1797 = vmatprep.subr.mxu0 0.0
    %1798 = vmatpush1.msra.mxu0 0.0
    %1799 = vmatprep.subr.mxu0 0.0
    %1800 = vmatpush1.msra.mxu0 0.0
    %1801 = vmatprep.subr.mxu0 0.0
    %1802 = vmatpush1.msra.mxu0 0.0
    %1803 = vmatprep.subr.mxu0 0.0
    %1804 = vmatpush1.msra.mxu0 0.0
    %1805 = vmatprep.subr.mxu0 0.0
    %1806 = vmatpush1.msra.mxu0 0.0
    %1807 = vmatprep.subr.mxu0 0.0
    %1808 = vmatpush1.msra.mxu0 0.0
    %1809 = vmatprep.subr.mxu0 0.0
    %1810 = vmatpush1.msra.mxu0 0.0
    %1811 = vmatprep.subr.mxu0 0.0
    %1812 = vmatpush1.msra.mxu0 0.0
    %1813 = vmatprep.subr.mxu0 0.0
    %1814 = vmatpush1.msra.mxu0 0.0
    %1815 = vmatprep.subr.mxu0 0.0
    %1816 = vmatpush1.msra.mxu0 0.0
    %1817 = vmatprep.subr.mxu0 0.0
    %1818 = vmatpush1.msra.mxu0 0.0
    %1819 = vmatprep.mubr.f32.mxu0 0.0
    %1820 = vmatmul.mubr.f32.gmra.mrb[0].mxu0 %v1753
    %v1821 = vpop.f32.mrb[0].mxu0
    %v1822 = vadd.f32 0.0, %v1821
    %v1823 = vpop.f32.mrb[0].mxu0
    %1824 = vdwg.mxu0
    %v1825 = vadd.f32 %v1752, %v1822
    %v1826 = vxor.u32 %v1825, 2147483648
    %v1827 = vmul.f32 %v1826, 1.442695
    %v1828 = vpow.pop %v1827
    %v1829 = vadd.f32 %v1828, 1.0
    %v1830 = vrcp.pop %v1829
    %v1831 = vmul.f32 1.0, %v1830
    %v1832 = vtanh.pop %v1825
    %v1833 = vmul.f32 %v1831, %v1740
    %1835 = vrot.lane.b32.xlu0 %v1832, 64
    %v1836 = vpop.permute.xlu0 %1835
    %v1838 = vmul.f32 %v1831, %v1836
    %1840 = vrot.lane.b32.xlu0 %v1838, 32
    %v1841 = vpop.permute.xlu0 %1840
    %v1843 = vadd.f32 %v1833, %v1841
    %v1844 = vtanh.pop %v1843
    %1846 = vrot.lane.b32.xlu0 %v1844, 64
    %v1847 = vpop.permute.xlu0 %1846
    %v1849 = vmul.f32 %v1831, %v1847
    %1851 = vrot.lane.b32.xlu0 %v1849, 32
    %v1852 = vpop.permute.xlu0 %1851
    %1854 = vst.msk [vmem:[#allocation3 + $0x78] sm:$0xff] %vm308, %v1852
    %v1855 = vld [vmem:[#allocation3] sm:$0xff]
    %v1856 = vld [vmem:[#allocation3 + $0x8] sm:$0xff]
    %v1857 = vld [vmem:[#allocation3 + $0x10] sm:$0xff]
    %v1858 = vld [vmem:[#allocation3 + $0x18] sm:$0xff]
    %v1859 = vld [vmem:[#allocation3 + $0x20] sm:$0xff]
    %v1860 = vld [vmem:[#allocation3 + $0x28] sm:$0xff]
    %v1861 = vld [vmem:[#allocation3 + $0x30] sm:$0xff]
    %v1862 = vld [vmem:[#allocation3 + $0x38] sm:$0xff]
    %v1863 = vld [vmem:[#allocation3 + $0x40] sm:$0xff]
    %v1864 = vld [vmem:[#allocation3 + $0x48] sm:$0xff]
    %v1865 = vld [vmem:[#allocation3 + $0x50] sm:$0xff]
    %v1866 = vld [vmem:[#allocation3 + $0x58] sm:$0xff]
    %v1867 = vld [vmem:[#allocation3 + $0x60] sm:$0xff]
    %v1868 = vld [vmem:[#allocation3 + $0x68] sm:$0xff]
    %v1869 = vld [vmem:[#allocation3 + $0x70] sm:$0xff]
    %v1870 = vld [vmem:[#allocation3 + $0x78] sm:$0xff]
    %v1871 = vld [vmem:[#allocation4] sm:$0xff]
    %v1872 = vld [vmem:[#allocation4 + $0x8] sm:$0xff]
    %v1873 = vld [vmem:[#allocation4 + $0x10] sm:$0xff]
    %v1874 = vld [vmem:[#allocation4 + $0x18] sm:$0xff]
    %s1875 = scalar_lea.vmem %s4, 1
    %v1876 = vld [vmem:[%s1875] sm:$0x1]
    %v1878 = vlaneseq
    %v1879 = vshrl.u32 %v1878, 7
    %v1880 = vsub.s32 0, %v1879
    %v1881 = vrot.slane %v1876, %v1880
    %v1884 = vsel %vm308, %v1855, 0
    %v1887 = vsel %vm308, %v1856, 0
    %v1890 = vsel %vm308, %v1857, 0
    %v1893 = vsel %vm308, %v1858, 0
    %v1896 = vsel %vm308, %v1859, 0
    %v1899 = vsel %vm308, %v1860, 0
    %v1902 = vsel %vm308, %v1861, 0
    %v1905 = vsel %vm308, %v1862, 0
    %v1908 = vsel %vm308, %v1863, 0
    %v1911 = vsel %vm308, %v1864, 0
    %v1914 = vsel %vm308, %v1865, 0
    %v1917 = vsel %vm308, %v1866, 0
    %v1920 = vsel %vm308, %v1867, 0
    %v1923 = vsel %vm308, %v1868, 0
    %v1926 = vsel %vm308, %v1869, 0
    %v1929 = vsel %vm308, %v1870, 0
    %1931 = vmatprep.subr.mxu0 0.0
    %1932 = vmatpush1.msra.mxu0 %v1871
    %1933 = vmatprep.subr.mxu0 0.0
    %1934 = vmatpush1.msra.mxu0 %v1872
    %1935 = vmatprep.subr.mxu0 0.0
    %1936 = vmatpush1.msra.mxu0 %v1873
    %1937 = vmatprep.subr.mxu0 0.0
    %1938 = vmatpush1.msra.mxu0 %v1874
    %1939 = vmatprep.subr.mxu0 0.0
    %1940 = vmatpush1.msra.mxu0 0.0
    %1941 = vmatprep.subr.mxu0 0.0
    %1942 = vmatpush1.msra.mxu0 0.0
    %1943 = vmatprep.subr.mxu0 0.0
    %1944 = vmatpush1.msra.mxu0 0.0
    %1945 = vmatprep.subr.mxu0 0.0
    %1946 = vmatpush1.msra.mxu0 0.0
    %1947 = vmatprep.subr.mxu0 0.0
    %1948 = vmatpush1.msra.mxu0 0.0
    %1949 = vmatprep.subr.mxu0 0.0
    %1950 = vmatpush1.msra.mxu0 0.0
    %1951 = vmatprep.subr.mxu0 0.0
    %1952 = vmatpush1.msra.mxu0 0.0
    %1953 = vmatprep.subr.mxu0 0.0
    %1954 = vmatpush1.msra.mxu0 0.0
    %1955 = vmatprep.subr.mxu0 0.0
    %1956 = vmatpush1.msra.mxu0 0.0
    %1957 = vmatprep.subr.mxu0 0.0
    %1958 = vmatpush1.msra.mxu0 0.0
    %1959 = vmatprep.subr.mxu0 0.0
    %1960 = vmatpush1.msra.mxu0 0.0
    %1961 = vmatprep.subr.mxu0 0.0
    %1962 = vmatpush1.msra.mxu0 0.0
    %1963 = vmatprep.subr.mxu0 0.0
    %1964 = vmatpush1.msra.mxu0 0.0
    %1965 = vmatprep.subr.mxu0 0.0
    %1966 = vmatpush1.msra.mxu0 0.0
    %1967 = vmatprep.subr.mxu0 0.0
    %1968 = vmatpush1.msra.mxu0 0.0
    %1969 = vmatprep.subr.mxu0 0.0
    %1970 = vmatpush1.msra.mxu0 0.0
    %1971 = vmatprep.subr.mxu0 0.0
    %1972 = vmatpush1.msra.mxu0 0.0
    %1973 = vmatprep.subr.mxu0 0.0
    %1974 = vmatpush1.msra.mxu0 0.0
    %1975 = vmatprep.subr.mxu0 0.0
    %1976 = vmatpush1.msra.mxu0 0.0
    %1977 = vmatprep.subr.mxu0 0.0
    %1978 = vmatpush1.msra.mxu0 0.0
    %1979 = vmatprep.subr.mxu0 0.0
    %1980 = vmatpush1.msra.mxu0 0.0
    %1981 = vmatprep.subr.mxu0 0.0
    %1982 = vmatpush1.msra.mxu0 0.0
    %1983 = vmatprep.subr.mxu0 0.0
    %1984 = vmatpush1.msra.mxu0 0.0
    %1985 = vmatprep.subr.mxu0 0.0
    %1986 = vmatpush1.msra.mxu0 0.0
    %1987 = vmatprep.subr.mxu0 0.0
    %1988 = vmatpush1.msra.mxu0 0.0
    %1989 = vmatprep.subr.mxu0 0.0
    %1990 = vmatpush1.msra.mxu0 0.0
    %1991 = vmatprep.subr.mxu0 0.0
    %1992 = vmatpush1.msra.mxu0 0.0
    %1993 = vmatprep.subr.mxu0 0.0
    %1994 = vmatpush1.msra.mxu0 0.0
    %1995 = vmatprep.mubr.f32.mxu0 0.0
    %1996 = vmatmul.mubr.f32.gmra.mrb[0].mxu0 %v1884
    %v1997 = vpop.f32.mrb[0].mxu0
    %v1998 = vadd.f32 %v1881, %v1997
    %v1999 = vpop.f32.mrb[0].mxu0
    %2000 = vmatprep.mubr.f32.mxu0 0.0
    %2001 = vmatmul.mubr.f32.gmra.mrb[0].mxu0 %v1887
    %v2002 = vpop.f32.mrb[0].mxu0
    %v2003 = vadd.f32 %v1881, %v2002
    %v2004 = vpop.f32.mrb[0].mxu0
    %2005 = vmatprep.mubr.f32.mxu0 0.0
    %2006 = vmatmul.mubr.f32.gmra.mrb[0].mxu0 %v1890
    %v2007 = vpop.f32.mrb[0].mxu0
    %v2008 = vadd.f32 %v1881, %v2007
    %v2009 = vpop.f32.mrb[0].mxu0
    %2010 = vmatprep.mubr.f32.mxu0 0.0
    %2011 = vmatmul.mubr.f32.gmra.mrb[0].mxu0 %v1893
    %v2012 = vpop.f32.mrb[0].mxu0
    %v2013 = vadd.f32 %v1881, %v2012
    %v2014 = vpop.f32.mrb[0].mxu0
    %2015 = vmatprep.mubr.f32.mxu0 0.0
    %2016 = vmatmul.mubr.f32.gmra.mrb[0].mxu0 %v1896
    %v2017 = vpop.f32.mrb[0].mxu0
    %v2018 = vadd.f32 %v1881, %v2017
    %v2019 = vpop.f32.mrb[0].mxu0
    %2020 = vmatprep.mubr.f32.mxu0 0.0
    %2021 = vmatmul.mubr.f32.gmra.mrb[0].mxu0 %v1899
    %v2022 = vpop.f32.mrb[0].mxu0
    %v2023 = vadd.f32 %v1881, %v2022
    %v2024 = vpop.f32.mrb[0].mxu0
    %2025 = vmatprep.mubr.f32.mxu0 0.0
    %2026 = vmatmul.mubr.f32.gmra.mrb[0].mxu0 %v1902
    %v2027 = vpop.f32.mrb[0].mxu0
    %v2028 = vadd.f32 %v1881, %v2027
    %v2029 = vpop.f32.mrb[0].mxu0
    %2030 = vmatprep.mubr.f32.mxu0 0.0
    %2031 = vmatmul.mubr.f32.gmra.mrb[0].mxu0 %v1905
    %v2032 = vpop.f32.mrb[0].mxu0
    %v2033 = vadd.f32 %v1881, %v2032
    %v2034 = vpop.f32.mrb[0].mxu0
    %2035 = vmatprep.mubr.f32.mxu0 0.0
    %2036 = vmatmul.mubr.f32.gmra.mrb[0].mxu0 %v1908
    %v2037 = vpop.f32.mrb[0].mxu0
    %v2038 = vadd.f32 %v1881, %v2037
    %v2039 = vpop.f32.mrb[0].mxu0
    %2040 = vmatprep.mubr.f32.mxu0 0.0
    %2041 = vmatmul.mubr.f32.gmra.mrb[0].mxu0 %v1911
    %v2042 = vpop.f32.mrb[0].mxu0
    %v2043 = vadd.f32 %v1881, %v2042
    %v2044 = vpop.f32.mrb[0].mxu0
    %2045 = vmatprep.mubr.f32.mxu0 0.0
    %2046 = vmatmul.mubr.f32.gmra.mrb[0].mxu0 %v1914
    %v2047 = vpop.f32.mrb[0].mxu0
    %v2048 = vadd.f32 %v1881, %v2047
    %v2049 = vpop.f32.mrb[0].mxu0
    %2050 = vmatprep.mubr.f32.mxu0 0.0
    %2051 = vmatmul.mubr.f32.gmra.mrb[0].mxu0 %v1917
    %v2052 = vpop.f32.mrb[0].mxu0
    %v2053 = vadd.f32 %v1881, %v2052
    %v2054 = vpop.f32.mrb[0].mxu0
    %2055 = vmatprep.mubr.f32.mxu0 0.0
    %2056 = vmatmul.mubr.f32.gmra.mrb[0].mxu0 %v1920
    %v2057 = vpop.f32.mrb[0].mxu0
    %v2058 = vadd.f32 %v1881, %v2057
    %v2059 = vpop.f32.mrb[0].mxu0
    %2060 = vmatprep.mubr.f32.mxu0 0.0
    %2061 = vmatmul.mubr.f32.gmra.mrb[0].mxu0 %v1923
    %v2062 = vpop.f32.mrb[0].mxu0
    %v2063 = vadd.f32 %v1881, %v2062
    %v2064 = vpop.f32.mrb[0].mxu0
    %2065 = vmatprep.mubr.f32.mxu0 0.0
    %2066 = vmatmul.mubr.f32.gmra.mrb[0].mxu0 %v1926
    %v2067 = vpop.f32.mrb[0].mxu0
    %v2068 = vadd.f32 %v1881, %v2067
    %v2069 = vpop.f32.mrb[0].mxu0
    %2070 = vmatprep.mubr.f32.mxu0 0.0
    %2071 = vmatmul.mubr.f32.gmra.mrb[0].mxu0 %v1929
    %v2072 = vpop.f32.mrb[0].mxu0
    %v2073 = vadd.f32 %v1881, %v2072
    %v2074 = vpop.f32.mrb[0].mxu0
    %2075 = vdwg.mxu0
    %2076 = vst [vmem:[#allocation2] sm:$0xff] %v1998
    %2077 = vst [vmem:[#allocation2 + $0x8] sm:$0xff] %v2003
    %2078 = vst [vmem:[#allocation2 + $0x10] sm:$0xff] %v2008
    %2079 = vst [vmem:[#allocation2 + $0x18] sm:$0xff] %v2013
    %2080 = vst [vmem:[#allocation2 + $0x20] sm:$0xff] %v2018
    %2081 = vst [vmem:[#allocation2 + $0x28] sm:$0xff] %v2023
    %2082 = vst [vmem:[#allocation2 + $0x30] sm:$0xff] %v2028
    %2083 = vst [vmem:[#allocation2 + $0x38] sm:$0xff] %v2033
    %2084 = vst [vmem:[#allocation2 + $0x40] sm:$0xff] %v2038
    %2085 = vst [vmem:[#allocation2 + $0x48] sm:$0xff] %v2043
    %2086 = vst [vmem:[#allocation2 + $0x50] sm:$0xff] %v2048
    %2087 = vst [vmem:[#allocation2 + $0x58] sm:$0xff] %v2053
    %2088 = vst [vmem:[#allocation2 + $0x60] sm:$0xff] %v2058
    %2089 = vst [vmem:[#allocation2 + $0x68] sm:$0xff] %v2063
    %2090 = vst [vmem:[#allocation2 + $0x70] sm:$0xff] %v2068
    %2091 = vst [vmem:[#allocation2 + $0x78] sm:$0xff] %v2073
    %s2092 = scalar_lea.vmem %s3, 32
    %v2093 = vld [vmem:[%s2092] sm:$0xff]
    %v2094 = vld [vmem:[%s2092 + $0x8] sm:$0xff]
    %v2095 = vld [vmem:[%s2092 + $0x10] sm:$0xff]
    %v2096 = vld [vmem:[%s2092 + $0x18] sm:$0xff]
    %v2097 = vld [vmem:[#allocation2] sm:$0xff]
    %v2098 = vxor.u32 %v2097, 2147483648
    %v2099 = vmul.f32 %v2098, 1.442695
    %v2100 = vpow.pop %v2099
    %v2101 = vadd.f32 %v2100, 1.0
    %v2102 = vrcp.pop %v2101
    %v2103 = vmul.f32 1.0, %v2102
    %v2104 = vtanh.pop %v2097
    %v2105 = vmul.f32 %v2103, 0.0
    %2107 = vrot.lane.b32.xlu0 %v2104, 64
    %v2108 = vpop.permute.xlu0 %2107
    %v2110 = vmul.f32 %v2103, %v2108
    %2112 = vrot.lane.b32.xlu0 %v2110, 32
    %v2113 = vpop.permute.xlu0 %2112
    %v2115 = vadd.f32 %v2105, %v2113
    %v2116 = vtanh.pop %v2115
    %2118 = vrot.lane.b32.xlu0 %v2116, 64
    %v2119 = vpop.permute.xlu0 %2118
    %v2121 = vmul.f32 %v2103, %v2119
    %2123 = vrot.lane.b32.xlu0 %v2121, 32
    %v2124 = vpop.permute.xlu0 %2123
    %2126 = vst.msk [vmem:[#allocation3] sm:$0xff] %vm308, %v2124
    %v2127 = vld [vmem:[#allocation2 + $0x8] sm:$0xff]
    %v2128 = vsel %vm308, %v2124, 0
    %2130 = vmatprep.subr.mxu0 0.0
    %2131 = vmatpush1.msra.mxu0 %v2093
    %2132 = vmatprep.subr.mxu0 0.0
    %2133 = vmatpush1.msra.mxu0 %v2094
    %2134 = vmatprep.subr.mxu0 0.0
    %2135 = vmatpush1.msra.mxu0 %v2095
    %2136 = vmatprep.subr.mxu0 0.0
    %2137 = vmatpush1.msra.mxu0 %v2096
    %2138 = vmatprep.subr.mxu0 0.0
    %2139 = vmatpush1.msra.mxu0 0.0
    %2140 = vmatprep.subr.mxu0 0.0
    %2141 = vmatpush1.msra.mxu0 0.0
    %2142 = vmatprep.subr.mxu0 0.0
    %2143 = vmatpush1.msra.mxu0 0.0
    %2144 = vmatprep.subr.mxu0 0.0
    %2145 = vmatpush1.msra.mxu0 0.0
    %2146 = vmatprep.subr.mxu0 0.0
    %2147 = vmatpush1.msra.mxu0 0.0
    %2148 = vmatprep.subr.mxu0 0.0
    %2149 = vmatpush1.msra.mxu0 0.0
    %2150 = vmatprep.subr.mxu0 0.0
    %2151 = vmatpush1.msra.mxu0 0.0
    %2152 = vmatprep.subr.mxu0 0.0
    %2153 = vmatpush1.msra.mxu0 0.0
    %2154 = vmatprep.subr.mxu0 0.0
    %2155 = vmatpush1.msra.mxu0 0.0
    %2156 = vmatprep.subr.mxu0 0.0
    %2157 = vmatpush1.msra.mxu0 0.0
    %2158 = vmatprep.subr.mxu0 0.0
    %2159 = vmatpush1.msra.mxu0 0.0
    %2160 = vmatprep.subr.mxu0 0.0
    %2161 = vmatpush1.msra.mxu0 0.0
    %2162 = vmatprep.subr.mxu0 0.0
    %2163 = vmatpush1.msra.mxu0 0.0
    %2164 = vmatprep.subr.mxu0 0.0
    %2165 = vmatpush1.msra.mxu0 0.0
    %2166 = vmatprep.subr.mxu0 0.0
    %2167 = vmatpush1.msra.mxu0 0.0
    %2168 = vmatprep.subr.mxu0 0.0
    %2169 = vmatpush1.msra.mxu0 0.0
    %2170 = vmatprep.subr.mxu0 0.0
    %2171 = vmatpush1.msra.mxu0 0.0
    %2172 = vmatprep.subr.mxu0 0.0
    %2173 = vmatpush1.msra.mxu0 0.0
    %2174 = vmatprep.subr.mxu0 0.0
    %2175 = vmatpush1.msra.mxu0 0.0
    %2176 = vmatprep.subr.mxu0 0.0
    %2177 = vmatpush1.msra.mxu0 0.0
    %2178 = vmatprep.subr.mxu0 0.0
    %2179 = vmatpush1.msra.mxu0 0.0
    %2180 = vmatprep.subr.mxu0 0.0
    %2181 = vmatpush1.msra.mxu0 0.0
    %2182 = vmatprep.subr.mxu0 0.0
    %2183 = vmatpush1.msra.mxu0 0.0
    %2184 = vmatprep.subr.mxu0 0.0
    %2185 = vmatpush1.msra.mxu0 0.0
    %2186 = vmatprep.subr.mxu0 0.0
    %2187 = vmatpush1.msra.mxu0 0.0
    %2188 = vmatprep.subr.mxu0 0.0
    %2189 = vmatpush1.msra.mxu0 0.0
    %2190 = vmatprep.subr.mxu0 0.0
    %2191 = vmatpush1.msra.mxu0 0.0
    %2192 = vmatprep.subr.mxu0 0.0
    %2193 = vmatpush1.msra.mxu0 0.0
    %2194 = vmatprep.mubr.f32.mxu0 0.0
    %2195 = vmatmul.mubr.f32.gmra.mrb[0].mxu0 %v2128
    %v2196 = vpop.f32.mrb[0].mxu0
    %v2197 = vadd.f32 0.0, %v2196
    %v2198 = vpop.f32.mrb[0].mxu0
    %2199 = vdwg.mxu0
    %v2200 = vadd.f32 %v2127, %v2197
    %v2201 = vxor.u32 %v2200, 2147483648
    %v2202 = vmul.f32 %v2201, 1.442695
    %v2203 = vpow.pop %v2202
    %v2204 = vadd.f32 %v2203, 1.0
    %v2205 = vrcp.pop %v2204
    %v2206 = vmul.f32 1.0, %v2205
    %v2207 = vtanh.pop %v2200
    %v2208 = vmul.f32 %v2206, %v2115
    %2210 = vrot.lane.b32.xlu0 %v2207, 64
    %v2211 = vpop.permute.xlu0 %2210
    %v2213 = vmul.f32 %v2206, %v2211
    %2215 = vrot.lane.b32.xlu0 %v2213, 32
    %v2216 = vpop.permute.xlu0 %2215
    %v2218 = vadd.f32 %v2208, %v2216
    %v2219 = vtanh.pop %v2218
    %2221 = vrot.lane.b32.xlu0 %v2219, 64
    %v2222 = vpop.permute.xlu0 %2221
    %v2224 = vmul.f32 %v2206, %v2222
    %2226 = vrot.lane.b32.xlu0 %v2224, 32
    %v2227 = vpop.permute.xlu0 %2226
    %2229 = vst.msk [vmem:[#allocation3 + $0x8] sm:$0xff] %vm308, %v2227
    %v2230 = vld [vmem:[#allocation2 + $0x10] sm:$0xff]
    %v2231 = vsel %vm308, %v2227, 0
    %2233 = vmatprep.subr.mxu0 0.0
    %2234 = vmatpush1.msra.mxu0 %v2093
    %2235 = vmatprep.subr.mxu0 0.0
    %2236 = vmatpush1.msra.mxu0 %v2094
    %2237 = vmatprep.subr.mxu0 0.0
    %2238 = vmatpush1.msra.mxu0 %v2095
    %2239 = vmatprep.subr.mxu0 0.0
    %2240 = vmatpush1.msra.mxu0 %v2096
    %2241 = vmatprep.subr.mxu0 0.0
    %2242 = vmatpush1.msra.mxu0 0.0
    %2243 = vmatprep.subr.mxu0 0.0
    %2244 = vmatpush1.msra.mxu0 0.0
    %2245 = vmatprep.subr.mxu0 0.0
    %2246 = vmatpush1.msra.mxu0 0.0
    %2247 = vmatprep.subr.mxu0 0.0
    %2248 = vmatpush1.msra.mxu0 0.0
    %2249 = vmatprep.subr.mxu0 0.0
    %2250 = vmatpush1.msra.mxu0 0.0
    %2251 = vmatprep.subr.mxu0 0.0
    %2252 = vmatpush1.msra.mxu0 0.0
    %2253 = vmatprep.subr.mxu0 0.0
    %2254 = vmatpush1.msra.mxu0 0.0
    %2255 = vmatprep.subr.mxu0 0.0
    %2256 = vmatpush1.msra.mxu0 0.0
    %2257 = vmatprep.subr.mxu0 0.0
    %2258 = vmatpush1.msra.mxu0 0.0
    %2259 = vmatprep.subr.mxu0 0.0
    %2260 = vmatpush1.msra.mxu0 0.0
    %2261 = vmatprep.subr.mxu0 0.0
    %2262 = vmatpush1.msra.mxu0 0.0
    %2263 = vmatprep.subr.mxu0 0.0
    %2264 = vmatpush1.msra.mxu0 0.0
    %2265 = vmatprep.subr.mxu0 0.0
    %2266 = vmatpush1.msra.mxu0 0.0
    %2267 = vmatprep.subr.mxu0 0.0
    %2268 = vmatpush1.msra.mxu0 0.0
    %2269 = vmatprep.subr.mxu0 0.0
    %2270 = vmatpush1.msra.mxu0 0.0
    %2271 = vmatprep.subr.mxu0 0.0
    %2272 = vmatpush1.msra.mxu0 0.0
    %2273 = vmatprep.subr.mxu0 0.0
    %2274 = vmatpush1.msra.mxu0 0.0
    %2275 = vmatprep.subr.mxu0 0.0
    %2276 = vmatpush1.msra.mxu0 0.0
    %2277 = vmatprep.subr.mxu0 0.0
    %2278 = vmatpush1.msra.mxu0 0.0
    %2279 = vmatprep.subr.mxu0 0.0
    %2280 = vmatpush1.msra.mxu0 0.0
    %2281 = vmatprep.subr.mxu0 0.0
    %2282 = vmatpush1.msra.mxu0 0.0
    %2283 = vmatprep.subr.mxu0 0.0
    %2284 = vmatpush1.msra.mxu0 0.0
    %2285 = vmatprep.subr.mxu0 0.0
    %2286 = vmatpush1.msra.mxu0 0.0
    %2287 = vmatprep.subr.mxu0 0.0
    %2288 = vmatpush1.msra.mxu0 0.0
    %2289 = vmatprep.subr.mxu0 0.0
    %2290 = vmatpush1.msra.mxu0 0.0
    %2291 = vmatprep.subr.mxu0 0.0
    %2292 = vmatpush1.msra.mxu0 0.0
    %2293 = vmatprep.subr.mxu0 0.0
    %2294 = vmatpush1.msra.mxu0 0.0
    %2295 = vmatprep.subr.mxu0 0.0
    %2296 = vmatpush1.msra.mxu0 0.0
    %2297 = vmatprep.mubr.f32.mxu0 0.0
    %2298 = vmatmul.mubr.f32.gmra.mrb[0].mxu0 %v2231
    %v2299 = vpop.f32.mrb[0].mxu0
    %v2300 = vadd.f32 0.0, %v2299
    %v2301 = vpop.f32.mrb[0].mxu0
    %2302 = vdwg.mxu0
    %v2303 = vadd.f32 %v2230, %v2300
    %v2304 = vxor.u32 %v2303, 2147483648
    %v2305 = vmul.f32 %v2304, 1.442695
    %v2306 = vpow.pop %v2305
    %v2307 = vadd.f32 %v2306, 1.0
    %v2308 = vrcp.pop %v2307
    %v2309 = vmul.f32 1.0, %v2308
    %v2310 = vtanh.pop %v2303
    %v2311 = vmul.f32 %v2309, %v2218
    %2313 = vrot.lane.b32.xlu0 %v2310, 64
    %v2314 = vpop.permute.xlu0 %2313
    %v2316 = vmul.f32 %v2309, %v2314
    %2318 = vrot.lane.b32.xlu0 %v2316, 32
    %v2319 = vpop.permute.xlu0 %2318
    %v2321 = vadd.f32 %v2311, %v2319
    %v2322 = vtanh.pop %v2321
    %2324 = vrot.lane.b32.xlu0 %v2322, 64
    %v2325 = vpop.permute.xlu0 %2324
    %v2327 = vmul.f32 %v2309, %v2325
    %2329 = vrot.lane.b32.xlu0 %v2327, 32
    %v2330 = vpop.permute.xlu0 %2329
    %2332 = vst.msk [vmem:[#allocation3 + $0x10] sm:$0xff] %vm308, %v2330
    %v2333 = vld [vmem:[#allocation2 + $0x18] sm:$0xff]
    %v2334 = vsel %vm308, %v2330, 0
    %2336 = vmatprep.subr.mxu0 0.0
    %2337 = vmatpush1.msra.mxu0 %v2093
    %2338 = vmatprep.subr.mxu0 0.0
    %2339 = vmatpush1.msra.mxu0 %v2094
    %2340 = vmatprep.subr.mxu0 0.0
    %2341 = vmatpush1.msra.mxu0 %v2095
    %2342 = vmatprep.subr.mxu0 0.0
    %2343 = vmatpush1.msra.mxu0 %v2096
    %2344 = vmatprep.subr.mxu0 0.0
    %2345 = vmatpush1.msra.mxu0 0.0
    %2346 = vmatprep.subr.mxu0 0.0
    %2347 = vmatpush1.msra.mxu0 0.0
    %2348 = vmatprep.subr.mxu0 0.0
    %2349 = vmatpush1.msra.mxu0 0.0
    %2350 = vmatprep.subr.mxu0 0.0
    %2351 = vmatpush1.msra.mxu0 0.0
    %2352 = vmatprep.subr.mxu0 0.0
    %2353 = vmatpush1.msra.mxu0 0.0
    %2354 = vmatprep.subr.mxu0 0.0
    %2355 = vmatpush1.msra.mxu0 0.0
    %2356 = vmatprep.subr.mxu0 0.0
    %2357 = vmatpush1.msra.mxu0 0.0
    %2358 = vmatprep.subr.mxu0 0.0
    %2359 = vmatpush1.msra.mxu0 0.0
    %2360 = vmatprep.subr.mxu0 0.0
    %2361 = vmatpush1.msra.mxu0 0.0
    %2362 = vmatprep.subr.mxu0 0.0
    %2363 = vmatpush1.msra.mxu0 0.0
    %2364 = vmatprep.subr.mxu0 0.0
    %2365 = vmatpush1.msra.mxu0 0.0
    %2366 = vmatprep.subr.mxu0 0.0
    %2367 = vmatpush1.msra.mxu0 0.0
    %2368 = vmatprep.subr.mxu0 0.0
    %2369 = vmatpush1.msra.mxu0 0.0
    %2370 = vmatprep.subr.mxu0 0.0
    %2371 = vmatpush1.msra.mxu0 0.0
    %2372 = vmatprep.subr.mxu0 0.0
    %2373 = vmatpush1.msra.mxu0 0.0
    %2374 = vmatprep.subr.mxu0 0.0
    %2375 = vmatpush1.msra.mxu0 0.0
    %2376 = vmatprep.subr.mxu0 0.0
    %2377 = vmatpush1.msra.mxu0 0.0
    %2378 = vmatprep.subr.mxu0 0.0
    %2379 = vmatpush1.msra.mxu0 0.0
    %2380 = vmatprep.subr.mxu0 0.0
    %2381 = vmatpush1.msra.mxu0 0.0
    %2382 = vmatprep.subr.mxu0 0.0
    %2383 = vmatpush1.msra.mxu0 0.0
    %2384 = vmatprep.subr.mxu0 0.0
    %2385 = vmatpush1.msra.mxu0 0.0
    %2386 = vmatprep.subr.mxu0 0.0
    %2387 = vmatpush1.msra.mxu0 0.0
    %2388 = vmatprep.subr.mxu0 0.0
    %2389 = vmatpush1.msra.mxu0 0.0
    %2390 = vmatprep.subr.mxu0 0.0
    %2391 = vmatpush1.msra.mxu0 0.0
    %2392 = vmatprep.subr.mxu0 0.0
    %2393 = vmatpush1.msra.mxu0 0.0
    %2394 = vmatprep.subr.mxu0 0.0
    %2395 = vmatpush1.msra.mxu0 0.0
    %2396 = vmatprep.subr.mxu0 0.0
    %2397 = vmatpush1.msra.mxu0 0.0
    %2398 = vmatprep.subr.mxu0 0.0
    %2399 = vmatpush1.msra.mxu0 0.0
    %2400 = vmatprep.mubr.f32.mxu0 0.0
    %2401 = vmatmul.mubr.f32.gmra.mrb[0].mxu0 %v2334
    %v2402 = vpop.f32.mrb[0].mxu0
    %v2403 = vadd.f32 0.0, %v2402
    %v2404 = vpop.f32.mrb[0].mxu0
    %2405 = vdwg.mxu0
    %v2406 = vadd.f32 %v2333, %v2403
    %v2407 = vxor.u32 %v2406, 2147483648
    %v2408 = vmul.f32 %v2407, 1.442695
    %v2409 = vpow.pop %v2408
    %v2410 = vadd.f32 %v2409, 1.0
    %v2411 = vrcp.pop %v2410
    %v2412 = vmul.f32 1.0, %v2411
    %v2413 = vtanh.pop %v2406
    %v2414 = vmul.f32 %v2412, %v2321
    %2416 = vrot.lane.b32.xlu0 %v2413, 64
    %v2417 = vpop.permute.xlu0 %2416
    %v2419 = vmul.f32 %v2412, %v2417
    %2421 = vrot.lane.b32.xlu0 %v2419, 32
    %v2422 = vpop.permute.xlu0 %2421
    %v2424 = vadd.f32 %v2414, %v2422
    %v2425 = vtanh.pop %v2424
    %2427 = vrot.lane.b32.xlu0 %v2425, 64
    %v2428 = vpop.permute.xlu0 %2427
    %v2430 = vmul.f32 %v2412, %v2428
    %2432 = vrot.lane.b32.xlu0 %v2430, 32
    %v2433 = vpop.permute.xlu0 %2432
    %2435 = vst.msk [vmem:[#allocation3 + $0x18] sm:$0xff] %vm308, %v2433
    %v2436 = vld [vmem:[#allocation2 + $0x20] sm:$0xff]
    %v2437 = vsel %vm308, %v2433, 0
    %2439 = vmatprep.subr.mxu0 0.0
    %2440 = vmatpush1.msra.mxu0 %v2093
    %2441 = vmatprep.subr.mxu0 0.0
    %2442 = vmatpush1.msra.mxu0 %v2094
    %2443 = vmatprep.subr.mxu0 0.0
    %2444 = vmatpush1.msra.mxu0 %v2095
    %2445 = vmatprep.subr.mxu0 0.0
    %2446 = vmatpush1.msra.mxu0 %v2096
    %2447 = vmatprep.subr.mxu0 0.0
    %2448 = vmatpush1.msra.mxu0 0.0
    %2449 = vmatprep.subr.mxu0 0.0
    %2450 = vmatpush1.msra.mxu0 0.0
    %2451 = vmatprep.subr.mxu0 0.0
    %2452 = vmatpush1.msra.mxu0 0.0
    %2453 = vmatprep.subr.mxu0 0.0
    %2454 = vmatpush1.msra.mxu0 0.0
    %2455 = vmatprep.subr.mxu0 0.0
    %2456 = vmatpush1.msra.mxu0 0.0
    %2457 = vmatprep.subr.mxu0 0.0
    %2458 = vmatpush1.msra.mxu0 0.0
    %2459 = vmatprep.subr.mxu0 0.0
    %2460 = vmatpush1.msra.mxu0 0.0
    %2461 = vmatprep.subr.mxu0 0.0
    %2462 = vmatpush1.msra.mxu0 0.0
    %2463 = vmatprep.subr.mxu0 0.0
    %2464 = vmatpush1.msra.mxu0 0.0
    %2465 = vmatprep.subr.mxu0 0.0
    %2466 = vmatpush1.msra.mxu0 0.0
    %2467 = vmatprep.subr.mxu0 0.0
    %2468 = vmatpush1.msra.mxu0 0.0
    %2469 = vmatprep.subr.mxu0 0.0
    %2470 = vmatpush1.msra.mxu0 0.0
    %2471 = vmatprep.subr.mxu0 0.0
    %2472 = vmatpush1.msra.mxu0 0.0
    %2473 = vmatprep.subr.mxu0 0.0
    %2474 = vmatpush1.msra.mxu0 0.0
    %2475 = vmatprep.subr.mxu0 0.0
    %2476 = vmatpush1.msra.mxu0 0.0
    %2477 = vmatprep.subr.mxu0 0.0
    %2478 = vmatpush1.msra.mxu0 0.0
    %2479 = vmatprep.subr.mxu0 0.0
    %2480 = vmatpush1.msra.mxu0 0.0
    %2481 = vmatprep.subr.mxu0 0.0
    %2482 = vmatpush1.msra.mxu0 0.0
    %2483 = vmatprep.subr.mxu0 0.0
    %2484 = vmatpush1.msra.mxu0 0.0
    %2485 = vmatprep.subr.mxu0 0.0
    %2486 = vmatpush1.msra.mxu0 0.0
    %2487 = vmatprep.subr.mxu0 0.0
    %2488 = vmatpush1.msra.mxu0 0.0
    %2489 = vmatprep.subr.mxu0 0.0
    %2490 = vmatpush1.msra.mxu0 0.0
    %2491 = vmatprep.subr.mxu0 0.0
    %2492 = vmatpush1.msra.mxu0 0.0
    %2493 = vmatprep.subr.mxu0 0.0
    %2494 = vmatpush1.msra.mxu0 0.0
    %2495 = vmatprep.subr.mxu0 0.0
    %2496 = vmatpush1.msra.mxu0 0.0
    %2497 = vmatprep.subr.mxu0 0.0
    %2498 = vmatpush1.msra.mxu0 0.0
    %2499 = vmatprep.subr.mxu0 0.0
    %2500 = vmatpush1.msra.mxu0 0.0
    %2501 = vmatprep.subr.mxu0 0.0
    %2502 = vmatpush1.msra.mxu0 0.0
    %2503 = vmatprep.mubr.f32.mxu0 0.0
    %2504 = vmatmul.mubr.f32.gmra.mrb[0].mxu0 %v2437
    %v2505 = vpop.f32.mrb[0].mxu0
    %v2506 = vadd.f32 0.0, %v2505
    %v2507 = vpop.f32.mrb[0].mxu0
    %2508 = vdwg.mxu0
    %v2509 = vadd.f32 %v2436, %v2506
    %v2510 = vxor.u32 %v2509, 2147483648
    %v2511 = vmul.f32 %v2510, 1.442695
    %v2512 = vpow.pop %v2511
    %v2513 = vadd.f32 %v2512, 1.0
    %v2514 = vrcp.pop %v2513
    %v2515 = vmul.f32 1.0, %v2514
    %v2516 = vtanh.pop %v2509
    %v2517 = vmul.f32 %v2515, %v2424
    %2519 = vrot.lane.b32.xlu0 %v2516, 64
    %v2520 = vpop.permute.xlu0 %2519
    %v2522 = vmul.f32 %v2515, %v2520
    %2524 = vrot.lane.b32.xlu0 %v2522, 32
    %v2525 = vpop.permute.xlu0 %2524
    %v2527 = vadd.f32 %v2517, %v2525
    %v2528 = vtanh.pop %v2527
    %2530 = vrot.lane.b32.xlu0 %v2528, 64
    %v2531 = vpop.permute.xlu0 %2530
    %v2533 = vmul.f32 %v2515, %v2531
    %2535 = vrot.lane.b32.xlu0 %v2533, 32
    %v2536 = vpop.permute.xlu0 %2535
    %2538 = vst.msk [vmem:[#allocation3 + $0x20] sm:$0xff] %vm308, %v2536
    %v2539 = vld [vmem:[#allocation2 + $0x28] sm:$0xff]
    %v2540 = vsel %vm308, %v2536, 0
    %2542 = vmatprep.subr.mxu0 0.0
    %2543 = vmatpush1.msra.mxu0 %v2093
    %2544 = vmatprep.subr.mxu0 0.0
    %2545 = vmatpush1.msra.mxu0 %v2094
    %2546 = vmatprep.subr.mxu0 0.0
    %2547 = vmatpush1.msra.mxu0 %v2095
    %2548 = vmatprep.subr.mxu0 0.0
    %2549 = vmatpush1.msra.mxu0 %v2096
    %2550 = vmatprep.subr.mxu0 0.0
    %2551 = vmatpush1.msra.mxu0 0.0
    %2552 = vmatprep.subr.mxu0 0.0
    %2553 = vmatpush1.msra.mxu0 0.0
    %2554 = vmatprep.subr.mxu0 0.0
    %2555 = vmatpush1.msra.mxu0 0.0
    %2556 = vmatprep.subr.mxu0 0.0
    %2557 = vmatpush1.msra.mxu0 0.0
    %2558 = vmatprep.subr.mxu0 0.0
    %2559 = vmatpush1.msra.mxu0 0.0
    %2560 = vmatprep.subr.mxu0 0.0
    %2561 = vmatpush1.msra.mxu0 0.0
    %2562 = vmatprep.subr.mxu0 0.0
    %2563 = vmatpush1.msra.mxu0 0.0
    %2564 = vmatprep.subr.mxu0 0.0
    %2565 = vmatpush1.msra.mxu0 0.0
    %2566 = vmatprep.subr.mxu0 0.0
    %2567 = vmatpush1.msra.mxu0 0.0
    %2568 = vmatprep.subr.mxu0 0.0
    %2569 = vmatpush1.msra.mxu0 0.0
    %2570 = vmatprep.subr.mxu0 0.0
    %2571 = vmatpush1.msra.mxu0 0.0
    %2572 = vmatprep.subr.mxu0 0.0
    %2573 = vmatpush1.msra.mxu0 0.0
    %2574 = vmatprep.subr.mxu0 0.0
    %2575 = vmatpush1.msra.mxu0 0.0
    %2576 = vmatprep.subr.mxu0 0.0
    %2577 = vmatpush1.msra.mxu0 0.0
    %2578 = vmatprep.subr.mxu0 0.0
    %2579 = vmatpush1.msra.mxu0 0.0
    %2580 = vmatprep.subr.mxu0 0.0
    %2581 = vmatpush1.msra.mxu0 0.0
    %2582 = vmatprep.subr.mxu0 0.0
    %2583 = vmatpush1.msra.mxu0 0.0
    %2584 = vmatprep.subr.mxu0 0.0
    %2585 = vmatpush1.msra.mxu0 0.0
    %2586 = vmatprep.subr.mxu0 0.0
    %2587 = vmatpush1.msra.mxu0 0.0
    %2588 = vmatprep.subr.mxu0 0.0
    %2589 = vmatpush1.msra.mxu0 0.0
    %2590 = vmatprep.subr.mxu0 0.0
    %2591 = vmatpush1.msra.mxu0 0.0
    %2592 = vmatprep.subr.mxu0 0.0
    %2593 = vmatpush1.msra.mxu0 0.0
    %2594 = vmatprep.subr.mxu0 0.0
    %2595 = vmatpush1.msra.mxu0 0.0
    %2596 = vmatprep.subr.mxu0 0.0
    %2597 = vmatpush1.msra.mxu0 0.0
    %2598 = vmatprep.subr.mxu0 0.0
    %2599 = vmatpush1.msra.mxu0 0.0
    %2600 = vmatprep.subr.mxu0 0.0
    %2601 = vmatpush1.msra.mxu0 0.0
    %2602 = vmatprep.subr.mxu0 0.0
    %2603 = vmatpush1.msra.mxu0 0.0
    %2604 = vmatprep.subr.mxu0 0.0
    %2605 = vmatpush1.msra.mxu0 0.0
    %2606 = vmatprep.mubr.f32.mxu0 0.0
    %2607 = vmatmul.mubr.f32.gmra.mrb[0].mxu0 %v2540
    %v2608 = vpop.f32.mrb[0].mxu0
    %v2609 = vadd.f32 0.0, %v2608
    %v2610 = vpop.f32.mrb[0].mxu0
    %2611 = vdwg.mxu0
    %v2612 = vadd.f32 %v2539, %v2609
    %v2613 = vxor.u32 %v2612, 2147483648
    %v2614 = vmul.f32 %v2613, 1.442695
    %v2615 = vpow.pop %v2614
    %v2616 = vadd.f32 %v2615, 1.0
    %v2617 = vrcp.pop %v2616
    %v2618 = vmul.f32 1.0, %v2617
    %v2619 = vtanh.pop %v2612
    %v2620 = vmul.f32 %v2618, %v2527
    %2622 = vrot.lane.b32.xlu0 %v2619, 64
    %v2623 = vpop.permute.xlu0 %2622
    %v2625 = vmul.f32 %v2618, %v2623
    %2627 = vrot.lane.b32.xlu0 %v2625, 32
    %v2628 = vpop.permute.xlu0 %2627
    %v2630 = vadd.f32 %v2620, %v2628
    %v2631 = vtanh.pop %v2630
    %2633 = vrot.lane.b32.xlu0 %v2631, 64
    %v2634 = vpop.permute.xlu0 %2633
    %v2636 = vmul.f32 %v2618, %v2634
    %2638 = vrot.lane.b32.xlu0 %v2636, 32
    %v2639 = vpop.permute.xlu0 %2638
    %2641 = vst.msk [vmem:[#allocation3 + $0x28] sm:$0xff] %vm308, %v2639
    %v2642 = vld [vmem:[#allocation2 + $0x30] sm:$0xff]
    %v2643 = vsel %vm308, %v2639, 0
    %2645 = vmatprep.subr.mxu0 0.0
    %2646 = vmatpush1.msra.mxu0 %v2093
    %2647 = vmatprep.subr.mxu0 0.0
    %2648 = vmatpush1.msra.mxu0 %v2094
    %2649 = vmatprep.subr.mxu0 0.0
    %2650 = vmatpush1.msra.mxu0 %v2095
    %2651 = vmatprep.subr.mxu0 0.0
    %2652 = vmatpush1.msra.mxu0 %v2096
    %2653 = vmatprep.subr.mxu0 0.0
    %2654 = vmatpush1.msra.mxu0 0.0
    %2655 = vmatprep.subr.mxu0 0.0
    %2656 = vmatpush1.msra.mxu0 0.0
    %2657 = vmatprep.subr.mxu0 0.0
    %2658 = vmatpush1.msra.mxu0 0.0
    %2659 = vmatprep.subr.mxu0 0.0
    %2660 = vmatpush1.msra.mxu0 0.0
    %2661 = vmatprep.subr.mxu0 0.0
    %2662 = vmatpush1.msra.mxu0 0.0
    %2663 = vmatprep.subr.mxu0 0.0
    %2664 = vmatpush1.msra.mxu0 0.0
    %2665 = vmatprep.subr.mxu0 0.0
    %2666 = vmatpush1.msra.mxu0 0.0
    %2667 = vmatprep.subr.mxu0 0.0
    %2668 = vmatpush1.msra.mxu0 0.0
    %2669 = vmatprep.subr.mxu0 0.0
    %2670 = vmatpush1.msra.mxu0 0.0
    %2671 = vmatprep.subr.mxu0 0.0
    %2672 = vmatpush1.msra.mxu0 0.0
    %2673 = vmatprep.subr.mxu0 0.0
    %2674 = vmatpush1.msra.mxu0 0.0
    %2675 = vmatprep.subr.mxu0 0.0
    %2676 = vmatpush1.msra.mxu0 0.0
    %2677 = vmatprep.subr.mxu0 0.0
    %2678 = vmatpush1.msra.mxu0 0.0
    %2679 = vmatprep.subr.mxu0 0.0
    %2680 = vmatpush1.msra.mxu0 0.0
    %2681 = vmatprep.subr.mxu0 0.0
    %2682 = vmatpush1.msra.mxu0 0.0
    %2683 = vmatprep.subr.mxu0 0.0
    %2684 = vmatpush1.msra.mxu0 0.0
    %2685 = vmatprep.subr.mxu0 0.0
    %2686 = vmatpush1.msra.mxu0 0.0
    %2687 = vmatprep.subr.mxu0 0.0
    %2688 = vmatpush1.msra.mxu0 0.0
    %2689 = vmatprep.subr.mxu0 0.0
    %2690 = vmatpush1.msra.mxu0 0.0
    %2691 = vmatprep.subr.mxu0 0.0
    %2692 = vmatpush1.msra.mxu0 0.0
    %2693 = vmatprep.subr.mxu0 0.0
    %2694 = vmatpush1.msra.mxu0 0.0
    %2695 = vmatprep.subr.mxu0 0.0
    %2696 = vmatpush1.msra.mxu0 0.0
    %2697 = vmatprep.subr.mxu0 0.0
    %2698 = vmatpush1.msra.mxu0 0.0
    %2699 = vmatprep.subr.mxu0 0.0
    %2700 = vmatpush1.msra.mxu0 0.0
    %2701 = vmatprep.subr.mxu0 0.0
    %2702 = vmatpush1.msra.mxu0 0.0
    %2703 = vmatprep.subr.mxu0 0.0
    %2704 = vmatpush1.msra.mxu0 0.0
    %2705 = vmatprep.subr.mxu0 0.0
    %2706 = vmatpush1.msra.mxu0 0.0
    %2707 = vmatprep.subr.mxu0 0.0
    %2708 = vmatpush1.msra.mxu0 0.0
    %2709 = vmatprep.mubr.f32.mxu0 0.0
    %2710 = vmatmul.mubr.f32.gmra.mrb[0].mxu0 %v2643
    %v2711 = vpop.f32.mrb[0].mxu0
    %v2712 = vadd.f32 0.0, %v2711
    %v2713 = vpop.f32.mrb[0].mxu0
    %2714 = vdwg.mxu0
    %v2715 = vadd.f32 %v2642, %v2712
    %v2716 = vxor.u32 %v2715, 2147483648
    %v2717 = vmul.f32 %v2716, 1.442695
    %v2718 = vpow.pop %v2717
    %v2719 = vadd.f32 %v2718, 1.0
    %v2720 = vrcp.pop %v2719
    %v2721 = vmul.f32 1.0, %v2720
    %v2722 = vtanh.pop %v2715
    %v2723 = vmul.f32 %v2721, %v2630
    %2725 = vrot.lane.b32.xlu0 %v2722, 64
    %v2726 = vpop.permute.xlu0 %2725
    %v2728 = vmul.f32 %v2721, %v2726
    %2730 = vrot.lane.b32.xlu0 %v2728, 32
    %v2731 = vpop.permute.xlu0 %2730
    %v2733 = vadd.f32 %v2723, %v2731
    %v2734 = vtanh.pop %v2733
    %2736 = vrot.lane.b32.xlu0 %v2734, 64
    %v2737 = vpop.permute.xlu0 %2736
    %v2739 = vmul.f32 %v2721, %v2737
    %2741 = vrot.lane.b32.xlu0 %v2739, 32
    %v2742 = vpop.permute.xlu0 %2741
    %2744 = vst.msk [vmem:[#allocation3 + $0x30] sm:$0xff] %vm308, %v2742
    %v2745 = vld [vmem:[#allocation2 + $0x38] sm:$0xff]
    %v2746 = vsel %vm308, %v2742, 0
    %2748 = vmatprep.subr.mxu0 0.0
    %2749 = vmatpush1.msra.mxu0 %v2093
    %2750 = vmatprep.subr.mxu0 0.0
    %2751 = vmatpush1.msra.mxu0 %v2094
    %2752 = vmatprep.subr.mxu0 0.0
    %2753 = vmatpush1.msra.mxu0 %v2095
    %2754 = vmatprep.subr.mxu0 0.0
    %2755 = vmatpush1.msra.mxu0 %v2096
    %2756 = vmatprep.subr.mxu0 0.0
    %2757 = vmatpush1.msra.mxu0 0.0
    %2758 = vmatprep.subr.mxu0 0.0
    %2759 = vmatpush1.msra.mxu0 0.0
    %2760 = vmatprep.subr.mxu0 0.0
    %2761 = vmatpush1.msra.mxu0 0.0
    %2762 = vmatprep.subr.mxu0 0.0
    %2763 = vmatpush1.msra.mxu0 0.0
    %2764 = vmatprep.subr.mxu0 0.0
    %2765 = vmatpush1.msra.mxu0 0.0
    %2766 = vmatprep.subr.mxu0 0.0
    %2767 = vmatpush1.msra.mxu0 0.0
    %2768 = vmatprep.subr.mxu0 0.0
    %2769 = vmatpush1.msra.mxu0 0.0
    %2770 = vmatprep.subr.mxu0 0.0
    %2771 = vmatpush1.msra.mxu0 0.0
    %2772 = vmatprep.subr.mxu0 0.0
    %2773 = vmatpush1.msra.mxu0 0.0
    %2774 = vmatprep.subr.mxu0 0.0
    %2775 = vmatpush1.msra.mxu0 0.0
    %2776 = vmatprep.subr.mxu0 0.0
    %2777 = vmatpush1.msra.mxu0 0.0
    %2778 = vmatprep.subr.mxu0 0.0
    %2779 = vmatpush1.msra.mxu0 0.0
    %2780 = vmatprep.subr.mxu0 0.0
    %2781 = vmatpush1.msra.mxu0 0.0
    %2782 = vmatprep.subr.mxu0 0.0
    %2783 = vmatpush1.msra.mxu0 0.0
    %2784 = vmatprep.subr.mxu0 0.0
    %2785 = vmatpush1.msra.mxu0 0.0
    %2786 = vmatprep.subr.mxu0 0.0
    %2787 = vmatpush1.msra.mxu0 0.0
    %2788 = vmatprep.subr.mxu0 0.0
    %2789 = vmatpush1.msra.mxu0 0.0
    %2790 = vmatprep.subr.mxu0 0.0
    %2791 = vmatpush1.msra.mxu0 0.0
    %2792 = vmatprep.subr.mxu0 0.0
    %2793 = vmatpush1.msra.mxu0 0.0
    %2794 = vmatprep.subr.mxu0 0.0
    %2795 = vmatpush1.msra.mxu0 0.0
    %2796 = vmatprep.subr.mxu0 0.0
    %2797 = vmatpush1.msra.mxu0 0.0
    %2798 = vmatprep.subr.mxu0 0.0
    %2799 = vmatpush1.msra.mxu0 0.0
    %2800 = vmatprep.subr.mxu0 0.0
    %2801 = vmatpush1.msra.mxu0 0.0
    %2802 = vmatprep.subr.mxu0 0.0
    %2803 = vmatpush1.msra.mxu0 0.0
    %2804 = vmatprep.subr.mxu0 0.0
    %2805 = vmatpush1.msra.mxu0 0.0
    %2806 = vmatprep.subr.mxu0 0.0
    %2807 = vmatpush1.msra.mxu0 0.0
    %2808 = vmatprep.subr.mxu0 0.0
    %2809 = vmatpush1.msra.mxu0 0.0
    %2810 = vmatprep.subr.mxu0 0.0
    %2811 = vmatpush1.msra.mxu0 0.0
    %2812 = vmatprep.mubr.f32.mxu0 0.0
    %2813 = vmatmul.mubr.f32.gmra.mrb[0].mxu0 %v2746
    %v2814 = vpop.f32.mrb[0].mxu0
    %v2815 = vadd.f32 0.0, %v2814
    %v2816 = vpop.f32.mrb[0].mxu0
    %2817 = vdwg.mxu0
    %v2818 = vadd.f32 %v2745, %v2815
    %v2819 = vxor.u32 %v2818, 2147483648
    %v2820 = vmul.f32 %v2819, 1.442695
    %v2821 = vpow.pop %v2820
    %v2822 = vadd.f32 %v2821, 1.0
    %v2823 = vrcp.pop %v2822
    %v2824 = vmul.f32 1.0, %v2823
    %v2825 = vtanh.pop %v2818
    %v2826 = vmul.f32 %v2824, %v2733
    %2828 = vrot.lane.b32.xlu0 %v2825, 64
    %v2829 = vpop.permute.xlu0 %2828
    %v2831 = vmul.f32 %v2824, %v2829
    %2833 = vrot.lane.b32.xlu0 %v2831, 32
    %v2834 = vpop.permute.xlu0 %2833
    %v2836 = vadd.f32 %v2826, %v2834
    %v2837 = vtanh.pop %v2836
    %2839 = vrot.lane.b32.xlu0 %v2837, 64
    %v2840 = vpop.permute.xlu0 %2839
    %v2842 = vmul.f32 %v2824, %v2840
    %2844 = vrot.lane.b32.xlu0 %v2842, 32
    %v2845 = vpop.permute.xlu0 %2844
    %2847 = vst.msk [vmem:[#allocation3 + $0x38] sm:$0xff] %vm308, %v2845
    %v2848 = vld [vmem:[#allocation2 + $0x40] sm:$0xff]
    %v2849 = vsel %vm308, %v2845, 0
    %2851 = vmatprep.subr.mxu0 0.0
    %2852 = vmatpush1.msra.mxu0 %v2093
    %2853 = vmatprep.subr.mxu0 0.0
    %2854 = vmatpush1.msra.mxu0 %v2094
    %2855 = vmatprep.subr.mxu0 0.0
    %2856 = vmatpush1.msra.mxu0 %v2095
    %2857 = vmatprep.subr.mxu0 0.0
    %2858 = vmatpush1.msra.mxu0 %v2096
    %2859 = vmatprep.subr.mxu0 0.0
    %2860 = vmatpush1.msra.mxu0 0.0
    %2861 = vmatprep.subr.mxu0 0.0
    %2862 = vmatpush1.msra.mxu0 0.0
    %2863 = vmatprep.subr.mxu0 0.0
    %2864 = vmatpush1.msra.mxu0 0.0
    %2865 = vmatprep.subr.mxu0 0.0
    %2866 = vmatpush1.msra.mxu0 0.0
    %2867 = vmatprep.subr.mxu0 0.0
    %2868 = vmatpush1.msra.mxu0 0.0
    %2869 = vmatprep.subr.mxu0 0.0
    %2870 = vmatpush1.msra.mxu0 0.0
    %2871 = vmatprep.subr.mxu0 0.0
    %2872 = vmatpush1.msra.mxu0 0.0
    %2873 = vmatprep.subr.mxu0 0.0
    %2874 = vmatpush1.msra.mxu0 0.0
    %2875 = vmatprep.subr.mxu0 0.0
    %2876 = vmatpush1.msra.mxu0 0.0
    %2877 = vmatprep.subr.mxu0 0.0
    %2878 = vmatpush1.msra.mxu0 0.0
    %2879 = vmatprep.subr.mxu0 0.0
    %2880 = vmatpush1.msra.mxu0 0.0
    %2881 = vmatprep.subr.mxu0 0.0
    %2882 = vmatpush1.msra.mxu0 0.0
    %2883 = vmatprep.subr.mxu0 0.0
    %2884 = vmatpush1.msra.mxu0 0.0
    %2885 = vmatprep.subr.mxu0 0.0
    %2886 = vmatpush1.msra.mxu0 0.0
    %2887 = vmatprep.subr.mxu0 0.0
    %2888 = vmatpush1.msra.mxu0 0.0
    %2889 = vmatprep.subr.mxu0 0.0
    %2890 = vmatpush1.msra.mxu0 0.0
    %2891 = vmatprep.subr.mxu0 0.0
    %2892 = vmatpush1.msra.mxu0 0.0
    %2893 = vmatprep.subr.mxu0 0.0
    %2894 = vmatpush1.msra.mxu0 0.0
    %2895 = vmatprep.subr.mxu0 0.0
    %2896 = vmatpush1.msra.mxu0 0.0
    %2897 = vmatprep.subr.mxu0 0.0
    %2898 = vmatpush1.msra.mxu0 0.0
    %2899 = vmatprep.subr.mxu0 0.0
    %2900 = vmatpush1.msra.mxu0 0.0
    %2901 = vmatprep.subr.mxu0 0.0
    %2902 = vmatpush1.msra.mxu0 0.0
    %2903 = vmatprep.subr.mxu0 0.0
    %2904 = vmatpush1.msra.mxu0 0.0
    %2905 = vmatprep.subr.mxu0 0.0
    %2906 = vmatpush1.msra.mxu0 0.0
    %2907 = vmatprep.subr.mxu0 0.0
    %2908 = vmatpush1.msra.mxu0 0.0
    %2909 = vmatprep.subr.mxu0 0.0
    %2910 = vmatpush1.msra.mxu0 0.0
    %2911 = vmatprep.subr.mxu0 0.0
    %2912 = vmatpush1.msra.mxu0 0.0
    %2913 = vmatprep.subr.mxu0 0.0
    %2914 = vmatpush1.msra.mxu0 0.0
    %2915 = vmatprep.mubr.f32.mxu0 0.0
    %2916 = vmatmul.mubr.f32.gmra.mrb[0].mxu0 %v2849
    %v2917 = vpop.f32.mrb[0].mxu0
    %v2918 = vadd.f32 0.0, %v2917
    %v2919 = vpop.f32.mrb[0].mxu0
    %2920 = vdwg.mxu0
    %v2921 = vadd.f32 %v2848, %v2918
    %v2922 = vxor.u32 %v2921, 2147483648
    %v2923 = vmul.f32 %v2922, 1.442695
    %v2924 = vpow.pop %v2923
    %v2925 = vadd.f32 %v2924, 1.0
    %v2926 = vrcp.pop %v2925
    %v2927 = vmul.f32 1.0, %v2926
    %v2928 = vtanh.pop %v2921
    %v2929 = vmul.f32 %v2927, %v2836
    %2931 = vrot.lane.b32.xlu0 %v2928, 64
    %v2932 = vpop.permute.xlu0 %2931
    %v2934 = vmul.f32 %v2927, %v2932
    %2936 = vrot.lane.b32.xlu0 %v2934, 32
    %v2937 = vpop.permute.xlu0 %2936
    %v2939 = vadd.f32 %v2929, %v2937
    %v2940 = vtanh.pop %v2939
    %2942 = vrot.lane.b32.xlu0 %v2940, 64
    %v2943 = vpop.permute.xlu0 %2942
    %v2945 = vmul.f32 %v2927, %v2943
    %2947 = vrot.lane.b32.xlu0 %v2945, 32
    %v2948 = vpop.permute.xlu0 %2947
    %2950 = vst.msk [vmem:[#allocation3 + $0x40] sm:$0xff] %vm308, %v2948
    %v2951 = vld [vmem:[#allocation2 + $0x48] sm:$0xff]
    %v2952 = vsel %vm308, %v2948, 0
    %2954 = vmatprep.subr.mxu0 0.0
    %2955 = vmatpush1.msra.mxu0 %v2093
    %2956 = vmatprep.subr.mxu0 0.0
    %2957 = vmatpush1.msra.mxu0 %v2094
    %2958 = vmatprep.subr.mxu0 0.0
    %2959 = vmatpush1.msra.mxu0 %v2095
    %2960 = vmatprep.subr.mxu0 0.0
    %2961 = vmatpush1.msra.mxu0 %v2096
    %2962 = vmatprep.subr.mxu0 0.0
    %2963 = vmatpush1.msra.mxu0 0.0
    %2964 = vmatprep.subr.mxu0 0.0
    %2965 = vmatpush1.msra.mxu0 0.0
    %2966 = vmatprep.subr.mxu0 0.0
    %2967 = vmatpush1.msra.mxu0 0.0
    %2968 = vmatprep.subr.mxu0 0.0
    %2969 = vmatpush1.msra.mxu0 0.0
    %2970 = vmatprep.subr.mxu0 0.0
    %2971 = vmatpush1.msra.mxu0 0.0
    %2972 = vmatprep.subr.mxu0 0.0
    %2973 = vmatpush1.msra.mxu0 0.0
    %2974 = vmatprep.subr.mxu0 0.0
    %2975 = vmatpush1.msra.mxu0 0.0
    %2976 = vmatprep.subr.mxu0 0.0
    %2977 = vmatpush1.msra.mxu0 0.0
    %2978 = vmatprep.subr.mxu0 0.0
    %2979 = vmatpush1.msra.mxu0 0.0
    %2980 = vmatprep.subr.mxu0 0.0
    %2981 = vmatpush1.msra.mxu0 0.0
    %2982 = vmatprep.subr.mxu0 0.0
    %2983 = vmatpush1.msra.mxu0 0.0
    %2984 = vmatprep.subr.mxu0 0.0
    %2985 = vmatpush1.msra.mxu0 0.0
    %2986 = vmatprep.subr.mxu0 0.0
    %2987 = vmatpush1.msra.mxu0 0.0
    %2988 = vmatprep.subr.mxu0 0.0
    %2989 = vmatpush1.msra.mxu0 0.0
    %2990 = vmatprep.subr.mxu0 0.0
    %2991 = vmatpush1.msra.mxu0 0.0
    %2992 = vmatprep.subr.mxu0 0.0
    %2993 = vmatpush1.msra.mxu0 0.0
    %2994 = vmatprep.subr.mxu0 0.0
    %2995 = vmatpush1.msra.mxu0 0.0
    %2996 = vmatprep.subr.mxu0 0.0
    %2997 = vmatpush1.msra.mxu0 0.0
    %2998 = vmatprep.subr.mxu0 0.0
    %2999 = vmatpush1.msra.mxu0 0.0
    %3000 = vmatprep.subr.mxu0 0.0
    %3001 = vmatpush1.msra.mxu0 0.0
    %3002 = vmatprep.subr.mxu0 0.0
    %3003 = vmatpush1.msra.mxu0 0.0
    %3004 = vmatprep.subr.mxu0 0.0
    %3005 = vmatpush1.msra.mxu0 0.0
    %3006 = vmatprep.subr.mxu0 0.0
    %3007 = vmatpush1.msra.mxu0 0.0
    %3008 = vmatprep.subr.mxu0 0.0
    %3009 = vmatpush1.msra.mxu0 0.0
    %3010 = vmatprep.subr.mxu0 0.0
    %3011 = vmatpush1.msra.mxu0 0.0
    %3012 = vmatprep.subr.mxu0 0.0
    %3013 = vmatpush1.msra.mxu0 0.0
    %3014 = vmatprep.subr.mxu0 0.0
    %3015 = vmatpush1.msra.mxu0 0.0
    %3016 = vmatprep.subr.mxu0 0.0
    %3017 = vmatpush1.msra.mxu0 0.0
    %3018 = vmatprep.mubr.f32.mxu0 0.0
    %3019 = vmatmul.mubr.f32.gmra.mrb[0].mxu0 %v2952
    %v3020 = vpop.f32.mrb[0].mxu0
    %v3021 = vadd.f32 0.0, %v3020
    %v3022 = vpop.f32.mrb[0].mxu0
    %3023 = vdwg.mxu0
    %v3024 = vadd.f32 %v2951, %v3021
    %v3025 = vxor.u32 %v3024, 2147483648
    %v3026 = vmul.f32 %v3025, 1.442695
    %v3027 = vpow.pop %v3026
    %v3028 = vadd.f32 %v3027, 1.0
    %v3029 = vrcp.pop %v3028
    %v3030 = vmul.f32 1.0, %v3029
    %v3031 = vtanh.pop %v3024
    %v3032 = vmul.f32 %v3030, %v2939
    %3034 = vrot.lane.b32.xlu0 %v3031, 64
    %v3035 = vpop.permute.xlu0 %3034
    %v3037 = vmul.f32 %v3030, %v3035
    %3039 = vrot.lane.b32.xlu0 %v3037, 32
    %v3040 = vpop.permute.xlu0 %3039
    %v3042 = vadd.f32 %v3032, %v3040
    %v3043 = vtanh.pop %v3042
    %3045 = vrot.lane.b32.xlu0 %v3043, 64
    %v3046 = vpop.permute.xlu0 %3045
    %v3048 = vmul.f32 %v3030, %v3046
    %3050 = vrot.lane.b32.xlu0 %v3048, 32
    %v3051 = vpop.permute.xlu0 %3050
    %3053 = vst.msk [vmem:[#allocation3 + $0x48] sm:$0xff] %vm308, %v3051
    %v3054 = vld [vmem:[#allocation2 + $0x50] sm:$0xff]
    %v3055 = vsel %vm308, %v3051, 0
    %3057 = vmatprep.subr.mxu0 0.0
    %3058 = vmatpush1.msra.mxu0 %v2093
    %3059 = vmatprep.subr.mxu0 0.0
    %3060 = vmatpush1.msra.mxu0 %v2094
    %3061 = vmatprep.subr.mxu0 0.0
    %3062 = vmatpush1.msra.mxu0 %v2095
    %3063 = vmatprep.subr.mxu0 0.0
    %3064 = vmatpush1.msra.mxu0 %v2096
    %3065 = vmatprep.subr.mxu0 0.0
    %3066 = vmatpush1.msra.mxu0 0.0
    %3067 = vmatprep.subr.mxu0 0.0
    %3068 = vmatpush1.msra.mxu0 0.0
    %3069 = vmatprep.subr.mxu0 0.0
    %3070 = vmatpush1.msra.mxu0 0.0
    %3071 = vmatprep.subr.mxu0 0.0
    %3072 = vmatpush1.msra.mxu0 0.0
    %3073 = vmatprep.subr.mxu0 0.0
    %3074 = vmatpush1.msra.mxu0 0.0
    %3075 = vmatprep.subr.mxu0 0.0
    %3076 = vmatpush1.msra.mxu0 0.0
    %3077 = vmatprep.subr.mxu0 0.0
    %3078 = vmatpush1.msra.mxu0 0.0
    %3079 = vmatprep.subr.mxu0 0.0
    %3080 = vmatpush1.msra.mxu0 0.0
    %3081 = vmatprep.subr.mxu0 0.0
    %3082 = vmatpush1.msra.mxu0 0.0
    %3083 = vmatprep.subr.mxu0 0.0
    %3084 = vmatpush1.msra.mxu0 0.0
    %3085 = vmatprep.subr.mxu0 0.0
    %3086 = vmatpush1.msra.mxu0 0.0
    %3087 = vmatprep.subr.mxu0 0.0
    %3088 = vmatpush1.msra.mxu0 0.0
    %3089 = vmatprep.subr.mxu0 0.0
    %3090 = vmatpush1.msra.mxu0 0.0
    %3091 = vmatprep.subr.mxu0 0.0
    %3092 = vmatpush1.msra.mxu0 0.0
    %3093 = vmatprep.subr.mxu0 0.0
    %3094 = vmatpush1.msra.mxu0 0.0
    %3095 = vmatprep.subr.mxu0 0.0
    %3096 = vmatpush1.msra.mxu0 0.0
    %3097 = vmatprep.subr.mxu0 0.0
    %3098 = vmatpush1.msra.mxu0 0.0
    %3099 = vmatprep.subr.mxu0 0.0
    %3100 = vmatpush1.msra.mxu0 0.0
    %3101 = vmatprep.subr.mxu0 0.0
    %3102 = vmatpush1.msra.mxu0 0.0
    %3103 = vmatprep.subr.mxu0 0.0
    %3104 = vmatpush1.msra.mxu0 0.0
    %3105 = vmatprep.subr.mxu0 0.0
    %3106 = vmatpush1.msra.mxu0 0.0
    %3107 = vmatprep.subr.mxu0 0.0
    %3108 = vmatpush1.msra.mxu0 0.0
    %3109 = vmatprep.subr.mxu0 0.0
    %3110 = vmatpush1.msra.mxu0 0.0
    %3111 = vmatprep.subr.mxu0 0.0
    %3112 = vmatpush1.msra.mxu0 0.0
    %3113 = vmatprep.subr.mxu0 0.0
    %3114 = vmatpush1.msra.mxu0 0.0
    %3115 = vmatprep.subr.mxu0 0.0
    %3116 = vmatpush1.msra.mxu0 0.0
    %3117 = vmatprep.subr.mxu0 0.0
    %3118 = vmatpush1.msra.mxu0 0.0
    %3119 = vmatprep.subr.mxu0 0.0
    %3120 = vmatpush1.msra.mxu0 0.0
    %3121 = vmatprep.mubr.f32.mxu0 0.0
    %3122 = vmatmul.mubr.f32.gmra.mrb[0].mxu0 %v3055
    %v3123 = vpop.f32.mrb[0].mxu0
    %v3124 = vadd.f32 0.0, %v3123
    %v3125 = vpop.f32.mrb[0].mxu0
    %3126 = vdwg.mxu0
    %v3127 = vadd.f32 %v3054, %v3124
    %v3128 = vxor.u32 %v3127, 2147483648
    %v3129 = vmul.f32 %v3128, 1.442695
    %v3130 = vpow.pop %v3129
    %v3131 = vadd.f32 %v3130, 1.0
    %v3132 = vrcp.pop %v3131
    %v3133 = vmul.f32 1.0, %v3132
    %v3134 = vtanh.pop %v3127
    %v3135 = vmul.f32 %v3133, %v3042
    %3137 = vrot.lane.b32.xlu0 %v3134, 64
    %v3138 = vpop.permute.xlu0 %3137
    %v3140 = vmul.f32 %v3133, %v3138
    %3142 = vrot.lane.b32.xlu0 %v3140, 32
    %v3143 = vpop.permute.xlu0 %3142
    %v3145 = vadd.f32 %v3135, %v3143
    %v3146 = vtanh.pop %v3145
    %3148 = vrot.lane.b32.xlu0 %v3146, 64
    %v3149 = vpop.permute.xlu0 %3148
    %v3151 = vmul.f32 %v3133, %v3149
    %3153 = vrot.lane.b32.xlu0 %v3151, 32
    %v3154 = vpop.permute.xlu0 %3153
    %3156 = vst.msk [vmem:[#allocation3 + $0x50] sm:$0xff] %vm308, %v3154
    %v3157 = vld [vmem:[#allocation2 + $0x58] sm:$0xff]
    %v3158 = vsel %vm308, %v3154, 0
    %3160 = vmatprep.subr.mxu0 0.0
    %3161 = vmatpush1.msra.mxu0 %v2093
    %3162 = vmatprep.subr.mxu0 0.0
    %3163 = vmatpush1.msra.mxu0 %v2094
    %3164 = vmatprep.subr.mxu0 0.0
    %3165 = vmatpush1.msra.mxu0 %v2095
    %3166 = vmatprep.subr.mxu0 0.0
    %3167 = vmatpush1.msra.mxu0 %v2096
    %3168 = vmatprep.subr.mxu0 0.0
    %3169 = vmatpush1.msra.mxu0 0.0
    %3170 = vmatprep.subr.mxu0 0.0
    %3171 = vmatpush1.msra.mxu0 0.0
    %3172 = vmatprep.subr.mxu0 0.0
    %3173 = vmatpush1.msra.mxu0 0.0
    %3174 = vmatprep.subr.mxu0 0.0
    %3175 = vmatpush1.msra.mxu0 0.0
    %3176 = vmatprep.subr.mxu0 0.0
    %3177 = vmatpush1.msra.mxu0 0.0
    %3178 = vmatprep.subr.mxu0 0.0
    %3179 = vmatpush1.msra.mxu0 0.0
    %3180 = vmatprep.subr.mxu0 0.0
    %3181 = vmatpush1.msra.mxu0 0.0
    %3182 = vmatprep.subr.mxu0 0.0
    %3183 = vmatpush1.msra.mxu0 0.0
    %3184 = vmatprep.subr.mxu0 0.0
    %3185 = vmatpush1.msra.mxu0 0.0
    %3186 = vmatprep.subr.mxu0 0.0
    %3187 = vmatpush1.msra.mxu0 0.0
    %3188 = vmatprep.subr.mxu0 0.0
    %3189 = vmatpush1.msra.mxu0 0.0
    %3190 = vmatprep.subr.mxu0 0.0
    %3191 = vmatpush1.msra.mxu0 0.0
    %3192 = vmatprep.subr.mxu0 0.0
    %3193 = vmatpush1.msra.mxu0 0.0
    %3194 = vmatprep.subr.mxu0 0.0
    %3195 = vmatpush1.msra.mxu0 0.0
    %3196 = vmatprep.subr.mxu0 0.0
    %3197 = vmatpush1.msra.mxu0 0.0
    %3198 = vmatprep.subr.mxu0 0.0
    %3199 = vmatpush1.msra.mxu0 0.0
    %3200 = vmatprep.subr.mxu0 0.0
    %3201 = vmatpush1.msra.mxu0 0.0
    %3202 = vmatprep.subr.mxu0 0.0
    %3203 = vmatpush1.msra.mxu0 0.0
    %3204 = vmatprep.subr.mxu0 0.0
    %3205 = vmatpush1.msra.mxu0 0.0
    %3206 = vmatprep.subr.mxu0 0.0
    %3207 = vmatpush1.msra.mxu0 0.0
    %3208 = vmatprep.subr.mxu0 0.0
    %3209 = vmatpush1.msra.mxu0 0.0
    %3210 = vmatprep.subr.mxu0 0.0
    %3211 = vmatpush1.msra.mxu0 0.0
    %3212 = vmatprep.subr.mxu0 0.0
    %3213 = vmatpush1.msra.mxu0 0.0
    %3214 = vmatprep.subr.mxu0 0.0
    %3215 = vmatpush1.msra.mxu0 0.0
    %3216 = vmatprep.subr.mxu0 0.0
    %3217 = vmatpush1.msra.mxu0 0.0
    %3218 = vmatprep.subr.mxu0 0.0
    %3219 = vmatpush1.msra.mxu0 0.0
    %3220 = vmatprep.subr.mxu0 0.0
    %3221 = vmatpush1.msra.mxu0 0.0
    %3222 = vmatprep.subr.mxu0 0.0
    %3223 = vmatpush1.msra.mxu0 0.0
    %3224 = vmatprep.mubr.f32.mxu0 0.0
    %3225 = vmatmul.mubr.f32.gmra.mrb[0].mxu0 %v3158
    %v3226 = vpop.f32.mrb[0].mxu0
    %v3227 = vadd.f32 0.0, %v3226
    %v3228 = vpop.f32.mrb[0].mxu0
    %3229 = vdwg.mxu0
    %v3230 = vadd.f32 %v3157, %v3227
    %v3231 = vxor.u32 %v3230, 2147483648
    %v3232 = vmul.f32 %v3231, 1.442695
    %v3233 = vpow.pop %v3232
    %v3234 = vadd.f32 %v3233, 1.0
    %v3235 = vrcp.pop %v3234
    %v3236 = vmul.f32 1.0, %v3235
    %v3237 = vtanh.pop %v3230
    %v3238 = vmul.f32 %v3236, %v3145
    %3240 = vrot.lane.b32.xlu0 %v3237, 64
    %v3241 = vpop.permute.xlu0 %3240
    %v3243 = vmul.f32 %v3236, %v3241
    %3245 = vrot.lane.b32.xlu0 %v3243, 32
    %v3246 = vpop.permute.xlu0 %3245
    %v3248 = vadd.f32 %v3238, %v3246
    %v3249 = vtanh.pop %v3248
    %3251 = vrot.lane.b32.xlu0 %v3249, 64
    %v3252 = vpop.permute.xlu0 %3251
    %v3254 = vmul.f32 %v3236, %v3252
    %3256 = vrot.lane.b32.xlu0 %v3254, 32
    %v3257 = vpop.permute.xlu0 %3256
    %3259 = vst.msk [vmem:[#allocation3 + $0x58] sm:$0xff] %vm308, %v3257
    %v3260 = vld [vmem:[#allocation2 + $0x60] sm:$0xff]
    %v3261 = vsel %vm308, %v3257, 0
    %3263 = vmatprep.subr.mxu0 0.0
    %3264 = vmatpush1.msra.mxu0 %v2093
    %3265 = vmatprep.subr.mxu0 0.0
    %3266 = vmatpush1.msra.mxu0 %v2094
    %3267 = vmatprep.subr.mxu0 0.0
    %3268 = vmatpush1.msra.mxu0 %v2095
    %3269 = vmatprep.subr.mxu0 0.0
    %3270 = vmatpush1.msra.mxu0 %v2096
    %3271 = vmatprep.subr.mxu0 0.0
    %3272 = vmatpush1.msra.mxu0 0.0
    %3273 = vmatprep.subr.mxu0 0.0
    %3274 = vmatpush1.msra.mxu0 0.0
    %3275 = vmatprep.subr.mxu0 0.0
    %3276 = vmatpush1.msra.mxu0 0.0
    %3277 = vmatprep.subr.mxu0 0.0
    %3278 = vmatpush1.msra.mxu0 0.0
    %3279 = vmatprep.subr.mxu0 0.0
    %3280 = vmatpush1.msra.mxu0 0.0
    %3281 = vmatprep.subr.mxu0 0.0
    %3282 = vmatpush1.msra.mxu0 0.0
    %3283 = vmatprep.subr.mxu0 0.0
    %3284 = vmatpush1.msra.mxu0 0.0
    %3285 = vmatprep.subr.mxu0 0.0
    %3286 = vmatpush1.msra.mxu0 0.0
    %3287 = vmatprep.subr.mxu0 0.0
    %3288 = vmatpush1.msra.mxu0 0.0
    %3289 = vmatprep.subr.mxu0 0.0
    %3290 = vmatpush1.msra.mxu0 0.0
    %3291 = vmatprep.subr.mxu0 0.0
    %3292 = vmatpush1.msra.mxu0 0.0
    %3293 = vmatprep.subr.mxu0 0.0
    %3294 = vmatpush1.msra.mxu0 0.0
    %3295 = vmatprep.subr.mxu0 0.0
    %3296 = vmatpush1.msra.mxu0 0.0
    %3297 = vmatprep.subr.mxu0 0.0
    %3298 = vmatpush1.msra.mxu0 0.0
    %3299 = vmatprep.subr.mxu0 0.0
    %3300 = vmatpush1.msra.mxu0 0.0
    %3301 = vmatprep.subr.mxu0 0.0
    %3302 = vmatpush1.msra.mxu0 0.0
    %3303 = vmatprep.subr.mxu0 0.0
    %3304 = vmatpush1.msra.mxu0 0.0
    %3305 = vmatprep.subr.mxu0 0.0
    %3306 = vmatpush1.msra.mxu0 0.0
    %3307 = vmatprep.subr.mxu0 0.0
    %3308 = vmatpush1.msra.mxu0 0.0
    %3309 = vmatprep.subr.mxu0 0.0
    %3310 = vmatpush1.msra.mxu0 0.0
    %3311 = vmatprep.subr.mxu0 0.0
    %3312 = vmatpush1.msra.mxu0 0.0
    %3313 = vmatprep.subr.mxu0 0.0
    %3314 = vmatpush1.msra.mxu0 0.0
    %3315 = vmatprep.subr.mxu0 0.0
    %3316 = vmatpush1.msra.mxu0 0.0
    %3317 = vmatprep.subr.mxu0 0.0
    %3318 = vmatpush1.msra.mxu0 0.0
    %3319 = vmatprep.subr.mxu0 0.0
    %3320 = vmatpush1.msra.mxu0 0.0
    %3321 = vmatprep.subr.mxu0 0.0
    %3322 = vmatpush1.msra.mxu0 0.0
    %3323 = vmatprep.subr.mxu0 0.0
    %3324 = vmatpush1.msra.mxu0 0.0
    %3325 = vmatprep.subr.mxu0 0.0
    %3326 = vmatpush1.msra.mxu0 0.0
    %3327 = vmatprep.mubr.f32.mxu0 0.0
    %3328 = vmatmul.mubr.f32.gmra.mrb[0].mxu0 %v3261
    %v3329 = vpop.f32.mrb[0].mxu0
    %v3330 = vadd.f32 0.0, %v3329
    %v3331 = vpop.f32.mrb[0].mxu0
    %3332 = vdwg.mxu0
    %v3333 = vadd.f32 %v3260, %v3330
    %v3334 = vxor.u32 %v3333, 2147483648
    %v3335 = vmul.f32 %v3334, 1.442695
    %v3336 = vpow.pop %v3335
    %v3337 = vadd.f32 %v3336, 1.0
    %v3338 = vrcp.pop %v3337
    %v3339 = vmul.f32 1.0, %v3338
    %v3340 = vtanh.pop %v3333
    %v3341 = vmul.f32 %v3339, %v3248
    %3343 = vrot.lane.b32.xlu0 %v3340, 64
    %v3344 = vpop.permute.xlu0 %3343
    %v3346 = vmul.f32 %v3339, %v3344
    %3348 = vrot.lane.b32.xlu0 %v3346, 32
    %v3349 = vpop.permute.xlu0 %3348
    %v3351 = vadd.f32 %v3341, %v3349
    %v3352 = vtanh.pop %v3351
    %3354 = vrot.lane.b32.xlu0 %v3352, 64
    %v3355 = vpop.permute.xlu0 %3354
    %v3357 = vmul.f32 %v3339, %v3355
    %3359 = vrot.lane.b32.xlu0 %v3357, 32
    %v3360 = vpop.permute.xlu0 %3359
    %3362 = vst.msk [vmem:[#allocation3 + $0x60] sm:$0xff] %vm308, %v3360
    %v3363 = vld [vmem:[#allocation2 + $0x68] sm:$0xff]
    %v3364 = vsel %vm308, %v3360, 0
    %3366 = vmatprep.subr.mxu0 0.0
    %3367 = vmatpush1.msra.mxu0 %v2093
    %3368 = vmatprep.subr.mxu0 0.0
    %3369 = vmatpush1.msra.mxu0 %v2094
    %3370 = vmatprep.subr.mxu0 0.0
    %3371 = vmatpush1.msra.mxu0 %v2095
    %3372 = vmatprep.subr.mxu0 0.0
    %3373 = vmatpush1.msra.mxu0 %v2096
    %3374 = vmatprep.subr.mxu0 0.0
    %3375 = vmatpush1.msra.mxu0 0.0
    %3376 = vmatprep.subr.mxu0 0.0
    %3377 = vmatpush1.msra.mxu0 0.0
    %3378 = vmatprep.subr.mxu0 0.0
    %3379 = vmatpush1.msra.mxu0 0.0
    %3380 = vmatprep.subr.mxu0 0.0
    %3381 = vmatpush1.msra.mxu0 0.0
    %3382 = vmatprep.subr.mxu0 0.0
    %3383 = vmatpush1.msra.mxu0 0.0
    %3384 = vmatprep.subr.mxu0 0.0
    %3385 = vmatpush1.msra.mxu0 0.0
    %3386 = vmatprep.subr.mxu0 0.0
    %3387 = vmatpush1.msra.mxu0 0.0
    %3388 = vmatprep.subr.mxu0 0.0
    %3389 = vmatpush1.msra.mxu0 0.0
    %3390 = vmatprep.subr.mxu0 0.0
    %3391 = vmatpush1.msra.mxu0 0.0
    %3392 = vmatprep.subr.mxu0 0.0
    %3393 = vmatpush1.msra.mxu0 0.0
    %3394 = vmatprep.subr.mxu0 0.0
    %3395 = vmatpush1.msra.mxu0 0.0
    %3396 = vmatprep.subr.mxu0 0.0
    %3397 = vmatpush1.msra.mxu0 0.0
    %3398 = vmatprep.subr.mxu0 0.0
    %3399 = vmatpush1.msra.mxu0 0.0
    %3400 = vmatprep.subr.mxu0 0.0
    %3401 = vmatpush1.msra.mxu0 0.0
    %3402 = vmatprep.subr.mxu0 0.0
    %3403 = vmatpush1.msra.mxu0 0.0
    %3404 = vmatprep.subr.mxu0 0.0
    %3405 = vmatpush1.msra.mxu0 0.0
    %3406 = vmatprep.subr.mxu0 0.0
    %3407 = vmatpush1.msra.mxu0 0.0
    %3408 = vmatprep.subr.mxu0 0.0
    %3409 = vmatpush1.msra.mxu0 0.0
    %3410 = vmatprep.subr.mxu0 0.0
    %3411 = vmatpush1.msra.mxu0 0.0
    %3412 = vmatprep.subr.mxu0 0.0
    %3413 = vmatpush1.msra.mxu0 0.0
    %3414 = vmatprep.subr.mxu0 0.0
    %3415 = vmatpush1.msra.mxu0 0.0
    %3416 = vmatprep.subr.mxu0 0.0
    %3417 = vmatpush1.msra.mxu0 0.0
    %3418 = vmatprep.subr.mxu0 0.0
    %3419 = vmatpush1.msra.mxu0 0.0
    %3420 = vmatprep.subr.mxu0 0.0
    %3421 = vmatpush1.msra.mxu0 0.0
    %3422 = vmatprep.subr.mxu0 0.0
    %3423 = vmatpush1.msra.mxu0 0.0
    %3424 = vmatprep.subr.mxu0 0.0
    %3425 = vmatpush1.msra.mxu0 0.0
    %3426 = vmatprep.subr.mxu0 0.0
    %3427 = vmatpush1.msra.mxu0 0.0
    %3428 = vmatprep.subr.mxu0 0.0
    %3429 = vmatpush1.msra.mxu0 0.0
    %3430 = vmatprep.mubr.f32.mxu0 0.0
    %3431 = vmatmul.mubr.f32.gmra.mrb[0].mxu0 %v3364
    %v3432 = vpop.f32.mrb[0].mxu0
    %v3433 = vadd.f32 0.0, %v3432
    %v3434 = vpop.f32.mrb[0].mxu0
    %3435 = vdwg.mxu0
    %v3436 = vadd.f32 %v3363, %v3433
    %v3437 = vxor.u32 %v3436, 2147483648
    %v3438 = vmul.f32 %v3437, 1.442695
    %v3439 = vpow.pop %v3438
    %v3440 = vadd.f32 %v3439, 1.0
    %v3441 = vrcp.pop %v3440
    %v3442 = vmul.f32 1.0, %v3441
    %v3443 = vtanh.pop %v3436
    %v3444 = vmul.f32 %v3442, %v3351
    %3446 = vrot.lane.b32.xlu0 %v3443, 64
    %v3447 = vpop.permute.xlu0 %3446
    %v3449 = vmul.f32 %v3442, %v3447
    %3451 = vrot.lane.b32.xlu0 %v3449, 32
    %v3452 = vpop.permute.xlu0 %3451
    %v3454 = vadd.f32 %v3444, %v3452
    %v3455 = vtanh.pop %v3454
    %3457 = vrot.lane.b32.xlu0 %v3455, 64
    %v3458 = vpop.permute.xlu0 %3457
    %v3460 = vmul.f32 %v3442, %v3458
    %3462 = vrot.lane.b32.xlu0 %v3460, 32
    %v3463 = vpop.permute.xlu0 %3462
    %3465 = vst.msk [vmem:[#allocation3 + $0x68] sm:$0xff] %vm308, %v3463
    %v3466 = vld [vmem:[#allocation2 + $0x70] sm:$0xff]
    %v3467 = vsel %vm308, %v3463, 0
    %3469 = vmatprep.subr.mxu0 0.0
    %3470 = vmatpush1.msra.mxu0 %v2093
    %3471 = vmatprep.subr.mxu0 0.0
    %3472 = vmatpush1.msra.mxu0 %v2094
    %3473 = vmatprep.subr.mxu0 0.0
    %3474 = vmatpush1.msra.mxu0 %v2095
    %3475 = vmatprep.subr.mxu0 0.0
    %3476 = vmatpush1.msra.mxu0 %v2096
    %3477 = vmatprep.subr.mxu0 0.0
    %3478 = vmatpush1.msra.mxu0 0.0
    %3479 = vmatprep.subr.mxu0 0.0
    %3480 = vmatpush1.msra.mxu0 0.0
    %3481 = vmatprep.subr.mxu0 0.0
    %3482 = vmatpush1.msra.mxu0 0.0
    %3483 = vmatprep.subr.mxu0 0.0
    %3484 = vmatpush1.msra.mxu0 0.0
    %3485 = vmatprep.subr.mxu0 0.0
    %3486 = vmatpush1.msra.mxu0 0.0
    %3487 = vmatprep.subr.mxu0 0.0
    %3488 = vmatpush1.msra.mxu0 0.0
    %3489 = vmatprep.subr.mxu0 0.0
    %3490 = vmatpush1.msra.mxu0 0.0
    %3491 = vmatprep.subr.mxu0 0.0
    %3492 = vmatpush1.msra.mxu0 0.0
    %3493 = vmatprep.subr.mxu0 0.0
    %3494 = vmatpush1.msra.mxu0 0.0
    %3495 = vmatprep.subr.mxu0 0.0
    %3496 = vmatpush1.msra.mxu0 0.0
    %3497 = vmatprep.subr.mxu0 0.0
    %3498 = vmatpush1.msra.mxu0 0.0
    %3499 = vmatprep.subr.mxu0 0.0
    %3500 = vmatpush1.msra.mxu0 0.0
    %3501 = vmatprep.subr.mxu0 0.0
    %3502 = vmatpush1.msra.mxu0 0.0
    %3503 = vmatprep.subr.mxu0 0.0
    %3504 = vmatpush1.msra.mxu0 0.0
    %3505 = vmatprep.subr.mxu0 0.0
    %3506 = vmatpush1.msra.mxu0 0.0
    %3507 = vmatprep.subr.mxu0 0.0
    %3508 = vmatpush1.msra.mxu0 0.0
    %3509 = vmatprep.subr.mxu0 0.0
    %3510 = vmatpush1.msra.mxu0 0.0
    %3511 = vmatprep.subr.mxu0 0.0
    %3512 = vmatpush1.msra.mxu0 0.0
    %3513 = vmatprep.subr.mxu0 0.0
    %3514 = vmatpush1.msra.mxu0 0.0
    %3515 = vmatprep.subr.mxu0 0.0
    %3516 = vmatpush1.msra.mxu0 0.0
    %3517 = vmatprep.subr.mxu0 0.0
    %3518 = vmatpush1.msra.mxu0 0.0
    %3519 = vmatprep.subr.mxu0 0.0
    %3520 = vmatpush1.msra.mxu0 0.0
    %3521 = vmatprep.subr.mxu0 0.0
    %3522 = vmatpush1.msra.mxu0 0.0
    %3523 = vmatprep.subr.mxu0 0.0
    %3524 = vmatpush1.msra.mxu0 0.0
    %3525 = vmatprep.subr.mxu0 0.0
    %3526 = vmatpush1.msra.mxu0 0.0
    %3527 = vmatprep.subr.mxu0 0.0
    %3528 = vmatpush1.msra.mxu0 0.0
    %3529 = vmatprep.subr.mxu0 0.0
    %3530 = vmatpush1.msra.mxu0 0.0
    %3531 = vmatprep.subr.mxu0 0.0
    %3532 = vmatpush1.msra.mxu0 0.0
    %3533 = vmatprep.mubr.f32.mxu0 0.0
    %3534 = vmatmul.mubr.f32.gmra.mrb[0].mxu0 %v3467
    %v3535 = vpop.f32.mrb[0].mxu0
    %v3536 = vadd.f32 0.0, %v3535
    %v3537 = vpop.f32.mrb[0].mxu0
    %3538 = vdwg.mxu0
    %v3539 = vadd.f32 %v3466, %v3536
    %v3540 = vxor.u32 %v3539, 2147483648
    %v3541 = vmul.f32 %v3540, 1.442695
    %v3542 = vpow.pop %v3541
    %v3543 = vadd.f32 %v3542, 1.0
    %v3544 = vrcp.pop %v3543
    %v3545 = vmul.f32 1.0, %v3544
    %v3546 = vtanh.pop %v3539
    %v3547 = vmul.f32 %v3545, %v3454
    %3549 = vrot.lane.b32.xlu0 %v3546, 64
    %v3550 = vpop.permute.xlu0 %3549
    %v3552 = vmul.f32 %v3545, %v3550
    %3554 = vrot.lane.b32.xlu0 %v3552, 32
    %v3555 = vpop.permute.xlu0 %3554
    %v3557 = vadd.f32 %v3547, %v3555
    %v3558 = vtanh.pop %v3557
    %3560 = vrot.lane.b32.xlu0 %v3558, 64
    %v3561 = vpop.permute.xlu0 %3560
    %v3563 = vmul.f32 %v3545, %v3561
    %3565 = vrot.lane.b32.xlu0 %v3563, 32
    %v3566 = vpop.permute.xlu0 %3565
    %3568 = vst.msk [vmem:[#allocation3 + $0x70] sm:$0xff] %vm308, %v3566
    %v3569 = vld [vmem:[#allocation2 + $0x78] sm:$0xff]
    %v3570 = vsel %vm308, %v3566, 0
    %3572 = vmatprep.subr.mxu0 0.0
    %3573 = vmatpush1.msra.mxu0 %v2093
    %3574 = vmatprep.subr.mxu0 0.0
    %3575 = vmatpush1.msra.mxu0 %v2094
    %3576 = vmatprep.subr.mxu0 0.0
    %3577 = vmatpush1.msra.mxu0 %v2095
    %3578 = vmatprep.subr.mxu0 0.0
    %3579 = vmatpush1.msra.mxu0 %v2096
    %3580 = vmatprep.subr.mxu0 0.0
    %3581 = vmatpush1.msra.mxu0 0.0
    %3582 = vmatprep.subr.mxu0 0.0
    %3583 = vmatpush1.msra.mxu0 0.0
    %3584 = vmatprep.subr.mxu0 0.0
    %3585 = vmatpush1.msra.mxu0 0.0
    %3586 = vmatprep.subr.mxu0 0.0
    %3587 = vmatpush1.msra.mxu0 0.0
    %3588 = vmatprep.subr.mxu0 0.0
    %3589 = vmatpush1.msra.mxu0 0.0
    %3590 = vmatprep.subr.mxu0 0.0
    %3591 = vmatpush1.msra.mxu0 0.0
    %3592 = vmatprep.subr.mxu0 0.0
    %3593 = vmatpush1.msra.mxu0 0.0
    %3594 = vmatprep.subr.mxu0 0.0
    %3595 = vmatpush1.msra.mxu0 0.0
    %3596 = vmatprep.subr.mxu0 0.0
    %3597 = vmatpush1.msra.mxu0 0.0
    %3598 = vmatprep.subr.mxu0 0.0
    %3599 = vmatpush1.msra.mxu0 0.0
    %3600 = vmatprep.subr.mxu0 0.0
    %3601 = vmatpush1.msra.mxu0 0.0
    %3602 = vmatprep.subr.mxu0 0.0
    %3603 = vmatpush1.msra.mxu0 0.0
    %3604 = vmatprep.subr.mxu0 0.0
    %3605 = vmatpush1.msra.mxu0 0.0
    %3606 = vmatprep.subr.mxu0 0.0
    %3607 = vmatpush1.msra.mxu0 0.0
    %3608 = vmatprep.subr.mxu0 0.0
    %3609 = vmatpush1.msra.mxu0 0.0
    %3610 = vmatprep.subr.mxu0 0.0
    %3611 = vmatpush1.msra.mxu0 0.0
    %3612 = vmatprep.subr.mxu0 0.0
    %3613 = vmatpush1.msra.mxu0 0.0
    %3614 = vmatprep.subr.mxu0 0.0
    %3615 = vmatpush1.msra.mxu0 0.0
    %3616 = vmatprep.subr.mxu0 0.0
    %3617 = vmatpush1.msra.mxu0 0.0
    %3618 = vmatprep.subr.mxu0 0.0
    %3619 = vmatpush1.msra.mxu0 0.0
    %3620 = vmatprep.subr.mxu0 0.0
    %3621 = vmatpush1.msra.mxu0 0.0
    %3622 = vmatprep.subr.mxu0 0.0
    %3623 = vmatpush1.msra.mxu0 0.0
    %3624 = vmatprep.subr.mxu0 0.0
    %3625 = vmatpush1.msra.mxu0 0.0
    %3626 = vmatprep.subr.mxu0 0.0
    %3627 = vmatpush1.msra.mxu0 0.0
    %3628 = vmatprep.subr.mxu0 0.0
    %3629 = vmatpush1.msra.mxu0 0.0
    %3630 = vmatprep.subr.mxu0 0.0
    %3631 = vmatpush1.msra.mxu0 0.0
    %3632 = vmatprep.subr.mxu0 0.0
    %3633 = vmatpush1.msra.mxu0 0.0
    %3634 = vmatprep.subr.mxu0 0.0
    %3635 = vmatpush1.msra.mxu0 0.0
    %3636 = vmatprep.mubr.f32.mxu0 0.0
    %3637 = vmatmul.mubr.f32.gmra.mrb[0].mxu0 %v3570
    %v3638 = vpop.f32.mrb[0].mxu0
    %v3639 = vadd.f32 0.0, %v3638
    %v3640 = vpop.f32.mrb[0].mxu0
    %3641 = vdwg.mxu0
    %v3642 = vadd.f32 %v3569, %v3639
    %v3643 = vxor.u32 %v3642, 2147483648
    %v3644 = vmul.f32 %v3643, 1.442695
    %v3645 = vpow.pop %v3644
    %v3646 = vadd.f32 %v3645, 1.0
    %v3647 = vrcp.pop %v3646
    %v3648 = vmul.f32 1.0, %v3647
    %v3649 = vtanh.pop %v3642
    %v3650 = vmul.f32 %v3648, %v3557
    %3652 = vrot.lane.b32.xlu0 %v3649, 64
    %v3653 = vpop.permute.xlu0 %3652
    %v3655 = vmul.f32 %v3648, %v3653
    %3657 = vrot.lane.b32.xlu0 %v3655, 32
    %v3658 = vpop.permute.xlu0 %3657
    %v3660 = vadd.f32 %v3650, %v3658
    %v3661 = vtanh.pop %v3660
    %3663 = vrot.lane.b32.xlu0 %v3661, 64
    %v3664 = vpop.permute.xlu0 %3663
    %v3666 = vmul.f32 %v3648, %v3664
    %3668 = vrot.lane.b32.xlu0 %v3666, 32
    %v3669 = vpop.permute.xlu0 %3668
    %3671 = vst.msk [vmem:[#allocation3 + $0x78] sm:$0xff] %vm308, %v3669
    %v3672 = vld [vmem:[#allocation3] sm:$0xff]
    %v3673 = vld [vmem:[#allocation3 + $0x8] sm:$0xff]
    %v3674 = vld [vmem:[#allocation3 + $0x10] sm:$0xff]
    %v3675 = vld [vmem:[#allocation3 + $0x18] sm:$0xff]
    %v3676 = vld [vmem:[#allocation3 + $0x20] sm:$0xff]
    %v3677 = vld [vmem:[#allocation3 + $0x28] sm:$0xff]
    %v3678 = vld [vmem:[#allocation3 + $0x30] sm:$0xff]
    %v3679 = vld [vmem:[#allocation3 + $0x38] sm:$0xff]
    %v3680 = vld [vmem:[#allocation3 + $0x40] sm:$0xff]
    %v3681 = vld [vmem:[#allocation3 + $0x48] sm:$0xff]
    %v3682 = vld [vmem:[#allocation3 + $0x50] sm:$0xff]
    %v3683 = vld [vmem:[#allocation3 + $0x58] sm:$0xff]
    %v3684 = vld [vmem:[#allocation3 + $0x60] sm:$0xff]
    %v3685 = vld [vmem:[#allocation3 + $0x68] sm:$0xff]
    %v3686 = vld [vmem:[#allocation3 + $0x70] sm:$0xff]
    %v3687 = vld [vmem:[#allocation3 + $0x78] sm:$0xff]
    %s3688 = scalar_lea.vmem [#allocation4], 32
    %v3689 = vld [vmem:[%s3688] sm:$0xff]
    %v3690 = vld [vmem:[%s3688 + $0x8] sm:$0xff]
    %v3691 = vld [vmem:[%s3688 + $0x10] sm:$0xff]
    %v3692 = vld [vmem:[%s3688 + $0x18] sm:$0xff]
    %s3693 = scalar_lea.vmem %s4, 2
    %v3694 = vld [vmem:[%s3693] sm:$0x1]
    %v3696 = vlaneseq
    %v3697 = vshrl.u32 %v3696, 7
    %v3698 = vsub.s32 0, %v3697
    %v3699 = vrot.slane %v3694, %v3698
    %v3702 = vsel %vm308, %v3672, 0
    %v3705 = vsel %vm308, %v3673, 0
    %v3708 = vsel %vm308, %v3674, 0
    %v3711 = vsel %vm308, %v3675, 0
    %v3714 = vsel %vm308, %v3676, 0
    %v3717 = vsel %vm308, %v3677, 0
    %v3720 = vsel %vm308, %v3678, 0
    %v3723 = vsel %vm308, %v3679, 0
    %v3726 = vsel %vm308, %v3680, 0
    %v3729 = vsel %vm308, %v3681, 0
    %v3732 = vsel %vm308, %v3682, 0
    %v3735 = vsel %vm308, %v3683, 0
    %v3738 = vsel %vm308, %v3684, 0
    %v3741 = vsel %vm308, %v3685, 0
    %v3744 = vsel %vm308, %v3686, 0
    %v3747 = vsel %vm308, %v3687, 0
    %3749 = vmatprep.subr.mxu0 0.0
    %3750 = vmatpush1.msra.mxu0 %v3689
    %3751 = vmatprep.subr.mxu0 0.0
    %3752 = vmatpush1.msra.mxu0 %v3690
    %3753 = vmatprep.subr.mxu0 0.0
    %3754 = vmatpush1.msra.mxu0 %v3691
    %3755 = vmatprep.subr.mxu0 0.0
    %3756 = vmatpush1.msra.mxu0 %v3692
    %3757 = vmatprep.subr.mxu0 0.0
    %3758 = vmatpush1.msra.mxu0 0.0
    %3759 = vmatprep.subr.mxu0 0.0
    %3760 = vmatpush1.msra.mxu0 0.0
    %3761 = vmatprep.subr.mxu0 0.0
    %3762 = vmatpush1.msra.mxu0 0.0
    %3763 = vmatprep.subr.mxu0 0.0
    %3764 = vmatpush1.msra.mxu0 0.0
    %3765 = vmatprep.subr.mxu0 0.0
    %3766 = vmatpush1.msra.mxu0 0.0
    %3767 = vmatprep.subr.mxu0 0.0
    %3768 = vmatpush1.msra.mxu0 0.0
    %3769 = vmatprep.subr.mxu0 0.0
    %3770 = vmatpush1.msra.mxu0 0.0
    %3771 = vmatprep.subr.mxu0 0.0
    %3772 = vmatpush1.msra.mxu0 0.0
    %3773 = vmatprep.subr.mxu0 0.0
    %3774 = vmatpush1.msra.mxu0 0.0
    %3775 = vmatprep.subr.mxu0 0.0
    %3776 = vmatpush1.msra.mxu0 0.0
    %3777 = vmatprep.subr.mxu0 0.0
    %3778 = vmatpush1.msra.mxu0 0.0
    %3779 = vmatprep.subr.mxu0 0.0
    %3780 = vmatpush1.msra.mxu0 0.0
    %3781 = vmatprep.subr.mxu0 0.0
    %3782 = vmatpush1.msra.mxu0 0.0
    %3783 = vmatprep.subr.mxu0 0.0
    %3784 = vmatpush1.msra.mxu0 0.0
    %3785 = vmatprep.subr.mxu0 0.0
    %3786 = vmatpush1.msra.mxu0 0.0
    %3787 = vmatprep.subr.mxu0 0.0
    %3788 = vmatpush1.msra.mxu0 0.0
    %3789 = vmatprep.subr.mxu0 0.0
    %3790 = vmatpush1.msra.mxu0 0.0
    %3791 = vmatprep.subr.mxu0 0.0
    %3792 = vmatpush1.msra.mxu0 0.0
    %3793 = vmatprep.subr.mxu0 0.0
    %3794 = vmatpush1.msra.mxu0 0.0
    %3795 = vmatprep.subr.mxu0 0.0
    %3796 = vmatpush1.msra.mxu0 0.0
    %3797 = vmatprep.subr.mxu0 0.0
    %3798 = vmatpush1.msra.mxu0 0.0
    %3799 = vmatprep.subr.mxu0 0.0
    %3800 = vmatpush1.msra.mxu0 0.0
    %3801 = vmatprep.subr.mxu0 0.0
    %3802 = vmatpush1.msra.mxu0 0.0
    %3803 = vmatprep.subr.mxu0 0.0
    %3804 = vmatpush1.msra.mxu0 0.0
    %3805 = vmatprep.subr.mxu0 0.0
    %3806 = vmatpush1.msra.mxu0 0.0
    %3807 = vmatprep.subr.mxu0 0.0
    %3808 = vmatpush1.msra.mxu0 0.0
    %3809 = vmatprep.subr.mxu0 0.0
    %3810 = vmatpush1.msra.mxu0 0.0
    %3811 = vmatprep.subr.mxu0 0.0
    %3812 = vmatpush1.msra.mxu0 0.0
    %3813 = vmatprep.mubr.f32.mxu0 0.0
    %3814 = vmatmul.mubr.f32.gmra.mrb[0].mxu0 %v3702
    %v3815 = vpop.f32.mrb[0].mxu0
    %v3816 = vadd.f32 %v3699, %v3815
    %v3817 = vpop.f32.mrb[0].mxu0
    %3818 = vmatprep.mubr.f32.mxu0 0.0
    %3819 = vmatmul.mubr.f32.gmra.mrb[0].mxu0 %v3705
    %v3820 = vpop.f32.mrb[0].mxu0
    %v3821 = vadd.f32 %v3699, %v3820
    %v3822 = vpop.f32.mrb[0].mxu0
    %3823 = vmatprep.mubr.f32.mxu0 0.0
    %3824 = vmatmul.mubr.f32.gmra.mrb[0].mxu0 %v3708
    %v3825 = vpop.f32.mrb[0].mxu0
    %v3826 = vadd.f32 %v3699, %v3825
    %v3827 = vpop.f32.mrb[0].mxu0
    %3828 = vmatprep.mubr.f32.mxu0 0.0
    %3829 = vmatmul.mubr.f32.gmra.mrb[0].mxu0 %v3711
    %v3830 = vpop.f32.mrb[0].mxu0
    %v3831 = vadd.f32 %v3699, %v3830
    %v3832 = vpop.f32.mrb[0].mxu0
    %3833 = vmatprep.mubr.f32.mxu0 0.0
    %3834 = vmatmul.mubr.f32.gmra.mrb[0].mxu0 %v3714
    %v3835 = vpop.f32.mrb[0].mxu0
    %v3836 = vadd.f32 %v3699, %v3835
    %v3837 = vpop.f32.mrb[0].mxu0
    %3838 = vmatprep.mubr.f32.mxu0 0.0
    %3839 = vmatmul.mubr.f32.gmra.mrb[0].mxu0 %v3717
    %v3840 = vpop.f32.mrb[0].mxu0
    %v3841 = vadd.f32 %v3699, %v3840
    %v3842 = vpop.f32.mrb[0].mxu0
    %3843 = vmatprep.mubr.f32.mxu0 0.0
    %3844 = vmatmul.mubr.f32.gmra.mrb[0].mxu0 %v3720
    %v3845 = vpop.f32.mrb[0].mxu0
    %v3846 = vadd.f32 %v3699, %v3845
    %v3847 = vpop.f32.mrb[0].mxu0
    %3848 = vmatprep.mubr.f32.mxu0 0.0
    %3849 = vmatmul.mubr.f32.gmra.mrb[0].mxu0 %v3723
    %v3850 = vpop.f32.mrb[0].mxu0
    %v3851 = vadd.f32 %v3699, %v3850
    %v3852 = vpop.f32.mrb[0].mxu0
    %3853 = vmatprep.mubr.f32.mxu0 0.0
    %3854 = vmatmul.mubr.f32.gmra.mrb[0].mxu0 %v3726
    %v3855 = vpop.f32.mrb[0].mxu0
    %v3856 = vadd.f32 %v3699, %v3855
    %v3857 = vpop.f32.mrb[0].mxu0
    %3858 = vmatprep.mubr.f32.mxu0 0.0
    %3859 = vmatmul.mubr.f32.gmra.mrb[0].mxu0 %v3729
    %v3860 = vpop.f32.mrb[0].mxu0
    %v3861 = vadd.f32 %v3699, %v3860
    %v3862 = vpop.f32.mrb[0].mxu0
    %3863 = vmatprep.mubr.f32.mxu0 0.0
    %3864 = vmatmul.mubr.f32.gmra.mrb[0].mxu0 %v3732
    %v3865 = vpop.f32.mrb[0].mxu0
    %v3866 = vadd.f32 %v3699, %v3865
    %v3867 = vpop.f32.mrb[0].mxu0
    %3868 = vmatprep.mubr.f32.mxu0 0.0
    %3869 = vmatmul.mubr.f32.gmra.mrb[0].mxu0 %v3735
    %v3870 = vpop.f32.mrb[0].mxu0
    %v3871 = vadd.f32 %v3699, %v3870
    %v3872 = vpop.f32.mrb[0].mxu0
    %3873 = vmatprep.mubr.f32.mxu0 0.0
    %3874 = vmatmul.mubr.f32.gmra.mrb[0].mxu0 %v3738
    %v3875 = vpop.f32.mrb[0].mxu0
    %v3876 = vadd.f32 %v3699, %v3875
    %v3877 = vpop.f32.mrb[0].mxu0
    %3878 = vmatprep.mubr.f32.mxu0 0.0
    %3879 = vmatmul.mubr.f32.gmra.mrb[0].mxu0 %v3741
    %v3880 = vpop.f32.mrb[0].mxu0
    %v3881 = vadd.f32 %v3699, %v3880
    %v3882 = vpop.f32.mrb[0].mxu0
    %3883 = vmatprep.mubr.f32.mxu0 0.0
    %3884 = vmatmul.mubr.f32.gmra.mrb[0].mxu0 %v3744
    %v3885 = vpop.f32.mrb[0].mxu0
    %v3886 = vadd.f32 %v3699, %v3885
    %v3887 = vpop.f32.mrb[0].mxu0
    %3888 = vmatprep.mubr.f32.mxu0 0.0
    %3889 = vmatmul.mubr.f32.gmra.mrb[0].mxu0 %v3747
    %v3890 = vpop.f32.mrb[0].mxu0
    %v3891 = vadd.f32 %v3699, %v3890
    %v3892 = vpop.f32.mrb[0].mxu0
    %3893 = vdwg.mxu0
    %3894 = vst [vmem:[#allocation2] sm:$0xff] %v3816
    %3895 = vst [vmem:[#allocation2 + $0x8] sm:$0xff] %v3821
    %3896 = vst [vmem:[#allocation2 + $0x10] sm:$0xff] %v3826
    %3897 = vst [vmem:[#allocation2 + $0x18] sm:$0xff] %v3831
    %3898 = vst [vmem:[#allocation2 + $0x20] sm:$0xff] %v3836
    %3899 = vst [vmem:[#allocation2 + $0x28] sm:$0xff] %v3841
    %3900 = vst [vmem:[#allocation2 + $0x30] sm:$0xff] %v3846
    %3901 = vst [vmem:[#allocation2 + $0x38] sm:$0xff] %v3851
    %3902 = vst [vmem:[#allocation2 + $0x40] sm:$0xff] %v3856
    %3903 = vst [vmem:[#allocation2 + $0x48] sm:$0xff] %v3861
    %3904 = vst [vmem:[#allocation2 + $0x50] sm:$0xff] %v3866
    %3905 = vst [vmem:[#allocation2 + $0x58] sm:$0xff] %v3871
    %3906 = vst [vmem:[#allocation2 + $0x60] sm:$0xff] %v3876
    %3907 = vst [vmem:[#allocation2 + $0x68] sm:$0xff] %v3881
    %3908 = vst [vmem:[#allocation2 + $0x70] sm:$0xff] %v3886
    %3909 = vst [vmem:[#allocation2 + $0x78] sm:$0xff] %v3891
    %s3910 = scalar_lea.vmem %s3, 64
    %v3911 = vld [vmem:[%s3910] sm:$0xff]
    %v3912 = vld [vmem:[%s3910 + $0x8] sm:$0xff]
    %v3913 = vld [vmem:[%s3910 + $0x10] sm:$0xff]
    %v3914 = vld [vmem:[%s3910 + $0x18] sm:$0xff]
    %v3915 = vld [vmem:[#allocation2] sm:$0xff]
    %v3916 = vxor.u32 %v3915, 2147483648
    %v3917 = vmul.f32 %v3916, 1.442695
    %v3918 = vpow.pop %v3917
    %v3919 = vadd.f32 %v3918, 1.0
    %v3920 = vrcp.pop %v3919
    %v3921 = vmul.f32 1.0, %v3920
    %v3922 = vtanh.pop %v3915
    %v3923 = vmul.f32 %v3921, 0.0
    %3925 = vrot.lane.b32.xlu0 %v3922, 64
    %v3926 = vpop.permute.xlu0 %3925
    %v3928 = vmul.f32 %v3921, %v3926
    %3930 = vrot.lane.b32.xlu0 %v3928, 32
    %v3931 = vpop.permute.xlu0 %3930
    %v3933 = vadd.f32 %v3923, %v3931
    %v3934 = vtanh.pop %v3933
    %3936 = vrot.lane.b32.xlu0 %v3934, 64
    %v3937 = vpop.permute.xlu0 %3936
    %v3939 = vmul.f32 %v3921, %v3937
    %3941 = vrot.lane.b32.xlu0 %v3939, 32
    %v3942 = vpop.permute.xlu0 %3941
    %3944 = vst.msk [vmem:[#allocation3] sm:$0xff] %vm308, %v3942
    %v3945 = vld [vmem:[#allocation2 + $0x8] sm:$0xff]
    %v3946 = vsel %vm308, %v3942, 0
    %3948 = vmatprep.subr.mxu0 0.0
    %3949 = vmatpush1.msra.mxu0 %v3911
    %3950 = vmatprep.subr.mxu0 0.0
    %3951 = vmatpush1.msra.mxu0 %v3912
    %3952 = vmatprep.subr.mxu0 0.0
    %3953 = vmatpush1.msra.mxu0 %v3913
    %3954 = vmatprep.subr.mxu0 0.0
    %3955 = vmatpush1.msra.mxu0 %v3914
    %3956 = vmatprep.subr.mxu0 0.0
    %3957 = vmatpush1.msra.mxu0 0.0
    %3958 = vmatprep.subr.mxu0 0.0
    %3959 = vmatpush1.msra.mxu0 0.0
    %3960 = vmatprep.subr.mxu0 0.0
    %3961 = vmatpush1.msra.mxu0 0.0
    %3962 = vmatprep.subr.mxu0 0.0
    %3963 = vmatpush1.msra.mxu0 0.0
    %3964 = vmatprep.subr.mxu0 0.0
    %3965 = vmatpush1.msra.mxu0 0.0
    %3966 = vmatprep.subr.mxu0 0.0
    %3967 = vmatpush1.msra.mxu0 0.0
    %3968 = vmatprep.subr.mxu0 0.0
    %3969 = vmatpush1.msra.mxu0 0.0
    %3970 = vmatprep.subr.mxu0 0.0
    %3971 = vmatpush1.msra.mxu0 0.0
    %3972 = vmatprep.subr.mxu0 0.0
    %3973 = vmatpush1.msra.mxu0 0.0
    %3974 = vmatprep.subr.mxu0 0.0
    %3975 = vmatpush1.msra.mxu0 0.0
    %3976 = vmatprep.subr.mxu0 0.0
    %3977 = vmatpush1.msra.mxu0 0.0
    %3978 = vmatprep.subr.mxu0 0.0
    %3979 = vmatpush1.msra.mxu0 0.0
    %3980 = vmatprep.subr.mxu0 0.0
    %3981 = vmatpush1.msra.mxu0 0.0
    %3982 = vmatprep.subr.mxu0 0.0
    %3983 = vmatpush1.msra.mxu0 0.0
    %3984 = vmatprep.subr.mxu0 0.0
    %3985 = vmatpush1.msra.mxu0 0.0
    %3986 = vmatprep.subr.mxu0 0.0
    %3987 = vmatpush1.msra.mxu0 0.0
    %3988 = vmatprep.subr.mxu0 0.0
    %3989 = vmatpush1.msra.mxu0 0.0
    %3990 = vmatprep.subr.mxu0 0.0
    %3991 = vmatpush1.msra.mxu0 0.0
    %3992 = vmatprep.subr.mxu0 0.0
    %3993 = vmatpush1.msra.mxu0 0.0
    %3994 = vmatprep.subr.mxu0 0.0
    %3995 = vmatpush1.msra.mxu0 0.0
    %3996 = vmatprep.subr.mxu0 0.0
    %3997 = vmatpush1.msra.mxu0 0.0
    %3998 = vmatprep.subr.mxu0 0.0
    %3999 = vmatpush1.msra.mxu0 0.0
    %4000 = vmatprep.subr.mxu0 0.0
    %4001 = vmatpush1.msra.mxu0 0.0
    %4002 = vmatprep.subr.mxu0 0.0
    %4003 = vmatpush1.msra.mxu0 0.0
    %4004 = vmatprep.subr.mxu0 0.0
    %4005 = vmatpush1.msra.mxu0 0.0
    %4006 = vmatprep.subr.mxu0 0.0
    %4007 = vmatpush1.msra.mxu0 0.0
    %4008 = vmatprep.subr.mxu0 0.0
    %4009 = vmatpush1.msra.mxu0 0.0
    %4010 = vmatprep.subr.mxu0 0.0
    %4011 = vmatpush1.msra.mxu0 0.0
    %4012 = vmatprep.mubr.f32.mxu0 0.0
    %4013 = vmatmul.mubr.f32.gmra.mrb[0].mxu0 %v3946
    %v4014 = vpop.f32.mrb[0].mxu0
    %v4015 = vadd.f32 0.0, %v4014
    %v4016 = vpop.f32.mrb[0].mxu0
    %4017 = vdwg.mxu0
    %v4018 = vadd.f32 %v3945, %v4015
    %v4019 = vxor.u32 %v4018, 2147483648
    %v4020 = vmul.f32 %v4019, 1.442695
    %v4021 = vpow.pop %v4020
    %v4022 = vadd.f32 %v4021, 1.0
    %v4023 = vrcp.pop %v4022
    %v4024 = vmul.f32 1.0, %v4023
    %v4025 = vtanh.pop %v4018
    %v4026 = vmul.f32 %v4024, %v3933
    %4028 = vrot.lane.b32.xlu0 %v4025, 64
    %v4029 = vpop.permute.xlu0 %4028
    %v4031 = vmul.f32 %v4024, %v4029
    %4033 = vrot.lane.b32.xlu0 %v4031, 32
    %v4034 = vpop.permute.xlu0 %4033
    %v4036 = vadd.f32 %v4026, %v4034
    %v4037 = vtanh.pop %v4036
    %4039 = vrot.lane.b32.xlu0 %v4037, 64
    %v4040 = vpop.permute.xlu0 %4039
    %v4042 = vmul.f32 %v4024, %v4040
    %4044 = vrot.lane.b32.xlu0 %v4042, 32
    %v4045 = vpop.permute.xlu0 %4044
    %4047 = vst.msk [vmem:[#allocation3 + $0x8] sm:$0xff] %vm308, %v4045
    %v4048 = vld [vmem:[#allocation2 + $0x10] sm:$0xff]
    %v4049 = vsel %vm308, %v4045, 0
    %4051 = vmatprep.subr.mxu0 0.0
    %4052 = vmatpush1.msra.mxu0 %v3911
    %4053 = vmatprep.subr.mxu0 0.0
    %4054 = vmatpush1.msra.mxu0 %v3912
    %4055 = vmatprep.subr.mxu0 0.0
    %4056 = vmatpush1.msra.mxu0 %v3913
    %4057 = vmatprep.subr.mxu0 0.0
    %4058 = vmatpush1.msra.mxu0 %v3914
    %4059 = vmatprep.subr.mxu0 0.0
    %4060 = vmatpush1.msra.mxu0 0.0
    %4061 = vmatprep.subr.mxu0 0.0
    %4062 = vmatpush1.msra.mxu0 0.0
    %4063 = vmatprep.subr.mxu0 0.0
    %4064 = vmatpush1.msra.mxu0 0.0
    %4065 = vmatprep.subr.mxu0 0.0
    %4066 = vmatpush1.msra.mxu0 0.0
    %4067 = vmatprep.subr.mxu0 0.0
    %4068 = vmatpush1.msra.mxu0 0.0
    %4069 = vmatprep.subr.mxu0 0.0
    %4070 = vmatpush1.msra.mxu0 0.0
    %4071 = vmatprep.subr.mxu0 0.0
    %4072 = vmatpush1.msra.mxu0 0.0
    %4073 = vmatprep.subr.mxu0 0.0
    %4074 = vmatpush1.msra.mxu0 0.0
    %4075 = vmatprep.subr.mxu0 0.0
    %4076 = vmatpush1.msra.mxu0 0.0
    %4077 = vmatprep.subr.mxu0 0.0
    %4078 = vmatpush1.msra.mxu0 0.0
    %4079 = vmatprep.subr.mxu0 0.0
    %4080 = vmatpush1.msra.mxu0 0.0
    %4081 = vmatprep.subr.mxu0 0.0
    %4082 = vmatpush1.msra.mxu0 0.0
    %4083 = vmatprep.subr.mxu0 0.0
    %4084 = vmatpush1.msra.mxu0 0.0
    %4085 = vmatprep.subr.mxu0 0.0
    %4086 = vmatpush1.msra.mxu0 0.0
    %4087 = vmatprep.subr.mxu0 0.0
    %4088 = vmatpush1.msra.mxu0 0.0
    %4089 = vmatprep.subr.mxu0 0.0
    %4090 = vmatpush1.msra.mxu0 0.0
    %4091 = vmatprep.subr.mxu0 0.0
    %4092 = vmatpush1.msra.mxu0 0.0
    %4093 = vmatprep.subr.mxu0 0.0
    %4094 = vmatpush1.msra.mxu0 0.0
    %4095 = vmatprep.subr.mxu0 0.0
    %4096 = vmatpush1.msra.mxu0 0.0
    %4097 = vmatprep.subr.mxu0 0.0
    %4098 = vmatpush1.msra.mxu0 0.0
    %4099 = vmatprep.subr.mxu0 0.0
    %4100 = vmatpush1.msra.mxu0 0.0
    %4101 = vmatprep.subr.mxu0 0.0
    %4102 = vmatpush1.msra.mxu0 0.0
    %4103 = vmatprep.subr.mxu0 0.0
    %4104 = vmatpush1.msra.mxu0 0.0
    %4105 = vmatprep.subr.mxu0 0.0
    %4106 = vmatpush1.msra.mxu0 0.0
    %4107 = vmatprep.subr.mxu0 0.0
    %4108 = vmatpush1.msra.mxu0 0.0
    %4109 = vmatprep.subr.mxu0 0.0
    %4110 = vmatpush1.msra.mxu0 0.0
    %4111 = vmatprep.subr.mxu0 0.0
    %4112 = vmatpush1.msra.mxu0 0.0
    %4113 = vmatprep.subr.mxu0 0.0
    %4114 = vmatpush1.msra.mxu0 0.0
    %4115 = vmatprep.mubr.f32.mxu0 0.0
    %4116 = vmatmul.mubr.f32.gmra.mrb[0].mxu0 %v4049
    %v4117 = vpop.f32.mrb[0].mxu0
    %v4118 = vadd.f32 0.0, %v4117
    %v4119 = vpop.f32.mrb[0].mxu0
    %4120 = vdwg.mxu0
    %v4121 = vadd.f32 %v4048, %v4118
    %v4122 = vxor.u32 %v4121, 2147483648
    %v4123 = vmul.f32 %v4122, 1.442695
    %v4124 = vpow.pop %v4123
    %v4125 = vadd.f32 %v4124, 1.0
    %v4126 = vrcp.pop %v4125
    %v4127 = vmul.f32 1.0, %v4126
    %v4128 = vtanh.pop %v4121
    %v4129 = vmul.f32 %v4127, %v4036
    %4131 = vrot.lane.b32.xlu0 %v4128, 64
    %v4132 = vpop.permute.xlu0 %4131
    %v4134 = vmul.f32 %v4127, %v4132
    %4136 = vrot.lane.b32.xlu0 %v4134, 32
    %v4137 = vpop.permute.xlu0 %4136
    %v4139 = vadd.f32 %v4129, %v4137
    %v4140 = vtanh.pop %v4139
    %4142 = vrot.lane.b32.xlu0 %v4140, 64
    %v4143 = vpop.permute.xlu0 %4142
    %v4145 = vmul.f32 %v4127, %v4143
    %4147 = vrot.lane.b32.xlu0 %v4145, 32
    %v4148 = vpop.permute.xlu0 %4147
    %4150 = vst.msk [vmem:[#allocation3 + $0x10] sm:$0xff] %vm308, %v4148
    %v4151 = vld [vmem:[#allocation2 + $0x18] sm:$0xff]
    %v4152 = vsel %vm308, %v4148, 0
    %4154 = vmatprep.subr.mxu0 0.0
    %4155 = vmatpush1.msra.mxu0 %v3911
    %4156 = vmatprep.subr.mxu0 0.0
    %4157 = vmatpush1.msra.mxu0 %v3912
    %4158 = vmatprep.subr.mxu0 0.0
    %4159 = vmatpush1.msra.mxu0 %v3913
    %4160 = vmatprep.subr.mxu0 0.0
    %4161 = vmatpush1.msra.mxu0 %v3914
    %4162 = vmatprep.subr.mxu0 0.0
    %4163 = vmatpush1.msra.mxu0 0.0
    %4164 = vmatprep.subr.mxu0 0.0
    %4165 = vmatpush1.msra.mxu0 0.0
    %4166 = vmatprep.subr.mxu0 0.0
    %4167 = vmatpush1.msra.mxu0 0.0
    %4168 = vmatprep.subr.mxu0 0.0
    %4169 = vmatpush1.msra.mxu0 0.0
    %4170 = vmatprep.subr.mxu0 0.0
    %4171 = vmatpush1.msra.mxu0 0.0
    %4172 = vmatprep.subr.mxu0 0.0
    %4173 = vmatpush1.msra.mxu0 0.0
    %4174 = vmatprep.subr.mxu0 0.0
    %4175 = vmatpush1.msra.mxu0 0.0
    %4176 = vmatprep.subr.mxu0 0.0
    %4177 = vmatpush1.msra.mxu0 0.0
    %4178 = vmatprep.subr.mxu0 0.0
    %4179 = vmatpush1.msra.mxu0 0.0
    %4180 = vmatprep.subr.mxu0 0.0
    %4181 = vmatpush1.msra.mxu0 0.0
    %4182 = vmatprep.subr.mxu0 0.0
    %4183 = vmatpush1.msra.mxu0 0.0
    %4184 = vmatprep.subr.mxu0 0.0
    %4185 = vmatpush1.msra.mxu0 0.0
    %4186 = vmatprep.subr.mxu0 0.0
    %4187 = vmatpush1.msra.mxu0 0.0
    %4188 = vmatprep.subr.mxu0 0.0
    %4189 = vmatpush1.msra.mxu0 0.0
    %4190 = vmatprep.subr.mxu0 0.0
    %4191 = vmatpush1.msra.mxu0 0.0
    %4192 = vmatprep.subr.mxu0 0.0
    %4193 = vmatpush1.msra.mxu0 0.0
    %4194 = vmatprep.subr.mxu0 0.0
    %4195 = vmatpush1.msra.mxu0 0.0
    %4196 = vmatprep.subr.mxu0 0.0
    %4197 = vmatpush1.msra.mxu0 0.0
    %4198 = vmatprep.subr.mxu0 0.0
    %4199 = vmatpush1.msra.mxu0 0.0
    %4200 = vmatprep.subr.mxu0 0.0
    %4201 = vmatpush1.msra.mxu0 0.0
    %4202 = vmatprep.subr.mxu0 0.0
    %4203 = vmatpush1.msra.mxu0 0.0
    %4204 = vmatprep.subr.mxu0 0.0
    %4205 = vmatpush1.msra.mxu0 0.0
    %4206 = vmatprep.subr.mxu0 0.0
    %4207 = vmatpush1.msra.mxu0 0.0
    %4208 = vmatprep.subr.mxu0 0.0
    %4209 = vmatpush1.msra.mxu0 0.0
    %4210 = vmatprep.subr.mxu0 0.0
    %4211 = vmatpush1.msra.mxu0 0.0
    %4212 = vmatprep.subr.mxu0 0.0
    %4213 = vmatpush1.msra.mxu0 0.0
    %4214 = vmatprep.subr.mxu0 0.0
    %4215 = vmatpush1.msra.mxu0 0.0
    %4216 = vmatprep.subr.mxu0 0.0
    %4217 = vmatpush1.msra.mxu0 0.0
    %4218 = vmatprep.mubr.f32.mxu0 0.0
    %4219 = vmatmul.mubr.f32.gmra.mrb[0].mxu0 %v4152
    %v4220 = vpop.f32.mrb[0].mxu0
    %v4221 = vadd.f32 0.0, %v4220
    %v4222 = vpop.f32.mrb[0].mxu0
    %4223 = vdwg.mxu0
    %v4224 = vadd.f32 %v4151, %v4221
    %v4225 = vxor.u32 %v4224, 2147483648
    %v4226 = vmul.f32 %v4225, 1.442695
    %v4227 = vpow.pop %v4226
    %v4228 = vadd.f32 %v4227, 1.0
    %v4229 = vrcp.pop %v4228
    %v4230 = vmul.f32 1.0, %v4229
    %v4231 = vtanh.pop %v4224
    %v4232 = vmul.f32 %v4230, %v4139
    %4234 = vrot.lane.b32.xlu0 %v4231, 64
    %v4235 = vpop.permute.xlu0 %4234
    %v4237 = vmul.f32 %v4230, %v4235
    %4239 = vrot.lane.b32.xlu0 %v4237, 32
    %v4240 = vpop.permute.xlu0 %4239
    %v4242 = vadd.f32 %v4232, %v4240
    %v4243 = vtanh.pop %v4242
    %4245 = vrot.lane.b32.xlu0 %v4243, 64
    %v4246 = vpop.permute.xlu0 %4245
    %v4248 = vmul.f32 %v4230, %v4246
    %4250 = vrot.lane.b32.xlu0 %v4248, 32
    %v4251 = vpop.permute.xlu0 %4250
    %4253 = vst.msk [vmem:[#allocation3 + $0x18] sm:$0xff] %vm308, %v4251
    %v4254 = vld [vmem:[#allocation2 + $0x20] sm:$0xff]
    %v4255 = vsel %vm308, %v4251, 0
    %4257 = vmatprep.subr.mxu0 0.0
    %4258 = vmatpush1.msra.mxu0 %v3911
    %4259 = vmatprep.subr.mxu0 0.0
    %4260 = vmatpush1.msra.mxu0 %v3912
    %4261 = vmatprep.subr.mxu0 0.0
    %4262 = vmatpush1.msra.mxu0 %v3913
    %4263 = vmatprep.subr.mxu0 0.0
    %4264 = vmatpush1.msra.mxu0 %v3914
    %4265 = vmatprep.subr.mxu0 0.0
    %4266 = vmatpush1.msra.mxu0 0.0
    %4267 = vmatprep.subr.mxu0 0.0
    %4268 = vmatpush1.msra.mxu0 0.0
    %4269 = vmatprep.subr.mxu0 0.0
    %4270 = vmatpush1.msra.mxu0 0.0
    %4271 = vmatprep.subr.mxu0 0.0
    %4272 = vmatpush1.msra.mxu0 0.0
    %4273 = vmatprep.subr.mxu0 0.0
    %4274 = vmatpush1.msra.mxu0 0.0
    %4275 = vmatprep.subr.mxu0 0.0
    %4276 = vmatpush1.msra.mxu0 0.0
    %4277 = vmatprep.subr.mxu0 0.0
    %4278 = vmatpush1.msra.mxu0 0.0
    %4279 = vmatprep.subr.mxu0 0.0
    %4280 = vmatpush1.msra.mxu0 0.0
    %4281 = vmatprep.subr.mxu0 0.0
    %4282 = vmatpush1.msra.mxu0 0.0
    %4283 = vmatprep.subr.mxu0 0.0
    %4284 = vmatpush1.msra.mxu0 0.0
    %4285 = vmatprep.subr.mxu0 0.0
    %4286 = vmatpush1.msra.mxu0 0.0
    %4287 = vmatprep.subr.mxu0 0.0
    %4288 = vmatpush1.msra.mxu0 0.0
    %4289 = vmatprep.subr.mxu0 0.0
    %4290 = vmatpush1.msra.mxu0 0.0
    %4291 = vmatprep.subr.mxu0 0.0
    %4292 = vmatpush1.msra.mxu0 0.0
    %4293 = vmatprep.subr.mxu0 0.0
    %4294 = vmatpush1.msra.mxu0 0.0
    %4295 = vmatprep.subr.mxu0 0.0
    %4296 = vmatpush1.msra.mxu0 0.0
    %4297 = vmatprep.subr.mxu0 0.0
    %4298 = vmatpush1.msra.mxu0 0.0
    %4299 = vmatprep.subr.mxu0 0.0
    %4300 = vmatpush1.msra.mxu0 0.0
    %4301 = vmatprep.subr.mxu0 0.0
    %4302 = vmatpush1.msra.mxu0 0.0
    %4303 = vmatprep.subr.mxu0 0.0
    %4304 = vmatpush1.msra.mxu0 0.0
    %4305 = vmatprep.subr.mxu0 0.0
    %4306 = vmatpush1.msra.mxu0 0.0
    %4307 = vmatprep.subr.mxu0 0.0
    %4308 = vmatpush1.msra.mxu0 0.0
    %4309 = vmatprep.subr.mxu0 0.0
    %4310 = vmatpush1.msra.mxu0 0.0
    %4311 = vmatprep.subr.mxu0 0.0
    %4312 = vmatpush1.msra.mxu0 0.0
    %4313 = vmatprep.subr.mxu0 0.0
    %4314 = vmatpush1.msra.mxu0 0.0
    %4315 = vmatprep.subr.mxu0 0.0
    %4316 = vmatpush1.msra.mxu0 0.0
    %4317 = vmatprep.subr.mxu0 0.0
    %4318 = vmatpush1.msra.mxu0 0.0
    %4319 = vmatprep.subr.mxu0 0.0
    %4320 = vmatpush1.msra.mxu0 0.0
    %4321 = vmatprep.mubr.f32.mxu0 0.0
    %4322 = vmatmul.mubr.f32.gmra.mrb[0].mxu0 %v4255
    %v4323 = vpop.f32.mrb[0].mxu0
    %v4324 = vadd.f32 0.0, %v4323
    %v4325 = vpop.f32.mrb[0].mxu0
    %4326 = vdwg.mxu0
    %v4327 = vadd.f32 %v4254, %v4324
    %v4328 = vxor.u32 %v4327, 2147483648
    %v4329 = vmul.f32 %v4328, 1.442695
    %v4330 = vpow.pop %v4329
    %v4331 = vadd.f32 %v4330, 1.0
    %v4332 = vrcp.pop %v4331
    %v4333 = vmul.f32 1.0, %v4332
    %v4334 = vtanh.pop %v4327
    %v4335 = vmul.f32 %v4333, %v4242
    %4337 = vrot.lane.b32.xlu0 %v4334, 64
    %v4338 = vpop.permute.xlu0 %4337
    %v4340 = vmul.f32 %v4333, %v4338
    %4342 = vrot.lane.b32.xlu0 %v4340, 32
    %v4343 = vpop.permute.xlu0 %4342
    %v4345 = vadd.f32 %v4335, %v4343
    %v4346 = vtanh.pop %v4345
    %4348 = vrot.lane.b32.xlu0 %v4346, 64
    %v4349 = vpop.permute.xlu0 %4348
    %v4351 = vmul.f32 %v4333, %v4349
    %4353 = vrot.lane.b32.xlu0 %v4351, 32
    %v4354 = vpop.permute.xlu0 %4353
    %4356 = vst.msk [vmem:[#allocation3 + $0x20] sm:$0xff] %vm308, %v4354
    %v4357 = vld [vmem:[#allocation2 + $0x28] sm:$0xff]
    %v4358 = vsel %vm308, %v4354, 0
    %4360 = vmatprep.subr.mxu0 0.0
    %4361 = vmatpush1.msra.mxu0 %v3911
    %4362 = vmatprep.subr.mxu0 0.0
    %4363 = vmatpush1.msra.mxu0 %v3912
    %4364 = vmatprep.subr.mxu0 0.0
    %4365 = vmatpush1.msra.mxu0 %v3913
    %4366 = vmatprep.subr.mxu0 0.0
    %4367 = vmatpush1.msra.mxu0 %v3914
    %4368 = vmatprep.subr.mxu0 0.0
    %4369 = vmatpush1.msra.mxu0 0.0
    %4370 = vmatprep.subr.mxu0 0.0
    %4371 = vmatpush1.msra.mxu0 0.0
    %4372 = vmatprep.subr.mxu0 0.0
    %4373 = vmatpush1.msra.mxu0 0.0
    %4374 = vmatprep.subr.mxu0 0.0
    %4375 = vmatpush1.msra.mxu0 0.0
    %4376 = vmatprep.subr.mxu0 0.0
    %4377 = vmatpush1.msra.mxu0 0.0
    %4378 = vmatprep.subr.mxu0 0.0
    %4379 = vmatpush1.msra.mxu0 0.0
    %4380 = vmatprep.subr.mxu0 0.0
    %4381 = vmatpush1.msra.mxu0 0.0
    %4382 = vmatprep.subr.mxu0 0.0
    %4383 = vmatpush1.msra.mxu0 0.0
    %4384 = vmatprep.subr.mxu0 0.0
    %4385 = vmatpush1.msra.mxu0 0.0
    %4386 = vmatprep.subr.mxu0 0.0
    %4387 = vmatpush1.msra.mxu0 0.0
    %4388 = vmatprep.subr.mxu0 0.0
    %4389 = vmatpush1.msra.mxu0 0.0
    %4390 = vmatprep.subr.mxu0 0.0
    %4391 = vmatpush1.msra.mxu0 0.0
    %4392 = vmatprep.subr.mxu0 0.0
    %4393 = vmatpush1.msra.mxu0 0.0
    %4394 = vmatprep.subr.mxu0 0.0
    %4395 = vmatpush1.msra.mxu0 0.0
    %4396 = vmatprep.subr.mxu0 0.0
    %4397 = vmatpush1.msra.mxu0 0.0
    %4398 = vmatprep.subr.mxu0 0.0
    %4399 = vmatpush1.msra.mxu0 0.0
    %4400 = vmatprep.subr.mxu0 0.0
    %4401 = vmatpush1.msra.mxu0 0.0
    %4402 = vmatprep.subr.mxu0 0.0
    %4403 = vmatpush1.msra.mxu0 0.0
    %4404 = vmatprep.subr.mxu0 0.0
    %4405 = vmatpush1.msra.mxu0 0.0
    %4406 = vmatprep.subr.mxu0 0.0
    %4407 = vmatpush1.msra.mxu0 0.0
    %4408 = vmatprep.subr.mxu0 0.0
    %4409 = vmatpush1.msra.mxu0 0.0
    %4410 = vmatprep.subr.mxu0 0.0
    %4411 = vmatpush1.msra.mxu0 0.0
    %4412 = vmatprep.subr.mxu0 0.0
    %4413 = vmatpush1.msra.mxu0 0.0
    %4414 = vmatprep.subr.mxu0 0.0
    %4415 = vmatpush1.msra.mxu0 0.0
    %4416 = vmatprep.subr.mxu0 0.0
    %4417 = vmatpush1.msra.mxu0 0.0
    %4418 = vmatprep.subr.mxu0 0.0
    %4419 = vmatpush1.msra.mxu0 0.0
    %4420 = vmatprep.subr.mxu0 0.0
    %4421 = vmatpush1.msra.mxu0 0.0
    %4422 = vmatprep.subr.mxu0 0.0
    %4423 = vmatpush1.msra.mxu0 0.0
    %4424 = vmatprep.mubr.f32.mxu0 0.0
    %4425 = vmatmul.mubr.f32.gmra.mrb[0].mxu0 %v4358
    %v4426 = vpop.f32.mrb[0].mxu0
    %v4427 = vadd.f32 0.0, %v4426
    %v4428 = vpop.f32.mrb[0].mxu0
    %4429 = vdwg.mxu0
    %v4430 = vadd.f32 %v4357, %v4427
    %v4431 = vxor.u32 %v4430, 2147483648
    %v4432 = vmul.f32 %v4431, 1.442695
    %v4433 = vpow.pop %v4432
    %v4434 = vadd.f32 %v4433, 1.0
    %v4435 = vrcp.pop %v4434
    %v4436 = vmul.f32 1.0, %v4435
    %v4437 = vtanh.pop %v4430
    %v4438 = vmul.f32 %v4436, %v4345
    %4440 = vrot.lane.b32.xlu0 %v4437, 64
    %v4441 = vpop.permute.xlu0 %4440
    %v4443 = vmul.f32 %v4436, %v4441
    %4445 = vrot.lane.b32.xlu0 %v4443, 32
    %v4446 = vpop.permute.xlu0 %4445
    %v4448 = vadd.f32 %v4438, %v4446
    %v4449 = vtanh.pop %v4448
    %4451 = vrot.lane.b32.xlu0 %v4449, 64
    %v4452 = vpop.permute.xlu0 %4451
    %v4454 = vmul.f32 %v4436, %v4452
    %4456 = vrot.lane.b32.xlu0 %v4454, 32
    %v4457 = vpop.permute.xlu0 %4456
    %4459 = vst.msk [vmem:[#allocation3 + $0x28] sm:$0xff] %vm308, %v4457
    %v4460 = vld [vmem:[#allocation2 + $0x30] sm:$0xff]
    %v4461 = vsel %vm308, %v4457, 0
    %4463 = vmatprep.subr.mxu0 0.0
    %4464 = vmatpush1.msra.mxu0 %v3911
    %4465 = vmatprep.subr.mxu0 0.0
    %4466 = vmatpush1.msra.mxu0 %v3912
    %4467 = vmatprep.subr.mxu0 0.0
    %4468 = vmatpush1.msra.mxu0 %v3913
    %4469 = vmatprep.subr.mxu0 0.0
    %4470 = vmatpush1.msra.mxu0 %v3914
    %4471 = vmatprep.subr.mxu0 0.0
    %4472 = vmatpush1.msra.mxu0 0.0
    %4473 = vmatprep.subr.mxu0 0.0
    %4474 = vmatpush1.msra.mxu0 0.0
    %4475 = vmatprep.subr.mxu0 0.0
    %4476 = vmatpush1.msra.mxu0 0.0
    %4477 = vmatprep.subr.mxu0 0.0
    %4478 = vmatpush1.msra.mxu0 0.0
    %4479 = vmatprep.subr.mxu0 0.0
    %4480 = vmatpush1.msra.mxu0 0.0
    %4481 = vmatprep.subr.mxu0 0.0
    %4482 = vmatpush1.msra.mxu0 0.0
    %4483 = vmatprep.subr.mxu0 0.0
    %4484 = vmatpush1.msra.mxu0 0.0
    %4485 = vmatprep.subr.mxu0 0.0
    %4486 = vmatpush1.msra.mxu0 0.0
    %4487 = vmatprep.subr.mxu0 0.0
    %4488 = vmatpush1.msra.mxu0 0.0
    %4489 = vmatprep.subr.mxu0 0.0
    %4490 = vmatpush1.msra.mxu0 0.0
    %4491 = vmatprep.subr.mxu0 0.0
    %4492 = vmatpush1.msra.mxu0 0.0
    %4493 = vmatprep.subr.mxu0 0.0
    %4494 = vmatpush1.msra.mxu0 0.0
    %4495 = vmatprep.subr.mxu0 0.0
    %4496 = vmatpush1.msra.mxu0 0.0
    %4497 = vmatprep.subr.mxu0 0.0
    %4498 = vmatpush1.msra.mxu0 0.0
    %4499 = vmatprep.subr.mxu0 0.0
    %4500 = vmatpush1.msra.mxu0 0.0
    %4501 = vmatprep.subr.mxu0 0.0
    %4502 = vmatpush1.msra.mxu0 0.0
    %4503 = vmatprep.subr.mxu0 0.0
    %4504 = vmatpush1.msra.mxu0 0.0
    %4505 = vmatprep.subr.mxu0 0.0
    %4506 = vmatpush1.msra.mxu0 0.0
    %4507 = vmatprep.subr.mxu0 0.0
    %4508 = vmatpush1.msra.mxu0 0.0
    %4509 = vmatprep.subr.mxu0 0.0
    %4510 = vmatpush1.msra.mxu0 0.0
    %4511 = vmatprep.subr.mxu0 0.0
    %4512 = vmatpush1.msra.mxu0 0.0
    %4513 = vmatprep.subr.mxu0 0.0
    %4514 = vmatpush1.msra.mxu0 0.0
    %4515 = vmatprep.subr.mxu0 0.0
    %4516 = vmatpush1.msra.mxu0 0.0
    %4517 = vmatprep.subr.mxu0 0.0
    %4518 = vmatpush1.msra.mxu0 0.0
    %4519 = vmatprep.subr.mxu0 0.0
    %4520 = vmatpush1.msra.mxu0 0.0
    %4521 = vmatprep.subr.mxu0 0.0
    %4522 = vmatpush1.msra.mxu0 0.0
    %4523 = vmatprep.subr.mxu0 0.0
    %4524 = vmatpush1.msra.mxu0 0.0
    %4525 = vmatprep.subr.mxu0 0.0
    %4526 = vmatpush1.msra.mxu0 0.0
    %4527 = vmatprep.mubr.f32.mxu0 0.0
    %4528 = vmatmul.mubr.f32.gmra.mrb[0].mxu0 %v4461
    %v4529 = vpop.f32.mrb[0].mxu0
    %v4530 = vadd.f32 0.0, %v4529
    %v4531 = vpop.f32.mrb[0].mxu0
    %4532 = vdwg.mxu0
    %v4533 = vadd.f32 %v4460, %v4530
    %v4534 = vxor.u32 %v4533, 2147483648
    %v4535 = vmul.f32 %v4534, 1.442695
    %v4536 = vpow.pop %v4535
    %v4537 = vadd.f32 %v4536, 1.0
    %v4538 = vrcp.pop %v4537
    %v4539 = vmul.f32 1.0, %v4538
    %v4540 = vtanh.pop %v4533
    %v4541 = vmul.f32 %v4539, %v4448
    %4543 = vrot.lane.b32.xlu0 %v4540, 64
    %v4544 = vpop.permute.xlu0 %4543
    %v4546 = vmul.f32 %v4539, %v4544
    %4548 = vrot.lane.b32.xlu0 %v4546, 32
    %v4549 = vpop.permute.xlu0 %4548
    %v4551 = vadd.f32 %v4541, %v4549
    %v4552 = vtanh.pop %v4551
    %4554 = vrot.lane.b32.xlu0 %v4552, 64
    %v4555 = vpop.permute.xlu0 %4554
    %v4557 = vmul.f32 %v4539, %v4555
    %4559 = vrot.lane.b32.xlu0 %v4557, 32
    %v4560 = vpop.permute.xlu0 %4559
    %4562 = vst.msk [vmem:[#allocation3 + $0x30] sm:$0xff] %vm308, %v4560
    %v4563 = vld [vmem:[#allocation2 + $0x38] sm:$0xff]
    %v4564 = vsel %vm308, %v4560, 0
    %4566 = vmatprep.subr.mxu0 0.0
    %4567 = vmatpush1.msra.mxu0 %v3911
    %4568 = vmatprep.subr.mxu0 0.0
    %4569 = vmatpush1.msra.mxu0 %v3912
    %4570 = vmatprep.subr.mxu0 0.0
    %4571 = vmatpush1.msra.mxu0 %v3913
    %4572 = vmatprep.subr.mxu0 0.0
    %4573 = vmatpush1.msra.mxu0 %v3914
    %4574 = vmatprep.subr.mxu0 0.0
    %4575 = vmatpush1.msra.mxu0 0.0
    %4576 = vmatprep.subr.mxu0 0.0
    %4577 = vmatpush1.msra.mxu0 0.0
    %4578 = vmatprep.subr.mxu0 0.0
    %4579 = vmatpush1.msra.mxu0 0.0
    %4580 = vmatprep.subr.mxu0 0.0
    %4581 = vmatpush1.msra.mxu0 0.0
    %4582 = vmatprep.subr.mxu0 0.0
    %4583 = vmatpush1.msra.mxu0 0.0
    %4584 = vmatprep.subr.mxu0 0.0
    %4585 = vmatpush1.msra.mxu0 0.0
    %4586 = vmatprep.subr.mxu0 0.0
    %4587 = vmatpush1.msra.mxu0 0.0
    %4588 = vmatprep.subr.mxu0 0.0
    %4589 = vmatpush1.msra.mxu0 0.0
    %4590 = vmatprep.subr.mxu0 0.0
    %4591 = vmatpush1.msra.mxu0 0.0
    %4592 = vmatprep.subr.mxu0 0.0
    %4593 = vmatpush1.msra.mxu0 0.0
    %4594 = vmatprep.subr.mxu0 0.0
    %4595 = vmatpush1.msra.mxu0 0.0
    %4596 = vmatprep.subr.mxu0 0.0
    %4597 = vmatpush1.msra.mxu0 0.0
    %4598 = vmatprep.subr.mxu0 0.0
    %4599 = vmatpush1.msra.mxu0 0.0
    %4600 = vmatprep.subr.mxu0 0.0
    %4601 = vmatpush1.msra.mxu0 0.0
    %4602 = vmatprep.subr.mxu0 0.0
    %4603 = vmatpush1.msra.mxu0 0.0
    %4604 = vmatprep.subr.mxu0 0.0
    %4605 = vmatpush1.msra.mxu0 0.0
    %4606 = vmatprep.subr.mxu0 0.0
    %4607 = vmatpush1.msra.mxu0 0.0
    %4608 = vmatprep.subr.mxu0 0.0
    %4609 = vmatpush1.msra.mxu0 0.0
    %4610 = vmatprep.subr.mxu0 0.0
    %4611 = vmatpush1.msra.mxu0 0.0
    %4612 = vmatprep.subr.mxu0 0.0
    %4613 = vmatpush1.msra.mxu0 0.0
    %4614 = vmatprep.subr.mxu0 0.0
    %4615 = vmatpush1.msra.mxu0 0.0
    %4616 = vmatprep.subr.mxu0 0.0
    %4617 = vmatpush1.msra.mxu0 0.0
    %4618 = vmatprep.subr.mxu0 0.0
    %4619 = vmatpush1.msra.mxu0 0.0
    %4620 = vmatprep.subr.mxu0 0.0
    %4621 = vmatpush1.msra.mxu0 0.0
    %4622 = vmatprep.subr.mxu0 0.0
    %4623 = vmatpush1.msra.mxu0 0.0
    %4624 = vmatprep.subr.mxu0 0.0
    %4625 = vmatpush1.msra.mxu0 0.0
    %4626 = vmatprep.subr.mxu0 0.0
    %4627 = vmatpush1.msra.mxu0 0.0
    %4628 = vmatprep.subr.mxu0 0.0
    %4629 = vmatpush1.msra.mxu0 0.0
    %4630 = vmatprep.mubr.f32.mxu0 0.0
    %4631 = vmatmul.mubr.f32.gmra.mrb[0].mxu0 %v4564
    %v4632 = vpop.f32.mrb[0].mxu0
    %v4633 = vadd.f32 0.0, %v4632
    %v4634 = vpop.f32.mrb[0].mxu0
    %4635 = vdwg.mxu0
    %v4636 = vadd.f32 %v4563, %v4633
    %v4637 = vxor.u32 %v4636, 2147483648
    %v4638 = vmul.f32 %v4637, 1.442695
    %v4639 = vpow.pop %v4638
    %v4640 = vadd.f32 %v4639, 1.0
    %v4641 = vrcp.pop %v4640
    %v4642 = vmul.f32 1.0, %v4641
    %v4643 = vtanh.pop %v4636
    %v4644 = vmul.f32 %v4642, %v4551
    %4646 = vrot.lane.b32.xlu0 %v4643, 64
    %v4647 = vpop.permute.xlu0 %4646
    %v4649 = vmul.f32 %v4642, %v4647
    %4651 = vrot.lane.b32.xlu0 %v4649, 32
    %v4652 = vpop.permute.xlu0 %4651
    %v4654 = vadd.f32 %v4644, %v4652
    %v4655 = vtanh.pop %v4654
    %4657 = vrot.lane.b32.xlu0 %v4655, 64
    %v4658 = vpop.permute.xlu0 %4657
    %v4660 = vmul.f32 %v4642, %v4658
    %4662 = vrot.lane.b32.xlu0 %v4660, 32
    %v4663 = vpop.permute.xlu0 %4662
    %4665 = vst.msk [vmem:[#allocation3 + $0x38] sm:$0xff] %vm308, %v4663
    %v4666 = vld [vmem:[#allocation2 + $0x40] sm:$0xff]
    %v4667 = vsel %vm308, %v4663, 0
    %4669 = vmatprep.subr.mxu0 0.0
    %4670 = vmatpush1.msra.mxu0 %v3911
    %4671 = vmatprep.subr.mxu0 0.0
    %4672 = vmatpush1.msra.mxu0 %v3912
    %4673 = vmatprep.subr.mxu0 0.0
    %4674 = vmatpush1.msra.mxu0 %v3913
    %4675 = vmatprep.subr.mxu0 0.0
    %4676 = vmatpush1.msra.mxu0 %v3914
    %4677 = vmatprep.subr.mxu0 0.0
    %4678 = vmatpush1.msra.mxu0 0.0
    %4679 = vmatprep.subr.mxu0 0.0
    %4680 = vmatpush1.msra.mxu0 0.0
    %4681 = vmatprep.subr.mxu0 0.0
    %4682 = vmatpush1.msra.mxu0 0.0
    %4683 = vmatprep.subr.mxu0 0.0
    %4684 = vmatpush1.msra.mxu0 0.0
    %4685 = vmatprep.subr.mxu0 0.0
    %4686 = vmatpush1.msra.mxu0 0.0
    %4687 = vmatprep.subr.mxu0 0.0
    %4688 = vmatpush1.msra.mxu0 0.0
    %4689 = vmatprep.subr.mxu0 0.0
    %4690 = vmatpush1.msra.mxu0 0.0
    %4691 = vmatprep.subr.mxu0 0.0
    %4692 = vmatpush1.msra.mxu0 0.0
    %4693 = vmatprep.subr.mxu0 0.0
    %4694 = vmatpush1.msra.mxu0 0.0
    %4695 = vmatprep.subr.mxu0 0.0
    %4696 = vmatpush1.msra.mxu0 0.0
    %4697 = vmatprep.subr.mxu0 0.0
    %4698 = vmatpush1.msra.mxu0 0.0
    %4699 = vmatprep.subr.mxu0 0.0
    %4700 = vmatpush1.msra.mxu0 0.0
    %4701 = vmatprep.subr.mxu0 0.0
    %4702 = vmatpush1.msra.mxu0 0.0
    %4703 = vmatprep.subr.mxu0 0.0
    %4704 = vmatpush1.msra.mxu0 0.0
    %4705 = vmatprep.subr.mxu0 0.0
    %4706 = vmatpush1.msra.mxu0 0.0
    %4707 = vmatprep.subr.mxu0 0.0
    %4708 = vmatpush1.msra.mxu0 0.0
    %4709 = vmatprep.subr.mxu0 0.0
    %4710 = vmatpush1.msra.mxu0 0.0
    %4711 = vmatprep.subr.mxu0 0.0
    %4712 = vmatpush1.msra.mxu0 0.0
    %4713 = vmatprep.subr.mxu0 0.0
    %4714 = vmatpush1.msra.mxu0 0.0
    %4715 = vmatprep.subr.mxu0 0.0
    %4716 = vmatpush1.msra.mxu0 0.0
    %4717 = vmatprep.subr.mxu0 0.0
    %4718 = vmatpush1.msra.mxu0 0.0
    %4719 = vmatprep.subr.mxu0 0.0
    %4720 = vmatpush1.msra.mxu0 0.0
    %4721 = vmatprep.subr.mxu0 0.0
    %4722 = vmatpush1.msra.mxu0 0.0
    %4723 = vmatprep.subr.mxu0 0.0
    %4724 = vmatpush1.msra.mxu0 0.0
    %4725 = vmatprep.subr.mxu0 0.0
    %4726 = vmatpush1.msra.mxu0 0.0
    %4727 = vmatprep.subr.mxu0 0.0
    %4728 = vmatpush1.msra.mxu0 0.0
    %4729 = vmatprep.subr.mxu0 0.0
    %4730 = vmatpush1.msra.mxu0 0.0
    %4731 = vmatprep.subr.mxu0 0.0
    %4732 = vmatpush1.msra.mxu0 0.0
    %4733 = vmatprep.mubr.f32.mxu0 0.0
    %4734 = vmatmul.mubr.f32.gmra.mrb[0].mxu0 %v4667
    %v4735 = vpop.f32.mrb[0].mxu0
    %v4736 = vadd.f32 0.0, %v4735
    %v4737 = vpop.f32.mrb[0].mxu0
    %4738 = vdwg.mxu0
    %v4739 = vadd.f32 %v4666, %v4736
    %v4740 = vxor.u32 %v4739, 2147483648
    %v4741 = vmul.f32 %v4740, 1.442695
    %v4742 = vpow.pop %v4741
    %v4743 = vadd.f32 %v4742, 1.0
    %v4744 = vrcp.pop %v4743
    %v4745 = vmul.f32 1.0, %v4744
    %v4746 = vtanh.pop %v4739
    %v4747 = vmul.f32 %v4745, %v4654
    %4749 = vrot.lane.b32.xlu0 %v4746, 64
    %v4750 = vpop.permute.xlu0 %4749
    %v4752 = vmul.f32 %v4745, %v4750
    %4754 = vrot.lane.b32.xlu0 %v4752, 32
    %v4755 = vpop.permute.xlu0 %4754
    %v4757 = vadd.f32 %v4747, %v4755
    %v4758 = vtanh.pop %v4757
    %4760 = vrot.lane.b32.xlu0 %v4758, 64
    %v4761 = vpop.permute.xlu0 %4760
    %v4763 = vmul.f32 %v4745, %v4761
    %4765 = vrot.lane.b32.xlu0 %v4763, 32
    %v4766 = vpop.permute.xlu0 %4765
    %4768 = vst.msk [vmem:[#allocation3 + $0x40] sm:$0xff] %vm308, %v4766
    %v4769 = vld [vmem:[#allocation2 + $0x48] sm:$0xff]
    %v4770 = vsel %vm308, %v4766, 0
    %4772 = vmatprep.subr.mxu0 0.0
    %4773 = vmatpush1.msra.mxu0 %v3911
    %4774 = vmatprep.subr.mxu0 0.0
    %4775 = vmatpush1.msra.mxu0 %v3912
    %4776 = vmatprep.subr.mxu0 0.0
    %4777 = vmatpush1.msra.mxu0 %v3913
    %4778 = vmatprep.subr.mxu0 0.0
    %4779 = vmatpush1.msra.mxu0 %v3914
    %4780 = vmatprep.subr.mxu0 0.0
    %4781 = vmatpush1.msra.mxu0 0.0
    %4782 = vmatprep.subr.mxu0 0.0
    %4783 = vmatpush1.msra.mxu0 0.0
    %4784 = vmatprep.subr.mxu0 0.0
    %4785 = vmatpush1.msra.mxu0 0.0
    %4786 = vmatprep.subr.mxu0 0.0
    %4787 = vmatpush1.msra.mxu0 0.0
    %4788 = vmatprep.subr.mxu0 0.0
    %4789 = vmatpush1.msra.mxu0 0.0
    %4790 = vmatprep.subr.mxu0 0.0
    %4791 = vmatpush1.msra.mxu0 0.0
    %4792 = vmatprep.subr.mxu0 0.0
    %4793 = vmatpush1.msra.mxu0 0.0
    %4794 = vmatprep.subr.mxu0 0.0
    %4795 = vmatpush1.msra.mxu0 0.0
    %4796 = vmatprep.subr.mxu0 0.0
    %4797 = vmatpush1.msra.mxu0 0.0
    %4798 = vmatprep.subr.mxu0 0.0
    %4799 = vmatpush1.msra.mxu0 0.0
    %4800 = vmatprep.subr.mxu0 0.0
    %4801 = vmatpush1.msra.mxu0 0.0
    %4802 = vmatprep.subr.mxu0 0.0
    %4803 = vmatpush1.msra.mxu0 0.0
    %4804 = vmatprep.subr.mxu0 0.0
    %4805 = vmatpush1.msra.mxu0 0.0
    %4806 = vmatprep.subr.mxu0 0.0
    %4807 = vmatpush1.msra.mxu0 0.0
    %4808 = vmatprep.subr.mxu0 0.0
    %4809 = vmatpush1.msra.mxu0 0.0
    %4810 = vmatprep.subr.mxu0 0.0
    %4811 = vmatpush1.msra.mxu0 0.0
    %4812 = vmatprep.subr.mxu0 0.0
    %4813 = vmatpush1.msra.mxu0 0.0
    %4814 = vmatprep.subr.mxu0 0.0
    %4815 = vmatpush1.msra.mxu0 0.0
    %4816 = vmatprep.subr.mxu0 0.0
    %4817 = vmatpush1.msra.mxu0 0.0
    %4818 = vmatprep.subr.mxu0 0.0
    %4819 = vmatpush1.msra.mxu0 0.0
    %4820 = vmatprep.subr.mxu0 0.0
    %4821 = vmatpush1.msra.mxu0 0.0
    %4822 = vmatprep.subr.mxu0 0.0
    %4823 = vmatpush1.msra.mxu0 0.0
    %4824 = vmatprep.subr.mxu0 0.0
    %4825 = vmatpush1.msra.mxu0 0.0
    %4826 = vmatprep.subr.mxu0 0.0
    %4827 = vmatpush1.msra.mxu0 0.0
    %4828 = vmatprep.subr.mxu0 0.0
    %4829 = vmatpush1.msra.mxu0 0.0
    %4830 = vmatprep.subr.mxu0 0.0
    %4831 = vmatpush1.msra.mxu0 0.0
    %4832 = vmatprep.subr.mxu0 0.0
    %4833 = vmatpush1.msra.mxu0 0.0
    %4834 = vmatprep.subr.mxu0 0.0
    %4835 = vmatpush1.msra.mxu0 0.0
    %4836 = vmatprep.mubr.f32.mxu0 0.0
    %4837 = vmatmul.mubr.f32.gmra.mrb[0].mxu0 %v4770
    %v4838 = vpop.f32.mrb[0].mxu0
    %v4839 = vadd.f32 0.0, %v4838
    %v4840 = vpop.f32.mrb[0].mxu0
    %4841 = vdwg.mxu0
    %v4842 = vadd.f32 %v4769, %v4839
    %v4843 = vxor.u32 %v4842, 2147483648
    %v4844 = vmul.f32 %v4843, 1.442695
    %v4845 = vpow.pop %v4844
    %v4846 = vadd.f32 %v4845, 1.0
    %v4847 = vrcp.pop %v4846
    %v4848 = vmul.f32 1.0, %v4847
    %v4849 = vtanh.pop %v4842
    %v4850 = vmul.f32 %v4848, %v4757
    %4852 = vrot.lane.b32.xlu0 %v4849, 64
    %v4853 = vpop.permute.xlu0 %4852
    %v4855 = vmul.f32 %v4848, %v4853
    %4857 = vrot.lane.b32.xlu0 %v4855, 32
    %v4858 = vpop.permute.xlu0 %4857
    %v4860 = vadd.f32 %v4850, %v4858
    %v4861 = vtanh.pop %v4860
    %4863 = vrot.lane.b32.xlu0 %v4861, 64
    %v4864 = vpop.permute.xlu0 %4863
    %v4866 = vmul.f32 %v4848, %v4864
    %4868 = vrot.lane.b32.xlu0 %v4866, 32
    %v4869 = vpop.permute.xlu0 %4868
    %4871 = vst.msk [vmem:[#allocation3 + $0x48] sm:$0xff] %vm308, %v4869
    %v4872 = vld [vmem:[#allocation2 + $0x50] sm:$0xff]
    %v4873 = vsel %vm308, %v4869, 0
    %4875 = vmatprep.subr.mxu0 0.0
    %4876 = vmatpush1.msra.mxu0 %v3911
    %4877 = vmatprep.subr.mxu0 0.0
    %4878 = vmatpush1.msra.mxu0 %v3912
    %4879 = vmatprep.subr.mxu0 0.0
    %4880 = vmatpush1.msra.mxu0 %v3913
    %4881 = vmatprep.subr.mxu0 0.0
    %4882 = vmatpush1.msra.mxu0 %v3914
    %4883 = vmatprep.subr.mxu0 0.0
    %4884 = vmatpush1.msra.mxu0 0.0
    %4885 = vmatprep.subr.mxu0 0.0
    %4886 = vmatpush1.msra.mxu0 0.0
    %4887 = vmatprep.subr.mxu0 0.0
    %4888 = vmatpush1.msra.mxu0 0.0
    %4889 = vmatprep.subr.mxu0 0.0
    %4890 = vmatpush1.msra.mxu0 0.0
    %4891 = vmatprep.subr.mxu0 0.0
    %4892 = vmatpush1.msra.mxu0 0.0
    %4893 = vmatprep.subr.mxu0 0.0
    %4894 = vmatpush1.msra.mxu0 0.0
    %4895 = vmatprep.subr.mxu0 0.0
    %4896 = vmatpush1.msra.mxu0 0.0
    %4897 = vmatprep.subr.mxu0 0.0
    %4898 = vmatpush1.msra.mxu0 0.0
    %4899 = vmatprep.subr.mxu0 0.0
    %4900 = vmatpush1.msra.mxu0 0.0
    %4901 = vmatprep.subr.mxu0 0.0
    %4902 = vmatpush1.msra.mxu0 0.0
    %4903 = vmatprep.subr.mxu0 0.0
    %4904 = vmatpush1.msra.mxu0 0.0
    %4905 = vmatprep.subr.mxu0 0.0
    %4906 = vmatpush1.msra.mxu0 0.0
    %4907 = vmatprep.subr.mxu0 0.0
    %4908 = vmatpush1.msra.mxu0 0.0
    %4909 = vmatprep.subr.mxu0 0.0
    %4910 = vmatpush1.msra.mxu0 0.0
    %4911 = vmatprep.subr.mxu0 0.0
    %4912 = vmatpush1.msra.mxu0 0.0
    %4913 = vmatprep.subr.mxu0 0.0
    %4914 = vmatpush1.msra.mxu0 0.0
    %4915 = vmatprep.subr.mxu0 0.0
    %4916 = vmatpush1.msra.mxu0 0.0
    %4917 = vmatprep.subr.mxu0 0.0
    %4918 = vmatpush1.msra.mxu0 0.0
    %4919 = vmatprep.subr.mxu0 0.0
    %4920 = vmatpush1.msra.mxu0 0.0
    %4921 = vmatprep.subr.mxu0 0.0
    %4922 = vmatpush1.msra.mxu0 0.0
    %4923 = vmatprep.subr.mxu0 0.0
    %4924 = vmatpush1.msra.mxu0 0.0
    %4925 = vmatprep.subr.mxu0 0.0
    %4926 = vmatpush1.msra.mxu0 0.0
    %4927 = vmatprep.subr.mxu0 0.0
    %4928 = vmatpush1.msra.mxu0 0.0
    %4929 = vmatprep.subr.mxu0 0.0
    %4930 = vmatpush1.msra.mxu0 0.0
    %4931 = vmatprep.subr.mxu0 0.0
    %4932 = vmatpush1.msra.mxu0 0.0
    %4933 = vmatprep.subr.mxu0 0.0
    %4934 = vmatpush1.msra.mxu0 0.0
    %4935 = vmatprep.subr.mxu0 0.0
    %4936 = vmatpush1.msra.mxu0 0.0
    %4937 = vmatprep.subr.mxu0 0.0
    %4938 = vmatpush1.msra.mxu0 0.0
    %4939 = vmatprep.mubr.f32.mxu0 0.0
    %4940 = vmatmul.mubr.f32.gmra.mrb[0].mxu0 %v4873
    %v4941 = vpop.f32.mrb[0].mxu0
    %v4942 = vadd.f32 0.0, %v4941
    %v4943 = vpop.f32.mrb[0].mxu0
    %4944 = vdwg.mxu0
    %v4945 = vadd.f32 %v4872, %v4942
    %v4946 = vxor.u32 %v4945, 2147483648
    %v4947 = vmul.f32 %v4946, 1.442695
    %v4948 = vpow.pop %v4947
    %v4949 = vadd.f32 %v4948, 1.0
    %v4950 = vrcp.pop %v4949
    %v4951 = vmul.f32 1.0, %v4950
    %v4952 = vtanh.pop %v4945
    %v4953 = vmul.f32 %v4951, %v4860
    %4955 = vrot.lane.b32.xlu0 %v4952, 64
    %v4956 = vpop.permute.xlu0 %4955
    %v4958 = vmul.f32 %v4951, %v4956
    %4960 = vrot.lane.b32.xlu0 %v4958, 32
    %v4961 = vpop.permute.xlu0 %4960
    %v4963 = vadd.f32 %v4953, %v4961
    %v4964 = vtanh.pop %v4963
    %4966 = vrot.lane.b32.xlu0 %v4964, 64
    %v4967 = vpop.permute.xlu0 %4966
    %v4969 = vmul.f32 %v4951, %v4967
    %4971 = vrot.lane.b32.xlu0 %v4969, 32
    %v4972 = vpop.permute.xlu0 %4971
    %4974 = vst.msk [vmem:[#allocation3 + $0x50] sm:$0xff] %vm308, %v4972
    %v4975 = vld [vmem:[#allocation2 + $0x58] sm:$0xff]
    %v4976 = vsel %vm308, %v4972, 0
    %4978 = vmatprep.subr.mxu0 0.0
    %4979 = vmatpush1.msra.mxu0 %v3911
    %4980 = vmatprep.subr.mxu0 0.0
    %4981 = vmatpush1.msra.mxu0 %v3912
    %4982 = vmatprep.subr.mxu0 0.0
    %4983 = vmatpush1.msra.mxu0 %v3913
    %4984 = vmatprep.subr.mxu0 0.0
    %4985 = vmatpush1.msra.mxu0 %v3914
    %4986 = vmatprep.subr.mxu0 0.0
    %4987 = vmatpush1.msra.mxu0 0.0
    %4988 = vmatprep.subr.mxu0 0.0
    %4989 = vmatpush1.msra.mxu0 0.0
    %4990 = vmatprep.subr.mxu0 0.0
    %4991 = vmatpush1.msra.mxu0 0.0
    %4992 = vmatprep.subr.mxu0 0.0
    %4993 = vmatpush1.msra.mxu0 0.0
    %4994 = vmatprep.subr.mxu0 0.0
    %4995 = vmatpush1.msra.mxu0 0.0
    %4996 = vmatprep.subr.mxu0 0.0
    %4997 = vmatpush1.msra.mxu0 0.0
    %4998 = vmatprep.subr.mxu0 0.0
    %4999 = vmatpush1.msra.mxu0 0.0
    %5000 = vmatprep.subr.mxu0 0.0
    %5001 = vmatpush1.msra.mxu0 0.0
    %5002 = vmatprep.subr.mxu0 0.0
    %5003 = vmatpush1.msra.mxu0 0.0
    %5004 = vmatprep.subr.mxu0 0.0
    %5005 = vmatpush1.msra.mxu0 0.0
    %5006 = vmatprep.subr.mxu0 0.0
    %5007 = vmatpush1.msra.mxu0 0.0
    %5008 = vmatprep.subr.mxu0 0.0
    %5009 = vmatpush1.msra.mxu0 0.0
    %5010 = vmatprep.subr.mxu0 0.0
    %5011 = vmatpush1.msra.mxu0 0.0
    %5012 = vmatprep.subr.mxu0 0.0
    %5013 = vmatpush1.msra.mxu0 0.0
    %5014 = vmatprep.subr.mxu0 0.0
    %5015 = vmatpush1.msra.mxu0 0.0
    %5016 = vmatprep.subr.mxu0 0.0
    %5017 = vmatpush1.msra.mxu0 0.0
    %5018 = vmatprep.subr.mxu0 0.0
    %5019 = vmatpush1.msra.mxu0 0.0
    %5020 = vmatprep.subr.mxu0 0.0
    %5021 = vmatpush1.msra.mxu0 0.0
    %5022 = vmatprep.subr.mxu0 0.0
    %5023 = vmatpush1.msra.mxu0 0.0
    %5024 = vmatprep.subr.mxu0 0.0
    %5025 = vmatpush1.msra.mxu0 0.0
    %5026 = vmatprep.subr.mxu0 0.0
    %5027 = vmatpush1.msra.mxu0 0.0
    %5028 = vmatprep.subr.mxu0 0.0
    %5029 = vmatpush1.msra.mxu0 0.0
    %5030 = vmatprep.subr.mxu0 0.0
    %5031 = vmatpush1.msra.mxu0 0.0
    %5032 = vmatprep.subr.mxu0 0.0
    %5033 = vmatpush1.msra.mxu0 0.0
    %5034 = vmatprep.subr.mxu0 0.0
    %5035 = vmatpush1.msra.mxu0 0.0
    %5036 = vmatprep.subr.mxu0 0.0
    %5037 = vmatpush1.msra.mxu0 0.0
    %5038 = vmatprep.subr.mxu0 0.0
    %5039 = vmatpush1.msra.mxu0 0.0
    %5040 = vmatprep.subr.mxu0 0.0
    %5041 = vmatpush1.msra.mxu0 0.0
    %5042 = vmatprep.mubr.f32.mxu0 0.0
    %5043 = vmatmul.mubr.f32.gmra.mrb[0].mxu0 %v4976
    %v5044 = vpop.f32.mrb[0].mxu0
    %v5045 = vadd.f32 0.0, %v5044
    %v5046 = vpop.f32.mrb[0].mxu0
    %5047 = vdwg.mxu0
    %v5048 = vadd.f32 %v4975, %v5045
    %v5049 = vxor.u32 %v5048, 2147483648
    %v5050 = vmul.f32 %v5049, 1.442695
    %v5051 = vpow.pop %v5050
    %v5052 = vadd.f32 %v5051, 1.0
    %v5053 = vrcp.pop %v5052
    %v5054 = vmul.f32 1.0, %v5053
    %v5055 = vtanh.pop %v5048
    %v5056 = vmul.f32 %v5054, %v4963
    %5058 = vrot.lane.b32.xlu0 %v5055, 64
    %v5059 = vpop.permute.xlu0 %5058
    %v5061 = vmul.f32 %v5054, %v5059
    %5063 = vrot.lane.b32.xlu0 %v5061, 32
    %v5064 = vpop.permute.xlu0 %5063
    %v5066 = vadd.f32 %v5056, %v5064
    %v5067 = vtanh.pop %v5066
    %5069 = vrot.lane.b32.xlu0 %v5067, 64
    %v5070 = vpop.permute.xlu0 %5069
    %v5072 = vmul.f32 %v5054, %v5070
    %5074 = vrot.lane.b32.xlu0 %v5072, 32
    %v5075 = vpop.permute.xlu0 %5074
    %5077 = vst.msk [vmem:[#allocation3 + $0x58] sm:$0xff] %vm308, %v5075
    %v5078 = vld [vmem:[#allocation2 + $0x60] sm:$0xff]
    %v5079 = vsel %vm308, %v5075, 0
    %5081 = vmatprep.subr.mxu0 0.0
    %5082 = vmatpush1.msra.mxu0 %v3911
    %5083 = vmatprep.subr.mxu0 0.0
    %5084 = vmatpush1.msra.mxu0 %v3912
    %5085 = vmatprep.subr.mxu0 0.0
    %5086 = vmatpush1.msra.mxu0 %v3913
    %5087 = vmatprep.subr.mxu0 0.0
    %5088 = vmatpush1.msra.mxu0 %v3914
    %5089 = vmatprep.subr.mxu0 0.0
    %5090 = vmatpush1.msra.mxu0 0.0
    %5091 = vmatprep.subr.mxu0 0.0
    %5092 = vmatpush1.msra.mxu0 0.0
    %5093 = vmatprep.subr.mxu0 0.0
    %5094 = vmatpush1.msra.mxu0 0.0
    %5095 = vmatprep.subr.mxu0 0.0
    %5096 = vmatpush1.msra.mxu0 0.0
    %5097 = vmatprep.subr.mxu0 0.0
    %5098 = vmatpush1.msra.mxu0 0.0
    %5099 = vmatprep.subr.mxu0 0.0
    %5100 = vmatpush1.msra.mxu0 0.0
    %5101 = vmatprep.subr.mxu0 0.0
    %5102 = vmatpush1.msra.mxu0 0.0
    %5103 = vmatprep.subr.mxu0 0.0
    %5104 = vmatpush1.msra.mxu0 0.0
    %5105 = vmatprep.subr.mxu0 0.0
    %5106 = vmatpush1.msra.mxu0 0.0
    %5107 = vmatprep.subr.mxu0 0.0
    %5108 = vmatpush1.msra.mxu0 0.0
    %5109 = vmatprep.subr.mxu0 0.0
    %5110 = vmatpush1.msra.mxu0 0.0
    %5111 = vmatprep.subr.mxu0 0.0
    %5112 = vmatpush1.msra.mxu0 0.0
    %5113 = vmatprep.subr.mxu0 0.0
    %5114 = vmatpush1.msra.mxu0 0.0
    %5115 = vmatprep.subr.mxu0 0.0
    %5116 = vmatpush1.msra.mxu0 0.0
    %5117 = vmatprep.subr.mxu0 0.0
    %5118 = vmatpush1.msra.mxu0 0.0
    %5119 = vmatprep.subr.mxu0 0.0
    %5120 = vmatpush1.msra.mxu0 0.0
    %5121 = vmatprep.subr.mxu0 0.0
    %5122 = vmatpush1.msra.mxu0 0.0
    %5123 = vmatprep.subr.mxu0 0.0
    %5124 = vmatpush1.msra.mxu0 0.0
    %5125 = vmatprep.subr.mxu0 0.0
    %5126 = vmatpush1.msra.mxu0 0.0
    %5127 = vmatprep.subr.mxu0 0.0
    %5128 = vmatpush1.msra.mxu0 0.0
    %5129 = vmatprep.subr.mxu0 0.0
    %5130 = vmatpush1.msra.mxu0 0.0
    %5131 = vmatprep.subr.mxu0 0.0
    %5132 = vmatpush1.msra.mxu0 0.0
    %5133 = vmatprep.subr.mxu0 0.0
    %5134 = vmatpush1.msra.mxu0 0.0
    %5135 = vmatprep.subr.mxu0 0.0
    %5136 = vmatpush1.msra.mxu0 0.0
    %5137 = vmatprep.subr.mxu0 0.0
    %5138 = vmatpush1.msra.mxu0 0.0
    %5139 = vmatprep.subr.mxu0 0.0
    %5140 = vmatpush1.msra.mxu0 0.0
    %5141 = vmatprep.subr.mxu0 0.0
    %5142 = vmatpush1.msra.mxu0 0.0
    %5143 = vmatprep.subr.mxu0 0.0
    %5144 = vmatpush1.msra.mxu0 0.0
    %5145 = vmatprep.mubr.f32.mxu0 0.0
    %5146 = vmatmul.mubr.f32.gmra.mrb[0].mxu0 %v5079
    %v5147 = vpop.f32.mrb[0].mxu0
    %v5148 = vadd.f32 0.0, %v5147
    %v5149 = vpop.f32.mrb[0].mxu0
    %5150 = vdwg.mxu0
    %v5151 = vadd.f32 %v5078, %v5148
    %v5152 = vxor.u32 %v5151, 2147483648
    %v5153 = vmul.f32 %v5152, 1.442695
    %v5154 = vpow.pop %v5153
    %v5155 = vadd.f32 %v5154, 1.0
    %v5156 = vrcp.pop %v5155
    %v5157 = vmul.f32 1.0, %v5156
    %v5158 = vtanh.pop %v5151
    %v5159 = vmul.f32 %v5157, %v5066
    %5161 = vrot.lane.b32.xlu0 %v5158, 64
    %v5162 = vpop.permute.xlu0 %5161
    %v5164 = vmul.f32 %v5157, %v5162
    %5166 = vrot.lane.b32.xlu0 %v5164, 32
    %v5167 = vpop.permute.xlu0 %5166
    %v5169 = vadd.f32 %v5159, %v5167
    %v5170 = vtanh.pop %v5169
    %5172 = vrot.lane.b32.xlu0 %v5170, 64
    %v5173 = vpop.permute.xlu0 %5172
    %v5175 = vmul.f32 %v5157, %v5173
    %5177 = vrot.lane.b32.xlu0 %v5175, 32
    %v5178 = vpop.permute.xlu0 %5177
    %5180 = vst.msk [vmem:[#allocation3 + $0x60] sm:$0xff] %vm308, %v5178
    %v5181 = vld [vmem:[#allocation2 + $0x68] sm:$0xff]
    %v5182 = vsel %vm308, %v5178, 0
    %5184 = vmatprep.subr.mxu0 0.0
    %5185 = vmatpush1.msra.mxu0 %v3911
    %5186 = vmatprep.subr.mxu0 0.0
    %5187 = vmatpush1.msra.mxu0 %v3912
    %5188 = vmatprep.subr.mxu0 0.0
    %5189 = vmatpush1.msra.mxu0 %v3913
    %5190 = vmatprep.subr.mxu0 0.0
    %5191 = vmatpush1.msra.mxu0 %v3914
    %5192 = vmatprep.subr.mxu0 0.0
    %5193 = vmatpush1.msra.mxu0 0.0
    %5194 = vmatprep.subr.mxu0 0.0
    %5195 = vmatpush1.msra.mxu0 0.0
    %5196 = vmatprep.subr.mxu0 0.0
    %5197 = vmatpush1.msra.mxu0 0.0
    %5198 = vmatprep.subr.mxu0 0.0
    %5199 = vmatpush1.msra.mxu0 0.0
    %5200 = vmatprep.subr.mxu0 0.0
    %5201 = vmatpush1.msra.mxu0 0.0
    %5202 = vmatprep.subr.mxu0 0.0
    %5203 = vmatpush1.msra.mxu0 0.0
    %5204 = vmatprep.subr.mxu0 0.0
    %5205 = vmatpush1.msra.mxu0 0.0
    %5206 = vmatprep.subr.mxu0 0.0
    %5207 = vmatpush1.msra.mxu0 0.0
    %5208 = vmatprep.subr.mxu0 0.0
    %5209 = vmatpush1.msra.mxu0 0.0
    %5210 = vmatprep.subr.mxu0 0.0
    %5211 = vmatpush1.msra.mxu0 0.0
    %5212 = vmatprep.subr.mxu0 0.0
    %5213 = vmatpush1.msra.mxu0 0.0
    %5214 = vmatprep.subr.mxu0 0.0
    %5215 = vmatpush1.msra.mxu0 0.0
    %5216 = vmatprep.subr.mxu0 0.0
    %5217 = vmatpush1.msra.mxu0 0.0
    %5218 = vmatprep.subr.mxu0 0.0
    %5219 = vmatpush1.msra.mxu0 0.0
    %5220 = vmatprep.subr.mxu0 0.0
    %5221 = vmatpush1.msra.mxu0 0.0
    %5222 = vmatprep.subr.mxu0 0.0
    %5223 = vmatpush1.msra.mxu0 0.0
    %5224 = vmatprep.subr.mxu0 0.0
    %5225 = vmatpush1.msra.mxu0 0.0
    %5226 = vmatprep.subr.mxu0 0.0
    %5227 = vmatpush1.msra.mxu0 0.0
    %5228 = vmatprep.subr.mxu0 0.0
    %5229 = vmatpush1.msra.mxu0 0.0
    %5230 = vmatprep.subr.mxu0 0.0
    %5231 = vmatpush1.msra.mxu0 0.0
    %5232 = vmatprep.subr.mxu0 0.0
    %5233 = vmatpush1.msra.mxu0 0.0
    %5234 = vmatprep.subr.mxu0 0.0
    %5235 = vmatpush1.msra.mxu0 0.0
    %5236 = vmatprep.subr.mxu0 0.0
    %5237 = vmatpush1.msra.mxu0 0.0
    %5238 = vmatprep.subr.mxu0 0.0
    %5239 = vmatpush1.msra.mxu0 0.0
    %5240 = vmatprep.subr.mxu0 0.0
    %5241 = vmatpush1.msra.mxu0 0.0
    %5242 = vmatprep.subr.mxu0 0.0
    %5243 = vmatpush1.msra.mxu0 0.0
    %5244 = vmatprep.subr.mxu0 0.0
    %5245 = vmatpush1.msra.mxu0 0.0
    %5246 = vmatprep.subr.mxu0 0.0
    %5247 = vmatpush1.msra.mxu0 0.0
    %5248 = vmatprep.mubr.f32.mxu0 0.0
    %5249 = vmatmul.mubr.f32.gmra.mrb[0].mxu0 %v5182
    %v5250 = vpop.f32.mrb[0].mxu0
    %v5251 = vadd.f32 0.0, %v5250
    %v5252 = vpop.f32.mrb[0].mxu0
    %5253 = vdwg.mxu0
    %v5254 = vadd.f32 %v5181, %v5251
    %v5255 = vxor.u32 %v5254, 2147483648
    %v5256 = vmul.f32 %v5255, 1.442695
    %v5257 = vpow.pop %v5256
    %v5258 = vadd.f32 %v5257, 1.0
    %v5259 = vrcp.pop %v5258
    %v5260 = vmul.f32 1.0, %v5259
    %v5261 = vtanh.pop %v5254
    %v5262 = vmul.f32 %v5260, %v5169
    %5264 = vrot.lane.b32.xlu0 %v5261, 64
    %v5265 = vpop.permute.xlu0 %5264
    %v5267 = vmul.f32 %v5260, %v5265
    %5269 = vrot.lane.b32.xlu0 %v5267, 32
    %v5270 = vpop.permute.xlu0 %5269
    %v5272 = vadd.f32 %v5262, %v5270
    %v5273 = vtanh.pop %v5272
    %5275 = vrot.lane.b32.xlu0 %v5273, 64
    %v5276 = vpop.permute.xlu0 %5275
    %v5278 = vmul.f32 %v5260, %v5276
    %5280 = vrot.lane.b32.xlu0 %v5278, 32
    %v5281 = vpop.permute.xlu0 %5280
    %5283 = vst.msk [vmem:[#allocation3 + $0x68] sm:$0xff] %vm308, %v5281
    %v5284 = vld [vmem:[#allocation2 + $0x70] sm:$0xff]
    %v5285 = vsel %vm308, %v5281, 0
    %5287 = vmatprep.subr.mxu0 0.0
    %5288 = vmatpush1.msra.mxu0 %v3911
    %5289 = vmatprep.subr.mxu0 0.0
    %5290 = vmatpush1.msra.mxu0 %v3912
    %5291 = vmatprep.subr.mxu0 0.0
    %5292 = vmatpush1.msra.mxu0 %v3913
    %5293 = vmatprep.subr.mxu0 0.0
    %5294 = vmatpush1.msra.mxu0 %v3914
    %5295 = vmatprep.subr.mxu0 0.0
    %5296 = vmatpush1.msra.mxu0 0.0
    %5297 = vmatprep.subr.mxu0 0.0
    %5298 = vmatpush1.msra.mxu0 0.0
    %5299 = vmatprep.subr.mxu0 0.0
    %5300 = vmatpush1.msra.mxu0 0.0
    %5301 = vmatprep.subr.mxu0 0.0
    %5302 = vmatpush1.msra.mxu0 0.0
    %5303 = vmatprep.subr.mxu0 0.0
    %5304 = vmatpush1.msra.mxu0 0.0
    %5305 = vmatprep.subr.mxu0 0.0
    %5306 = vmatpush1.msra.mxu0 0.0
    %5307 = vmatprep.subr.mxu0 0.0
    %5308 = vmatpush1.msra.mxu0 0.0
    %5309 = vmatprep.subr.mxu0 0.0
    %5310 = vmatpush1.msra.mxu0 0.0
    %5311 = vmatprep.subr.mxu0 0.0
    %5312 = vmatpush1.msra.mxu0 0.0
    %5313 = vmatprep.subr.mxu0 0.0
    %5314 = vmatpush1.msra.mxu0 0.0
    %5315 = vmatprep.subr.mxu0 0.0
    %5316 = vmatpush1.msra.mxu0 0.0
    %5317 = vmatprep.subr.mxu0 0.0
    %5318 = vmatpush1.msra.mxu0 0.0
    %5319 = vmatprep.subr.mxu0 0.0
    %5320 = vmatpush1.msra.mxu0 0.0
    %5321 = vmatprep.subr.mxu0 0.0
    %5322 = vmatpush1.msra.mxu0 0.0
    %5323 = vmatprep.subr.mxu0 0.0
    %5324 = vmatpush1.msra.mxu0 0.0
    %5325 = vmatprep.subr.mxu0 0.0
    %5326 = vmatpush1.msra.mxu0 0.0
    %5327 = vmatprep.subr.mxu0 0.0
    %5328 = vmatpush1.msra.mxu0 0.0
    %5329 = vmatprep.subr.mxu0 0.0
    %5330 = vmatpush1.msra.mxu0 0.0
    %5331 = vmatprep.subr.mxu0 0.0
    %5332 = vmatpush1.msra.mxu0 0.0
    %5333 = vmatprep.subr.mxu0 0.0
    %5334 = vmatpush1.msra.mxu0 0.0
    %5335 = vmatprep.subr.mxu0 0.0
    %5336 = vmatpush1.msra.mxu0 0.0
    %5337 = vmatprep.subr.mxu0 0.0
    %5338 = vmatpush1.msra.mxu0 0.0
    %5339 = vmatprep.subr.mxu0 0.0
    %5340 = vmatpush1.msra.mxu0 0.0
    %5341 = vmatprep.subr.mxu0 0.0
    %5342 = vmatpush1.msra.mxu0 0.0
    %5343 = vmatprep.subr.mxu0 0.0
    %5344 = vmatpush1.msra.mxu0 0.0
    %5345 = vmatprep.subr.mxu0 0.0
    %5346 = vmatpush1.msra.mxu0 0.0
    %5347 = vmatprep.subr.mxu0 0.0
    %5348 = vmatpush1.msra.mxu0 0.0
    %5349 = vmatprep.subr.mxu0 0.0
    %5350 = vmatpush1.msra.mxu0 0.0
    %5351 = vmatprep.mubr.f32.mxu0 0.0
    %5352 = vmatmul.mubr.f32.gmra.mrb[0].mxu0 %v5285
    %v5353 = vpop.f32.mrb[0].mxu0
    %v5354 = vadd.f32 0.0, %v5353
    %v5355 = vpop.f32.mrb[0].mxu0
    %5356 = vdwg.mxu0
    %v5357 = vadd.f32 %v5284, %v5354
    %v5358 = vxor.u32 %v5357, 2147483648
    %v5359 = vmul.f32 %v5358, 1.442695
    %v5360 = vpow.pop %v5359
    %v5361 = vadd.f32 %v5360, 1.0
    %v5362 = vrcp.pop %v5361
    %v5363 = vmul.f32 1.0, %v5362
    %v5364 = vtanh.pop %v5357
    %v5365 = vmul.f32 %v5363, %v5272
    %5367 = vrot.lane.b32.xlu0 %v5364, 64
    %v5368 = vpop.permute.xlu0 %5367
    %v5370 = vmul.f32 %v5363, %v5368
    %5372 = vrot.lane.b32.xlu0 %v5370, 32
    %v5373 = vpop.permute.xlu0 %5372
    %v5375 = vadd.f32 %v5365, %v5373
    %v5376 = vtanh.pop %v5375
    %5378 = vrot.lane.b32.xlu0 %v5376, 64
    %v5379 = vpop.permute.xlu0 %5378
    %v5381 = vmul.f32 %v5363, %v5379
    %5383 = vrot.lane.b32.xlu0 %v5381, 32
    %v5384 = vpop.permute.xlu0 %5383
    %5386 = vst.msk [vmem:[#allocation3 + $0x70] sm:$0xff] %vm308, %v5384
    %v5387 = vld [vmem:[#allocation2 + $0x78] sm:$0xff]
    %v5388 = vsel %vm308, %v5384, 0
    %5390 = vmatprep.subr.mxu0 0.0
    %5391 = vmatpush1.msra.mxu0 %v3911
    %5392 = vmatprep.subr.mxu0 0.0
    %5393 = vmatpush1.msra.mxu0 %v3912
    %5394 = vmatprep.subr.mxu0 0.0
    %5395 = vmatpush1.msra.mxu0 %v3913
    %5396 = vmatprep.subr.mxu0 0.0
    %5397 = vmatpush1.msra.mxu0 %v3914
    %5398 = vmatprep.subr.mxu0 0.0
    %5399 = vmatpush1.msra.mxu0 0.0
    %5400 = vmatprep.subr.mxu0 0.0
    %5401 = vmatpush1.msra.mxu0 0.0
    %5402 = vmatprep.subr.mxu0 0.0
    %5403 = vmatpush1.msra.mxu0 0.0
    %5404 = vmatprep.subr.mxu0 0.0
    %5405 = vmatpush1.msra.mxu0 0.0
    %5406 = vmatprep.subr.mxu0 0.0
    %5407 = vmatpush1.msra.mxu0 0.0
    %5408 = vmatprep.subr.mxu0 0.0
    %5409 = vmatpush1.msra.mxu0 0.0
    %5410 = vmatprep.subr.mxu0 0.0
    %5411 = vmatpush1.msra.mxu0 0.0
    %5412 = vmatprep.subr.mxu0 0.0
    %5413 = vmatpush1.msra.mxu0 0.0
    %5414 = vmatprep.subr.mxu0 0.0
    %5415 = vmatpush1.msra.mxu0 0.0
    %5416 = vmatprep.subr.mxu0 0.0
    %5417 = vmatpush1.msra.mxu0 0.0
    %5418 = vmatprep.subr.mxu0 0.0
    %5419 = vmatpush1.msra.mxu0 0.0
    %5420 = vmatprep.subr.mxu0 0.0
    %5421 = vmatpush1.msra.mxu0 0.0
    %5422 = vmatprep.subr.mxu0 0.0
    %5423 = vmatpush1.msra.mxu0 0.0
    %5424 = vmatprep.subr.mxu0 0.0
    %5425 = vmatpush1.msra.mxu0 0.0
    %5426 = vmatprep.subr.mxu0 0.0
    %5427 = vmatpush1.msra.mxu0 0.0
    %5428 = vmatprep.subr.mxu0 0.0
    %5429 = vmatpush1.msra.mxu0 0.0
    %5430 = vmatprep.subr.mxu0 0.0
    %5431 = vmatpush1.msra.mxu0 0.0
    %5432 = vmatprep.subr.mxu0 0.0
    %5433 = vmatpush1.msra.mxu0 0.0
    %5434 = vmatprep.subr.mxu0 0.0
    %5435 = vmatpush1.msra.mxu0 0.0
    %5436 = vmatprep.subr.mxu0 0.0
    %5437 = vmatpush1.msra.mxu0 0.0
    %5438 = vmatprep.subr.mxu0 0.0
    %5439 = vmatpush1.msra.mxu0 0.0
    %5440 = vmatprep.subr.mxu0 0.0
    %5441 = vmatpush1.msra.mxu0 0.0
    %5442 = vmatprep.subr.mxu0 0.0
    %5443 = vmatpush1.msra.mxu0 0.0
    %5444 = vmatprep.subr.mxu0 0.0
    %5445 = vmatpush1.msra.mxu0 0.0
    %5446 = vmatprep.subr.mxu0 0.0
    %5447 = vmatpush1.msra.mxu0 0.0
    %5448 = vmatprep.subr.mxu0 0.0
    %5449 = vmatpush1.msra.mxu0 0.0
    %5450 = vmatprep.subr.mxu0 0.0
    %5451 = vmatpush1.msra.mxu0 0.0
    %5452 = vmatprep.subr.mxu0 0.0
    %5453 = vmatpush1.msra.mxu0 0.0
    %5454 = vmatprep.mubr.f32.mxu0 0.0
    %5455 = vmatmul.mubr.f32.gmra.mrb[0].mxu0 %v5388
    %v5456 = vpop.f32.mrb[0].mxu0
    %v5457 = vadd.f32 0.0, %v5456
    %v5458 = vpop.f32.mrb[0].mxu0
    %5459 = vdwg.mxu0
    %v5460 = vadd.f32 %v5387, %v5457
    %v5461 = vxor.u32 %v5460, 2147483648
    %v5462 = vmul.f32 %v5461, 1.442695
    %v5463 = vpow.pop %v5462
    %v5464 = vadd.f32 %v5463, 1.0
    %v5465 = vrcp.pop %v5464
    %v5466 = vmul.f32 1.0, %v5465
    %v5467 = vtanh.pop %v5460
    %v5468 = vmul.f32 %v5466, %v5375
    %5470 = vrot.lane.b32.xlu0 %v5467, 64
    %v5471 = vpop.permute.xlu0 %5470
    %v5473 = vmul.f32 %v5466, %v5471
    %5475 = vrot.lane.b32.xlu0 %v5473, 32
    %v5476 = vpop.permute.xlu0 %5475
    %v5478 = vadd.f32 %v5468, %v5476
    %v5479 = vtanh.pop %v5478
    %5481 = vrot.lane.b32.xlu0 %v5479, 64
    %v5482 = vpop.permute.xlu0 %5481
    %v5484 = vmul.f32 %v5466, %v5482
    %5486 = vrot.lane.b32.xlu0 %v5484, 32
    %v5487 = vpop.permute.xlu0 %5486
    %5489 = vst.msk [vmem:[#allocation3 + $0x78] sm:$0xff] %vm308, %v5487
    %v5490 = vld [vmem:[%s5] sm:$0xff]
    %v5491 = vld [vmem:[%s5 + $0x8] sm:$0xff]
    %v5492 = vld [vmem:[%s5 + $0x10] sm:$0xff]
    %v5493 = vld [vmem:[%s5 + $0x18] sm:$0xff]
    %v5494 = vld [vmem:[%s6] sm:$0x1]
    %v5496 = vlaneseq
    %v5497 = vshrl.u32 %v5496, 7
    %v5498 = vsub.s32 0, %v5497
    %v5499 = vrot.slane %v5494, %v5498
    %v5501 = vsel %vm308, %v5487, 0
    %5503 = vmatprep.subr.mxu0 0.0
    %5504 = vmatpush1.msra.mxu0 %v5490
    %5505 = vmatprep.subr.mxu0 0.0
    %5506 = vmatpush1.msra.mxu0 %v5491
    %5507 = vmatprep.subr.mxu0 0.0
    %5508 = vmatpush1.msra.mxu0 %v5492
    %5509 = vmatprep.subr.mxu0 0.0
    %5510 = vmatpush1.msra.mxu0 %v5493
    %5511 = vmatprep.subr.mxu0 0.0
    %5512 = vmatpush1.msra.mxu0 0.0
    %5513 = vmatprep.subr.mxu0 0.0
    %5514 = vmatpush1.msra.mxu0 0.0
    %5515 = vmatprep.subr.mxu0 0.0
    %5516 = vmatpush1.msra.mxu0 0.0
    %5517 = vmatprep.subr.mxu0 0.0
    %5518 = vmatpush1.msra.mxu0 0.0
    %5519 = vmatprep.subr.mxu0 0.0
    %5520 = vmatpush1.msra.mxu0 0.0
    %5521 = vmatprep.subr.mxu0 0.0
    %5522 = vmatpush1.msra.mxu0 0.0
    %5523 = vmatprep.subr.mxu0 0.0
    %5524 = vmatpush1.msra.mxu0 0.0
    %5525 = vmatprep.subr.mxu0 0.0
    %5526 = vmatpush1.msra.mxu0 0.0
    %5527 = vmatprep.subr.mxu0 0.0
    %5528 = vmatpush1.msra.mxu0 0.0
    %5529 = vmatprep.subr.mxu0 0.0
    %5530 = vmatpush1.msra.mxu0 0.0
    %5531 = vmatprep.subr.mxu0 0.0
    %5532 = vmatpush1.msra.mxu0 0.0
    %5533 = vmatprep.subr.mxu0 0.0
    %5534 = vmatpush1.msra.mxu0 0.0
    %5535 = vmatprep.subr.mxu0 0.0
    %5536 = vmatpush1.msra.mxu0 0.0
    %5537 = vmatprep.subr.mxu0 0.0
    %5538 = vmatpush1.msra.mxu0 0.0
    %5539 = vmatprep.subr.mxu0 0.0
    %5540 = vmatpush1.msra.mxu0 0.0
    %5541 = vmatprep.subr.mxu0 0.0
    %5542 = vmatpush1.msra.mxu0 0.0
    %5543 = vmatprep.subr.mxu0 0.0
    %5544 = vmatpush1.msra.mxu0 0.0
    %5545 = vmatprep.subr.mxu0 0.0
    %5546 = vmatpush1.msra.mxu0 0.0
    %5547 = vmatprep.subr.mxu0 0.0
    %5548 = vmatpush1.msra.mxu0 0.0
    %5549 = vmatprep.subr.mxu0 0.0
    %5550 = vmatpush1.msra.mxu0 0.0
    %5551 = vmatprep.subr.mxu0 0.0
    %5552 = vmatpush1.msra.mxu0 0.0
    %5553 = vmatprep.subr.mxu0 0.0
    %5554 = vmatpush1.msra.mxu0 0.0
    %5555 = vmatprep.subr.mxu0 0.0
    %5556 = vmatpush1.msra.mxu0 0.0
    %5557 = vmatprep.subr.mxu0 0.0
    %5558 = vmatpush1.msra.mxu0 0.0
    %5559 = vmatprep.subr.mxu0 0.0
    %5560 = vmatpush1.msra.mxu0 0.0
    %5561 = vmatprep.subr.mxu0 0.0
    %5562 = vmatpush1.msra.mxu0 0.0
    %5563 = vmatprep.subr.mxu0 0.0
    %5564 = vmatpush1.msra.mxu0 0.0
    %5565 = vmatprep.subr.mxu0 0.0
    %5566 = vmatpush1.msra.mxu0 0.0
    %5567 = vmatprep.mubr.f32.mxu0 0.0
    %5568 = vmatmul.mubr.f32.gmra.mrb[0].mxu0 %v5501
    %v5569 = vpop.f32.mrb[0].mxu0
    %v5570 = vadd.f32 %v5499, %v5569
    %v5571 = vpop.f32.mrb[0].mxu0
    %5572 = vdwg.mxu0
    %5573 = vst [vmem:[#allocation7] sm:$0xff] %v5570
    // Predicated region
    $region34: #{tpu_custom_call.1} parent=1 // pred_check
      _
    $region35: #{tpu_custom_call.1} parent=1 // pred_check_branch
      %5575 = sbr.rel (0) target = $region37
    $region36: #{tpu_custom_call.1} parent=1 // pred_region
      %s5577 = ssub.s32 128, 128
      %5578 = vsyncadd [#allocation6], %s5577
      %s5580 = sshll.u32 [#allocation7], 4
      %s5581 = int_to_ptr.vmem [resolvable:$true] %s5580
      %5583 = dma.vmem_to_hbm [thread:$0]  %s5581, 128, %s7, [#allocation6]
    $region37: #{tpu_custom_call.1} parent=1 // pred_fallthru
      _
    // Predicated region
    $region38: #{tpu_custom_call.1} parent=1 // pred_check
      _
    $region39: #{tpu_custom_call.1} parent=1 // pred_check_branch
      %5585 = sbr.rel (0) target = $region41
    $region40: #{tpu_custom_call.1} parent=1 // pred_region
      %5586 = dma.done [#allocation6], 128
    $region41: #{tpu_custom_call.1} parent=1 // pred_fallthru
      _
    %5587 = vsyncpa [#allocation5], 1
    %5588 = vsyncpa [#allocation6], 1

</llo_original>
